<compile_context>
chip_gen: v7x
topology: tpu7x:2x2x1
jax: 0.10.0
libtpu: 0.0.40
codegen_flags: <defaults>
</compile_context>

<pallas_src>
import functools

import jax
import jax.numpy as jnp
from jax.experimental import pallas as pl
from jax.experimental.pallas import tpu as pltpu


def _round_up(x, m):
    return ((x + m - 1) // m) * m


# (cin, kernel, pad) per conv stage -- fixed by the module architecture.
_CONV_CFG = ((1, 5, 2), (32, 5, 2), (64, 3, 1))


# ----------------------------------------------------------------------------
# Pallas kernels
# ----------------------------------------------------------------------------
def _conv_bn_relu_pool_kernel(x_ref, w_ref, b_ref, o_ref, *, H, W, Ho, Wo):
    """One image: im2col-patches @ folded-weight + bias, ReLU, 2x2 max pool.

    x_ref: (H*W, Kpad) bf16 patches, w_ref: (Kpad, Cp) bf16, b_ref: (1, Cp) f32,
    o_ref: (Ho*Wo, Cp) bf16.  MXU matmul with f32 accumulation; pooling uses
    only contiguous slices / static indexing (pure VPU maxima, no strides).
    """
    z = jnp.dot(x_ref[...], w_ref[...], preferred_element_type=jnp.float32)
    z = jnp.maximum(z + b_ref[...], 0.0)                         # (H*W, Cp)
    c = z.shape[-1]
    # h-pair max: group image-row pairs, contiguous halves along the row dim.
    zz = z[: 2 * Ho * W].reshape(Ho, 2 * W, c)
    zh = jnp.maximum(zz[:, :W, :], zz[:, W:, :])                 # (Ho, W, Cp)
    # w-pair max: crop odd tail column, pair adjacent columns.
    zw = zh[:, : 2 * Wo, :].reshape(Ho * Wo, 2, c)
    p = jnp.maximum(zw[:, 0, :], zw[:, 1, :])                    # (Ho*Wo, Cp)
    o_ref[...] = p.astype(o_ref.dtype)


def _mlp_kernel(x_ref, w1_ref, b1_ref, w2_ref, b2_ref, w3_ref, b3_ref, o_ref):
    # fc1 + ReLU + fc2 + ReLU + (Dropout==identity at inference) + fc3.
    h = jnp.dot(x_ref[...], w1_ref[...], preferred_element_type=jnp.float32)
    h = jnp.maximum(h + b1_ref[...], 0.0)
    h = jnp.dot(h.astype(jnp.bfloat16), w2_ref[...],
                preferred_element_type=jnp.float32)
    h = jnp.maximum(h + b2_ref[...], 0.0)
    z = jnp.dot(h.astype(jnp.bfloat16), w3_ref[...],
                preferred_element_type=jnp.float32)
    o_ref[...] = (z + b3_ref[...]).astype(o_ref.dtype)


# ----------------------------------------------------------------------------
# Glue: NHWC im2col (XLA), layer wrappers
# ----------------------------------------------------------------------------
def im2col_nhwc(x, cin, kh, kw, pad, k_pad):
    """(N,H,W,C>=cin) bf16 -> (N, H*W, k_pad) bf16; columns = (kh, kw, cin)."""
    n, h, w, _ = x.shape
    xs = x[..., :cin]
    xp = jnp.pad(xs, ((0, 0), (pad, pad), (pad, pad), (0, 0)))
    cols = [xp[:, i:i + h, j:j + w, :] for i in range(kh) for j in range(kw)]
    k = kh * kw * cin
    if k_pad > k:
        cols.append(jnp.zeros((n, h, w, k_pad - k), x.dtype))
    return jnp.concatenate(cols, axis=-1).reshape(n, h * w, k_pad)


def conv_bn_relu_pool(x_nhwc, wmat, bias, *, cin, kh, pad):
    """Conv2d(stride 1) + BN(inference, folded) + ReLU + MaxPool2x2, fused."""
    n, h, w, _ = x_nhwc.shape
    ho, wo = h // 2, w // 2
    k_pad, cp = wmat.shape
    patches = im2col_nhwc(x_nhwc, cin, kh, kh, pad, k_pad)     # (N, H*W, Kpad)
    kern = functools.partial(_conv_bn_relu_pool_kernel, H=h, W=w, Ho=ho, Wo=wo)
    flops = 2 * n * h * w * k_pad * cp + 3 * n * ho * wo * cp
    bytes_accessed = (n * h * w * k_pad * 2 + k_pad * cp * 2 + cp * 4
                      + n * ho * wo * cp * 2)
    out = pl.pallas_call(
        kern,
        out_shape=jax.ShapeDtypeStruct((n, ho * wo, cp), jnp.bfloat16),
        grid=(n,),
        in_specs=[
            pl.BlockSpec((None, h * w, k_pad), lambda i: (i, 0, 0)),
            pl.BlockSpec((k_pad, cp), lambda i: (0, 0)),   # VMEM-resident
            pl.BlockSpec((1, cp), lambda i: (0, 0)),
        ],
        out_specs=pl.BlockSpec((None, ho * wo, cp), lambda i: (i, 0, 0)),
        compiler_params=pltpu.CompilerParams(
            dimension_semantics=("parallel",)),
        cost_estimate=pl.CostEstimate(flops=flops, transcendentals=0,
                                      bytes_accessed=bytes_accessed),
    )(patches, wmat, bias)
    return out.reshape(n, ho, wo, cp)


def mlp_head(x_bf16, prep):
    """Fused fc1+fc2+fc3 head on (N, 1152) bf16 -> (N, 128) f32 logits-pad."""
    n, kin = x_bf16.shape
    np_ = _round_up(n, 8)
    tm = 128 if np_ >= 128 else np_
    np_ = _round_up(np_, tm)
    if np_ > n:
        x_bf16 = jnp.pad(x_bf16, ((0, np_ - n), (0, 0)))
    flops = 2 * np_ * (kin * 128 + 128 * 128 + 128 * 128)
    bytes_accessed = (np_ * kin * 2 + (kin * 128 + 2 * 128 * 128) * 2
                      + 3 * 128 * 4 + np_ * 128 * 4)
    out = pl.pallas_call(
        _mlp_kernel,
        out_shape=jax.ShapeDtypeStruct((np_, 128), jnp.float32),
        grid=(np_ // tm,),
        in_specs=[
            pl.BlockSpec((tm, kin), lambda i: (i, 0)),
            pl.BlockSpec((kin, 128), lambda i: (0, 0)),
            pl.BlockSpec((1, 128), lambda i: (0, 0)),
            pl.BlockSpec((128, 128), lambda i: (0, 0)),
            pl.BlockSpec((1, 128), lambda i: (0, 0)),
            pl.BlockSpec((128, 128), lambda i: (0, 0)),
            pl.BlockSpec((1, 128), lambda i: (0, 0)),
        ],
        out_specs=pl.BlockSpec((tm, 128), lambda i: (i, 0)),
        compiler_params=pltpu.CompilerParams(
            dimension_semantics=("parallel",)),
        cost_estimate=pl.CostEstimate(flops=flops, transcendentals=0,
                                      bytes_accessed=bytes_accessed),
    )(x_bf16, prep["fc1_w"], prep["fc1_b"], prep["fc2_w"], prep["fc2_b"],
      prep["fc3_w"], prep["fc3_b"])
    return out[:n]


# ----------------------------------------------------------------------------
# One-time (load-time) weight preparation -- NOT inside the jitted forward.
# ----------------------------------------------------------------------------
def prepare_params(p, eps=1e-5):
    prep = {}
    for idx, (cin, kh, _pad) in enumerate(_CONV_CFG, start=1):
        w, b, bn = p[f"conv{idx}_w"], p[f"conv{idx}_b"], p[f"bn{idx}"]
        cout = w.shape[0]
        k = kh * kh * cin
        k_pad = _round_up(k, 128)
        cp = _round_up(cout, 128)
        scale = bn["gamma"] / jnp.sqrt(bn["var"] + eps)
        shift = bn["beta"] - bn["mean"] * scale
        wmat = w.transpose(2, 3, 1, 0).reshape(k, cout) * scale[None, :]
        bias = b * scale + shift
        wp = jnp.zeros((k_pad, cp), jnp.float32).at[:k, :cout].set(wmat)
        bp = jnp.zeros((1, cp), jnp.float32).at[0, :cout].set(bias)
        prep[f"conv{idx}_w"] = wp.astype(jnp.bfloat16)
        prep[f"conv{idx}_b"] = bp
    # fc1 expects NCHW (c,h,w) flattening; our activations flatten as (h,w,c).
    w1 = (p["fc1_w"].reshape(128, 128, 3, 3).transpose(0, 2, 3, 1)
          .reshape(128, 1152).T)
    prep["fc1_w"] = w1.astype(jnp.bfloat16)
    prep["fc1_b"] = p["fc1_b"].reshape(1, 128)
    prep["fc2_w"] = p["fc2_w"].T.astype(jnp.bfloat16)
    prep["fc2_b"] = p["fc2_b"].reshape(1, 128)
    prep["fc3_w"] = (jnp.zeros((128, 128), jnp.float32)
                     .at[:, :26].set(p["fc3_w"].T)).astype(jnp.bfloat16)
    prep["fc3_b"] = jnp.zeros((1, 128), jnp.float32).at[0, :26].set(p["fc3_b"])
    return prep


def init_params(key):
    def uniform(k, shape, fan_in):
        bound = 1.0 / jnp.sqrt(float(fan_in))
        return jax.random.uniform(k, shape, jnp.float32, -bound, bound)

    ks = jax.random.split(key, 12)
    p = {
        "conv1_w": uniform(ks[0], (32, 1, 5, 5), 1 * 25),
        "conv1_b": uniform(ks[1], (32,), 1 * 25),
        "conv2_w": uniform(ks[2], (64, 32, 5, 5), 32 * 25),
        "conv2_b": uniform(ks[3], (64,), 32 * 25),
        "conv3_w": uniform(ks[4], (128, 64, 3, 3), 64 * 9),
        "conv3_b": uniform(ks[5], (128,), 64 * 9),
        "fc1_w": uniform(ks[6], (128, 128 * 3 * 3), 128 * 3 * 3),
        "fc1_b": uniform(ks[7], (128,), 128 * 3 * 3),
        "fc2_w": uniform(ks[8], (128, 128), 128),
        "fc2_b": uniform(ks[9], (128,), 128),
        "fc3_w": uniform(ks[10], (26, 128), 128),
        "fc3_b": uniform(ks[11], (26,), 128),
    }
    for i, c in [(1, 32), (2, 64), (3, 128)]:
        p[f"bn{i}"] = {
            "gamma": jnp.ones((c,), jnp.float32),
            "beta": jnp.zeros((c,), jnp.float32),
            "mean": jnp.zeros((c,), jnp.float32),
            "var": jnp.ones((c,), jnp.float32),
        }
    return p


def cnn_forward(x, prep):
    """CNNModel.forward; x: (N, 1, 28, 28) f32 -> (N, 26) f32 logits."""
    n = x.shape[0]
    y = jnp.transpose(x, (0, 2, 3, 1)).astype(jnp.bfloat16)   # NHWC, bf16
    for idx, (cin, kh, pad) in enumerate(_CONV_CFG, start=1):
        y = conv_bn_relu_pool(y, prep[f"conv{idx}_w"], prep[f"conv{idx}_b"],
                              cin=cin, kh=kh, pad=pad)
    y = y.reshape(n, -1)                                       # (N, 3*3*128)
    # TODO(synk): train-mode Dropout masks and train-mode BatchNorm batch
    # statistics are not replicated; inference semantics are used.
    logits = mlp_head(y, prep)
    return logits[:, :26]


# ----------------------------------------------------------------------------
# Pure-JAX reference (numerical sanity check)
# ----------------------------------------------------------------------------
def reference_forward(x, p, eps=1e-5):
    def conv(x, w, b, pad):
        y = jax.lax.conv_general_dilated(
            x, w, (1, 1), [(pad, pad), (pad, pad)],
            dimension_numbers=("NCHW", "OIHW", "NCHW"))
        return y + b[None, :, None, None]

    def bn(x, s):
        g, be, m, v = s["gamma"], s["beta"], s["mean"], s["var"]
        inv = jax.lax.rsqrt(v + eps)
        return g[None, :, None, None] * (x - m[None, :, None, None]) \
            * inv[None, :, None, None] + be[None, :, None, None]

    def pool(x):
        return jax.lax.reduce_window(x, -jnp.inf, jax.lax.max,
                                     (1, 1, 2, 2), (1, 1, 2, 2), "VALID")

    y = pool(jax.nn.relu(bn(conv(x, p["conv1_w"], p["conv1_b"], 2), p["bn1"])))
    y = pool(jax.nn.relu(bn(conv(y, p["conv2_w"], p["conv2_b"], 2), p["bn2"])))
    y = pool(jax.nn.relu(bn(conv(y, p["conv3_w"], p["conv3_b"], 1), p["bn3"])))
    y = y.reshape(y.shape[0], -1)
    y = jax.nn.relu(y @ p["fc1_w"].T + p["fc1_b"])
    y = jax.nn.relu(y @ p["fc2_w"].T + p["fc2_b"])
    return y @ p["fc3_w"].T + p["fc3_b"]


if __name__ == "__main__":
    key = jax.random.PRNGKey(0)
    kx, kp = jax.random.split(key)
    params = init_params(kp)
    prep = prepare_params(params)            # load-time weight prep (no jit)
    # Spatial size is forced to 28x28x1 by fc1 = Linear(128*3*3, 128).
    x = jax.random.normal(kx, (2, 1, 28, 28), jnp.float32)

    out = jax.jit(cnn_forward)(x, prep)
    out = jax.block_until_ready(out)

    assert out.shape == (2, 26) and bool(jnp.all(jnp.isfinite(out)))
    ref = reference_forward(x, params)
    max_err = float(jnp.max(jnp.abs(out - ref)))
    assert jnp.allclose(out, ref, atol=2e-2, rtol=2e-2), max_err
    print("KERNEL_OK")
</pallas_src>

<mosaic_0001>
module attributes {stable_mosaic.version = 11 : i64} {
  func.func @_conv_bn_relu_pool_kernel(%arg0: i32, %arg1: memref<1x784x128xbf16, #tpu.memory_space<vmem>>, %arg2: memref<128x128xbf16, #tpu.memory_space<vmem>>, %arg3: memref<1x128xf32, #tpu.memory_space<vmem>>, %arg4: memref<1x196x128xbf16, #tpu.memory_space<vmem>>) attributes {dimension_semantics = [#tpu.dimension_semantics<parallel>], iteration_bounds = array<i64: 2>, scalar_prefetch = 0 : i64, scratch_operands = 0 : i64, tpu.core_type = #tpu.core_type<tc>, window_params = [{transform_indices = @transform_0, window_bounds = array<i64: 1, 784, 128>}, {pipeline_mode = #tpu.pipeline_mode<synchronous>, transform_indices = @transform_1, window_bounds = array<i64: 128, 128>}, {pipeline_mode = #tpu.pipeline_mode<synchronous>, transform_indices = @transform_2, window_bounds = array<i64: 1, 128>}, {transform_indices = @transform_3, window_bounds = array<i64: 1, 196, 128>}]} {
    %c0 = arith.constant 0 : index
    %c0_0 = arith.constant 0 : index
    %c0_1 = arith.constant 0 : index
    %0 = vector.load %arg1[%c0, %c0_0, %c0_1] : memref<1x784x128xbf16, #tpu.memory_space<vmem>>, vector<1x784x128xbf16>
    %1 = vector.shape_cast %0 : vector<1x784x128xbf16> to vector<784x128xbf16>
    %c0_2 = arith.constant 0 : index
    %c0_3 = arith.constant 0 : index
    %2 = vector.load %arg2[%c0_2, %c0_3] : memref<128x128xbf16, #tpu.memory_space<vmem>>, vector<128x128xbf16>
    %cst = arith.constant dense<0.000000e+00> : vector<784x128xf32>
    %3 = tpu.matmul %1, %2, %cst {dimension_numbers = #tpu.dot_dimension_numbers<[1], [0], [0], [1], [0, 0, 1, 1], [], []>} : vector<784x128xbf16>, vector<128x128xbf16>, vector<784x128xf32> -> vector<784x128xf32>
    %c0_4 = arith.constant 0 : index
    %c0_5 = arith.constant 0 : index
    %4 = vector.load %arg3[%c0_4, %c0_5] : memref<1x128xf32, #tpu.memory_space<vmem>>, vector<1x128xf32>
    %5 = vector.broadcast %4 : vector<1x128xf32> to vector<784x128xf32>
    %6 = arith.addf %3, %5 : vector<784x128xf32>
    %cst_6 = arith.constant 0.000000e+00 : f32
    %7 = vector.broadcast %cst_6 : f32 to vector<784x128xf32>
    %8 = arith.maximumf %6, %7 : vector<784x128xf32>
    %9 = vector.shape_cast %8 : vector<784x128xf32> to vector<14x56x128xf32>
    %10 = vector.extract_strided_slice %9 {offsets = [0, 0, 0], sizes = [14, 28, 128], strides = [1, 1, 1]} : vector<14x56x128xf32> to vector<14x28x128xf32>
    %11 = vector.extract_strided_slice %9 {offsets = [0, 28, 0], sizes = [14, 28, 128], strides = [1, 1, 1]} : vector<14x56x128xf32> to vector<14x28x128xf32>
    %12 = arith.maximumf %10, %11 : vector<14x28x128xf32>
    %13 = vector.shape_cast %12 : vector<14x28x128xf32> to vector<196x2x128xf32>
    %14 = vector.extract_strided_slice %13 {offsets = [0, 0, 0], sizes = [196, 1, 128], strides = [1, 1, 1]} : vector<196x2x128xf32> to vector<196x1x128xf32>
    %15 = vector.shape_cast %14 : vector<196x1x128xf32> to vector<196x128xf32>
    %16 = vector.extract_strided_slice %13 {offsets = [0, 1, 0], sizes = [196, 1, 128], strides = [1, 1, 1]} : vector<196x2x128xf32> to vector<196x1x128xf32>
    %17 = vector.shape_cast %16 : vector<196x1x128xf32> to vector<196x128xf32>
    %18 = arith.maximumf %15, %17 : vector<196x128xf32>
    %19 = arith.truncf %18 : vector<196x128xf32> to vector<196x128xbf16>
    %c0_7 = arith.constant 0 : index
    %c0_8 = arith.constant 0 : index
    %c0_9 = arith.constant 0 : index
    %20 = vector.load %arg4[%c0_7, %c0_8, %c0_9] : memref<1x196x128xbf16, #tpu.memory_space<vmem>>, vector<1x196x128xbf16>
    %21 = vector.shape_cast %20 : vector<1x196x128xbf16> to vector<196x128xbf16>
    %22 = vector.shape_cast %19 : vector<196x128xbf16> to vector<1x196x128xbf16>
    tpu.vector_store %arg4[%c0_7, %c0_8, %c0_9], %22 {strides = array<i32>} : memref<1x196x128xbf16, #tpu.memory_space<vmem>>, vector<1x196x128xbf16>,
    return
  }
  func.func @transform_0(%arg0: i32) -> (i32, i32, i32) {
    %c0_i32 = arith.constant 0 : i32
    %c0_i32_0 = arith.constant 0 : i32
    %c0_i32_1 = arith.constant 0 : i32
    return %arg0, %c0_i32, %c0_i32_0 : i32, i32, i32
  }
  func.func @transform_1(%arg0: i32) -> (i32, i32) {
    %c0_i32 = arith.constant 0 : i32
    %c0_i32_0 = arith.constant 0 : i32
    %c0_i32_1 = arith.constant 0 : i32
    return %c0_i32, %c0_i32_0 : i32, i32
  }
  func.func @transform_2(%arg0: i32) -> (i32, i32) {
    %c0_i32 = arith.constant 0 : i32
    %c0_i32_0 = arith.constant 0 : i32
    %c0_i32_1 = arith.constant 0 : i32
    return %c0_i32, %c0_i32_0 : i32, i32
  }
  func.func @transform_3(%arg0: i32) -> (i32, i32, i32) {
    %c0_i32 = arith.constant 0 : i32
    %c0_i32_0 = arith.constant 0 : i32
    %c0_i32_1 = arith.constant 0 : i32
    return %arg0, %c0_i32, %c0_i32_0 : i32, i32, i32
  }
}

module attributes {stable_mosaic.version = 11 : i64} {
  func.func @_conv_bn_relu_pool_kernel(%arg0: i32, %arg1: memref<1x196x896xbf16, #tpu.memory_space<vmem>>, %arg2: memref<896x128xbf16, #tpu.memory_space<vmem>>, %arg3: memref<1x128xf32, #tpu.memory_space<vmem>>, %arg4: memref<1x49x128xbf16, #tpu.memory_space<vmem>>) attributes {dimension_semantics = [#tpu.dimension_semantics<parallel>], iteration_bounds = array<i64: 2>, scalar_prefetch = 0 : i64, scratch_operands = 0 : i64, tpu.core_type = #tpu.core_type<tc>, window_params = [{transform_indices = @transform_0, window_bounds = array<i64: 1, 196, 896>}, {pipeline_mode = #tpu.pipeline_mode<synchronous>, transform_indices = @transform_1, window_bounds = array<i64: 896, 128>}, {pipeline_mode = #tpu.pipeline_mode<synchronous>, transform_indices = @transform_2, window_bounds = array<i64: 1, 128>}, {transform_indices = @transform_3, window_bounds = array<i64: 1, 49, 128>}]} {
    %c0 = arith.constant 0 : index
    %c0_0 = arith.constant 0 : index
    %c0_1 = arith.constant 0 : index
    %0 = vector.load %arg1[%c0, %c0_0, %c0_1] : memref<1x196x896xbf16, #tpu.memory_space<vmem>>, vector<1x196x896xbf16>
    %1 = vector.shape_cast %0 : vector<1x196x896xbf16> to vector<196x896xbf16>
    %c0_2 = arith.constant 0 : index
    %c0_3 = arith.constant 0 : index
    %2 = vector.load %arg2[%c0_2, %c0_3] : memref<896x128xbf16, #tpu.memory_space<vmem>>, vector<896x128xbf16>
    %cst = arith.constant dense<0.000000e+00> : vector<196x128xf32>
    %3 = tpu.matmul %1, %2, %cst {dimension_numbers = #tpu.dot_dimension_numbers<[1], [0], [0], [1], [0, 0, 1, 1], [], []>} : vector<196x896xbf16>, vector<896x128xbf16>, vector<196x128xf32> -> vector<196x128xf32>
    %c0_4 = arith.constant 0 : index
    %c0_5 = arith.constant 0 : index
    %4 = vector.load %arg3[%c0_4, %c0_5] : memref<1x128xf32, #tpu.memory_space<vmem>>, vector<1x128xf32>
    %5 = vector.broadcast %4 : vector<1x128xf32> to vector<196x128xf32>
    %6 = arith.addf %3, %5 : vector<196x128xf32>
    %cst_6 = arith.constant 0.000000e+00 : f32
    %7 = vector.broadcast %cst_6 : f32 to vector<196x128xf32>
    %8 = arith.maximumf %6, %7 : vector<196x128xf32>
    %9 = vector.shape_cast %8 : vector<196x128xf32> to vector<7x28x128xf32>
    %10 = vector.extract_strided_slice %9 {offsets = [0, 0, 0], sizes = [7, 14, 128], strides = [1, 1, 1]} : vector<7x28x128xf32> to vector<7x14x128xf32>
    %11 = vector.extract_strided_slice %9 {offsets = [0, 14, 0], sizes = [7, 14, 128], strides = [1, 1, 1]} : vector<7x28x128xf32> to vector<7x14x128xf32>
    %12 = arith.maximumf %10, %11 : vector<7x14x128xf32>
    %13 = vector.shape_cast %12 : vector<7x14x128xf32> to vector<49x2x128xf32>
    %14 = vector.extract_strided_slice %13 {offsets = [0, 0, 0], sizes = [49, 1, 128], strides = [1, 1, 1]} : vector<49x2x128xf32> to vector<49x1x128xf32>
    %15 = vector.shape_cast %14 : vector<49x1x128xf32> to vector<49x128xf32>
    %16 = vector.extract_strided_slice %13 {offsets = [0, 1, 0], sizes = [49, 1, 128], strides = [1, 1, 1]} : vector<49x2x128xf32> to vector<49x1x128xf32>
    %17 = vector.shape_cast %16 : vector<49x1x128xf32> to vector<49x128xf32>
    %18 = arith.maximumf %15, %17 : vector<49x128xf32>
    %19 = arith.truncf %18 : vector<49x128xf32> to vector<49x128xbf16>
    %c0_7 = arith.constant 0 : index
    %c0_8 = arith.constant 0 : index
    %c0_9 = arith.constant 0 : index
    %20 = vector.load %arg4[%c0_7, %c0_8, %c0_9] : memref<1x49x128xbf16, #tpu.memory_space<vmem>>, vector<1x49x128xbf16>
    %21 = vector.shape_cast %20 : vector<1x49x128xbf16> to vector<49x128xbf16>
    %22 = vector.shape_cast %19 : vector<49x128xbf16> to vector<1x49x128xbf16>
    tpu.vector_store %arg4[%c0_7, %c0_8, %c0_9], %22 {strides = array<i32>} : memref<1x49x128xbf16, #tpu.memory_space<vmem>>, vector<1x49x128xbf16>,
    return
  }
  func.func @transform_0(%arg0: i32) -> (i32, i32, i32) {
    %c0_i32 = arith.constant 0 : i32
    %c0_i32_0 = arith.constant 0 : i32
    %c0_i32_1 = arith.constant 0 : i32
    return %arg0, %c0_i32, %c0_i32_0 : i32, i32, i32
  }
  func.func @transform_1(%arg0: i32) -> (i32, i32) {
    %c0_i32 = arith.constant 0 : i32
    %c0_i32_0 = arith.constant 0 : i32
    %c0_i32_1 = arith.constant 0 : i32
    return %c0_i32, %c0_i32_0 : i32, i32
  }
  func.func @transform_2(%arg0: i32) -> (i32, i32) {
    %c0_i32 = arith.constant 0 : i32
    %c0_i32_0 = arith.constant 0 : i32
    %c0_i32_1 = arith.constant 0 : i32
    return %c0_i32, %c0_i32_0 : i32, i32
  }
  func.func @transform_3(%arg0: i32) -> (i32, i32, i32) {
    %c0_i32 = arith.constant 0 : i32
    %c0_i32_0 = arith.constant 0 : i32
    %c0_i32_1 = arith.constant 0 : i32
    return %arg0, %c0_i32, %c0_i32_0 : i32, i32, i32
  }
}

module attributes {stable_mosaic.version = 11 : i64} {
  func.func @_conv_bn_relu_pool_kernel(%arg0: i32, %arg1: memref<1x49x640xbf16, #tpu.memory_space<vmem>>, %arg2: memref<640x128xbf16, #tpu.memory_space<vmem>>, %arg3: memref<1x128xf32, #tpu.memory_space<vmem>>, %arg4: memref<1x9x128xbf16, #tpu.memory_space<vmem>>) attributes {dimension_semantics = [#tpu.dimension_semantics<parallel>], iteration_bounds = array<i64: 2>, scalar_prefetch = 0 : i64, scratch_operands = 0 : i64, tpu.core_type = #tpu.core_type<tc>, window_params = [{transform_indices = @transform_0, window_bounds = array<i64: 1, 49, 640>}, {pipeline_mode = #tpu.pipeline_mode<synchronous>, transform_indices = @transform_1, window_bounds = array<i64: 640, 128>}, {pipeline_mode = #tpu.pipeline_mode<synchronous>, transform_indices = @transform_2, window_bounds = array<i64: 1, 128>}, {transform_indices = @transform_3, window_bounds = array<i64: 1, 9, 128>}]} {
    %c0 = arith.constant 0 : index
    %c0_0 = arith.constant 0 : index
    %c0_1 = arith.constant 0 : index
    %0 = vector.load %arg1[%c0, %c0_0, %c0_1] : memref<1x49x640xbf16, #tpu.memory_space<vmem>>, vector<1x49x640xbf16>
    %1 = vector.shape_cast %0 : vector<1x49x640xbf16> to vector<49x640xbf16>
    %c0_2 = arith.constant 0 : index
    %c0_3 = arith.constant 0 : index
    %2 = vector.load %arg2[%c0_2, %c0_3] : memref<640x128xbf16, #tpu.memory_space<vmem>>, vector<640x128xbf16>
    %cst = arith.constant dense<0.000000e+00> : vector<49x128xf32>
    %3 = tpu.matmul %1, %2, %cst {dimension_numbers = #tpu.dot_dimension_numbers<[1], [0], [0], [1], [0, 0, 1, 1], [], []>} : vector<49x640xbf16>, vector<640x128xbf16>, vector<49x128xf32> -> vector<49x128xf32>
    %c0_4 = arith.constant 0 : index
    %c0_5 = arith.constant 0 : index
    %4 = vector.load %arg3[%c0_4, %c0_5] : memref<1x128xf32, #tpu.memory_space<vmem>>, vector<1x128xf32>
    %5 = vector.broadcast %4 : vector<1x128xf32> to vector<49x128xf32>
    %6 = arith.addf %3, %5 : vector<49x128xf32>
    %cst_6 = arith.constant 0.000000e+00 : f32
    %7 = vector.broadcast %cst_6 : f32 to vector<49x128xf32>
    %8 = arith.maximumf %6, %7 : vector<49x128xf32>
    %9 = vector.extract_strided_slice %8 {offsets = [0, 0], sizes = [42, 128], strides = [1, 1]} : vector<49x128xf32> to vector<42x128xf32>
    %10 = vector.shape_cast %9 : vector<42x128xf32> to vector<3x14x128xf32>
    %11 = vector.extract_strided_slice %10 {offsets = [0, 0, 0], sizes = [3, 7, 128], strides = [1, 1, 1]} : vector<3x14x128xf32> to vector<3x7x128xf32>
    %12 = vector.extract_strided_slice %10 {offsets = [0, 7, 0], sizes = [3, 7, 128], strides = [1, 1, 1]} : vector<3x14x128xf32> to vector<3x7x128xf32>
    %13 = arith.maximumf %11, %12 : vector<3x7x128xf32>
    %14 = vector.extract_strided_slice %13 {offsets = [0, 0, 0], sizes = [3, 6, 128], strides = [1, 1, 1]} : vector<3x7x128xf32> to vector<3x6x128xf32>
    %15 = vector.shape_cast %14 : vector<3x6x128xf32> to vector<9x2x128xf32>
    %16 = vector.extract_strided_slice %15 {offsets = [0, 0, 0], sizes = [9, 1, 128], strides = [1, 1, 1]} : vector<9x2x128xf32> to vector<9x1x128xf32>
    %17 = vector.shape_cast %16 : vector<9x1x128xf32> to vector<9x128xf32>
    %18 = vector.extract_strided_slice %15 {offsets = [0, 1, 0], sizes = [9, 1, 128], strides = [1, 1, 1]} : vector<9x2x128xf32> to vector<9x1x128xf32>
    %19 = vector.shape_cast %18 : vector<9x1x128xf32> to vector<9x128xf32>
    %20 = arith.maximumf %17, %19 : vector<9x128xf32>
    %21 = arith.truncf %20 : vector<9x128xf32> to vector<9x128xbf16>
    %c0_7 = arith.constant 0 : index
    %c0_8 = arith.constant 0 : index
    %c0_9 = arith.constant 0 : index
    %22 = vector.load %arg4[%c0_7, %c0_8, %c0_9] : memref<1x9x128xbf16, #tpu.memory_space<vmem>>, vector<1x9x128xbf16>
    %23 = vector.shape_cast %22 : vector<1x9x128xbf16> to vector<9x128xbf16>
    %24 = vector.shape_cast %21 : vector<9x128xbf16> to vector<1x9x128xbf16>
    tpu.vector_store %arg4[%c0_7, %c0_8, %c0_9], %24 {strides = array<i32>} : memref<1x9x128xbf16, #tpu.memory_space<vmem>>, vector<1x9x128xbf16>,
    return
  }
  func.func @transform_0(%arg0: i32) -> (i32, i32, i32) {
    %c0_i32 = arith.constant 0 : i32
    %c0_i32_0 = arith.constant 0 : i32
    %c0_i32_1 = arith.constant 0 : i32
    return %arg0, %c0_i32, %c0_i32_0 : i32, i32, i32
  }
  func.func @transform_1(%arg0: i32) -> (i32, i32) {
    %c0_i32 = arith.constant 0 : i32
    %c0_i32_0 = arith.constant 0 : i32
    %c0_i32_1 = arith.constant 0 : i32
    return %c0_i32, %c0_i32_0 : i32, i32
  }
  func.func @transform_2(%arg0: i32) -> (i32, i32) {
    %c0_i32 = arith.constant 0 : i32
    %c0_i32_0 = arith.constant 0 : i32
    %c0_i32_1 = arith.constant 0 : i32
    return %c0_i32, %c0_i32_0 : i32, i32
  }
  func.func @transform_3(%arg0: i32) -> (i32, i32, i32) {
    %c0_i32 = arith.constant 0 : i32
    %c0_i32_0 = arith.constant 0 : i32
    %c0_i32_1 = arith.constant 0 : i32
    return %arg0, %c0_i32, %c0_i32_0 : i32, i32, i32
  }
}

module attributes {stable_mosaic.version = 11 : i64} {
  func.func @_mlp_kernel(%arg0: i32, %arg1: memref<8x1152xbf16, #tpu.memory_space<vmem>>, %arg2: memref<1152x128xbf16, #tpu.memory_space<vmem>>, %arg3: memref<1x128xf32, #tpu.memory_space<vmem>>, %arg4: memref<128x128xbf16, #tpu.memory_space<vmem>>, %arg5: memref<1x128xf32, #tpu.memory_space<vmem>>, %arg6: memref<128x128xbf16, #tpu.memory_space<vmem>>, %arg7: memref<1x128xf32, #tpu.memory_space<vmem>>, %arg8: memref<8x128xf32, #tpu.memory_space<vmem>>) attributes {dimension_semantics = [#tpu.dimension_semantics<parallel>], iteration_bounds = array<i64: 1>, scalar_prefetch = 0 : i64, scratch_operands = 0 : i64, tpu.core_type = #tpu.core_type<tc>, window_params = [{transform_indices = @transform_0, window_bounds = array<i64: 8, 1152>}, {pipeline_mode = #tpu.pipeline_mode<synchronous>, transform_indices = @transform_1, window_bounds = array<i64: 1152, 128>}, {pipeline_mode = #tpu.pipeline_mode<synchronous>, transform_indices = @transform_2, window_bounds = array<i64: 1, 128>}, {pipeline_mode = #tpu.pipeline_mode<synchronous>, transform_indices = @transform_3, window_bounds = array<i64: 128, 128>}, {pipeline_mode = #tpu.pipeline_mode<synchronous>, transform_indices = @transform_4, window_bounds = array<i64: 1, 128>}, {pipeline_mode = #tpu.pipeline_mode<synchronous>, transform_indices = @transform_5, window_bounds = array<i64: 128, 128>}, {pipeline_mode = #tpu.pipeline_mode<synchronous>, transform_indices = @transform_6, window_bounds = array<i64: 1, 128>}, {transform_indices = @transform_7, window_bounds = array<i64: 8, 128>}]} {
    %c0 = arith.constant 0 : index
    %c0_0 = arith.constant 0 : index
    %0 = vector.load %arg1[%c0, %c0_0] : memref<8x1152xbf16, #tpu.memory_space<vmem>>, vector<8x1152xbf16>
    %c0_1 = arith.constant 0 : index
    %c0_2 = arith.constant 0 : index
    %1 = vector.load %arg2[%c0_1, %c0_2] : memref<1152x128xbf16, #tpu.memory_space<vmem>>, vector<1152x128xbf16>
    %cst = arith.constant dense<0.000000e+00> : vector<8x128xf32>
    %2 = tpu.matmul %0, %1, %cst {dimension_numbers = #tpu.dot_dimension_numbers<[1], [0], [0], [1], [0, 0, 1, 1], [], []>} : vector<8x1152xbf16>, vector<1152x128xbf16>, vector<8x128xf32> -> vector<8x128xf32>
    %c0_3 = arith.constant 0 : index
    %c0_4 = arith.constant 0 : index
    %3 = vector.load %arg3[%c0_3, %c0_4] : memref<1x128xf32, #tpu.memory_space<vmem>>, vector<1x128xf32>
    %4 = vector.broadcast %3 : vector<1x128xf32> to vector<8x128xf32>
    %5 = arith.addf %2, %4 : vector<8x128xf32>
    %cst_5 = arith.constant 0.000000e+00 : f32
    %6 = vector.broadcast %cst_5 : f32 to vector<8x128xf32>
    %7 = arith.maximumf %5, %6 : vector<8x128xf32>
    %8 = arith.truncf %7 : vector<8x128xf32> to vector<8x128xbf16>
    %c0_6 = arith.constant 0 : index
    %c0_7 = arith.constant 0 : index
    %9 = vector.load %arg4[%c0_6, %c0_7] : memref<128x128xbf16, #tpu.memory_space<vmem>>, vector<128x128xbf16>
    %cst_8 = arith.constant dense<0.000000e+00> : vector<8x128xf32>
    %10 = tpu.matmul %8, %9, %cst_8 {dimension_numbers = #tpu.dot_dimension_numbers<[1], [0], [0], [1], [0, 0, 1, 1], [], []>} : vector<8x128xbf16>, vector<128x128xbf16>, vector<8x128xf32> -> vector<8x128xf32>
    %c0_9 = arith.constant 0 : index
    %c0_10 = arith.constant 0 : index
    %11 = vector.load %arg5[%c0_9, %c0_10] : memref<1x128xf32, #tpu.memory_space<vmem>>, vector<1x128xf32>
    %12 = vector.broadcast %11 : vector<1x128xf32> to vector<8x128xf32>
    %13 = arith.addf %10, %12 : vector<8x128xf32>
    %cst_11 = arith.constant 0.000000e+00 : f32
    %14 = vector.broadcast %cst_11 : f32 to vector<8x128xf32>
    %15 = arith.maximumf %13, %14 : vector<8x128xf32>
    %16 = arith.truncf %15 : vector<8x128xf32> to vector<8x128xbf16>
    %c0_12 = arith.constant 0 : index
    %c0_13 = arith.constant 0 : index
    %17 = vector.load %arg6[%c0_12, %c0_13] : memref<128x128xbf16, #tpu.memory_space<vmem>>, vector<128x128xbf16>
    %cst_14 = arith.constant dense<0.000000e+00> : vector<8x128xf32>
    %18 = tpu.matmul %16, %17, %cst_14 {dimension_numbers = #tpu.dot_dimension_numbers<[1], [0], [0], [1], [0, 0, 1, 1], [], []>} : vector<8x128xbf16>, vector<128x128xbf16>, vector<8x128xf32> -> vector<8x128xf32>
    %c0_15 = arith.constant 0 : index
    %c0_16 = arith.constant 0 : index
    %19 = vector.load %arg7[%c0_15, %c0_16] : memref<1x128xf32, #tpu.memory_space<vmem>>, vector<1x128xf32>
    %20 = vector.broadcast %19 : vector<1x128xf32> to vector<8x128xf32>
    %21 = arith.addf %18, %20 : vector<8x128xf32>
    %c0_17 = arith.constant 0 : index
    %c0_18 = arith.constant 0 : index
    %22 = vector.load %arg8[%c0_17, %c0_18] : memref<8x128xf32, #tpu.memory_space<vmem>>, vector<8x128xf32>
    tpu.vector_store %arg8[%c0_17, %c0_18], %21 {strides = array<i32>} : memref<8x128xf32, #tpu.memory_space<vmem>>, vector<8x128xf32>,
    return
  }
  func.func @transform_0(%arg0: i32) -> (i32, i32) {
    %c0_i32 = arith.constant 0 : i32
    %c0_i32_0 = arith.constant 0 : i32
    return %arg0, %c0_i32 : i32, i32
  }
  func.func @transform_1(%arg0: i32) -> (i32, i32) {
    %c0_i32 = arith.constant 0 : i32
    %c0_i32_0 = arith.constant 0 : i32
    %c0_i32_1 = arith.constant 0 : i32
    return %c0_i32, %c0_i32_0 : i32, i32
  }
  func.func @transform_2(%arg0: i32) -> (i32, i32) {
    %c0_i32 = arith.constant 0 : i32
    %c0_i32_0 = arith.constant 0 : i32
    %c0_i32_1 = arith.constant 0 : i32
    return %c0_i32, %c0_i32_0 : i32, i32
  }
  func.func @transform_3(%arg0: i32) -> (i32, i32) {
    %c0_i32 = arith.constant 0 : i32
    %c0_i32_0 = arith.constant 0 : i32
    %c0_i32_1 = arith.constant 0 : i32
    return %c0_i32, %c0_i32_0 : i32, i32
  }
  func.func @transform_4(%arg0: i32) -> (i32, i32) {
    %c0_i32 = arith.constant 0 : i32
    %c0_i32_0 = arith.constant 0 : i32
    %c0_i32_1 = arith.constant 0 : i32
    return %c0_i32, %c0_i32_0 : i32, i32
  }
  func.func @transform_5(%arg0: i32) -> (i32, i32) {
    %c0_i32 = arith.constant 0 : i32
    %c0_i32_0 = arith.constant 0 : i32
    %c0_i32_1 = arith.constant 0 : i32
    return %c0_i32, %c0_i32_0 : i32, i32
  }
  func.func @transform_6(%arg0: i32) -> (i32, i32) {
    %c0_i32 = arith.constant 0 : i32
    %c0_i32_0 = arith.constant 0 : i32
    %c0_i32_1 = arith.constant 0 : i32
    return %c0_i32, %c0_i32_0 : i32, i32
  }
  func.func @transform_7(%arg0: i32) -> (i32, i32) {
    %c0_i32 = arith.constant 0 : i32
    %c0_i32_0 = arith.constant 0 : i32
    return %arg0, %c0_i32 : i32, i32
  }
}

</mosaic_0001>

<llo_original>
// kernel: cnn_forward.4
$region0: #{cnn_forward.4}
  #allocation0 [shape = 'u32[]', space=smem, size = 0x4, offset = 0x4, fixed_abs, tag = 'smem constant byte address 0x4 - core index']
  #allocation1 [shape = 'u32[144,128]{1,0:T(1,128)}', space=vmem, size = 0x12000, scoped, tag = 'internal scratch']
  %s0 = inlined_call_operand.vmem [shape: bf16[2,784,128], index: 0, kind: input, shape index: {}]
  %s1 = inlined_call_operand.vmem [shape: bf16[128,128], index: 1, kind: input, shape index: {}]
  %s2 = inlined_call_operand.vmem [shape: f32[1,128], index: 2, kind: input, shape index: {}]
  %s3 = inlined_call_operand.vmem [shape: bf16[2,196,128], index: 3, kind: output, shape index: {}]
  %s4 = sld [smem:[#allocation0]]
  $region45: #{cnn_forward.4} parent=0
    _
  %s6 = ssub.s32 1, %s4
  %s7 = scalar_select 0, %s6, %s4
  loop: start=0, step=1, limit=4
  $region2: #{cnn_forward.4} parent=0 // loop_pre_header
    _
  $region3: #{cnn_forward.4} parent=0 // loop_header
    %s9 = sphi 0, %s13
    %p10 = scmp.ge.s32.totalorder %s9, 4
    %s19 = sphi 0, %s21
    %s22 = sphi 0, %s19
    %s23 = sphi 0, %s22
    %s39 = sphi 0, %s23
    %s43 = sphi 0, %s43
    %s45 = sphi 0, %s43
    %s46 = sphi 0, %s45
    %s60 = sphi 0, %s46
    %s64 = sphi 0, %s64
    %s66 = sphi 0, %s64
    %s67 = sphi 0, %s66
    %s81 = sphi 0, %s67
    %s87 = sphi 0, %s89
    %s90 = sphi 0, %s87
    %s91 = sphi 0, %s90
    %s107 = sphi 0, %s91
  $region4: #{cnn_forward.4} parent=0 // loop_header_branch
    %12 = sbr.rel (%p10) target = $region8
  $region5: #{cnn_forward.4} parent=0 // loop_body
    %s14 = ssub.s32 %s9, 1
    %s15 = ssub.s32 %s9, 2
    %s16 = sadd.s32 %s9, 1
    %s17 = ssub.s32 %s9, %s16
    %p18 = scmp.eq.s32.totalorder %s17, 0
    %s20 = sadd.s32 %s19, 1
    %s21 = scalar_select %p18, %s19, %s20
    %p24 = pneg %p18
    %p25 = scmp.eq.s32.totalorder %s9, 1
    %p26 = por %p24, %p25
    %p27 = scmp.ne.s32.totalorder %s19, %s22
    %p28 = scmp.eq.s32.totalorder %s9, 0
    %p29 = por %p27, %p28
    %p30 = scmp.ne.s32.totalorder %s19, %s22
    %p31 = scmp.eq.s32.totalorder %s14, 1
    %p32 = por %p30, %p31
    %p33 = scmp.ne.s32.totalorder %s22, %s23
    %p34 = scmp.eq.s32.totalorder %s14, 0
    %p35 = por %p33, %p34
    %p36 = scmp.ne.s32.totalorder %s22, %s23
    %p37 = scmp.eq.s32.totalorder %s15, 1
    %p38 = por %p36, %p37
    %p40 = scmp.ne.s32.totalorder %s23, %s39
    %p41 = scmp.eq.s32.totalorder %s15, 0
    %p42 = por %p40, %p41
    %s44 = sadd.s32 %s43, 1
    %p47 = scmp.eq.s32.totalorder %s9, 1
    %p48 = scmp.ne.s32.totalorder %s43, %s45
    %p49 = scmp.eq.s32.totalorder %s9, 0
    %p50 = por %p48, %p49
    %p51 = scmp.ne.s32.totalorder %s43, %s45
    %p52 = scmp.eq.s32.totalorder %s14, 1
    %p53 = por %p51, %p52
    %p54 = scmp.ne.s32.totalorder %s45, %s46
    %p55 = scmp.eq.s32.totalorder %s14, 0
    %p56 = por %p54, %p55
    %p57 = scmp.ne.s32.totalorder %s45, %s46
    %p58 = scmp.eq.s32.totalorder %s15, 1
    %p59 = por %p57, %p58
    %p61 = scmp.ne.s32.totalorder %s46, %s60
    %p62 = scmp.eq.s32.totalorder %s15, 0
    %p63 = por %p61, %p62
    %s65 = sadd.s32 %s64, 1
    %p68 = scmp.eq.s32.totalorder %s9, 1
    %p69 = scmp.ne.s32.totalorder %s64, %s66
    %p70 = scmp.eq.s32.totalorder %s9, 0
    %p71 = por %p69, %p70
    %p72 = scmp.ne.s32.totalorder %s64, %s66
    %p73 = scmp.eq.s32.totalorder %s14, 1
    %p74 = por %p72, %p73
    %p75 = scmp.ne.s32.totalorder %s66, %s67
    %p76 = scmp.eq.s32.totalorder %s14, 0
    %p77 = por %p75, %p76
    %p78 = scmp.ne.s32.totalorder %s66, %s67
    %p79 = scmp.eq.s32.totalorder %s15, 1
    %p80 = por %p78, %p79
    %p82 = scmp.ne.s32.totalorder %s67, %s81
    %p83 = scmp.eq.s32.totalorder %s15, 0
    %p84 = por %p82, %p83
    %s85 = ssub.s32 %s9, %s16
    %p86 = scmp.eq.s32.totalorder %s85, 0
    %s88 = sadd.s32 %s87, 1
    %s89 = scalar_select %p86, %s87, %s88
    %p92 = pneg %p86
    %p93 = scmp.eq.s32.totalorder %s9, 1
    %p94 = por %p92, %p93
    %p95 = scmp.ne.s32.totalorder %s87, %s90
    %p96 = scmp.eq.s32.totalorder %s9, 0
    %p97 = por %p95, %p96
    %p98 = scmp.ne.s32.totalorder %s87, %s90
    %p99 = scmp.eq.s32.totalorder %s14, 1
    %p100 = por %p98, %p99
    %p101 = scmp.ne.s32.totalorder %s90, %s91
    %p102 = scmp.eq.s32.totalorder %s14, 0
    %p103 = por %p101, %p102
    %p104 = scmp.ne.s32.totalorder %s90, %s91
    %p105 = scmp.eq.s32.totalorder %s15, 1
    %p106 = por %p104, %p105
    %p108 = scmp.ne.s32.totalorder %s91, %s107
    %p109 = scmp.eq.s32.totalorder %s15, 0
    %p110 = por %p108, %p109
    %p111 = scmp.le.s32.totalorder 1, %s9
    %p112 = scmp.lt.s32.totalorder %s9, 3
    %p113 = pnand %p111, %p112
    %p114 = pneg %p113
    // Predicated region
    $region9: #{cnn_forward.4} parent=5 // pred_check
      _
    $region10: #{cnn_forward.4} parent=5 // pred_check_branch
      %116 = sbr.rel (%p113) target = $region12
    $region11: #{cnn_forward.4} parent=5 // pred_region
      %s117 = ssub.s32 %s9, 1
      // Predicated region
      $region13: #{cnn_forward.4} parent=11 // pred_check
        %p118 = pneg %p56
      $region14: #{cnn_forward.4} parent=11 // pred_check_branch
        %120 = sbr.rel (%p118) target = $region16
      $region15: #{cnn_forward.4} parent=11 // pred_region
        _
      $region16: #{cnn_forward.4} parent=11 // pred_fallthru
        _
      // Predicated region
      $region17: #{cnn_forward.4} parent=11 // pred_check
        %p121 = pneg %p77
      $region18: #{cnn_forward.4} parent=11 // pred_check_branch
        %123 = sbr.rel (%p121) target = $region20
      $region19: #{cnn_forward.4} parent=11 // pred_region
        _
      $region20: #{cnn_forward.4} parent=11 // pred_fallthru
        _
    $region12: #{cnn_forward.4} parent=5 // pred_fallthru
      _
    %p124 = scmp.lt.s32.totalorder %s9, 2
    // Predicated region
    $region21: #{cnn_forward.4} parent=5 // pred_check
      %p125 = pneg %p124
    $region22: #{cnn_forward.4} parent=5 // pred_check_branch
      %127 = sbr.rel (%p125) target = $region24
    $region23: #{cnn_forward.4} parent=5 // pred_region
      // Predicated region
      $region25: #{cnn_forward.4} parent=23 // pred_check
        %p128 = pneg %p29
      $region26: #{cnn_forward.4} parent=23 // pred_check_branch
        %130 = sbr.rel (%p128) target = $region28
      $region27: #{cnn_forward.4} parent=23 // pred_region
        %p131 = scmp.lt.s32.totalorder %s9, 1
        %s132 = scalar_select %p131, %s9, 1
        %s133 = smul.addr %s132, 98
        %s134 = smul.addr %s133, 4
        %s135 = scalar_lea.vmem %s0, %s134
      $region28: #{cnn_forward.4} parent=23 // pred_fallthru
        _
    $region24: #{cnn_forward.4} parent=5 // pred_fallthru
      _
    %p136 = scmp.le.s32.totalorder 1, %s9
    %p137 = scmp.lt.s32.totalorder %s9, 3
    %p138 = pnand %p136, %p137
    %p139 = pneg %p138
    // Predicated region
    $region29: #{cnn_forward.4} parent=5 // pred_check
      _
    $region30: #{cnn_forward.4} parent=5 // pred_check_branch
      %141 = sbr.rel (%p138) target = $region32
    $region31: #{cnn_forward.4} parent=5 // pred_region
      %s142 = ssub.s32 %s9, 1
      %p143 = scmp.lt.s32.totalorder %s14, 1
      %s144 = scalar_select %p143, %s14, 1
      %s145 = smul.addr %s144, 98
      %s146 = smul.addr %s145, 4
      %s147 = scalar_lea.vmem %s0, %s146
      %p148 = pneg %p35
      %p149 = pneg %p32
      %p150 = pneg %p56
      %p151 = pneg %p53
      %p152 = pneg %p77
      %p153 = pneg %p74
      %p154 = pneg %p103
      %p155 = pneg %p100
      %p156 = scmp.lt.s32.totalorder %s14, 1
      %s157 = scalar_select %p156, %s14, 1
      %s158 = smul.addr %s157, 25
      %s159 = smul.addr %s158, 4
      %s160 = scalar_lea.vmem %s3, %s159
      %p161 = scmp.lt.s32.totalorder %s14, 1
      %s162 = scalar_select %p161, %s14, 1
      %s163 = smul.addr %s162, 98
      %s164 = smul.addr %s163, 4
      %s165 = scalar_lea.vmem %s0, %s164
      %p166 = scmp.lt.s32.totalorder %s14, 1
      %s167 = scalar_select %p166, %s14, 1
      %s168 = smul.addr %s167, 25
      %s169 = smul.addr %s168, 4
      %s170 = scalar_lea.vmem %s3, %s169
      %v172 = vld [vmem:[%s165] sm:$0xf]
      %v173 = vld [vmem:[%s165 + $0x4] sm:$0xf]
      %v174 = vld [vmem:[%s165 + $0x8] sm:$0xf]
      %v175 = vld [vmem:[%s165 + $0xc] sm:$0xf]
      %v176 = vld [vmem:[%s165 + $0x10] sm:$0xf]
      %v177 = vld [vmem:[%s165 + $0x14] sm:$0xf]
      %v178 = vld [vmem:[%s165 + $0x18] sm:$0xf]
      %v179 = vld [vmem:[%s165 + $0x1c] sm:$0xf]
      %v180 = vld [vmem:[%s165 + $0x20] sm:$0xf]
      %v181 = vld [vmem:[%s165 + $0x24] sm:$0xf]
      %v182 = vld [vmem:[%s165 + $0x28] sm:$0xf]
      %v183 = vld [vmem:[%s165 + $0x2c] sm:$0xf]
      %v184 = vld [vmem:[%s165 + $0x30] sm:$0xf]
      %v185 = vld [vmem:[%s165 + $0x34] sm:$0xf]
      %v186 = vld [vmem:[%s165 + $0x38] sm:$0xf]
      %v187 = vld [vmem:[%s165 + $0x3c] sm:$0xf]
      %v188 = vld [vmem:[%s165 + $0x40] sm:$0xf]
      %v189 = vld [vmem:[%s165 + $0x44] sm:$0xf]
      %v190 = vld [vmem:[%s165 + $0x48] sm:$0xf]
      %v191 = vld [vmem:[%s165 + $0x4c] sm:$0xf]
      %v192 = vld [vmem:[%s165 + $0x50] sm:$0xf]
      %v193 = vld [vmem:[%s165 + $0x54] sm:$0xf]
      %v194 = vld [vmem:[%s165 + $0x58] sm:$0xf]
      %v195 = vld [vmem:[%s165 + $0x5c] sm:$0xf]
      %v196 = vld [vmem:[%s165 + $0x60] sm:$0xf]
      %v197 = vld [vmem:[%s165 + $0x64] sm:$0xf]
      %v198 = vld [vmem:[%s165 + $0x68] sm:$0xf]
      %v199 = vld [vmem:[%s165 + $0x6c] sm:$0xf]
      %v200 = vld [vmem:[%s165 + $0x70] sm:$0xf]
      %v201 = vld [vmem:[%s165 + $0x74] sm:$0xf]
      %v202 = vld [vmem:[%s165 + $0x78] sm:$0xf]
      %v203 = vld [vmem:[%s165 + $0x7c] sm:$0xf]
      %v204 = vld [vmem:[%s165 + $0x80] sm:$0xf]
      %v205 = vld [vmem:[%s165 + $0x84] sm:$0xf]
      %v206 = vld [vmem:[%s165 + $0x88] sm:$0xf]
      %v207 = vld [vmem:[%s165 + $0x8c] sm:$0xf]
      %v208 = vld [vmem:[%s165 + $0x90] sm:$0xf]
      %v209 = vld [vmem:[%s165 + $0x94] sm:$0xf]
      %v210 = vld [vmem:[%s165 + $0x98] sm:$0xf]
      %v211 = vld [vmem:[%s165 + $0x9c] sm:$0xf]
      %v212 = vld [vmem:[%s165 + $0xa0] sm:$0xf]
      %v213 = vld [vmem:[%s165 + $0xa4] sm:$0xf]
      %v214 = vld [vmem:[%s165 + $0xa8] sm:$0xf]
      %v215 = vld [vmem:[%s165 + $0xac] sm:$0xf]
      %v216 = vld [vmem:[%s165 + $0xb0] sm:$0xf]
      %v217 = vld [vmem:[%s165 + $0xb4] sm:$0xf]
      %v218 = vld [vmem:[%s165 + $0xb8] sm:$0xf]
      %v219 = vld [vmem:[%s165 + $0xbc] sm:$0xf]
      %v220 = vld [vmem:[%s165 + $0xc0] sm:$0xf]
      %v221 = vld [vmem:[%s165 + $0xc4] sm:$0xf]
      %v222 = vld [vmem:[%s165 + $0xc8] sm:$0xf]
      %v223 = vld [vmem:[%s165 + $0xcc] sm:$0xf]
      %v224 = vld [vmem:[%s165 + $0xd0] sm:$0xf]
      %v225 = vld [vmem:[%s165 + $0xd4] sm:$0xf]
      %v226 = vld [vmem:[%s165 + $0xd8] sm:$0xf]
      %v227 = vld [vmem:[%s165 + $0xdc] sm:$0xf]
      %v228 = vld [vmem:[%s165 + $0xe0] sm:$0xf]
      %v229 = vld [vmem:[%s165 + $0xe4] sm:$0xf]
      %v230 = vld [vmem:[%s165 + $0xe8] sm:$0xf]
      %v231 = vld [vmem:[%s165 + $0xec] sm:$0xf]
      %v232 = vld [vmem:[%s165 + $0xf0] sm:$0xf]
      %v233 = vld [vmem:[%s165 + $0xf4] sm:$0xf]
      %v234 = vld [vmem:[%s165 + $0xf8] sm:$0xf]
      %v235 = vld [vmem:[%s165 + $0xfc] sm:$0xf]
      %v236 = vld [vmem:[%s165 + $0x100] sm:$0xf]
      %v237 = vld [vmem:[%s165 + $0x104] sm:$0xf]
      %v238 = vld [vmem:[%s165 + $0x108] sm:$0xf]
      %v239 = vld [vmem:[%s165 + $0x10c] sm:$0xf]
      %v240 = vld [vmem:[%s165 + $0x110] sm:$0xf]
      %v241 = vld [vmem:[%s165 + $0x114] sm:$0xf]
      %v242 = vld [vmem:[%s165 + $0x118] sm:$0xf]
      %v243 = vld [vmem:[%s165 + $0x11c] sm:$0xf]
      %v244 = vld [vmem:[%s165 + $0x120] sm:$0xf]
      %v245 = vld [vmem:[%s165 + $0x124] sm:$0xf]
      %v246 = vld [vmem:[%s165 + $0x128] sm:$0xf]
      %v247 = vld [vmem:[%s165 + $0x12c] sm:$0xf]
      %v248 = vld [vmem:[%s165 + $0x130] sm:$0xf]
      %v249 = vld [vmem:[%s165 + $0x134] sm:$0xf]
      %v250 = vld [vmem:[%s165 + $0x138] sm:$0xf]
      %v251 = vld [vmem:[%s165 + $0x13c] sm:$0xf]
      %v252 = vld [vmem:[%s165 + $0x140] sm:$0xf]
      %v253 = vld [vmem:[%s165 + $0x144] sm:$0xf]
      %v254 = vld [vmem:[%s165 + $0x148] sm:$0xf]
      %v255 = vld [vmem:[%s165 + $0x14c] sm:$0xf]
      %v256 = vld [vmem:[%s165 + $0x150] sm:$0xf]
      %v257 = vld [vmem:[%s165 + $0x154] sm:$0xf]
      %v258 = vld [vmem:[%s165 + $0x158] sm:$0xf]
      %v259 = vld [vmem:[%s165 + $0x15c] sm:$0xf]
      %v260 = vld [vmem:[%s165 + $0x160] sm:$0xf]
      %v261 = vld [vmem:[%s165 + $0x164] sm:$0xf]
      %v262 = vld [vmem:[%s165 + $0x168] sm:$0xf]
      %v263 = vld [vmem:[%s165 + $0x16c] sm:$0xf]
      %v264 = vld [vmem:[%s165 + $0x170] sm:$0xf]
      %v265 = vld [vmem:[%s165 + $0x174] sm:$0xf]
      %v266 = vld [vmem:[%s165 + $0x178] sm:$0xf]
      %v267 = vld [vmem:[%s165 + $0x17c] sm:$0xf]
      %v268 = vld [vmem:[%s165 + $0x180] sm:$0xf]
      %v269 = vld [vmem:[%s165 + $0x184] sm:$0xf]
      %v270 = vld [vmem:[%s1] sm:$0xf]
      %v271 = vld [vmem:[%s1 + $0x4] sm:$0xf]
      %v272 = vld [vmem:[%s1 + $0x8] sm:$0xf]
      %v273 = vld [vmem:[%s1 + $0xc] sm:$0xf]
      %v274 = vld [vmem:[%s1 + $0x10] sm:$0xf]
      %v275 = vld [vmem:[%s1 + $0x14] sm:$0xf]
      %v276 = vld [vmem:[%s1 + $0x18] sm:$0xf]
      %v277 = vld [vmem:[%s1 + $0x1c] sm:$0xf]
      %v278 = vld [vmem:[%s1 + $0x20] sm:$0xf]
      %v279 = vld [vmem:[%s1 + $0x24] sm:$0xf]
      %v280 = vld [vmem:[%s1 + $0x28] sm:$0xf]
      %v281 = vld [vmem:[%s1 + $0x2c] sm:$0xf]
      %v282 = vld [vmem:[%s1 + $0x30] sm:$0xf]
      %v283 = vld [vmem:[%s1 + $0x34] sm:$0xf]
      %v284 = vld [vmem:[%s1 + $0x38] sm:$0xf]
      %v285 = vld [vmem:[%s1 + $0x3c] sm:$0xf]
      %v286 = vld [vmem:[%s2] sm:$0x1]
      %v288 = vlaneseq
      %v289 = vshrl.u32 %v288, 7
      %v290 = vsub.s32 0, %v289
      %v291 = vrot.slane %v286, %v290
      %v391 = vunpack.c.l.b16 %v172
      %v392 = vunpack.c.l.b16 %v173
      %v393 = vunpack.c.l.b16 %v174
      %v394 = vunpack.c.l.b16 %v175
      %v395 = vunpack.c.l.b16 %v176
      %v396 = vunpack.c.l.b16 %v177
      %v397 = vunpack.c.l.b16 %v178
      %v398 = vunpack.c.l.b16 %v179
      %v399 = vunpack.c.l.b16 %v180
      %v400 = vunpack.c.l.b16 %v181
      %v401 = vunpack.c.l.b16 %v182
      %v402 = vunpack.c.l.b16 %v183
      %v403 = vunpack.c.l.b16 %v184
      %v404 = vunpack.c.l.b16 %v185
      %v405 = vunpack.c.l.b16 %v186
      %v406 = vunpack.c.l.b16 %v187
      %v407 = vunpack.c.l.b16 %v188
      %v408 = vunpack.c.l.b16 %v189
      %v409 = vunpack.c.l.b16 %v190
      %v410 = vunpack.c.l.b16 %v191
      %v411 = vunpack.c.l.b16 %v192
      %v412 = vunpack.c.l.b16 %v193
      %v413 = vunpack.c.l.b16 %v194
      %v414 = vunpack.c.l.b16 %v195
      %v415 = vunpack.c.l.b16 %v196
      %v416 = vunpack.c.l.b16 %v197
      %v417 = vunpack.c.l.b16 %v198
      %v418 = vunpack.c.l.b16 %v199
      %v419 = vunpack.c.l.b16 %v200
      %v420 = vunpack.c.l.b16 %v201
      %v421 = vunpack.c.l.b16 %v202
      %v422 = vunpack.c.l.b16 %v203
      %v423 = vunpack.c.l.b16 %v204
      %v424 = vunpack.c.l.b16 %v205
      %v425 = vunpack.c.l.b16 %v206
      %v426 = vunpack.c.l.b16 %v207
      %v427 = vunpack.c.l.b16 %v208
      %v428 = vunpack.c.l.b16 %v209
      %v429 = vunpack.c.l.b16 %v210
      %v430 = vunpack.c.l.b16 %v211
      %v431 = vunpack.c.l.b16 %v212
      %v432 = vunpack.c.l.b16 %v213
      %v433 = vunpack.c.l.b16 %v214
      %v434 = vunpack.c.l.b16 %v215
      %v435 = vunpack.c.l.b16 %v216
      %v436 = vunpack.c.l.b16 %v217
      %v437 = vunpack.c.l.b16 %v218
      %v438 = vunpack.c.l.b16 %v219
      %v439 = vunpack.c.l.b16 %v220
      %v440 = vunpack.c.l.b16 %v221
      %v441 = vunpack.c.l.b16 %v222
      %v442 = vunpack.c.l.b16 %v223
      %v443 = vunpack.c.l.b16 %v224
      %v444 = vunpack.c.l.b16 %v225
      %v445 = vunpack.c.l.b16 %v226
      %v446 = vunpack.c.l.b16 %v227
      %v447 = vunpack.c.l.b16 %v228
      %v448 = vunpack.c.l.b16 %v229
      %v449 = vunpack.c.l.b16 %v230
      %v450 = vunpack.c.l.b16 %v231
      %v451 = vunpack.c.l.b16 %v232
      %v452 = vunpack.c.l.b16 %v233
      %v453 = vunpack.c.l.b16 %v234
      %v454 = vunpack.c.l.b16 %v235
      %v455 = vunpack.c.l.b16 %v236
      %v456 = vunpack.c.l.b16 %v237
      %v457 = vunpack.c.l.b16 %v238
      %v458 = vunpack.c.l.b16 %v239
      %v459 = vunpack.c.l.b16 %v240
      %v460 = vunpack.c.l.b16 %v241
      %v461 = vunpack.c.l.b16 %v242
      %v462 = vunpack.c.l.b16 %v243
      %v463 = vunpack.c.l.b16 %v244
      %v464 = vunpack.c.l.b16 %v245
      %v465 = vunpack.c.l.b16 %v246
      %v466 = vunpack.c.l.b16 %v247
      %v467 = vunpack.c.l.b16 %v248
      %v468 = vunpack.c.l.b16 %v249
      %v469 = vunpack.c.l.b16 %v250
      %v470 = vunpack.c.l.b16 %v251
      %v471 = vunpack.c.l.b16 %v252
      %v472 = vunpack.c.l.b16 %v253
      %v473 = vunpack.c.l.b16 %v254
      %v474 = vunpack.c.l.b16 %v255
      %v475 = vunpack.c.l.b16 %v256
      %v476 = vunpack.c.l.b16 %v257
      %v477 = vunpack.c.l.b16 %v258
      %v478 = vunpack.c.l.b16 %v259
      %v479 = vunpack.c.l.b16 %v260
      %v480 = vunpack.c.l.b16 %v261
      %v481 = vunpack.c.l.b16 %v262
      %v482 = vunpack.c.l.b16 %v263
      %v483 = vunpack.c.l.b16 %v264
      %v484 = vunpack.c.l.b16 %v265
      %v485 = vunpack.c.l.b16 %v266
      %v486 = vunpack.c.l.b16 %v267
      %v487 = vunpack.c.l.b16 %v268
      %v488 = vunpack.c.l.b16 %v269
      %v489 = vpack.c.b16 %v392, %v391
      %v490 = vpack.c.b16 %v394, %v393
      %v491 = vpack.c.b16 %v396, %v395
      %v492 = vpack.c.b16 %v398, %v397
      %v493 = vpack.c.b16 %v400, %v399
      %v494 = vpack.c.b16 %v402, %v401
      %v495 = vpack.c.b16 %v404, %v403
      %v496 = vpack.c.b16 %v406, %v405
      %v497 = vpack.c.b16 %v408, %v407
      %v498 = vpack.c.b16 %v410, %v409
      %v499 = vpack.c.b16 %v412, %v411
      %v500 = vpack.c.b16 %v414, %v413
      %v501 = vpack.c.b16 %v416, %v415
      %v502 = vpack.c.b16 %v418, %v417
      %v503 = vpack.c.b16 %v420, %v419
      %v504 = vpack.c.b16 %v422, %v421
      %v505 = vpack.c.b16 %v424, %v423
      %v506 = vpack.c.b16 %v426, %v425
      %v507 = vpack.c.b16 %v428, %v427
      %v508 = vpack.c.b16 %v430, %v429
      %v509 = vpack.c.b16 %v432, %v431
      %v510 = vpack.c.b16 %v434, %v433
      %v511 = vpack.c.b16 %v436, %v435
      %v512 = vpack.c.b16 %v438, %v437
      %v513 = vpack.c.b16 %v440, %v439
      %v514 = vpack.c.b16 %v442, %v441
      %v515 = vpack.c.b16 %v444, %v443
      %v516 = vpack.c.b16 %v446, %v445
      %v517 = vpack.c.b16 %v448, %v447
      %v518 = vpack.c.b16 %v450, %v449
      %v519 = vpack.c.b16 %v452, %v451
      %v520 = vpack.c.b16 %v454, %v453
      %v521 = vpack.c.b16 %v456, %v455
      %v522 = vpack.c.b16 %v458, %v457
      %v523 = vpack.c.b16 %v460, %v459
      %v524 = vpack.c.b16 %v462, %v461
      %v525 = vpack.c.b16 %v464, %v463
      %v526 = vpack.c.b16 %v466, %v465
      %v527 = vpack.c.b16 %v468, %v467
      %v528 = vpack.c.b16 %v470, %v469
      %v529 = vpack.c.b16 %v472, %v471
      %v530 = vpack.c.b16 %v474, %v473
      %v531 = vpack.c.b16 %v476, %v475
      %v532 = vpack.c.b16 %v478, %v477
      %v533 = vpack.c.b16 %v480, %v479
      %v534 = vpack.c.b16 %v482, %v481
      %v535 = vpack.c.b16 %v484, %v483
      %v536 = vpack.c.b16 %v486, %v485
      %v537 = vpack.c.b16 %v488, %v487
      %v603 = vunpack.c.l.b16 %v270
      %v604 = vunpack.c.l.b16 %v271
      %v605 = vunpack.c.l.b16 %v272
      %v606 = vunpack.c.l.b16 %v273
      %v607 = vunpack.c.l.b16 %v274
      %v608 = vunpack.c.l.b16 %v275
      %v609 = vunpack.c.l.b16 %v276
      %v610 = vunpack.c.l.b16 %v277
      %v611 = vunpack.c.l.b16 %v278
      %v612 = vunpack.c.l.b16 %v279
      %v613 = vunpack.c.l.b16 %v280
      %v614 = vunpack.c.l.b16 %v281
      %v615 = vunpack.c.l.b16 %v282
      %v616 = vunpack.c.l.b16 %v283
      %v617 = vunpack.c.l.b16 %v284
      %v618 = vunpack.c.l.b16 %v285
      %v619 = vpack.c.b16 %v604, %v603
      %v620 = vpack.c.b16 %v606, %v605
      %v621 = vpack.c.b16 %v608, %v607
      %v622 = vpack.c.b16 %v610, %v609
      %v623 = vpack.c.b16 %v612, %v611
      %v624 = vpack.c.b16 %v614, %v613
      %v625 = vpack.c.b16 %v616, %v615
      %v626 = vpack.c.b16 %v618, %v617
      %635 = vmatprep.subr.bf16.mxu0 0
      %636 = vmatpush1.bf16.msra.mxu0 %v619
      %637 = vmatprep.subr.bf16.mxu0 0
      %638 = vmatpush1.bf16.msra.mxu0 %v620
      %639 = vmatprep.subr.bf16.mxu0 0
      %640 = vmatpush1.bf16.msra.mxu0 %v621
      %641 = vmatprep.subr.bf16.mxu0 0
      %642 = vmatpush1.bf16.msra.mxu0 %v622
      %643 = vmatprep.subr.bf16.mxu0 0
      %644 = vmatpush1.bf16.msra.mxu0 %v623
      %645 = vmatprep.subr.bf16.mxu0 0
      %646 = vmatpush1.bf16.msra.mxu0 %v624
      %647 = vmatprep.subr.bf16.mxu0 0
      %648 = vmatpush1.bf16.msra.mxu0 %v625
      %649 = vmatprep.subr.bf16.mxu0 0
      %650 = vmatpush1.bf16.msra.mxu0 %v626
      %651 = vmatprep.subr.bf16.mxu0 0
      %652 = vmatpush1.bf16.msra.mxu0 0
      %653 = vmatprep.subr.bf16.mxu0 0
      %654 = vmatpush1.bf16.msra.mxu0 0
      %655 = vmatprep.subr.bf16.mxu0 0
      %656 = vmatpush1.bf16.msra.mxu0 0
      %657 = vmatprep.subr.bf16.mxu0 0
      %658 = vmatpush1.bf16.msra.mxu0 0
      %659 = vmatprep.subr.bf16.mxu0 0
      %660 = vmatpush1.bf16.msra.mxu0 0
      %661 = vmatprep.subr.bf16.mxu0 0
      %662 = vmatpush1.bf16.msra.mxu0 0
      %663 = vmatprep.subr.bf16.mxu0 0
      %664 = vmatpush1.bf16.msra.mxu0 0
      %665 = vmatprep.subr.bf16.mxu0 0
      %666 = vmatpush1.bf16.msra.mxu0 0
      %667 = vmatprep.mubr.bf16.mxu0 0
      %668 = vmatmul.mubr.bf16.gmra.mrb[0].mxu0 %v489
      %v669 = vpop.f32.mrb[0].mxu0
      %v670 = vadd.f32 %v291, %v669
      %v671 = vpop.f32.mrb[0].mxu0
      %v672 = vpop.f32.mrb[0].mxu0
      %v673 = vadd.f32 %v291, %v672
      %v674 = vpop.f32.mrb[0].mxu0
      %675 = vmatprep.mubr.bf16.mxu0 0
      %676 = vmatmul.mubr.bf16.gmra.mrb[0].mxu0 %v490
      %v677 = vpop.f32.mrb[0].mxu0
      %v678 = vadd.f32 %v291, %v677
      %v679 = vpop.f32.mrb[0].mxu0
      %v680 = vpop.f32.mrb[0].mxu0
      %v681 = vadd.f32 %v291, %v680
      %v682 = vpop.f32.mrb[0].mxu0
      %683 = vmatprep.mubr.bf16.mxu0 0
      %684 = vmatmul.mubr.bf16.gmra.mrb[0].mxu0 %v491
      %v685 = vpop.f32.mrb[0].mxu0
      %v686 = vadd.f32 %v291, %v685
      %v687 = vpop.f32.mrb[0].mxu0
      %v688 = vpop.f32.mrb[0].mxu0
      %v689 = vadd.f32 %v291, %v688
      %v690 = vpop.f32.mrb[0].mxu0
      %691 = vmatprep.mubr.bf16.mxu0 0
      %692 = vmatmul.mubr.bf16.gmra.mrb[0].mxu0 %v492
      %v693 = vpop.f32.mrb[0].mxu0
      %v694 = vadd.f32 %v291, %v693
      %v695 = vpop.f32.mrb[0].mxu0
      %v696 = vpop.f32.mrb[0].mxu0
      %v697 = vadd.f32 %v291, %v696
      %v698 = vpop.f32.mrb[0].mxu0
      %699 = vmatprep.mubr.bf16.mxu0 0
      %700 = vmatmul.mubr.bf16.gmra.mrb[0].mxu0 %v493
      %v701 = vpop.f32.mrb[0].mxu0
      %v702 = vadd.f32 %v291, %v701
      %v703 = vpop.f32.mrb[0].mxu0
      %v704 = vpop.f32.mrb[0].mxu0
      %v705 = vadd.f32 %v291, %v704
      %v706 = vpop.f32.mrb[0].mxu0
      %707 = vmatprep.mubr.bf16.mxu0 0
      %708 = vmatmul.mubr.bf16.gmra.mrb[0].mxu0 %v494
      %v709 = vpop.f32.mrb[0].mxu0
      %v710 = vadd.f32 %v291, %v709
      %v711 = vpop.f32.mrb[0].mxu0
      %v712 = vpop.f32.mrb[0].mxu0
      %v713 = vadd.f32 %v291, %v712
      %v714 = vpop.f32.mrb[0].mxu0
      %715 = vmatprep.mubr.bf16.mxu0 0
      %716 = vmatmul.mubr.bf16.gmra.mrb[0].mxu0 %v495
      %v717 = vpop.f32.mrb[0].mxu0
      %v718 = vadd.f32 %v291, %v717
      %v719 = vpop.f32.mrb[0].mxu0
      %v720 = vpop.f32.mrb[0].mxu0
      %v721 = vadd.f32 %v291, %v720
      %v722 = vpop.f32.mrb[0].mxu0
      %723 = vmatprep.mubr.bf16.mxu0 0
      %724 = vmatmul.mubr.bf16.gmra.mrb[0].mxu0 %v496
      %v725 = vpop.f32.mrb[0].mxu0
      %v726 = vadd.f32 %v291, %v725
      %v727 = vpop.f32.mrb[0].mxu0
      %v728 = vpop.f32.mrb[0].mxu0
      %v729 = vadd.f32 %v291, %v728
      %v730 = vpop.f32.mrb[0].mxu0
      %731 = vmatprep.mubr.bf16.mxu0 0
      %732 = vmatmul.mubr.bf16.gmra.mrb[0].mxu0 %v497
      %v733 = vpop.f32.mrb[0].mxu0
      %v734 = vadd.f32 %v291, %v733
      %v735 = vpop.f32.mrb[0].mxu0
      %v736 = vpop.f32.mrb[0].mxu0
      %v737 = vadd.f32 %v291, %v736
      %v738 = vpop.f32.mrb[0].mxu0
      %739 = vmatprep.mubr.bf16.mxu0 0
      %740 = vmatmul.mubr.bf16.gmra.mrb[0].mxu0 %v498
      %v741 = vpop.f32.mrb[0].mxu0
      %v742 = vadd.f32 %v291, %v741
      %v743 = vpop.f32.mrb[0].mxu0
      %v744 = vpop.f32.mrb[0].mxu0
      %v745 = vadd.f32 %v291, %v744
      %v746 = vpop.f32.mrb[0].mxu0
      %747 = vmatprep.mubr.bf16.mxu0 0
      %748 = vmatmul.mubr.bf16.gmra.mrb[0].mxu0 %v499
      %v749 = vpop.f32.mrb[0].mxu0
      %v750 = vadd.f32 %v291, %v749
      %v751 = vpop.f32.mrb[0].mxu0
      %v752 = vpop.f32.mrb[0].mxu0
      %v753 = vadd.f32 %v291, %v752
      %v754 = vpop.f32.mrb[0].mxu0
      %755 = vmatprep.mubr.bf16.mxu0 0
      %756 = vmatmul.mubr.bf16.gmra.mrb[0].mxu0 %v500
      %v757 = vpop.f32.mrb[0].mxu0
      %v758 = vadd.f32 %v291, %v757
      %v759 = vpop.f32.mrb[0].mxu0
      %v760 = vpop.f32.mrb[0].mxu0
      %v761 = vadd.f32 %v291, %v760
      %v762 = vpop.f32.mrb[0].mxu0
      %763 = vmatprep.mubr.bf16.mxu0 0
      %764 = vmatmul.mubr.bf16.gmra.mrb[0].mxu0 %v501
      %v765 = vpop.f32.mrb[0].mxu0
      %v766 = vadd.f32 %v291, %v765
      %v767 = vpop.f32.mrb[0].mxu0
      %v768 = vpop.f32.mrb[0].mxu0
      %v769 = vadd.f32 %v291, %v768
      %v770 = vpop.f32.mrb[0].mxu0
      %771 = vmatprep.mubr.bf16.mxu0 0
      %772 = vmatmul.mubr.bf16.gmra.mrb[0].mxu0 %v502
      %v773 = vpop.f32.mrb[0].mxu0
      %v774 = vadd.f32 %v291, %v773
      %v775 = vpop.f32.mrb[0].mxu0
      %v776 = vpop.f32.mrb[0].mxu0
      %v777 = vadd.f32 %v291, %v776
      %v778 = vpop.f32.mrb[0].mxu0
      %779 = vmatprep.mubr.bf16.mxu0 0
      %780 = vmatmul.mubr.bf16.gmra.mrb[0].mxu0 %v503
      %v781 = vpop.f32.mrb[0].mxu0
      %v782 = vadd.f32 %v291, %v781
      %v783 = vpop.f32.mrb[0].mxu0
      %v784 = vpop.f32.mrb[0].mxu0
      %v785 = vadd.f32 %v291, %v784
      %v786 = vpop.f32.mrb[0].mxu0
      %787 = vmatprep.mubr.bf16.mxu0 0
      %788 = vmatmul.mubr.bf16.gmra.mrb[0].mxu0 %v504
      %v789 = vpop.f32.mrb[0].mxu0
      %v790 = vadd.f32 %v291, %v789
      %v791 = vpop.f32.mrb[0].mxu0
      %v792 = vpop.f32.mrb[0].mxu0
      %v793 = vadd.f32 %v291, %v792
      %v794 = vpop.f32.mrb[0].mxu0
      %795 = vmatprep.mubr.bf16.mxu0 0
      %796 = vmatmul.mubr.bf16.gmra.mrb[0].mxu0 %v505
      %v797 = vpop.f32.mrb[0].mxu0
      %v798 = vadd.f32 %v291, %v797
      %v799 = vpop.f32.mrb[0].mxu0
      %v800 = vpop.f32.mrb[0].mxu0
      %v801 = vadd.f32 %v291, %v800
      %v802 = vpop.f32.mrb[0].mxu0
      %803 = vmatprep.mubr.bf16.mxu0 0
      %804 = vmatmul.mubr.bf16.gmra.mrb[0].mxu0 %v506
      %v805 = vpop.f32.mrb[0].mxu0
      %v806 = vadd.f32 %v291, %v805
      %v807 = vpop.f32.mrb[0].mxu0
      %v808 = vpop.f32.mrb[0].mxu0
      %v809 = vadd.f32 %v291, %v808
      %v810 = vpop.f32.mrb[0].mxu0
      %811 = vmatprep.mubr.bf16.mxu0 0
      %812 = vmatmul.mubr.bf16.gmra.mrb[0].mxu0 %v507
      %v813 = vpop.f32.mrb[0].mxu0
      %v814 = vadd.f32 %v291, %v813
      %v815 = vpop.f32.mrb[0].mxu0
      %v816 = vpop.f32.mrb[0].mxu0
      %v817 = vadd.f32 %v291, %v816
      %v818 = vpop.f32.mrb[0].mxu0
      %819 = vmatprep.mubr.bf16.mxu0 0
      %820 = vmatmul.mubr.bf16.gmra.mrb[0].mxu0 %v508
      %v821 = vpop.f32.mrb[0].mxu0
      %v822 = vadd.f32 %v291, %v821
      %v823 = vpop.f32.mrb[0].mxu0
      %v824 = vpop.f32.mrb[0].mxu0
      %v825 = vadd.f32 %v291, %v824
      %v826 = vpop.f32.mrb[0].mxu0
      %827 = vmatprep.mubr.bf16.mxu0 0
      %828 = vmatmul.mubr.bf16.gmra.mrb[0].mxu0 %v509
      %v829 = vpop.f32.mrb[0].mxu0
      %v830 = vadd.f32 %v291, %v829
      %v831 = vpop.f32.mrb[0].mxu0
      %v832 = vpop.f32.mrb[0].mxu0
      %v833 = vadd.f32 %v291, %v832
      %v834 = vpop.f32.mrb[0].mxu0
      %835 = vmatprep.mubr.bf16.mxu0 0
      %836 = vmatmul.mubr.bf16.gmra.mrb[0].mxu0 %v510
      %v837 = vpop.f32.mrb[0].mxu0
      %v838 = vadd.f32 %v291, %v837
      %v839 = vpop.f32.mrb[0].mxu0
      %v840 = vpop.f32.mrb[0].mxu0
      %v841 = vadd.f32 %v291, %v840
      %v842 = vpop.f32.mrb[0].mxu0
      %843 = vmatprep.mubr.bf16.mxu0 0
      %844 = vmatmul.mubr.bf16.gmra.mrb[0].mxu0 %v511
      %v845 = vpop.f32.mrb[0].mxu0
      %v846 = vadd.f32 %v291, %v845
      %v847 = vpop.f32.mrb[0].mxu0
      %v848 = vpop.f32.mrb[0].mxu0
      %v849 = vadd.f32 %v291, %v848
      %v850 = vpop.f32.mrb[0].mxu0
      %851 = vmatprep.mubr.bf16.mxu0 0
      %852 = vmatmul.mubr.bf16.gmra.mrb[0].mxu0 %v512
      %v853 = vpop.f32.mrb[0].mxu0
      %v854 = vadd.f32 %v291, %v853
      %v855 = vpop.f32.mrb[0].mxu0
      %v856 = vpop.f32.mrb[0].mxu0
      %v857 = vadd.f32 %v291, %v856
      %v858 = vpop.f32.mrb[0].mxu0
      %859 = vmatprep.mubr.bf16.mxu0 0
      %860 = vmatmul.mubr.bf16.gmra.mrb[0].mxu0 %v513
      %v861 = vpop.f32.mrb[0].mxu0
      %v862 = vadd.f32 %v291, %v861
      %v863 = vpop.f32.mrb[0].mxu0
      %v864 = vpop.f32.mrb[0].mxu0
      %v865 = vadd.f32 %v291, %v864
      %v866 = vpop.f32.mrb[0].mxu0
      %867 = vmatprep.mubr.bf16.mxu0 0
      %868 = vmatmul.mubr.bf16.gmra.mrb[0].mxu0 %v514
      %v869 = vpop.f32.mrb[0].mxu0
      %v870 = vadd.f32 %v291, %v869
      %v871 = vpop.f32.mrb[0].mxu0
      %v872 = vpop.f32.mrb[0].mxu0
      %v873 = vadd.f32 %v291, %v872
      %v874 = vpop.f32.mrb[0].mxu0
      %875 = vmatprep.mubr.bf16.mxu0 0
      %876 = vmatmul.mubr.bf16.gmra.mrb[0].mxu0 %v515
      %v877 = vpop.f32.mrb[0].mxu0
      %v878 = vadd.f32 %v291, %v877
      %v879 = vpop.f32.mrb[0].mxu0
      %v880 = vpop.f32.mrb[0].mxu0
      %v881 = vadd.f32 %v291, %v880
      %v882 = vpop.f32.mrb[0].mxu0
      %883 = vmatprep.mubr.bf16.mxu0 0
      %884 = vmatmul.mubr.bf16.gmra.mrb[0].mxu0 %v516
      %v885 = vpop.f32.mrb[0].mxu0
      %v886 = vadd.f32 %v291, %v885
      %v887 = vpop.f32.mrb[0].mxu0
      %v888 = vpop.f32.mrb[0].mxu0
      %v889 = vadd.f32 %v291, %v888
      %v890 = vpop.f32.mrb[0].mxu0
      %891 = vmatprep.mubr.bf16.mxu0 0
      %892 = vmatmul.mubr.bf16.gmra.mrb[0].mxu0 %v517
      %v893 = vpop.f32.mrb[0].mxu0
      %v894 = vadd.f32 %v291, %v893
      %v895 = vpop.f32.mrb[0].mxu0
      %v896 = vpop.f32.mrb[0].mxu0
      %v897 = vadd.f32 %v291, %v896
      %v898 = vpop.f32.mrb[0].mxu0
      %899 = vmatprep.mubr.bf16.mxu0 0
      %900 = vmatmul.mubr.bf16.gmra.mrb[0].mxu0 %v518
      %v901 = vpop.f32.mrb[0].mxu0
      %v902 = vadd.f32 %v291, %v901
      %v903 = vpop.f32.mrb[0].mxu0
      %v904 = vpop.f32.mrb[0].mxu0
      %v905 = vadd.f32 %v291, %v904
      %v906 = vpop.f32.mrb[0].mxu0
      %907 = vmatprep.mubr.bf16.mxu0 0
      %908 = vmatmul.mubr.bf16.gmra.mrb[0].mxu0 %v519
      %v909 = vpop.f32.mrb[0].mxu0
      %v910 = vadd.f32 %v291, %v909
      %v911 = vpop.f32.mrb[0].mxu0
      %v912 = vpop.f32.mrb[0].mxu0
      %v913 = vadd.f32 %v291, %v912
      %v914 = vpop.f32.mrb[0].mxu0
      %915 = vmatprep.mubr.bf16.mxu0 0
      %916 = vmatmul.mubr.bf16.gmra.mrb[0].mxu0 %v520
      %v917 = vpop.f32.mrb[0].mxu0
      %v918 = vadd.f32 %v291, %v917
      %v919 = vpop.f32.mrb[0].mxu0
      %v920 = vpop.f32.mrb[0].mxu0
      %v921 = vadd.f32 %v291, %v920
      %v922 = vpop.f32.mrb[0].mxu0
      %923 = vmatprep.mubr.bf16.mxu0 0
      %924 = vmatmul.mubr.bf16.gmra.mrb[0].mxu0 %v521
      %v925 = vpop.f32.mrb[0].mxu0
      %v926 = vadd.f32 %v291, %v925
      %v927 = vpop.f32.mrb[0].mxu0
      %v928 = vpop.f32.mrb[0].mxu0
      %v929 = vadd.f32 %v291, %v928
      %v930 = vpop.f32.mrb[0].mxu0
      %931 = vmatprep.mubr.bf16.mxu0 0
      %932 = vmatmul.mubr.bf16.gmra.mrb[0].mxu0 %v522
      %v933 = vpop.f32.mrb[0].mxu0
      %v934 = vadd.f32 %v291, %v933
      %v935 = vpop.f32.mrb[0].mxu0
      %v936 = vpop.f32.mrb[0].mxu0
      %v937 = vadd.f32 %v291, %v936
      %v938 = vpop.f32.mrb[0].mxu0
      %939 = vmatprep.mubr.bf16.mxu0 0
      %940 = vmatmul.mubr.bf16.gmra.mrb[0].mxu0 %v523
      %v941 = vpop.f32.mrb[0].mxu0
      %v942 = vadd.f32 %v291, %v941
      %v943 = vpop.f32.mrb[0].mxu0
      %v944 = vpop.f32.mrb[0].mxu0
      %v945 = vadd.f32 %v291, %v944
      %v946 = vpop.f32.mrb[0].mxu0
      %947 = vmatprep.mubr.bf16.mxu0 0
      %948 = vmatmul.mubr.bf16.gmra.mrb[0].mxu0 %v524
      %v949 = vpop.f32.mrb[0].mxu0
      %v950 = vadd.f32 %v291, %v949
      %v951 = vpop.f32.mrb[0].mxu0
      %v952 = vpop.f32.mrb[0].mxu0
      %v953 = vadd.f32 %v291, %v952
      %v954 = vpop.f32.mrb[0].mxu0
      %955 = vmatprep.mubr.bf16.mxu0 0
      %956 = vmatmul.mubr.bf16.gmra.mrb[0].mxu0 %v525
      %v957 = vpop.f32.mrb[0].mxu0
      %v958 = vadd.f32 %v291, %v957
      %v959 = vpop.f32.mrb[0].mxu0
      %v960 = vpop.f32.mrb[0].mxu0
      %v961 = vadd.f32 %v291, %v960
      %v962 = vpop.f32.mrb[0].mxu0
      %963 = vmatprep.mubr.bf16.mxu0 0
      %964 = vmatmul.mubr.bf16.gmra.mrb[0].mxu0 %v526
      %v965 = vpop.f32.mrb[0].mxu0
      %v966 = vadd.f32 %v291, %v965
      %v967 = vpop.f32.mrb[0].mxu0
      %v968 = vpop.f32.mrb[0].mxu0
      %v969 = vadd.f32 %v291, %v968
      %v970 = vpop.f32.mrb[0].mxu0
      %971 = vmatprep.mubr.bf16.mxu0 0
      %972 = vmatmul.mubr.bf16.gmra.mrb[0].mxu0 %v527
      %v973 = vpop.f32.mrb[0].mxu0
      %v974 = vadd.f32 %v291, %v973
      %v975 = vpop.f32.mrb[0].mxu0
      %v976 = vpop.f32.mrb[0].mxu0
      %v977 = vadd.f32 %v291, %v976
      %v978 = vpop.f32.mrb[0].mxu0
      %979 = vmatprep.mubr.bf16.mxu0 0
      %980 = vmatmul.mubr.bf16.gmra.mrb[0].mxu0 %v528
      %v981 = vpop.f32.mrb[0].mxu0
      %v982 = vadd.f32 %v291, %v981
      %v983 = vpop.f32.mrb[0].mxu0
      %v984 = vpop.f32.mrb[0].mxu0
      %v985 = vadd.f32 %v291, %v984
      %v986 = vpop.f32.mrb[0].mxu0
      %987 = vmatprep.mubr.bf16.mxu0 0
      %988 = vmatmul.mubr.bf16.gmra.mrb[0].mxu0 %v529
      %v989 = vpop.f32.mrb[0].mxu0
      %v990 = vadd.f32 %v291, %v989
      %v991 = vpop.f32.mrb[0].mxu0
      %v992 = vpop.f32.mrb[0].mxu0
      %v993 = vadd.f32 %v291, %v992
      %v994 = vpop.f32.mrb[0].mxu0
      %995 = vmatprep.mubr.bf16.mxu0 0
      %996 = vmatmul.mubr.bf16.gmra.mrb[0].mxu0 %v530
      %v997 = vpop.f32.mrb[0].mxu0
      %v998 = vadd.f32 %v291, %v997
      %v999 = vpop.f32.mrb[0].mxu0
      %v1000 = vpop.f32.mrb[0].mxu0
      %v1001 = vadd.f32 %v291, %v1000
      %v1002 = vpop.f32.mrb[0].mxu0
      %1003 = vmatprep.mubr.bf16.mxu0 0
      %1004 = vmatmul.mubr.bf16.gmra.mrb[0].mxu0 %v531
      %v1005 = vpop.f32.mrb[0].mxu0
      %v1006 = vadd.f32 %v291, %v1005
      %v1007 = vpop.f32.mrb[0].mxu0
      %v1008 = vpop.f32.mrb[0].mxu0
      %v1009 = vadd.f32 %v291, %v1008
      %v1010 = vpop.f32.mrb[0].mxu0
      %1011 = vmatprep.mubr.bf16.mxu0 0
      %1012 = vmatmul.mubr.bf16.gmra.mrb[0].mxu0 %v532
      %v1013 = vpop.f32.mrb[0].mxu0
      %v1014 = vadd.f32 %v291, %v1013
      %v1015 = vpop.f32.mrb[0].mxu0
      %v1016 = vpop.f32.mrb[0].mxu0
      %v1017 = vadd.f32 %v291, %v1016
      %v1018 = vpop.f32.mrb[0].mxu0
      %1019 = vmatprep.mubr.bf16.mxu0 0
      %1020 = vmatmul.mubr.bf16.gmra.mrb[0].mxu0 %v533
      %v1021 = vpop.f32.mrb[0].mxu0
      %v1022 = vadd.f32 %v291, %v1021
      %v1023 = vpop.f32.mrb[0].mxu0
      %v1024 = vpop.f32.mrb[0].mxu0
      %v1025 = vadd.f32 %v291, %v1024
      %v1026 = vpop.f32.mrb[0].mxu0
      %1027 = vmatprep.mubr.bf16.mxu0 0
      %1028 = vmatmul.mubr.bf16.gmra.mrb[0].mxu0 %v534
      %v1029 = vpop.f32.mrb[0].mxu0
      %v1030 = vadd.f32 %v291, %v1029
      %v1031 = vpop.f32.mrb[0].mxu0
      %v1032 = vpop.f32.mrb[0].mxu0
      %v1033 = vadd.f32 %v291, %v1032
      %v1034 = vpop.f32.mrb[0].mxu0
      %1035 = vmatprep.mubr.bf16.mxu0 0
      %1036 = vmatmul.mubr.bf16.gmra.mrb[0].mxu0 %v535
      %v1037 = vpop.f32.mrb[0].mxu0
      %v1038 = vadd.f32 %v291, %v1037
      %v1039 = vpop.f32.mrb[0].mxu0
      %v1040 = vpop.f32.mrb[0].mxu0
      %v1041 = vadd.f32 %v291, %v1040
      %v1042 = vpop.f32.mrb[0].mxu0
      %1043 = vmatprep.mubr.bf16.mxu0 0
      %1044 = vmatmul.mubr.bf16.gmra.mrb[0].mxu0 %v536
      %v1045 = vpop.f32.mrb[0].mxu0
      %v1046 = vadd.f32 %v291, %v1045
      %v1047 = vpop.f32.mrb[0].mxu0
      %v1048 = vpop.f32.mrb[0].mxu0
      %v1049 = vadd.f32 %v291, %v1048
      %v1050 = vpop.f32.mrb[0].mxu0
      %1051 = vmatprep.mubr.bf16.mxu0 0
      %1052 = vmatmul.mubr.bf16.gmra.mrb[0].mxu0 %v537
      %v1053 = vpop.f32.mrb[0].mxu0
      %v1054 = vadd.f32 %v291, %v1053
      %v1055 = vpop.f32.mrb[0].mxu0
      %v1056 = vpop.f32.mrb[0].mxu0
      %v1057 = vadd.f32 %v291, %v1056
      %v1058 = vpop.f32.mrb[0].mxu0
      %1059 = vdwg.mxu0
      %v1060 = vmax.f32 %v670, 0.0
      %v1061 = vmax.f32 %v673, 0.0
      %v1062 = vmax.f32 %v678, 0.0
      %v1063 = vmax.f32 %v681, 0.0
      %v1064 = vmax.f32 %v686, 0.0
      %v1065 = vmax.f32 %v689, 0.0
      %v1066 = vmax.f32 %v694, 0.0
      %v1067 = vmax.f32 %v697, 0.0
      %v1068 = vmax.f32 %v702, 0.0
      %v1069 = vmax.f32 %v705, 0.0
      %v1070 = vmax.f32 %v710, 0.0
      %v1071 = vmax.f32 %v713, 0.0
      %v1072 = vmax.f32 %v718, 0.0
      %v1073 = vmax.f32 %v721, 0.0
      %v1074 = vmax.f32 %v726, 0.0
      %v1075 = vmax.f32 %v729, 0.0
      %v1076 = vmax.f32 %v734, 0.0
      %v1077 = vmax.f32 %v737, 0.0
      %v1078 = vmax.f32 %v742, 0.0
      %v1079 = vmax.f32 %v745, 0.0
      %v1080 = vmax.f32 %v750, 0.0
      %v1081 = vmax.f32 %v753, 0.0
      %v1082 = vmax.f32 %v758, 0.0
      %v1083 = vmax.f32 %v761, 0.0
      %v1084 = vmax.f32 %v766, 0.0
      %v1085 = vmax.f32 %v769, 0.0
      %v1086 = vmax.f32 %v774, 0.0
      %v1087 = vmax.f32 %v777, 0.0
      %v1088 = vmax.f32 %v782, 0.0
      %v1089 = vmax.f32 %v785, 0.0
      %v1090 = vmax.f32 %v790, 0.0
      %v1091 = vmax.f32 %v793, 0.0
      %v1092 = vmax.f32 %v798, 0.0
      %v1093 = vmax.f32 %v801, 0.0
      %v1094 = vmax.f32 %v806, 0.0
      %v1095 = vmax.f32 %v809, 0.0
      %v1096 = vmax.f32 %v814, 0.0
      %v1097 = vmax.f32 %v817, 0.0
      %v1098 = vmax.f32 %v822, 0.0
      %v1099 = vmax.f32 %v825, 0.0
      %v1100 = vmax.f32 %v830, 0.0
      %v1101 = vmax.f32 %v833, 0.0
      %v1102 = vmax.f32 %v838, 0.0
      %v1103 = vmax.f32 %v841, 0.0
      %v1104 = vmax.f32 %v846, 0.0
      %v1105 = vmax.f32 %v849, 0.0
      %v1106 = vmax.f32 %v854, 0.0
      %v1107 = vmax.f32 %v857, 0.0
      %v1108 = vmax.f32 %v862, 0.0
      %v1109 = vmax.f32 %v865, 0.0
      %v1110 = vmax.f32 %v870, 0.0
      %v1111 = vmax.f32 %v873, 0.0
      %v1112 = vmax.f32 %v878, 0.0
      %v1113 = vmax.f32 %v881, 0.0
      %v1114 = vmax.f32 %v886, 0.0
      %v1115 = vmax.f32 %v889, 0.0
      %v1116 = vmax.f32 %v894, 0.0
      %v1117 = vmax.f32 %v897, 0.0
      %v1118 = vmax.f32 %v902, 0.0
      %v1119 = vmax.f32 %v905, 0.0
      %v1120 = vmax.f32 %v910, 0.0
      %v1121 = vmax.f32 %v913, 0.0
      %v1122 = vmax.f32 %v918, 0.0
      %v1123 = vmax.f32 %v921, 0.0
      %v1124 = vmax.f32 %v926, 0.0
      %v1125 = vmax.f32 %v929, 0.0
      %v1126 = vmax.f32 %v934, 0.0
      %v1127 = vmax.f32 %v937, 0.0
      %v1128 = vmax.f32 %v942, 0.0
      %v1129 = vmax.f32 %v945, 0.0
      %v1130 = vmax.f32 %v950, 0.0
      %v1131 = vmax.f32 %v953, 0.0
      %v1132 = vmax.f32 %v958, 0.0
      %v1133 = vmax.f32 %v961, 0.0
      %v1134 = vmax.f32 %v966, 0.0
      %v1135 = vmax.f32 %v969, 0.0
      %v1136 = vmax.f32 %v974, 0.0
      %v1137 = vmax.f32 %v977, 0.0
      %v1138 = vmax.f32 %v982, 0.0
      %v1139 = vmax.f32 %v985, 0.0
      %v1140 = vmax.f32 %v990, 0.0
      %v1141 = vmax.f32 %v993, 0.0
      %v1142 = vmax.f32 %v998, 0.0
      %v1143 = vmax.f32 %v1001, 0.0
      %v1144 = vmax.f32 %v1006, 0.0
      %v1145 = vmax.f32 %v1009, 0.0
      %v1146 = vmax.f32 %v1014, 0.0
      %v1147 = vmax.f32 %v1017, 0.0
      %v1148 = vmax.f32 %v1022, 0.0
      %v1149 = vmax.f32 %v1025, 0.0
      %v1150 = vmax.f32 %v1030, 0.0
      %v1151 = vmax.f32 %v1033, 0.0
      %v1152 = vmax.f32 %v1038, 0.0
      %v1153 = vmax.f32 %v1041, 0.0
      %v1154 = vmax.f32 %v1046, 0.0
      %v1155 = vmax.f32 %v1049, 0.0
      %v1156 = vmax.f32 %v1054, 0.0
      %v1157 = vmax.f32 %v1057, 0.0
      %vm1214 = vcmask 1043456
      %v1215 = vrot.slane %v1063, 4
      %v1216 = vrot.slane %v1064, 4
      %v1217 = vsel %vm1214, %v1215, %v1216
      %v1218 = vrot.slane %v1065, 4
      %v1219 = vsel %vm1214, %v1216, %v1218
      %v1220 = vrot.slane %v1066, 4
      %v1221 = vsel %vm1214, %v1218, %v1220
      %v1222 = vrot.slane %v1070, 4
      %v1223 = vrot.slane %v1071, 4
      %v1224 = vsel %vm1214, %v1222, %v1223
      %v1225 = vrot.slane %v1072, 4
      %v1226 = vsel %vm1214, %v1223, %v1225
      %v1227 = vrot.slane %v1073, 4
      %v1228 = vsel %vm1214, %v1225, %v1227
      %v1229 = vrot.slane %v1077, 4
      %v1230 = vrot.slane %v1078, 4
      %v1231 = vsel %vm1214, %v1229, %v1230
      %v1232 = vrot.slane %v1079, 4
      %v1233 = vsel %vm1214, %v1230, %v1232
      %v1234 = vrot.slane %v1080, 4
      %v1235 = vsel %vm1214, %v1232, %v1234
      %v1236 = vrot.slane %v1084, 4
      %v1237 = vrot.slane %v1085, 4
      %v1238 = vsel %vm1214, %v1236, %v1237
      %v1239 = vrot.slane %v1086, 4
      %v1240 = vsel %vm1214, %v1237, %v1239
      %v1241 = vrot.slane %v1087, 4
      %v1242 = vsel %vm1214, %v1239, %v1241
      %v1243 = vrot.slane %v1091, 4
      %v1244 = vrot.slane %v1092, 4
      %v1245 = vsel %vm1214, %v1243, %v1244
      %v1246 = vrot.slane %v1093, 4
      %v1247 = vsel %vm1214, %v1244, %v1246
      %v1248 = vrot.slane %v1094, 4
      %v1249 = vsel %vm1214, %v1246, %v1248
      %v1250 = vrot.slane %v1098, 4
      %v1251 = vrot.slane %v1099, 4
      %v1252 = vsel %vm1214, %v1250, %v1251
      %v1253 = vrot.slane %v1100, 4
      %v1254 = vsel %vm1214, %v1251, %v1253
      %v1255 = vrot.slane %v1101, 4
      %v1256 = vsel %vm1214, %v1253, %v1255
      %v1257 = vrot.slane %v1105, 4
      %v1258 = vrot.slane %v1106, 4
      %v1259 = vsel %vm1214, %v1257, %v1258
      %v1260 = vrot.slane %v1107, 4
      %v1261 = vsel %vm1214, %v1258, %v1260
      %v1262 = vrot.slane %v1108, 4
      %v1263 = vsel %vm1214, %v1260, %v1262
      %v1264 = vrot.slane %v1112, 4
      %v1265 = vrot.slane %v1113, 4
      %v1266 = vsel %vm1214, %v1264, %v1265
      %v1267 = vrot.slane %v1114, 4
      %v1268 = vsel %vm1214, %v1265, %v1267
      %v1269 = vrot.slane %v1115, 4
      %v1270 = vsel %vm1214, %v1267, %v1269
      %v1271 = vrot.slane %v1119, 4
      %v1272 = vrot.slane %v1120, 4
      %v1273 = vsel %vm1214, %v1271, %v1272
      %v1274 = vrot.slane %v1121, 4
      %v1275 = vsel %vm1214, %v1272, %v1274
      %v1276 = vrot.slane %v1122, 4
      %v1277 = vsel %vm1214, %v1274, %v1276
      %v1278 = vrot.slane %v1126, 4
      %v1279 = vrot.slane %v1127, 4
      %v1280 = vsel %vm1214, %v1278, %v1279
      %v1281 = vrot.slane %v1128, 4
      %v1282 = vsel %vm1214, %v1279, %v1281
      %v1283 = vrot.slane %v1129, 4
      %v1284 = vsel %vm1214, %v1281, %v1283
      %v1285 = vrot.slane %v1133, 4
      %v1286 = vrot.slane %v1134, 4
      %v1287 = vsel %vm1214, %v1285, %v1286
      %v1288 = vrot.slane %v1135, 4
      %v1289 = vsel %vm1214, %v1286, %v1288
      %v1290 = vrot.slane %v1136, 4
      %v1291 = vsel %vm1214, %v1288, %v1290
      %v1292 = vrot.slane %v1140, 4
      %v1293 = vrot.slane %v1141, 4
      %v1294 = vsel %vm1214, %v1292, %v1293
      %v1295 = vrot.slane %v1142, 4
      %v1296 = vsel %vm1214, %v1293, %v1295
      %v1297 = vrot.slane %v1143, 4
      %v1298 = vsel %vm1214, %v1295, %v1297
      %v1299 = vrot.slane %v1147, 4
      %v1300 = vrot.slane %v1148, 4
      %v1301 = vsel %vm1214, %v1299, %v1300
      %v1302 = vrot.slane %v1149, 4
      %v1303 = vsel %vm1214, %v1300, %v1302
      %v1304 = vrot.slane %v1150, 4
      %v1305 = vsel %vm1214, %v1302, %v1304
      %v1306 = vrot.slane %v1154, 4
      %v1307 = vrot.slane %v1155, 4
      %v1308 = vsel %vm1214, %v1306, %v1307
      %v1309 = vrot.slane %v1156, 4
      %v1310 = vsel %vm1214, %v1307, %v1309
      %v1311 = vrot.slane %v1157, 4
      %v1312 = vsel %vm1214, %v1309, %v1311
      %v1369 = vmax.f32 %v1060, %v1217
      %v1370 = vmax.f32 %v1061, %v1219
      %v1371 = vmax.f32 %v1062, %v1221
      %v1372 = vmax.f32 %v1063, %v1220
      %v1373 = vmax.f32 %v1067, %v1224
      %v1374 = vmax.f32 %v1068, %v1226
      %v1375 = vmax.f32 %v1069, %v1228
      %v1376 = vmax.f32 %v1070, %v1227
      %v1377 = vmax.f32 %v1074, %v1231
      %v1378 = vmax.f32 %v1075, %v1233
      %v1379 = vmax.f32 %v1076, %v1235
      %v1380 = vmax.f32 %v1077, %v1234
      %v1381 = vmax.f32 %v1081, %v1238
      %v1382 = vmax.f32 %v1082, %v1240
      %v1383 = vmax.f32 %v1083, %v1242
      %v1384 = vmax.f32 %v1084, %v1241
      %v1385 = vmax.f32 %v1088, %v1245
      %v1386 = vmax.f32 %v1089, %v1247
      %v1387 = vmax.f32 %v1090, %v1249
      %v1388 = vmax.f32 %v1091, %v1248
      %v1389 = vmax.f32 %v1095, %v1252
      %v1390 = vmax.f32 %v1096, %v1254
      %v1391 = vmax.f32 %v1097, %v1256
      %v1392 = vmax.f32 %v1098, %v1255
      %v1393 = vmax.f32 %v1102, %v1259
      %v1394 = vmax.f32 %v1103, %v1261
      %v1395 = vmax.f32 %v1104, %v1263
      %v1396 = vmax.f32 %v1105, %v1262
      %v1397 = vmax.f32 %v1109, %v1266
      %v1398 = vmax.f32 %v1110, %v1268
      %v1399 = vmax.f32 %v1111, %v1270
      %v1400 = vmax.f32 %v1112, %v1269
      %v1401 = vmax.f32 %v1116, %v1273
      %v1402 = vmax.f32 %v1117, %v1275
      %v1403 = vmax.f32 %v1118, %v1277
      %v1404 = vmax.f32 %v1119, %v1276
      %v1405 = vmax.f32 %v1123, %v1280
      %v1406 = vmax.f32 %v1124, %v1282
      %v1407 = vmax.f32 %v1125, %v1284
      %v1408 = vmax.f32 %v1126, %v1283
      %v1409 = vmax.f32 %v1130, %v1287
      %v1410 = vmax.f32 %v1131, %v1289
      %v1411 = vmax.f32 %v1132, %v1291
      %v1412 = vmax.f32 %v1133, %v1290
      %v1413 = vmax.f32 %v1137, %v1294
      %v1414 = vmax.f32 %v1138, %v1296
      %v1415 = vmax.f32 %v1139, %v1298
      %v1416 = vmax.f32 %v1140, %v1297
      %v1417 = vmax.f32 %v1144, %v1301
      %v1418 = vmax.f32 %v1145, %v1303
      %v1419 = vmax.f32 %v1146, %v1305
      %v1420 = vmax.f32 %v1147, %v1304
      %v1421 = vmax.f32 %v1151, %v1308
      %v1422 = vmax.f32 %v1152, %v1310
      %v1423 = vmax.f32 %v1153, %v1312
      %v1424 = vmax.f32 %v1154, %v1311
      %v1481 = vcombine.high %v1369, %v1369
      %v1483 = vunpack.c.l.s4 1983009808
      %v1484 = vunpack.c.0.s8 %v1483
      %v1485 = vlaneseq
      %v1486 = vshrl.u32 %v1485, 7
      %v1487 = vsub.s32 %v1484, %v1486
      %v1488 = vrot.slane %v1369, %v1487
      %v1490 = vunpack.c.l.s4 1983009808
      %v1491 = vunpack.c.0.s8 %v1490
      %v1492 = vlaneseq
      %v1493 = vshrl.u32 %v1492, 7
      %v1494 = vsub.s32 %v1491, %v1493
      %v1495 = vrot.slane %v1481, %v1494
      %v1496 = vcombine.high %v1488, %v1488
      %v1497 = vcombine.high %v1495, %v1495
      %v1498 = vcombine.high %v1370, %v1370
      %v1500 = vunpack.c.l.s4 1983009808
      %v1501 = vunpack.c.0.s8 %v1500
      %v1502 = vlaneseq
      %v1503 = vshrl.u32 %v1502, 7
      %v1504 = vsub.s32 %v1501, %v1503
      %v1505 = vrot.slane %v1370, %v1504
      %v1507 = vunpack.c.l.s4 1983009808
      %v1508 = vunpack.c.0.s8 %v1507
      %v1509 = vlaneseq
      %v1510 = vshrl.u32 %v1509, 7
      %v1511 = vsub.s32 %v1508, %v1510
      %v1512 = vrot.slane %v1498, %v1511
      %v1513 = vcombine.high %v1505, %v1505
      %v1514 = vcombine.high %v1512, %v1512
      %v1515 = vcombine.high %v1371, %v1371
      %v1517 = vunpack.c.l.s4 1983009808
      %v1518 = vunpack.c.0.s8 %v1517
      %v1519 = vlaneseq
      %v1520 = vshrl.u32 %v1519, 7
      %v1521 = vsub.s32 %v1518, %v1520
      %v1522 = vrot.slane %v1371, %v1521
      %v1524 = vunpack.c.l.s4 1983009808
      %v1525 = vunpack.c.0.s8 %v1524
      %v1526 = vlaneseq
      %v1527 = vshrl.u32 %v1526, 7
      %v1528 = vsub.s32 %v1525, %v1527
      %v1529 = vrot.slane %v1515, %v1528
      %v1530 = vcombine.high %v1522, %v1522
      %v1531 = vcombine.high %v1529, %v1529
      %v1533 = vunpack.c.l.s4 1983009808
      %v1534 = vunpack.c.0.s8 %v1533
      %v1535 = vlaneseq
      %v1536 = vshrl.u32 %v1535, 7
      %v1537 = vsub.s32 %v1534, %v1536
      %v1538 = vrot.slane %v1372, %v1537
      %v1539 = vcombine.high %v1538, %v1538
      %v1540 = vcombine.high %v1373, %v1373
      %v1542 = vunpack.c.l.s4 1983009808
      %v1543 = vunpack.c.0.s8 %v1542
      %v1544 = vlaneseq
      %v1545 = vshrl.u32 %v1544, 7
      %v1546 = vsub.s32 %v1543, %v1545
      %v1547 = vrot.slane %v1373, %v1546
      %v1549 = vunpack.c.l.s4 1983009808
      %v1550 = vunpack.c.0.s8 %v1549
      %v1551 = vlaneseq
      %v1552 = vshrl.u32 %v1551, 7
      %v1553 = vsub.s32 %v1550, %v1552
      %v1554 = vrot.slane %v1540, %v1553
      %v1555 = vcombine.high %v1547, %v1547
      %v1556 = vcombine.high %v1554, %v1554
      %v1557 = vcombine.high %v1374, %v1374
      %v1559 = vunpack.c.l.s4 1983009808
      %v1560 = vunpack.c.0.s8 %v1559
      %v1561 = vlaneseq
      %v1562 = vshrl.u32 %v1561, 7
      %v1563 = vsub.s32 %v1560, %v1562
      %v1564 = vrot.slane %v1374, %v1563
      %v1566 = vunpack.c.l.s4 1983009808
      %v1567 = vunpack.c.0.s8 %v1566
      %v1568 = vlaneseq
      %v1569 = vshrl.u32 %v1568, 7
      %v1570 = vsub.s32 %v1567, %v1569
      %v1571 = vrot.slane %v1557, %v1570
      %v1572 = vcombine.high %v1564, %v1564
      %v1573 = vcombine.high %v1571, %v1571
      %v1574 = vcombine.high %v1375, %v1375
      %v1576 = vunpack.c.l.s4 1983009808
      %v1577 = vunpack.c.0.s8 %v1576
      %v1578 = vlaneseq
      %v1579 = vshrl.u32 %v1578, 7
      %v1580 = vsub.s32 %v1577, %v1579
      %v1581 = vrot.slane %v1375, %v1580
      %v1583 = vunpack.c.l.s4 1983009808
      %v1584 = vunpack.c.0.s8 %v1583
      %v1585 = vlaneseq
      %v1586 = vshrl.u32 %v1585, 7
      %v1587 = vsub.s32 %v1584, %v1586
      %v1588 = vrot.slane %v1574, %v1587
      %v1589 = vcombine.high %v1581, %v1581
      %v1590 = vcombine.high %v1588, %v1588
      %v1592 = vunpack.c.l.s4 1983009808
      %v1593 = vunpack.c.0.s8 %v1592
      %v1594 = vlaneseq
      %v1595 = vshrl.u32 %v1594, 7
      %v1596 = vsub.s32 %v1593, %v1595
      %v1597 = vrot.slane %v1376, %v1596
      %v1598 = vcombine.high %v1597, %v1597
      %v1599 = vcombine.high %v1377, %v1377
      %v1601 = vunpack.c.l.s4 1983009808
      %v1602 = vunpack.c.0.s8 %v1601
      %v1603 = vlaneseq
      %v1604 = vshrl.u32 %v1603, 7
      %v1605 = vsub.s32 %v1602, %v1604
      %v1606 = vrot.slane %v1377, %v1605
      %v1608 = vunpack.c.l.s4 1983009808
      %v1609 = vunpack.c.0.s8 %v1608
      %v1610 = vlaneseq
      %v1611 = vshrl.u32 %v1610, 7
      %v1612 = vsub.s32 %v1609, %v1611
      %v1613 = vrot.slane %v1599, %v1612
      %v1614 = vcombine.high %v1606, %v1606
      %v1615 = vcombine.high %v1613, %v1613
      %v1616 = vcombine.high %v1378, %v1378
      %v1618 = vunpack.c.l.s4 1983009808
      %v1619 = vunpack.c.0.s8 %v1618
      %v1620 = vlaneseq
      %v1621 = vshrl.u32 %v1620, 7
      %v1622 = vsub.s32 %v1619, %v1621
      %v1623 = vrot.slane %v1378, %v1622
      %v1625 = vunpack.c.l.s4 1983009808
      %v1626 = vunpack.c.0.s8 %v1625
      %v1627 = vlaneseq
      %v1628 = vshrl.u32 %v1627, 7
      %v1629 = vsub.s32 %v1626, %v1628
      %v1630 = vrot.slane %v1616, %v1629
      %v1631 = vcombine.high %v1623, %v1623
      %v1632 = vcombine.high %v1630, %v1630
      %v1633 = vcombine.high %v1379, %v1379
      %v1635 = vunpack.c.l.s4 1983009808
      %v1636 = vunpack.c.0.s8 %v1635
      %v1637 = vlaneseq
      %v1638 = vshrl.u32 %v1637, 7
      %v1639 = vsub.s32 %v1636, %v1638
      %v1640 = vrot.slane %v1379, %v1639
      %v1642 = vunpack.c.l.s4 1983009808
      %v1643 = vunpack.c.0.s8 %v1642
      %v1644 = vlaneseq
      %v1645 = vshrl.u32 %v1644, 7
      %v1646 = vsub.s32 %v1643, %v1645
      %v1647 = vrot.slane %v1633, %v1646
      %v1648 = vcombine.high %v1640, %v1640
      %v1649 = vcombine.high %v1647, %v1647
      %v1651 = vunpack.c.l.s4 1983009808
      %v1652 = vunpack.c.0.s8 %v1651
      %v1653 = vlaneseq
      %v1654 = vshrl.u32 %v1653, 7
      %v1655 = vsub.s32 %v1652, %v1654
      %v1656 = vrot.slane %v1380, %v1655
      %v1657 = vcombine.high %v1656, %v1656
      %v1658 = vcombine.high %v1381, %v1381
      %v1660 = vunpack.c.l.s4 1983009808
      %v1661 = vunpack.c.0.s8 %v1660
      %v1662 = vlaneseq
      %v1663 = vshrl.u32 %v1662, 7
      %v1664 = vsub.s32 %v1661, %v1663
      %v1665 = vrot.slane %v1381, %v1664
      %v1667 = vunpack.c.l.s4 1983009808
      %v1668 = vunpack.c.0.s8 %v1667
      %v1669 = vlaneseq
      %v1670 = vshrl.u32 %v1669, 7
      %v1671 = vsub.s32 %v1668, %v1670
      %v1672 = vrot.slane %v1658, %v1671
      %v1673 = vcombine.high %v1665, %v1665
      %v1674 = vcombine.high %v1672, %v1672
      %v1675 = vcombine.high %v1382, %v1382
      %v1677 = vunpack.c.l.s4 1983009808
      %v1678 = vunpack.c.0.s8 %v1677
      %v1679 = vlaneseq
      %v1680 = vshrl.u32 %v1679, 7
      %v1681 = vsub.s32 %v1678, %v1680
      %v1682 = vrot.slane %v1382, %v1681
      %v1684 = vunpack.c.l.s4 1983009808
      %v1685 = vunpack.c.0.s8 %v1684
      %v1686 = vlaneseq
      %v1687 = vshrl.u32 %v1686, 7
      %v1688 = vsub.s32 %v1685, %v1687
      %v1689 = vrot.slane %v1675, %v1688
      %v1690 = vcombine.high %v1682, %v1682
      %v1691 = vcombine.high %v1689, %v1689
      %v1692 = vcombine.high %v1383, %v1383
      %v1694 = vunpack.c.l.s4 1983009808
      %v1695 = vunpack.c.0.s8 %v1694
      %v1696 = vlaneseq
      %v1697 = vshrl.u32 %v1696, 7
      %v1698 = vsub.s32 %v1695, %v1697
      %v1699 = vrot.slane %v1383, %v1698
      %v1701 = vunpack.c.l.s4 1983009808
      %v1702 = vunpack.c.0.s8 %v1701
      %v1703 = vlaneseq
      %v1704 = vshrl.u32 %v1703, 7
      %v1705 = vsub.s32 %v1702, %v1704
      %v1706 = vrot.slane %v1692, %v1705
      %v1707 = vcombine.high %v1699, %v1699
      %v1708 = vcombine.high %v1706, %v1706
      %v1710 = vunpack.c.l.s4 1983009808
      %v1711 = vunpack.c.0.s8 %v1710
      %v1712 = vlaneseq
      %v1713 = vshrl.u32 %v1712, 7
      %v1714 = vsub.s32 %v1711, %v1713
      %v1715 = vrot.slane %v1384, %v1714
      %v1716 = vcombine.high %v1715, %v1715
      %v1717 = vcombine.high %v1385, %v1385
      %v1719 = vunpack.c.l.s4 1983009808
      %v1720 = vunpack.c.0.s8 %v1719
      %v1721 = vlaneseq
      %v1722 = vshrl.u32 %v1721, 7
      %v1723 = vsub.s32 %v1720, %v1722
      %v1724 = vrot.slane %v1385, %v1723
      %v1726 = vunpack.c.l.s4 1983009808
      %v1727 = vunpack.c.0.s8 %v1726
      %v1728 = vlaneseq
      %v1729 = vshrl.u32 %v1728, 7
      %v1730 = vsub.s32 %v1727, %v1729
      %v1731 = vrot.slane %v1717, %v1730
      %v1732 = vcombine.high %v1724, %v1724
      %v1733 = vcombine.high %v1731, %v1731
      %v1734 = vcombine.high %v1386, %v1386
      %v1736 = vunpack.c.l.s4 1983009808
      %v1737 = vunpack.c.0.s8 %v1736
      %v1738 = vlaneseq
      %v1739 = vshrl.u32 %v1738, 7
      %v1740 = vsub.s32 %v1737, %v1739
      %v1741 = vrot.slane %v1386, %v1740
      %v1743 = vunpack.c.l.s4 1983009808
      %v1744 = vunpack.c.0.s8 %v1743
      %v1745 = vlaneseq
      %v1746 = vshrl.u32 %v1745, 7
      %v1747 = vsub.s32 %v1744, %v1746
      %v1748 = vrot.slane %v1734, %v1747
      %v1749 = vcombine.high %v1741, %v1741
      %v1750 = vcombine.high %v1748, %v1748
      %v1751 = vcombine.high %v1387, %v1387
      %v1753 = vunpack.c.l.s4 1983009808
      %v1754 = vunpack.c.0.s8 %v1753
      %v1755 = vlaneseq
      %v1756 = vshrl.u32 %v1755, 7
      %v1757 = vsub.s32 %v1754, %v1756
      %v1758 = vrot.slane %v1387, %v1757
      %v1760 = vunpack.c.l.s4 1983009808
      %v1761 = vunpack.c.0.s8 %v1760
      %v1762 = vlaneseq
      %v1763 = vshrl.u32 %v1762, 7
      %v1764 = vsub.s32 %v1761, %v1763
      %v1765 = vrot.slane %v1751, %v1764
      %v1766 = vcombine.high %v1758, %v1758
      %v1767 = vcombine.high %v1765, %v1765
      %v1769 = vunpack.c.l.s4 1983009808
      %v1770 = vunpack.c.0.s8 %v1769
      %v1771 = vlaneseq
      %v1772 = vshrl.u32 %v1771, 7
      %v1773 = vsub.s32 %v1770, %v1772
      %v1774 = vrot.slane %v1388, %v1773
      %v1775 = vcombine.high %v1774, %v1774
      %v1776 = vcombine.high %v1389, %v1389
      %v1778 = vunpack.c.l.s4 1983009808
      %v1779 = vunpack.c.0.s8 %v1778
      %v1780 = vlaneseq
      %v1781 = vshrl.u32 %v1780, 7
      %v1782 = vsub.s32 %v1779, %v1781
      %v1783 = vrot.slane %v1389, %v1782
      %v1785 = vunpack.c.l.s4 1983009808
      %v1786 = vunpack.c.0.s8 %v1785
      %v1787 = vlaneseq
      %v1788 = vshrl.u32 %v1787, 7
      %v1789 = vsub.s32 %v1786, %v1788
      %v1790 = vrot.slane %v1776, %v1789
      %v1791 = vcombine.high %v1783, %v1783
      %v1792 = vcombine.high %v1790, %v1790
      %v1793 = vcombine.high %v1390, %v1390
      %v1795 = vunpack.c.l.s4 1983009808
      %v1796 = vunpack.c.0.s8 %v1795
      %v1797 = vlaneseq
      %v1798 = vshrl.u32 %v1797, 7
      %v1799 = vsub.s32 %v1796, %v1798
      %v1800 = vrot.slane %v1390, %v1799
      %v1802 = vunpack.c.l.s4 1983009808
      %v1803 = vunpack.c.0.s8 %v1802
      %v1804 = vlaneseq
      %v1805 = vshrl.u32 %v1804, 7
      %v1806 = vsub.s32 %v1803, %v1805
      %v1807 = vrot.slane %v1793, %v1806
      %v1808 = vcombine.high %v1800, %v1800
      %v1809 = vcombine.high %v1807, %v1807
      %v1810 = vcombine.high %v1391, %v1391
      %v1812 = vunpack.c.l.s4 1983009808
      %v1813 = vunpack.c.0.s8 %v1812
      %v1814 = vlaneseq
      %v1815 = vshrl.u32 %v1814, 7
      %v1816 = vsub.s32 %v1813, %v1815
      %v1817 = vrot.slane %v1391, %v1816
      %v1819 = vunpack.c.l.s4 1983009808
      %v1820 = vunpack.c.0.s8 %v1819
      %v1821 = vlaneseq
      %v1822 = vshrl.u32 %v1821, 7
      %v1823 = vsub.s32 %v1820, %v1822
      %v1824 = vrot.slane %v1810, %v1823
      %v1825 = vcombine.high %v1817, %v1817
      %v1826 = vcombine.high %v1824, %v1824
      %v1828 = vunpack.c.l.s4 1983009808
      %v1829 = vunpack.c.0.s8 %v1828
      %v1830 = vlaneseq
      %v1831 = vshrl.u32 %v1830, 7
      %v1832 = vsub.s32 %v1829, %v1831
      %v1833 = vrot.slane %v1392, %v1832
      %v1834 = vcombine.high %v1833, %v1833
      %v1835 = vcombine.high %v1393, %v1393
      %v1837 = vunpack.c.l.s4 1983009808
      %v1838 = vunpack.c.0.s8 %v1837
      %v1839 = vlaneseq
      %v1840 = vshrl.u32 %v1839, 7
      %v1841 = vsub.s32 %v1838, %v1840
      %v1842 = vrot.slane %v1393, %v1841
      %v1844 = vunpack.c.l.s4 1983009808
      %v1845 = vunpack.c.0.s8 %v1844
      %v1846 = vlaneseq
      %v1847 = vshrl.u32 %v1846, 7
      %v1848 = vsub.s32 %v1845, %v1847
      %v1849 = vrot.slane %v1835, %v1848
      %v1850 = vcombine.high %v1842, %v1842
      %v1851 = vcombine.high %v1849, %v1849
      %v1852 = vcombine.high %v1394, %v1394
      %v1854 = vunpack.c.l.s4 1983009808
      %v1855 = vunpack.c.0.s8 %v1854
      %v1856 = vlaneseq
      %v1857 = vshrl.u32 %v1856, 7
      %v1858 = vsub.s32 %v1855, %v1857
      %v1859 = vrot.slane %v1394, %v1858
      %v1861 = vunpack.c.l.s4 1983009808
      %v1862 = vunpack.c.0.s8 %v1861
      %v1863 = vlaneseq
      %v1864 = vshrl.u32 %v1863, 7
      %v1865 = vsub.s32 %v1862, %v1864
      %v1866 = vrot.slane %v1852, %v1865
      %v1867 = vcombine.high %v1859, %v1859
      %v1868 = vcombine.high %v1866, %v1866
      %v1869 = vcombine.high %v1395, %v1395
      %v1871 = vunpack.c.l.s4 1983009808
      %v1872 = vunpack.c.0.s8 %v1871
      %v1873 = vlaneseq
      %v1874 = vshrl.u32 %v1873, 7
      %v1875 = vsub.s32 %v1872, %v1874
      %v1876 = vrot.slane %v1395, %v1875
      %v1878 = vunpack.c.l.s4 1983009808
      %v1879 = vunpack.c.0.s8 %v1878
      %v1880 = vlaneseq
      %v1881 = vshrl.u32 %v1880, 7
      %v1882 = vsub.s32 %v1879, %v1881
      %v1883 = vrot.slane %v1869, %v1882
      %v1884 = vcombine.high %v1876, %v1876
      %v1885 = vcombine.high %v1883, %v1883
      %v1887 = vunpack.c.l.s4 1983009808
      %v1888 = vunpack.c.0.s8 %v1887
      %v1889 = vlaneseq
      %v1890 = vshrl.u32 %v1889, 7
      %v1891 = vsub.s32 %v1888, %v1890
      %v1892 = vrot.slane %v1396, %v1891
      %v1893 = vcombine.high %v1892, %v1892
      %v1894 = vcombine.high %v1397, %v1397
      %v1896 = vunpack.c.l.s4 1983009808
      %v1897 = vunpack.c.0.s8 %v1896
      %v1898 = vlaneseq
      %v1899 = vshrl.u32 %v1898, 7
      %v1900 = vsub.s32 %v1897, %v1899
      %v1901 = vrot.slane %v1397, %v1900
      %v1903 = vunpack.c.l.s4 1983009808
      %v1904 = vunpack.c.0.s8 %v1903
      %v1905 = vlaneseq
      %v1906 = vshrl.u32 %v1905, 7
      %v1907 = vsub.s32 %v1904, %v1906
      %v1908 = vrot.slane %v1894, %v1907
      %v1909 = vcombine.high %v1901, %v1901
      %v1910 = vcombine.high %v1908, %v1908
      %v1911 = vcombine.high %v1398, %v1398
      %v1913 = vunpack.c.l.s4 1983009808
      %v1914 = vunpack.c.0.s8 %v1913
      %v1915 = vlaneseq
      %v1916 = vshrl.u32 %v1915, 7
      %v1917 = vsub.s32 %v1914, %v1916
      %v1918 = vrot.slane %v1398, %v1917
      %v1920 = vunpack.c.l.s4 1983009808
      %v1921 = vunpack.c.0.s8 %v1920
      %v1922 = vlaneseq
      %v1923 = vshrl.u32 %v1922, 7
      %v1924 = vsub.s32 %v1921, %v1923
      %v1925 = vrot.slane %v1911, %v1924
      %v1926 = vcombine.high %v1918, %v1918
      %v1927 = vcombine.high %v1925, %v1925
      %v1928 = vcombine.high %v1399, %v1399
      %v1930 = vunpack.c.l.s4 1983009808
      %v1931 = vunpack.c.0.s8 %v1930
      %v1932 = vlaneseq
      %v1933 = vshrl.u32 %v1932, 7
      %v1934 = vsub.s32 %v1931, %v1933
      %v1935 = vrot.slane %v1399, %v1934
      %v1937 = vunpack.c.l.s4 1983009808
      %v1938 = vunpack.c.0.s8 %v1937
      %v1939 = vlaneseq
      %v1940 = vshrl.u32 %v1939, 7
      %v1941 = vsub.s32 %v1938, %v1940
      %v1942 = vrot.slane %v1928, %v1941
      %v1943 = vcombine.high %v1935, %v1935
      %v1944 = vcombine.high %v1942, %v1942
      %v1946 = vunpack.c.l.s4 1983009808
      %v1947 = vunpack.c.0.s8 %v1946
      %v1948 = vlaneseq
      %v1949 = vshrl.u32 %v1948, 7
      %v1950 = vsub.s32 %v1947, %v1949
      %v1951 = vrot.slane %v1400, %v1950
      %v1952 = vcombine.high %v1951, %v1951
      %v1953 = vcombine.high %v1401, %v1401
      %v1955 = vunpack.c.l.s4 1983009808
      %v1956 = vunpack.c.0.s8 %v1955
      %v1957 = vlaneseq
      %v1958 = vshrl.u32 %v1957, 7
      %v1959 = vsub.s32 %v1956, %v1958
      %v1960 = vrot.slane %v1401, %v1959
      %v1962 = vunpack.c.l.s4 1983009808
      %v1963 = vunpack.c.0.s8 %v1962
      %v1964 = vlaneseq
      %v1965 = vshrl.u32 %v1964, 7
      %v1966 = vsub.s32 %v1963, %v1965
      %v1967 = vrot.slane %v1953, %v1966
      %v1968 = vcombine.high %v1960, %v1960
      %v1969 = vcombine.high %v1967, %v1967
      %v1970 = vcombine.high %v1402, %v1402
      %v1972 = vunpack.c.l.s4 1983009808
      %v1973 = vunpack.c.0.s8 %v1972
      %v1974 = vlaneseq
      %v1975 = vshrl.u32 %v1974, 7
      %v1976 = vsub.s32 %v1973, %v1975
      %v1977 = vrot.slane %v1402, %v1976
      %v1979 = vunpack.c.l.s4 1983009808
      %v1980 = vunpack.c.0.s8 %v1979
      %v1981 = vlaneseq
      %v1982 = vshrl.u32 %v1981, 7
      %v1983 = vsub.s32 %v1980, %v1982
      %v1984 = vrot.slane %v1970, %v1983
      %v1985 = vcombine.high %v1977, %v1977
      %v1986 = vcombine.high %v1984, %v1984
      %v1987 = vcombine.high %v1403, %v1403
      %v1989 = vunpack.c.l.s4 1983009808
      %v1990 = vunpack.c.0.s8 %v1989
      %v1991 = vlaneseq
      %v1992 = vshrl.u32 %v1991, 7
      %v1993 = vsub.s32 %v1990, %v1992
      %v1994 = vrot.slane %v1403, %v1993
      %v1996 = vunpack.c.l.s4 1983009808
      %v1997 = vunpack.c.0.s8 %v1996
      %v1998 = vlaneseq
      %v1999 = vshrl.u32 %v1998, 7
      %v2000 = vsub.s32 %v1997, %v1999
      %v2001 = vrot.slane %v1987, %v2000
      %v2002 = vcombine.high %v1994, %v1994
      %v2003 = vcombine.high %v2001, %v2001
      %v2005 = vunpack.c.l.s4 1983009808
      %v2006 = vunpack.c.0.s8 %v2005
      %v2007 = vlaneseq
      %v2008 = vshrl.u32 %v2007, 7
      %v2009 = vsub.s32 %v2006, %v2008
      %v2010 = vrot.slane %v1404, %v2009
      %v2011 = vcombine.high %v2010, %v2010
      %v2012 = vcombine.high %v1405, %v1405
      %v2014 = vunpack.c.l.s4 1983009808
      %v2015 = vunpack.c.0.s8 %v2014
      %v2016 = vlaneseq
      %v2017 = vshrl.u32 %v2016, 7
      %v2018 = vsub.s32 %v2015, %v2017
      %v2019 = vrot.slane %v1405, %v2018
      %v2021 = vunpack.c.l.s4 1983009808
      %v2022 = vunpack.c.0.s8 %v2021
      %v2023 = vlaneseq
      %v2024 = vshrl.u32 %v2023, 7
      %v2025 = vsub.s32 %v2022, %v2024
      %v2026 = vrot.slane %v2012, %v2025
      %v2027 = vcombine.high %v2019, %v2019
      %v2028 = vcombine.high %v2026, %v2026
      %v2029 = vcombine.high %v1406, %v1406
      %v2031 = vunpack.c.l.s4 1983009808
      %v2032 = vunpack.c.0.s8 %v2031
      %v2033 = vlaneseq
      %v2034 = vshrl.u32 %v2033, 7
      %v2035 = vsub.s32 %v2032, %v2034
      %v2036 = vrot.slane %v1406, %v2035
      %v2038 = vunpack.c.l.s4 1983009808
      %v2039 = vunpack.c.0.s8 %v2038
      %v2040 = vlaneseq
      %v2041 = vshrl.u32 %v2040, 7
      %v2042 = vsub.s32 %v2039, %v2041
      %v2043 = vrot.slane %v2029, %v2042
      %v2044 = vcombine.high %v2036, %v2036
      %v2045 = vcombine.high %v2043, %v2043
      %v2046 = vcombine.high %v1407, %v1407
      %v2048 = vunpack.c.l.s4 1983009808
      %v2049 = vunpack.c.0.s8 %v2048
      %v2050 = vlaneseq
      %v2051 = vshrl.u32 %v2050, 7
      %v2052 = vsub.s32 %v2049, %v2051
      %v2053 = vrot.slane %v1407, %v2052
      %v2055 = vunpack.c.l.s4 1983009808
      %v2056 = vunpack.c.0.s8 %v2055
      %v2057 = vlaneseq
      %v2058 = vshrl.u32 %v2057, 7
      %v2059 = vsub.s32 %v2056, %v2058
      %v2060 = vrot.slane %v2046, %v2059
      %v2061 = vcombine.high %v2053, %v2053
      %v2062 = vcombine.high %v2060, %v2060
      %v2064 = vunpack.c.l.s4 1983009808
      %v2065 = vunpack.c.0.s8 %v2064
      %v2066 = vlaneseq
      %v2067 = vshrl.u32 %v2066, 7
      %v2068 = vsub.s32 %v2065, %v2067
      %v2069 = vrot.slane %v1408, %v2068
      %v2070 = vcombine.high %v2069, %v2069
      %v2071 = vcombine.high %v1409, %v1409
      %v2073 = vunpack.c.l.s4 1983009808
      %v2074 = vunpack.c.0.s8 %v2073
      %v2075 = vlaneseq
      %v2076 = vshrl.u32 %v2075, 7
      %v2077 = vsub.s32 %v2074, %v2076
      %v2078 = vrot.slane %v1409, %v2077
      %v2080 = vunpack.c.l.s4 1983009808
      %v2081 = vunpack.c.0.s8 %v2080
      %v2082 = vlaneseq
      %v2083 = vshrl.u32 %v2082, 7
      %v2084 = vsub.s32 %v2081, %v2083
      %v2085 = vrot.slane %v2071, %v2084
      %v2086 = vcombine.high %v2078, %v2078
      %v2087 = vcombine.high %v2085, %v2085
      %v2088 = vcombine.high %v1410, %v1410
      %v2090 = vunpack.c.l.s4 1983009808
      %v2091 = vunpack.c.0.s8 %v2090
      %v2092 = vlaneseq
      %v2093 = vshrl.u32 %v2092, 7
      %v2094 = vsub.s32 %v2091, %v2093
      %v2095 = vrot.slane %v1410, %v2094
      %v2097 = vunpack.c.l.s4 1983009808
      %v2098 = vunpack.c.0.s8 %v2097
      %v2099 = vlaneseq
      %v2100 = vshrl.u32 %v2099, 7
      %v2101 = vsub.s32 %v2098, %v2100
      %v2102 = vrot.slane %v2088, %v2101
      %v2103 = vcombine.high %v2095, %v2095
      %v2104 = vcombine.high %v2102, %v2102
      %v2105 = vcombine.high %v1411, %v1411
      %v2107 = vunpack.c.l.s4 1983009808
      %v2108 = vunpack.c.0.s8 %v2107
      %v2109 = vlaneseq
      %v2110 = vshrl.u32 %v2109, 7
      %v2111 = vsub.s32 %v2108, %v2110
      %v2112 = vrot.slane %v1411, %v2111
      %v2114 = vunpack.c.l.s4 1983009808
      %v2115 = vunpack.c.0.s8 %v2114
      %v2116 = vlaneseq
      %v2117 = vshrl.u32 %v2116, 7
      %v2118 = vsub.s32 %v2115, %v2117
      %v2119 = vrot.slane %v2105, %v2118
      %v2120 = vcombine.high %v2112, %v2112
      %v2121 = vcombine.high %v2119, %v2119
      %v2123 = vunpack.c.l.s4 1983009808
      %v2124 = vunpack.c.0.s8 %v2123
      %v2125 = vlaneseq
      %v2126 = vshrl.u32 %v2125, 7
      %v2127 = vsub.s32 %v2124, %v2126
      %v2128 = vrot.slane %v1412, %v2127
      %v2129 = vcombine.high %v2128, %v2128
      %v2130 = vcombine.high %v1413, %v1413
      %v2132 = vunpack.c.l.s4 1983009808
      %v2133 = vunpack.c.0.s8 %v2132
      %v2134 = vlaneseq
      %v2135 = vshrl.u32 %v2134, 7
      %v2136 = vsub.s32 %v2133, %v2135
      %v2137 = vrot.slane %v1413, %v2136
      %v2139 = vunpack.c.l.s4 1983009808
      %v2140 = vunpack.c.0.s8 %v2139
      %v2141 = vlaneseq
      %v2142 = vshrl.u32 %v2141, 7
      %v2143 = vsub.s32 %v2140, %v2142
      %v2144 = vrot.slane %v2130, %v2143
      %v2145 = vcombine.high %v2137, %v2137
      %v2146 = vcombine.high %v2144, %v2144
      %v2147 = vcombine.high %v1414, %v1414
      %v2149 = vunpack.c.l.s4 1983009808
      %v2150 = vunpack.c.0.s8 %v2149
      %v2151 = vlaneseq
      %v2152 = vshrl.u32 %v2151, 7
      %v2153 = vsub.s32 %v2150, %v2152
      %v2154 = vrot.slane %v1414, %v2153
      %v2156 = vunpack.c.l.s4 1983009808
      %v2157 = vunpack.c.0.s8 %v2156
      %v2158 = vlaneseq
      %v2159 = vshrl.u32 %v2158, 7
      %v2160 = vsub.s32 %v2157, %v2159
      %v2161 = vrot.slane %v2147, %v2160
      %v2162 = vcombine.high %v2154, %v2154
      %v2163 = vcombine.high %v2161, %v2161
      %v2164 = vcombine.high %v1415, %v1415
      %v2166 = vunpack.c.l.s4 1983009808
      %v2167 = vunpack.c.0.s8 %v2166
      %v2168 = vlaneseq
      %v2169 = vshrl.u32 %v2168, 7
      %v2170 = vsub.s32 %v2167, %v2169
      %v2171 = vrot.slane %v1415, %v2170
      %v2173 = vunpack.c.l.s4 1983009808
      %v2174 = vunpack.c.0.s8 %v2173
      %v2175 = vlaneseq
      %v2176 = vshrl.u32 %v2175, 7
      %v2177 = vsub.s32 %v2174, %v2176
      %v2178 = vrot.slane %v2164, %v2177
      %v2179 = vcombine.high %v2171, %v2171
      %v2180 = vcombine.high %v2178, %v2178
      %v2182 = vunpack.c.l.s4 1983009808
      %v2183 = vunpack.c.0.s8 %v2182
      %v2184 = vlaneseq
      %v2185 = vshrl.u32 %v2184, 7
      %v2186 = vsub.s32 %v2183, %v2185
      %v2187 = vrot.slane %v1416, %v2186
      %v2188 = vcombine.high %v2187, %v2187
      %v2189 = vcombine.high %v1417, %v1417
      %v2191 = vunpack.c.l.s4 1983009808
      %v2192 = vunpack.c.0.s8 %v2191
      %v2193 = vlaneseq
      %v2194 = vshrl.u32 %v2193, 7
      %v2195 = vsub.s32 %v2192, %v2194
      %v2196 = vrot.slane %v1417, %v2195
      %v2198 = vunpack.c.l.s4 1983009808
      %v2199 = vunpack.c.0.s8 %v2198
      %v2200 = vlaneseq
      %v2201 = vshrl.u32 %v2200, 7
      %v2202 = vsub.s32 %v2199, %v2201
      %v2203 = vrot.slane %v2189, %v2202
      %v2204 = vcombine.high %v2196, %v2196
      %v2205 = vcombine.high %v2203, %v2203
      %v2206 = vcombine.high %v1418, %v1418
      %v2208 = vunpack.c.l.s4 1983009808
      %v2209 = vunpack.c.0.s8 %v2208
      %v2210 = vlaneseq
      %v2211 = vshrl.u32 %v2210, 7
      %v2212 = vsub.s32 %v2209, %v2211
      %v2213 = vrot.slane %v1418, %v2212
      %v2215 = vunpack.c.l.s4 1983009808
      %v2216 = vunpack.c.0.s8 %v2215
      %v2217 = vlaneseq
      %v2218 = vshrl.u32 %v2217, 7
      %v2219 = vsub.s32 %v2216, %v2218
      %v2220 = vrot.slane %v2206, %v2219
      %v2221 = vcombine.high %v2213, %v2213
      %v2222 = vcombine.high %v2220, %v2220
      %v2223 = vcombine.high %v1419, %v1419
      %v2225 = vunpack.c.l.s4 1983009808
      %v2226 = vunpack.c.0.s8 %v2225
      %v2227 = vlaneseq
      %v2228 = vshrl.u32 %v2227, 7
      %v2229 = vsub.s32 %v2226, %v2228
      %v2230 = vrot.slane %v1419, %v2229
      %v2232 = vunpack.c.l.s4 1983009808
      %v2233 = vunpack.c.0.s8 %v2232
      %v2234 = vlaneseq
      %v2235 = vshrl.u32 %v2234, 7
      %v2236 = vsub.s32 %v2233, %v2235
      %v2237 = vrot.slane %v2223, %v2236
      %v2238 = vcombine.high %v2230, %v2230
      %v2239 = vcombine.high %v2237, %v2237
      %v2241 = vunpack.c.l.s4 1983009808
      %v2242 = vunpack.c.0.s8 %v2241
      %v2243 = vlaneseq
      %v2244 = vshrl.u32 %v2243, 7
      %v2245 = vsub.s32 %v2242, %v2244
      %v2246 = vrot.slane %v1420, %v2245
      %v2247 = vcombine.high %v2246, %v2246
      %v2248 = vcombine.high %v1421, %v1421
      %v2250 = vunpack.c.l.s4 1983009808
      %v2251 = vunpack.c.0.s8 %v2250
      %v2252 = vlaneseq
      %v2253 = vshrl.u32 %v2252, 7
      %v2254 = vsub.s32 %v2251, %v2253
      %v2255 = vrot.slane %v1421, %v2254
      %v2257 = vunpack.c.l.s4 1983009808
      %v2258 = vunpack.c.0.s8 %v2257
      %v2259 = vlaneseq
      %v2260 = vshrl.u32 %v2259, 7
      %v2261 = vsub.s32 %v2258, %v2260
      %v2262 = vrot.slane %v2248, %v2261
      %v2263 = vcombine.high %v2255, %v2255
      %v2264 = vcombine.high %v2262, %v2262
      %v2265 = vcombine.high %v1422, %v1422
      %v2267 = vunpack.c.l.s4 1983009808
      %v2268 = vunpack.c.0.s8 %v2267
      %v2269 = vlaneseq
      %v2270 = vshrl.u32 %v2269, 7
      %v2271 = vsub.s32 %v2268, %v2270
      %v2272 = vrot.slane %v1422, %v2271
      %v2274 = vunpack.c.l.s4 1983009808
      %v2275 = vunpack.c.0.s8 %v2274
      %v2276 = vlaneseq
      %v2277 = vshrl.u32 %v2276, 7
      %v2278 = vsub.s32 %v2275, %v2277
      %v2279 = vrot.slane %v2265, %v2278
      %v2280 = vcombine.high %v2272, %v2272
      %v2281 = vcombine.high %v2279, %v2279
      %v2282 = vcombine.high %v1423, %v1423
      %v2284 = vunpack.c.l.s4 1983009808
      %v2285 = vunpack.c.0.s8 %v2284
      %v2286 = vlaneseq
      %v2287 = vshrl.u32 %v2286, 7
      %v2288 = vsub.s32 %v2285, %v2287
      %v2289 = vrot.slane %v1423, %v2288
      %v2291 = vunpack.c.l.s4 1983009808
      %v2292 = vunpack.c.0.s8 %v2291
      %v2293 = vlaneseq
      %v2294 = vshrl.u32 %v2293, 7
      %v2295 = vsub.s32 %v2292, %v2294
      %v2296 = vrot.slane %v2282, %v2295
      %v2297 = vcombine.high %v2289, %v2289
      %v2298 = vcombine.high %v2296, %v2296
      %v2300 = vunpack.c.l.s4 1983009808
      %v2301 = vunpack.c.0.s8 %v2300
      %v2302 = vlaneseq
      %v2303 = vshrl.u32 %v2302, 7
      %v2304 = vsub.s32 %v2301, %v2303
      %v2305 = vrot.slane %v1424, %v2304
      %v2306 = vcombine.high %v2305, %v2305
      %v2503 = vrot.slane %v1488, 7
      %v2504 = vrot.slane %v2503, 2
      %v2505 = vrot.slane %v1496, 7
      %v2506 = vrot.slane %v2505, 2
      %v2507 = vrot.slane %v1495, 7
      %v2508 = vrot.slane %v2507, 2
      %v2509 = vrot.slane %v1497, 7
      %v2510 = vrot.slane %v2509, 2
      %v2511 = vrot.slane %v1505, 7
      %v2512 = vrot.slane %v2511, 2
      %v2513 = vrot.slane %v1513, 7
      %v2514 = vrot.slane %v2513, 2
      %v2515 = vrot.slane %v1512, 7
      %v2516 = vrot.slane %v2515, 2
      %v2517 = vrot.slane %v1514, 7
      %v2518 = vrot.slane %v2517, 2
      %v2519 = vrot.slane %v1522, 7
      %v2520 = vrot.slane %v2519, 2
      %v2521 = vrot.slane %v1530, 7
      %v2522 = vrot.slane %v2521, 2
      %v2523 = vrot.slane %v1529, 7
      %v2524 = vrot.slane %v2523, 2
      %v2525 = vrot.slane %v1531, 7
      %v2526 = vrot.slane %v2525, 2
      %v2527 = vrot.slane %v1538, 7
      %v2528 = vrot.slane %v2527, 2
      %v2529 = vrot.slane %v1539, 7
      %v2530 = vrot.slane %v2529, 2
      %v2531 = vrot.slane %v1547, 7
      %v2532 = vrot.slane %v2531, 2
      %v2533 = vrot.slane %v1555, 7
      %v2534 = vrot.slane %v2533, 2
      %v2535 = vrot.slane %v1554, 7
      %v2536 = vrot.slane %v2535, 2
      %v2537 = vrot.slane %v1556, 7
      %v2538 = vrot.slane %v2537, 2
      %v2539 = vrot.slane %v1564, 7
      %v2540 = vrot.slane %v2539, 2
      %v2541 = vrot.slane %v1572, 7
      %v2542 = vrot.slane %v2541, 2
      %v2543 = vrot.slane %v1571, 7
      %v2544 = vrot.slane %v2543, 2
      %v2545 = vrot.slane %v1573, 7
      %v2546 = vrot.slane %v2545, 2
      %v2547 = vrot.slane %v1581, 7
      %v2548 = vrot.slane %v2547, 2
      %v2549 = vrot.slane %v1589, 7
      %v2550 = vrot.slane %v2549, 2
      %v2551 = vrot.slane %v1588, 7
      %v2552 = vrot.slane %v2551, 2
      %v2553 = vrot.slane %v1590, 7
      %v2554 = vrot.slane %v2553, 2
      %v2555 = vrot.slane %v1597, 7
      %v2556 = vrot.slane %v2555, 2
      %v2557 = vrot.slane %v1598, 7
      %v2558 = vrot.slane %v2557, 2
      %v2559 = vrot.slane %v1606, 7
      %v2560 = vrot.slane %v2559, 2
      %v2561 = vrot.slane %v1614, 7
      %v2562 = vrot.slane %v2561, 2
      %v2563 = vrot.slane %v1613, 7
      %v2564 = vrot.slane %v2563, 2
      %v2565 = vrot.slane %v1615, 7
      %v2566 = vrot.slane %v2565, 2
      %v2567 = vrot.slane %v1623, 7
      %v2568 = vrot.slane %v2567, 2
      %v2569 = vrot.slane %v1631, 7
      %v2570 = vrot.slane %v2569, 2
      %v2571 = vrot.slane %v1630, 7
      %v2572 = vrot.slane %v2571, 2
      %v2573 = vrot.slane %v1632, 7
      %v2574 = vrot.slane %v2573, 2
      %v2575 = vrot.slane %v1640, 7
      %v2576 = vrot.slane %v2575, 2
      %v2577 = vrot.slane %v1648, 7
      %v2578 = vrot.slane %v2577, 2
      %v2579 = vrot.slane %v1647, 7
      %v2580 = vrot.slane %v2579, 2
      %v2581 = vrot.slane %v1649, 7
      %v2582 = vrot.slane %v2581, 2
      %v2583 = vrot.slane %v1656, 7
      %v2584 = vrot.slane %v2583, 2
      %v2585 = vrot.slane %v1657, 7
      %v2586 = vrot.slane %v2585, 2
      %v2587 = vrot.slane %v1665, 7
      %v2588 = vrot.slane %v2587, 2
      %v2589 = vrot.slane %v1673, 7
      %v2590 = vrot.slane %v2589, 2
      %v2591 = vrot.slane %v1672, 7
      %v2592 = vrot.slane %v2591, 2
      %v2593 = vrot.slane %v1674, 7
      %v2594 = vrot.slane %v2593, 2
      %v2595 = vrot.slane %v1682, 7
      %v2596 = vrot.slane %v2595, 2
      %v2597 = vrot.slane %v1690, 7
      %v2598 = vrot.slane %v2597, 2
      %v2599 = vrot.slane %v1689, 7
      %v2600 = vrot.slane %v2599, 2
      %v2601 = vrot.slane %v1691, 7
      %v2602 = vrot.slane %v2601, 2
      %v2603 = vrot.slane %v1699, 7
      %v2604 = vrot.slane %v2603, 2
      %v2605 = vrot.slane %v1707, 7
      %v2606 = vrot.slane %v2605, 2
      %v2607 = vrot.slane %v1706, 7
      %v2608 = vrot.slane %v2607, 2
      %v2609 = vrot.slane %v1708, 7
      %v2610 = vrot.slane %v2609, 2
      %v2611 = vrot.slane %v1715, 7
      %v2612 = vrot.slane %v2611, 2
      %v2613 = vrot.slane %v1716, 7
      %v2614 = vrot.slane %v2613, 2
      %v2615 = vrot.slane %v1724, 7
      %v2616 = vrot.slane %v2615, 2
      %v2617 = vrot.slane %v1732, 7
      %v2618 = vrot.slane %v2617, 2
      %v2619 = vrot.slane %v1731, 7
      %v2620 = vrot.slane %v2619, 2
      %v2621 = vrot.slane %v1733, 7
      %v2622 = vrot.slane %v2621, 2
      %v2623 = vrot.slane %v1741, 7
      %v2624 = vrot.slane %v2623, 2
      %v2625 = vrot.slane %v1749, 7
      %v2626 = vrot.slane %v2625, 2
      %v2627 = vrot.slane %v1748, 7
      %v2628 = vrot.slane %v2627, 2
      %v2629 = vrot.slane %v1750, 7
      %v2630 = vrot.slane %v2629, 2
      %v2631 = vrot.slane %v1758, 7
      %v2632 = vrot.slane %v2631, 2
      %v2633 = vrot.slane %v1766, 7
      %v2634 = vrot.slane %v2633, 2
      %v2635 = vrot.slane %v1765, 7
      %v2636 = vrot.slane %v2635, 2
      %v2637 = vrot.slane %v1767, 7
      %v2638 = vrot.slane %v2637, 2
      %v2639 = vrot.slane %v1774, 7
      %v2640 = vrot.slane %v2639, 2
      %v2641 = vrot.slane %v1775, 7
      %v2642 = vrot.slane %v2641, 2
      %v2643 = vrot.slane %v1783, 7
      %v2644 = vrot.slane %v2643, 2
      %v2645 = vrot.slane %v1791, 7
      %v2646 = vrot.slane %v2645, 2
      %v2647 = vrot.slane %v1790, 7
      %v2648 = vrot.slane %v2647, 2
      %v2649 = vrot.slane %v1792, 7
      %v2650 = vrot.slane %v2649, 2
      %v2651 = vrot.slane %v1800, 7
      %v2652 = vrot.slane %v2651, 2
      %v2653 = vrot.slane %v1808, 7
      %v2654 = vrot.slane %v2653, 2
      %v2655 = vrot.slane %v1807, 7
      %v2656 = vrot.slane %v2655, 2
      %v2657 = vrot.slane %v1809, 7
      %v2658 = vrot.slane %v2657, 2
      %v2659 = vrot.slane %v1817, 7
      %v2660 = vrot.slane %v2659, 2
      %v2661 = vrot.slane %v1825, 7
      %v2662 = vrot.slane %v2661, 2
      %v2663 = vrot.slane %v1824, 7
      %v2664 = vrot.slane %v2663, 2
      %v2665 = vrot.slane %v1826, 7
      %v2666 = vrot.slane %v2665, 2
      %v2667 = vrot.slane %v1833, 7
      %v2668 = vrot.slane %v2667, 2
      %v2669 = vrot.slane %v1834, 7
      %v2670 = vrot.slane %v2669, 2
      %v2671 = vrot.slane %v1842, 7
      %v2672 = vrot.slane %v2671, 2
      %v2673 = vrot.slane %v1850, 7
      %v2674 = vrot.slane %v2673, 2
      %v2675 = vrot.slane %v1849, 7
      %v2676 = vrot.slane %v2675, 2
      %v2677 = vrot.slane %v1851, 7
      %v2678 = vrot.slane %v2677, 2
      %v2679 = vrot.slane %v1859, 7
      %v2680 = vrot.slane %v2679, 2
      %v2681 = vrot.slane %v1867, 7
      %v2682 = vrot.slane %v2681, 2
      %v2683 = vrot.slane %v1866, 7
      %v2684 = vrot.slane %v2683, 2
      %v2685 = vrot.slane %v1868, 7
      %v2686 = vrot.slane %v2685, 2
      %v2687 = vrot.slane %v1876, 7
      %v2688 = vrot.slane %v2687, 2
      %v2689 = vrot.slane %v1884, 7
      %v2690 = vrot.slane %v2689, 2
      %v2691 = vrot.slane %v1883, 7
      %v2692 = vrot.slane %v2691, 2
      %v2693 = vrot.slane %v1885, 7
      %v2694 = vrot.slane %v2693, 2
      %v2695 = vrot.slane %v1892, 7
      %v2696 = vrot.slane %v2695, 2
      %v2697 = vrot.slane %v1893, 7
      %v2698 = vrot.slane %v2697, 2
      %v2699 = vrot.slane %v1901, 7
      %v2700 = vrot.slane %v2699, 2
      %v2701 = vrot.slane %v1909, 7
      %v2702 = vrot.slane %v2701, 2
      %v2703 = vrot.slane %v1908, 7
      %v2704 = vrot.slane %v2703, 2
      %v2705 = vrot.slane %v1910, 7
      %v2706 = vrot.slane %v2705, 2
      %v2707 = vrot.slane %v1918, 7
      %v2708 = vrot.slane %v2707, 2
      %v2709 = vrot.slane %v1926, 7
      %v2710 = vrot.slane %v2709, 2
      %v2711 = vrot.slane %v1925, 7
      %v2712 = vrot.slane %v2711, 2
      %v2713 = vrot.slane %v1927, 7
      %v2714 = vrot.slane %v2713, 2
      %v2715 = vrot.slane %v1935, 7
      %v2716 = vrot.slane %v2715, 2
      %v2717 = vrot.slane %v1943, 7
      %v2718 = vrot.slane %v2717, 2
      %v2719 = vrot.slane %v1942, 7
      %v2720 = vrot.slane %v2719, 2
      %v2721 = vrot.slane %v1944, 7
      %v2722 = vrot.slane %v2721, 2
      %v2723 = vrot.slane %v1951, 7
      %v2724 = vrot.slane %v2723, 2
      %v2725 = vrot.slane %v1952, 7
      %v2726 = vrot.slane %v2725, 2
      %v2727 = vrot.slane %v1960, 7
      %v2728 = vrot.slane %v2727, 2
      %v2729 = vrot.slane %v1968, 7
      %v2730 = vrot.slane %v2729, 2
      %v2731 = vrot.slane %v1967, 7
      %v2732 = vrot.slane %v2731, 2
      %v2733 = vrot.slane %v1969, 7
      %v2734 = vrot.slane %v2733, 2
      %v2735 = vrot.slane %v1977, 7
      %v2736 = vrot.slane %v2735, 2
      %v2737 = vrot.slane %v1985, 7
      %v2738 = vrot.slane %v2737, 2
      %v2739 = vrot.slane %v1984, 7
      %v2740 = vrot.slane %v2739, 2
      %v2741 = vrot.slane %v1986, 7
      %v2742 = vrot.slane %v2741, 2
      %v2743 = vrot.slane %v1994, 7
      %v2744 = vrot.slane %v2743, 2
      %v2745 = vrot.slane %v2002, 7
      %v2746 = vrot.slane %v2745, 2
      %v2747 = vrot.slane %v2001, 7
      %v2748 = vrot.slane %v2747, 2
      %v2749 = vrot.slane %v2003, 7
      %v2750 = vrot.slane %v2749, 2
      %v2751 = vrot.slane %v2010, 7
      %v2752 = vrot.slane %v2751, 2
      %v2753 = vrot.slane %v2011, 7
      %v2754 = vrot.slane %v2753, 2
      %v2755 = vrot.slane %v2019, 7
      %v2756 = vrot.slane %v2755, 2
      %v2757 = vrot.slane %v2027, 7
      %v2758 = vrot.slane %v2757, 2
      %v2759 = vrot.slane %v2026, 7
      %v2760 = vrot.slane %v2759, 2
      %v2761 = vrot.slane %v2028, 7
      %v2762 = vrot.slane %v2761, 2
      %v2763 = vrot.slane %v2036, 7
      %v2764 = vrot.slane %v2763, 2
      %v2765 = vrot.slane %v2044, 7
      %v2766 = vrot.slane %v2765, 2
      %v2767 = vrot.slane %v2043, 7
      %v2768 = vrot.slane %v2767, 2
      %v2769 = vrot.slane %v2045, 7
      %v2770 = vrot.slane %v2769, 2
      %v2771 = vrot.slane %v2053, 7
      %v2772 = vrot.slane %v2771, 2
      %v2773 = vrot.slane %v2061, 7
      %v2774 = vrot.slane %v2773, 2
      %v2775 = vrot.slane %v2060, 7
      %v2776 = vrot.slane %v2775, 2
      %v2777 = vrot.slane %v2062, 7
      %v2778 = vrot.slane %v2777, 2
      %v2779 = vrot.slane %v2069, 7
      %v2780 = vrot.slane %v2779, 2
      %v2781 = vrot.slane %v2070, 7
      %v2782 = vrot.slane %v2781, 2
      %v2783 = vrot.slane %v2078, 7
      %v2784 = vrot.slane %v2783, 2
      %v2785 = vrot.slane %v2086, 7
      %v2786 = vrot.slane %v2785, 2
      %v2787 = vrot.slane %v2085, 7
      %v2788 = vrot.slane %v2787, 2
      %v2789 = vrot.slane %v2087, 7
      %v2790 = vrot.slane %v2789, 2
      %v2791 = vrot.slane %v2095, 7
      %v2792 = vrot.slane %v2791, 2
      %v2793 = vrot.slane %v2103, 7
      %v2794 = vrot.slane %v2793, 2
      %v2795 = vrot.slane %v2102, 7
      %v2796 = vrot.slane %v2795, 2
      %v2797 = vrot.slane %v2104, 7
      %v2798 = vrot.slane %v2797, 2
      %v2799 = vrot.slane %v2112, 7
      %v2800 = vrot.slane %v2799, 2
      %v2801 = vrot.slane %v2120, 7
      %v2802 = vrot.slane %v2801, 2
      %v2803 = vrot.slane %v2119, 7
      %v2804 = vrot.slane %v2803, 2
      %v2805 = vrot.slane %v2121, 7
      %v2806 = vrot.slane %v2805, 2
      %v2807 = vrot.slane %v2128, 7
      %v2808 = vrot.slane %v2807, 2
      %v2809 = vrot.slane %v2129, 7
      %v2810 = vrot.slane %v2809, 2
      %v2811 = vrot.slane %v2137, 7
      %v2812 = vrot.slane %v2811, 2
      %v2813 = vrot.slane %v2145, 7
      %v2814 = vrot.slane %v2813, 2
      %v2815 = vrot.slane %v2144, 7
      %v2816 = vrot.slane %v2815, 2
      %v2817 = vrot.slane %v2146, 7
      %v2818 = vrot.slane %v2817, 2
      %v2819 = vrot.slane %v2154, 7
      %v2820 = vrot.slane %v2819, 2
      %v2821 = vrot.slane %v2162, 7
      %v2822 = vrot.slane %v2821, 2
      %v2823 = vrot.slane %v2161, 7
      %v2824 = vrot.slane %v2823, 2
      %v2825 = vrot.slane %v2163, 7
      %v2826 = vrot.slane %v2825, 2
      %v2827 = vrot.slane %v2171, 7
      %v2828 = vrot.slane %v2827, 2
      %v2829 = vrot.slane %v2179, 7
      %v2830 = vrot.slane %v2829, 2
      %v2831 = vrot.slane %v2178, 7
      %v2832 = vrot.slane %v2831, 2
      %v2833 = vrot.slane %v2180, 7
      %v2834 = vrot.slane %v2833, 2
      %v2835 = vrot.slane %v2187, 7
      %v2836 = vrot.slane %v2835, 2
      %v2837 = vrot.slane %v2188, 7
      %v2838 = vrot.slane %v2837, 2
      %v2839 = vrot.slane %v2196, 7
      %v2840 = vrot.slane %v2839, 2
      %v2841 = vrot.slane %v2204, 7
      %v2842 = vrot.slane %v2841, 2
      %v2843 = vrot.slane %v2203, 7
      %v2844 = vrot.slane %v2843, 2
      %v2845 = vrot.slane %v2205, 7
      %v2846 = vrot.slane %v2845, 2
      %v2847 = vrot.slane %v2213, 7
      %v2848 = vrot.slane %v2847, 2
      %v2849 = vrot.slane %v2221, 7
      %v2850 = vrot.slane %v2849, 2
      %v2851 = vrot.slane %v2220, 7
      %v2852 = vrot.slane %v2851, 2
      %v2853 = vrot.slane %v2222, 7
      %v2854 = vrot.slane %v2853, 2
      %v2855 = vrot.slane %v2230, 7
      %v2856 = vrot.slane %v2855, 2
      %v2857 = vrot.slane %v2238, 7
      %v2858 = vrot.slane %v2857, 2
      %v2859 = vrot.slane %v2237, 7
      %v2860 = vrot.slane %v2859, 2
      %v2861 = vrot.slane %v2239, 7
      %v2862 = vrot.slane %v2861, 2
      %v2863 = vrot.slane %v2246, 7
      %v2864 = vrot.slane %v2863, 2
      %v2865 = vrot.slane %v2247, 7
      %v2866 = vrot.slane %v2865, 2
      %v2867 = vrot.slane %v2255, 7
      %v2868 = vrot.slane %v2867, 2
      %v2869 = vrot.slane %v2263, 7
      %v2870 = vrot.slane %v2869, 2
      %v2871 = vrot.slane %v2262, 7
      %v2872 = vrot.slane %v2871, 2
      %v2873 = vrot.slane %v2264, 7
      %v2874 = vrot.slane %v2873, 2
      %v2875 = vrot.slane %v2272, 7
      %v2876 = vrot.slane %v2875, 2
      %v2877 = vrot.slane %v2280, 7
      %v2878 = vrot.slane %v2877, 2
      %v2879 = vrot.slane %v2279, 7
      %v2880 = vrot.slane %v2879, 2
      %v2881 = vrot.slane %v2281, 7
      %v2882 = vrot.slane %v2881, 2
      %v2883 = vrot.slane %v2289, 7
      %v2884 = vrot.slane %v2883, 2
      %v2885 = vrot.slane %v2297, 7
      %v2886 = vrot.slane %v2885, 2
      %v2887 = vrot.slane %v2296, 7
      %v2888 = vrot.slane %v2887, 2
      %v2889 = vrot.slane %v2298, 7
      %v2890 = vrot.slane %v2889, 2
      %v2891 = vrot.slane %v2305, 7
      %v2892 = vrot.slane %v2891, 2
      %v2893 = vrot.slane %v2306, 7
      %v2894 = vrot.slane %v2893, 2
      %v3091 = vmax.f32 %v1488, %v2504
      %v3092 = vmax.f32 %v1496, %v2506
      %v3093 = vmax.f32 %v1495, %v2508
      %v3094 = vmax.f32 %v1497, %v2510
      %v3095 = vmax.f32 %v1505, %v2512
      %v3096 = vmax.f32 %v1513, %v2514
      %v3097 = vmax.f32 %v1512, %v2516
      %v3098 = vmax.f32 %v1514, %v2518
      %v3099 = vmax.f32 %v1522, %v2520
      %v3100 = vmax.f32 %v1530, %v2522
      %v3101 = vmax.f32 %v1529, %v2524
      %v3102 = vmax.f32 %v1531, %v2526
      %v3103 = vmax.f32 %v1538, %v2528
      %v3104 = vmax.f32 %v1539, %v2530
      %v3105 = vmax.f32 %v1547, %v2532
      %v3106 = vmax.f32 %v1555, %v2534
      %v3107 = vmax.f32 %v1554, %v2536
      %v3108 = vmax.f32 %v1556, %v2538
      %v3109 = vmax.f32 %v1564, %v2540
      %v3110 = vmax.f32 %v1572, %v2542
      %v3111 = vmax.f32 %v1571, %v2544
      %v3112 = vmax.f32 %v1573, %v2546
      %v3113 = vmax.f32 %v1581, %v2548
      %v3114 = vmax.f32 %v1589, %v2550
      %v3115 = vmax.f32 %v1588, %v2552
      %v3116 = vmax.f32 %v1590, %v2554
      %v3117 = vmax.f32 %v1597, %v2556
      %v3118 = vmax.f32 %v1598, %v2558
      %v3119 = vmax.f32 %v1606, %v2560
      %v3120 = vmax.f32 %v1614, %v2562
      %v3121 = vmax.f32 %v1613, %v2564
      %v3122 = vmax.f32 %v1615, %v2566
      %v3123 = vmax.f32 %v1623, %v2568
      %v3124 = vmax.f32 %v1631, %v2570
      %v3125 = vmax.f32 %v1630, %v2572
      %v3126 = vmax.f32 %v1632, %v2574
      %v3127 = vmax.f32 %v1640, %v2576
      %v3128 = vmax.f32 %v1648, %v2578
      %v3129 = vmax.f32 %v1647, %v2580
      %v3130 = vmax.f32 %v1649, %v2582
      %v3131 = vmax.f32 %v1656, %v2584
      %v3132 = vmax.f32 %v1657, %v2586
      %v3133 = vmax.f32 %v1665, %v2588
      %v3134 = vmax.f32 %v1673, %v2590
      %v3135 = vmax.f32 %v1672, %v2592
      %v3136 = vmax.f32 %v1674, %v2594
      %v3137 = vmax.f32 %v1682, %v2596
      %v3138 = vmax.f32 %v1690, %v2598
      %v3139 = vmax.f32 %v1689, %v2600
      %v3140 = vmax.f32 %v1691, %v2602
      %v3141 = vmax.f32 %v1699, %v2604
      %v3142 = vmax.f32 %v1707, %v2606
      %v3143 = vmax.f32 %v1706, %v2608
      %v3144 = vmax.f32 %v1708, %v2610
      %v3145 = vmax.f32 %v1715, %v2612
      %v3146 = vmax.f32 %v1716, %v2614
      %v3147 = vmax.f32 %v1724, %v2616
      %v3148 = vmax.f32 %v1732, %v2618
      %v3149 = vmax.f32 %v1731, %v2620
      %v3150 = vmax.f32 %v1733, %v2622
      %v3151 = vmax.f32 %v1741, %v2624
      %v3152 = vmax.f32 %v1749, %v2626
      %v3153 = vmax.f32 %v1748, %v2628
      %v3154 = vmax.f32 %v1750, %v2630
      %v3155 = vmax.f32 %v1758, %v2632
      %v3156 = vmax.f32 %v1766, %v2634
      %v3157 = vmax.f32 %v1765, %v2636
      %v3158 = vmax.f32 %v1767, %v2638
      %v3159 = vmax.f32 %v1774, %v2640
      %v3160 = vmax.f32 %v1775, %v2642
      %v3161 = vmax.f32 %v1783, %v2644
      %v3162 = vmax.f32 %v1791, %v2646
      %v3163 = vmax.f32 %v1790, %v2648
      %v3164 = vmax.f32 %v1792, %v2650
      %v3165 = vmax.f32 %v1800, %v2652
      %v3166 = vmax.f32 %v1808, %v2654
      %v3167 = vmax.f32 %v1807, %v2656
      %v3168 = vmax.f32 %v1809, %v2658
      %v3169 = vmax.f32 %v1817, %v2660
      %v3170 = vmax.f32 %v1825, %v2662
      %v3171 = vmax.f32 %v1824, %v2664
      %v3172 = vmax.f32 %v1826, %v2666
      %v3173 = vmax.f32 %v1833, %v2668
      %v3174 = vmax.f32 %v1834, %v2670
      %v3175 = vmax.f32 %v1842, %v2672
      %v3176 = vmax.f32 %v1850, %v2674
      %v3177 = vmax.f32 %v1849, %v2676
      %v3178 = vmax.f32 %v1851, %v2678
      %v3179 = vmax.f32 %v1859, %v2680
      %v3180 = vmax.f32 %v1867, %v2682
      %v3181 = vmax.f32 %v1866, %v2684
      %v3182 = vmax.f32 %v1868, %v2686
      %v3183 = vmax.f32 %v1876, %v2688
      %v3184 = vmax.f32 %v1884, %v2690
      %v3185 = vmax.f32 %v1883, %v2692
      %v3186 = vmax.f32 %v1885, %v2694
      %v3187 = vmax.f32 %v1892, %v2696
      %v3188 = vmax.f32 %v1893, %v2698
      %v3189 = vmax.f32 %v1901, %v2700
      %v3190 = vmax.f32 %v1909, %v2702
      %v3191 = vmax.f32 %v1908, %v2704
      %v3192 = vmax.f32 %v1910, %v2706
      %v3193 = vmax.f32 %v1918, %v2708
      %v3194 = vmax.f32 %v1926, %v2710
      %v3195 = vmax.f32 %v1925, %v2712
      %v3196 = vmax.f32 %v1927, %v2714
      %v3197 = vmax.f32 %v1935, %v2716
      %v3198 = vmax.f32 %v1943, %v2718
      %v3199 = vmax.f32 %v1942, %v2720
      %v3200 = vmax.f32 %v1944, %v2722
      %v3201 = vmax.f32 %v1951, %v2724
      %v3202 = vmax.f32 %v1952, %v2726
      %v3203 = vmax.f32 %v1960, %v2728
      %v3204 = vmax.f32 %v1968, %v2730
      %v3205 = vmax.f32 %v1967, %v2732
      %v3206 = vmax.f32 %v1969, %v2734
      %v3207 = vmax.f32 %v1977, %v2736
      %v3208 = vmax.f32 %v1985, %v2738
      %v3209 = vmax.f32 %v1984, %v2740
      %v3210 = vmax.f32 %v1986, %v2742
      %v3211 = vmax.f32 %v1994, %v2744
      %v3212 = vmax.f32 %v2002, %v2746
      %v3213 = vmax.f32 %v2001, %v2748
      %v3214 = vmax.f32 %v2003, %v2750
      %v3215 = vmax.f32 %v2010, %v2752
      %v3216 = vmax.f32 %v2011, %v2754
      %v3217 = vmax.f32 %v2019, %v2756
      %v3218 = vmax.f32 %v2027, %v2758
      %v3219 = vmax.f32 %v2026, %v2760
      %v3220 = vmax.f32 %v2028, %v2762
      %v3221 = vmax.f32 %v2036, %v2764
      %v3222 = vmax.f32 %v2044, %v2766
      %v3223 = vmax.f32 %v2043, %v2768
      %v3224 = vmax.f32 %v2045, %v2770
      %v3225 = vmax.f32 %v2053, %v2772
      %v3226 = vmax.f32 %v2061, %v2774
      %v3227 = vmax.f32 %v2060, %v2776
      %v3228 = vmax.f32 %v2062, %v2778
      %v3229 = vmax.f32 %v2069, %v2780
      %v3230 = vmax.f32 %v2070, %v2782
      %v3231 = vmax.f32 %v2078, %v2784
      %v3232 = vmax.f32 %v2086, %v2786
      %v3233 = vmax.f32 %v2085, %v2788
      %v3234 = vmax.f32 %v2087, %v2790
      %v3235 = vmax.f32 %v2095, %v2792
      %v3236 = vmax.f32 %v2103, %v2794
      %v3237 = vmax.f32 %v2102, %v2796
      %v3238 = vmax.f32 %v2104, %v2798
      %v3239 = vmax.f32 %v2112, %v2800
      %v3240 = vmax.f32 %v2120, %v2802
      %v3241 = vmax.f32 %v2119, %v2804
      %v3242 = vmax.f32 %v2121, %v2806
      %v3243 = vmax.f32 %v2128, %v2808
      %v3244 = vmax.f32 %v2129, %v2810
      %v3245 = vmax.f32 %v2137, %v2812
      %v3246 = vmax.f32 %v2145, %v2814
      %v3247 = vmax.f32 %v2144, %v2816
      %v3248 = vmax.f32 %v2146, %v2818
      %v3249 = vmax.f32 %v2154, %v2820
      %v3250 = vmax.f32 %v2162, %v2822
      %v3251 = vmax.f32 %v2161, %v2824
      %v3252 = vmax.f32 %v2163, %v2826
      %v3253 = vmax.f32 %v2171, %v2828
      %v3254 = vmax.f32 %v2179, %v2830
      %v3255 = vmax.f32 %v2178, %v2832
      %v3256 = vmax.f32 %v2180, %v2834
      %v3257 = vmax.f32 %v2187, %v2836
      %v3258 = vmax.f32 %v2188, %v2838
      %v3259 = vmax.f32 %v2196, %v2840
      %v3260 = vmax.f32 %v2204, %v2842
      %v3261 = vmax.f32 %v2203, %v2844
      %v3262 = vmax.f32 %v2205, %v2846
      %v3263 = vmax.f32 %v2213, %v2848
      %v3264 = vmax.f32 %v2221, %v2850
      %v3265 = vmax.f32 %v2220, %v2852
      %v3266 = vmax.f32 %v2222, %v2854
      %v3267 = vmax.f32 %v2230, %v2856
      %v3268 = vmax.f32 %v2238, %v2858
      %v3269 = vmax.f32 %v2237, %v2860
      %v3270 = vmax.f32 %v2239, %v2862
      %v3271 = vmax.f32 %v2246, %v2864
      %v3272 = vmax.f32 %v2247, %v2866
      %v3273 = vmax.f32 %v2255, %v2868
      %v3274 = vmax.f32 %v2263, %v2870
      %v3275 = vmax.f32 %v2262, %v2872
      %v3276 = vmax.f32 %v2264, %v2874
      %v3277 = vmax.f32 %v2272, %v2876
      %v3278 = vmax.f32 %v2280, %v2878
      %v3279 = vmax.f32 %v2279, %v2880
      %v3280 = vmax.f32 %v2281, %v2882
      %v3281 = vmax.f32 %v2289, %v2884
      %v3282 = vmax.f32 %v2297, %v2886
      %v3283 = vmax.f32 %v2296, %v2888
      %v3284 = vmax.f32 %v2298, %v2890
      %v3285 = vmax.f32 %v2305, %v2892
      %v3286 = vmax.f32 %v2306, %v2894
      %v3287 = vpack.c.bf16 %v3091, %v3091
      %v3288 = vpack.c.bf16 %v3092, %v3092
      %v3289 = vpack.c.bf16 %v3093, %v3093
      %v3290 = vpack.c.bf16 %v3094, %v3094
      %v3291 = vpack.c.bf16 %v3095, %v3095
      %v3292 = vpack.c.bf16 %v3096, %v3096
      %v3293 = vpack.c.bf16 %v3097, %v3097
      %v3294 = vpack.c.bf16 %v3098, %v3098
      %v3295 = vpack.c.bf16 %v3099, %v3099
      %v3296 = vpack.c.bf16 %v3100, %v3100
      %v3297 = vpack.c.bf16 %v3101, %v3101
      %v3298 = vpack.c.bf16 %v3102, %v3102
      %v3299 = vpack.c.bf16 %v3103, %v3103
      %v3300 = vpack.c.bf16 %v3104, %v3104
      %v3301 = vpack.c.bf16 %v3105, %v3105
      %v3302 = vpack.c.bf16 %v3106, %v3106
      %v3303 = vpack.c.bf16 %v3107, %v3107
      %v3304 = vpack.c.bf16 %v3108, %v3108
      %v3305 = vpack.c.bf16 %v3109, %v3109
      %v3306 = vpack.c.bf16 %v3110, %v3110
      %v3307 = vpack.c.bf16 %v3111, %v3111
      %v3308 = vpack.c.bf16 %v3112, %v3112
      %v3309 = vpack.c.bf16 %v3113, %v3113
      %v3310 = vpack.c.bf16 %v3114, %v3114
      %v3311 = vpack.c.bf16 %v3115, %v3115
      %v3312 = vpack.c.bf16 %v3116, %v3116
      %v3313 = vpack.c.bf16 %v3117, %v3117
      %v3314 = vpack.c.bf16 %v3118, %v3118
      %v3315 = vpack.c.bf16 %v3119, %v3119
      %v3316 = vpack.c.bf16 %v3120, %v3120
      %v3317 = vpack.c.bf16 %v3121, %v3121
      %v3318 = vpack.c.bf16 %v3122, %v3122
      %v3319 = vpack.c.bf16 %v3123, %v3123
      %v3320 = vpack.c.bf16 %v3124, %v3124
      %v3321 = vpack.c.bf16 %v3125, %v3125
      %v3322 = vpack.c.bf16 %v3126, %v3126
      %v3323 = vpack.c.bf16 %v3127, %v3127
      %v3324 = vpack.c.bf16 %v3128, %v3128
      %v3325 = vpack.c.bf16 %v3129, %v3129
      %v3326 = vpack.c.bf16 %v3130, %v3130
      %v3327 = vpack.c.bf16 %v3131, %v3131
      %v3328 = vpack.c.bf16 %v3132, %v3132
      %v3329 = vpack.c.bf16 %v3133, %v3133
      %v3330 = vpack.c.bf16 %v3134, %v3134
      %v3331 = vpack.c.bf16 %v3135, %v3135
      %v3332 = vpack.c.bf16 %v3136, %v3136
      %v3333 = vpack.c.bf16 %v3137, %v3137
      %v3334 = vpack.c.bf16 %v3138, %v3138
      %v3335 = vpack.c.bf16 %v3139, %v3139
      %v3336 = vpack.c.bf16 %v3140, %v3140
      %v3337 = vpack.c.bf16 %v3141, %v3141
      %v3338 = vpack.c.bf16 %v3142, %v3142
      %v3339 = vpack.c.bf16 %v3143, %v3143
      %v3340 = vpack.c.bf16 %v3144, %v3144
      %v3341 = vpack.c.bf16 %v3145, %v3145
      %v3342 = vpack.c.bf16 %v3146, %v3146
      %v3343 = vpack.c.bf16 %v3147, %v3147
      %v3344 = vpack.c.bf16 %v3148, %v3148
      %v3345 = vpack.c.bf16 %v3149, %v3149
      %v3346 = vpack.c.bf16 %v3150, %v3150
      %v3347 = vpack.c.bf16 %v3151, %v3151
      %v3348 = vpack.c.bf16 %v3152, %v3152
      %v3349 = vpack.c.bf16 %v3153, %v3153
      %v3350 = vpack.c.bf16 %v3154, %v3154
      %v3351 = vpack.c.bf16 %v3155, %v3155
      %v3352 = vpack.c.bf16 %v3156, %v3156
      %v3353 = vpack.c.bf16 %v3157, %v3157
      %v3354 = vpack.c.bf16 %v3158, %v3158
      %v3355 = vpack.c.bf16 %v3159, %v3159
      %v3356 = vpack.c.bf16 %v3160, %v3160
      %v3357 = vpack.c.bf16 %v3161, %v3161
      %v3358 = vpack.c.bf16 %v3162, %v3162
      %v3359 = vpack.c.bf16 %v3163, %v3163
      %v3360 = vpack.c.bf16 %v3164, %v3164
      %v3361 = vpack.c.bf16 %v3165, %v3165
      %v3362 = vpack.c.bf16 %v3166, %v3166
      %v3363 = vpack.c.bf16 %v3167, %v3167
      %v3364 = vpack.c.bf16 %v3168, %v3168
      %v3365 = vpack.c.bf16 %v3169, %v3169
      %v3366 = vpack.c.bf16 %v3170, %v3170
      %v3367 = vpack.c.bf16 %v3171, %v3171
      %v3368 = vpack.c.bf16 %v3172, %v3172
      %v3369 = vpack.c.bf16 %v3173, %v3173
      %v3370 = vpack.c.bf16 %v3174, %v3174
      %v3371 = vpack.c.bf16 %v3175, %v3175
      %v3372 = vpack.c.bf16 %v3176, %v3176
      %v3373 = vpack.c.bf16 %v3177, %v3177
      %v3374 = vpack.c.bf16 %v3178, %v3178
      %v3375 = vpack.c.bf16 %v3179, %v3179
      %v3376 = vpack.c.bf16 %v3180, %v3180
      %v3377 = vpack.c.bf16 %v3181, %v3181
      %v3378 = vpack.c.bf16 %v3182, %v3182
      %v3379 = vpack.c.bf16 %v3183, %v3183
      %v3380 = vpack.c.bf16 %v3184, %v3184
      %v3381 = vpack.c.bf16 %v3185, %v3185
      %v3382 = vpack.c.bf16 %v3186, %v3186
      %v3383 = vpack.c.bf16 %v3187, %v3187
      %v3384 = vpack.c.bf16 %v3188, %v3188
      %v3385 = vpack.c.bf16 %v3189, %v3189
      %v3386 = vpack.c.bf16 %v3190, %v3190
      %v3387 = vpack.c.bf16 %v3191, %v3191
      %v3388 = vpack.c.bf16 %v3192, %v3192
      %v3389 = vpack.c.bf16 %v3193, %v3193
      %v3390 = vpack.c.bf16 %v3194, %v3194
      %v3391 = vpack.c.bf16 %v3195, %v3195
      %v3392 = vpack.c.bf16 %v3196, %v3196
      %v3393 = vpack.c.bf16 %v3197, %v3197
      %v3394 = vpack.c.bf16 %v3198, %v3198
      %v3395 = vpack.c.bf16 %v3199, %v3199
      %v3396 = vpack.c.bf16 %v3200, %v3200
      %v3397 = vpack.c.bf16 %v3201, %v3201
      %v3398 = vpack.c.bf16 %v3202, %v3202
      %v3399 = vpack.c.bf16 %v3203, %v3203
      %v3400 = vpack.c.bf16 %v3204, %v3204
      %v3401 = vpack.c.bf16 %v3205, %v3205
      %v3402 = vpack.c.bf16 %v3206, %v3206
      %v3403 = vpack.c.bf16 %v3207, %v3207
      %v3404 = vpack.c.bf16 %v3208, %v3208
      %v3405 = vpack.c.bf16 %v3209, %v3209
      %v3406 = vpack.c.bf16 %v3210, %v3210
      %v3407 = vpack.c.bf16 %v3211, %v3211
      %v3408 = vpack.c.bf16 %v3212, %v3212
      %v3409 = vpack.c.bf16 %v3213, %v3213
      %v3410 = vpack.c.bf16 %v3214, %v3214
      %v3411 = vpack.c.bf16 %v3215, %v3215
      %v3412 = vpack.c.bf16 %v3216, %v3216
      %v3413 = vpack.c.bf16 %v3217, %v3217
      %v3414 = vpack.c.bf16 %v3218, %v3218
      %v3415 = vpack.c.bf16 %v3219, %v3219
      %v3416 = vpack.c.bf16 %v3220, %v3220
      %v3417 = vpack.c.bf16 %v3221, %v3221
      %v3418 = vpack.c.bf16 %v3222, %v3222
      %v3419 = vpack.c.bf16 %v3223, %v3223
      %v3420 = vpack.c.bf16 %v3224, %v3224
      %v3421 = vpack.c.bf16 %v3225, %v3225
      %v3422 = vpack.c.bf16 %v3226, %v3226
      %v3423 = vpack.c.bf16 %v3227, %v3227
      %v3424 = vpack.c.bf16 %v3228, %v3228
      %v3425 = vpack.c.bf16 %v3229, %v3229
      %v3426 = vpack.c.bf16 %v3230, %v3230
      %v3427 = vpack.c.bf16 %v3231, %v3231
      %v3428 = vpack.c.bf16 %v3232, %v3232
      %v3429 = vpack.c.bf16 %v3233, %v3233
      %v3430 = vpack.c.bf16 %v3234, %v3234
      %v3431 = vpack.c.bf16 %v3235, %v3235
      %v3432 = vpack.c.bf16 %v3236, %v3236
      %v3433 = vpack.c.bf16 %v3237, %v3237
      %v3434 = vpack.c.bf16 %v3238, %v3238
      %v3435 = vpack.c.bf16 %v3239, %v3239
      %v3436 = vpack.c.bf16 %v3240, %v3240
      %v3437 = vpack.c.bf16 %v3241, %v3241
      %v3438 = vpack.c.bf16 %v3242, %v3242
      %v3439 = vpack.c.bf16 %v3243, %v3243
      %v3440 = vpack.c.bf16 %v3244, %v3244
      %v3441 = vpack.c.bf16 %v3245, %v3245
      %v3442 = vpack.c.bf16 %v3246, %v3246
      %v3443 = vpack.c.bf16 %v3247, %v3247
      %v3444 = vpack.c.bf16 %v3248, %v3248
      %v3445 = vpack.c.bf16 %v3249, %v3249
      %v3446 = vpack.c.bf16 %v3250, %v3250
      %v3447 = vpack.c.bf16 %v3251, %v3251
      %v3448 = vpack.c.bf16 %v3252, %v3252
      %v3449 = vpack.c.bf16 %v3253, %v3253
      %v3450 = vpack.c.bf16 %v3254, %v3254
      %v3451 = vpack.c.bf16 %v3255, %v3255
      %v3452 = vpack.c.bf16 %v3256, %v3256
      %v3453 = vpack.c.bf16 %v3257, %v3257
      %v3454 = vpack.c.bf16 %v3258, %v3258
      %v3455 = vpack.c.bf16 %v3259, %v3259
      %v3456 = vpack.c.bf16 %v3260, %v3260
      %v3457 = vpack.c.bf16 %v3261, %v3261
      %v3458 = vpack.c.bf16 %v3262, %v3262
      %v3459 = vpack.c.bf16 %v3263, %v3263
      %v3460 = vpack.c.bf16 %v3264, %v3264
      %v3461 = vpack.c.bf16 %v3265, %v3265
      %v3462 = vpack.c.bf16 %v3266, %v3266
      %v3463 = vpack.c.bf16 %v3267, %v3267
      %v3464 = vpack.c.bf16 %v3268, %v3268
      %v3465 = vpack.c.bf16 %v3269, %v3269
      %v3466 = vpack.c.bf16 %v3270, %v3270
      %v3467 = vpack.c.bf16 %v3271, %v3271
      %v3468 = vpack.c.bf16 %v3272, %v3272
      %v3469 = vpack.c.bf16 %v3273, %v3273
      %v3470 = vpack.c.bf16 %v3274, %v3274
      %v3471 = vpack.c.bf16 %v3275, %v3275
      %v3472 = vpack.c.bf16 %v3276, %v3276
      %v3473 = vpack.c.bf16 %v3277, %v3277
      %v3474 = vpack.c.bf16 %v3278, %v3278
      %v3475 = vpack.c.bf16 %v3279, %v3279
      %v3476 = vpack.c.bf16 %v3280, %v3280
      %v3477 = vpack.c.bf16 %v3281, %v3281
      %v3478 = vpack.c.bf16 %v3282, %v3282
      %v3479 = vpack.c.bf16 %v3283, %v3283
      %v3480 = vpack.c.bf16 %v3284, %v3284
      %v3481 = vpack.c.bf16 %v3285, %v3285
      %v3482 = vpack.c.bf16 %v3286, %v3286
      %v3679 = vunpack.c.l.b16 %v3287
      %v3680 = vunpack.c.l.b16 %v3288
      %v3681 = vunpack.c.l.b16 %v3289
      %v3682 = vunpack.c.l.b16 %v3290
      %v3683 = vunpack.c.l.b16 %v3291
      %v3684 = vunpack.c.l.b16 %v3292
      %v3685 = vunpack.c.l.b16 %v3293
      %v3686 = vunpack.c.l.b16 %v3294
      %v3687 = vunpack.c.l.b16 %v3295
      %v3688 = vunpack.c.l.b16 %v3296
      %v3689 = vunpack.c.l.b16 %v3297
      %v3690 = vunpack.c.l.b16 %v3298
      %v3691 = vunpack.c.l.b16 %v3299
      %v3692 = vunpack.c.l.b16 %v3300
      %v3693 = vunpack.c.l.b16 %v3301
      %v3694 = vunpack.c.l.b16 %v3302
      %v3695 = vunpack.c.l.b16 %v3303
      %v3696 = vunpack.c.l.b16 %v3304
      %v3697 = vunpack.c.l.b16 %v3305
      %v3698 = vunpack.c.l.b16 %v3306
      %v3699 = vunpack.c.l.b16 %v3307
      %v3700 = vunpack.c.l.b16 %v3308
      %v3701 = vunpack.c.l.b16 %v3309
      %v3702 = vunpack.c.l.b16 %v3310
      %v3703 = vunpack.c.l.b16 %v3311
      %v3704 = vunpack.c.l.b16 %v3312
      %v3705 = vunpack.c.l.b16 %v3313
      %v3706 = vunpack.c.l.b16 %v3314
      %v3707 = vunpack.c.l.b16 %v3315
      %v3708 = vunpack.c.l.b16 %v3316
      %v3709 = vunpack.c.l.b16 %v3317
      %v3710 = vunpack.c.l.b16 %v3318
      %v3711 = vunpack.c.l.b16 %v3319
      %v3712 = vunpack.c.l.b16 %v3320
      %v3713 = vunpack.c.l.b16 %v3321
      %v3714 = vunpack.c.l.b16 %v3322
      %v3715 = vunpack.c.l.b16 %v3323
      %v3716 = vunpack.c.l.b16 %v3324
      %v3717 = vunpack.c.l.b16 %v3325
      %v3718 = vunpack.c.l.b16 %v3326
      %v3719 = vunpack.c.l.b16 %v3327
      %v3720 = vunpack.c.l.b16 %v3328
      %v3721 = vunpack.c.l.b16 %v3329
      %v3722 = vunpack.c.l.b16 %v3330
      %v3723 = vunpack.c.l.b16 %v3331
      %v3724 = vunpack.c.l.b16 %v3332
      %v3725 = vunpack.c.l.b16 %v3333
      %v3726 = vunpack.c.l.b16 %v3334
      %v3727 = vunpack.c.l.b16 %v3335
      %v3728 = vunpack.c.l.b16 %v3336
      %v3729 = vunpack.c.l.b16 %v3337
      %v3730 = vunpack.c.l.b16 %v3338
      %v3731 = vunpack.c.l.b16 %v3339
      %v3732 = vunpack.c.l.b16 %v3340
      %v3733 = vunpack.c.l.b16 %v3341
      %v3734 = vunpack.c.l.b16 %v3342
      %v3735 = vunpack.c.l.b16 %v3343
      %v3736 = vunpack.c.l.b16 %v3344
      %v3737 = vunpack.c.l.b16 %v3345
      %v3738 = vunpack.c.l.b16 %v3346
      %v3739 = vunpack.c.l.b16 %v3347
      %v3740 = vunpack.c.l.b16 %v3348
      %v3741 = vunpack.c.l.b16 %v3349
      %v3742 = vunpack.c.l.b16 %v3350
      %v3743 = vunpack.c.l.b16 %v3351
      %v3744 = vunpack.c.l.b16 %v3352
      %v3745 = vunpack.c.l.b16 %v3353
      %v3746 = vunpack.c.l.b16 %v3354
      %v3747 = vunpack.c.l.b16 %v3355
      %v3748 = vunpack.c.l.b16 %v3356
      %v3749 = vunpack.c.l.b16 %v3357
      %v3750 = vunpack.c.l.b16 %v3358
      %v3751 = vunpack.c.l.b16 %v3359
      %v3752 = vunpack.c.l.b16 %v3360
      %v3753 = vunpack.c.l.b16 %v3361
      %v3754 = vunpack.c.l.b16 %v3362
      %v3755 = vunpack.c.l.b16 %v3363
      %v3756 = vunpack.c.l.b16 %v3364
      %v3757 = vunpack.c.l.b16 %v3365
      %v3758 = vunpack.c.l.b16 %v3366
      %v3759 = vunpack.c.l.b16 %v3367
      %v3760 = vunpack.c.l.b16 %v3368
      %v3761 = vunpack.c.l.b16 %v3369
      %v3762 = vunpack.c.l.b16 %v3370
      %v3763 = vunpack.c.l.b16 %v3371
      %v3764 = vunpack.c.l.b16 %v3372
      %v3765 = vunpack.c.l.b16 %v3373
      %v3766 = vunpack.c.l.b16 %v3374
      %v3767 = vunpack.c.l.b16 %v3375
      %v3768 = vunpack.c.l.b16 %v3376
      %v3769 = vunpack.c.l.b16 %v3377
      %v3770 = vunpack.c.l.b16 %v3378
      %v3771 = vunpack.c.l.b16 %v3379
      %v3772 = vunpack.c.l.b16 %v3380
      %v3773 = vunpack.c.l.b16 %v3381
      %v3774 = vunpack.c.l.b16 %v3382
      %v3775 = vunpack.c.l.b16 %v3383
      %v3776 = vunpack.c.l.b16 %v3384
      %v3777 = vunpack.c.l.b16 %v3385
      %v3778 = vunpack.c.l.b16 %v3386
      %v3779 = vunpack.c.l.b16 %v3387
      %v3780 = vunpack.c.l.b16 %v3388
      %v3781 = vunpack.c.l.b16 %v3389
      %v3782 = vunpack.c.l.b16 %v3390
      %v3783 = vunpack.c.l.b16 %v3391
      %v3784 = vunpack.c.l.b16 %v3392
      %v3785 = vunpack.c.l.b16 %v3393
      %v3786 = vunpack.c.l.b16 %v3394
      %v3787 = vunpack.c.l.b16 %v3395
      %v3788 = vunpack.c.l.b16 %v3396
      %v3789 = vunpack.c.l.b16 %v3397
      %v3790 = vunpack.c.l.b16 %v3398
      %v3791 = vunpack.c.l.b16 %v3399
      %v3792 = vunpack.c.l.b16 %v3400
      %v3793 = vunpack.c.l.b16 %v3401
      %v3794 = vunpack.c.l.b16 %v3402
      %v3795 = vunpack.c.l.b16 %v3403
      %v3796 = vunpack.c.l.b16 %v3404
      %v3797 = vunpack.c.l.b16 %v3405
      %v3798 = vunpack.c.l.b16 %v3406
      %v3799 = vunpack.c.l.b16 %v3407
      %v3800 = vunpack.c.l.b16 %v3408
      %v3801 = vunpack.c.l.b16 %v3409
      %v3802 = vunpack.c.l.b16 %v3410
      %v3803 = vunpack.c.l.b16 %v3411
      %v3804 = vunpack.c.l.b16 %v3412
      %v3805 = vunpack.c.l.b16 %v3413
      %v3806 = vunpack.c.l.b16 %v3414
      %v3807 = vunpack.c.l.b16 %v3415
      %v3808 = vunpack.c.l.b16 %v3416
      %v3809 = vunpack.c.l.b16 %v3417
      %v3810 = vunpack.c.l.b16 %v3418
      %v3811 = vunpack.c.l.b16 %v3419
      %v3812 = vunpack.c.l.b16 %v3420
      %v3813 = vunpack.c.l.b16 %v3421
      %v3814 = vunpack.c.l.b16 %v3422
      %v3815 = vunpack.c.l.b16 %v3423
      %v3816 = vunpack.c.l.b16 %v3424
      %v3817 = vunpack.c.l.b16 %v3425
      %v3818 = vunpack.c.l.b16 %v3426
      %v3819 = vunpack.c.l.b16 %v3427
      %v3820 = vunpack.c.l.b16 %v3428
      %v3821 = vunpack.c.l.b16 %v3429
      %v3822 = vunpack.c.l.b16 %v3430
      %v3823 = vunpack.c.l.b16 %v3431
      %v3824 = vunpack.c.l.b16 %v3432
      %v3825 = vunpack.c.l.b16 %v3433
      %v3826 = vunpack.c.l.b16 %v3434
      %v3827 = vunpack.c.l.b16 %v3435
      %v3828 = vunpack.c.l.b16 %v3436
      %v3829 = vunpack.c.l.b16 %v3437
      %v3830 = vunpack.c.l.b16 %v3438
      %v3831 = vunpack.c.l.b16 %v3439
      %v3832 = vunpack.c.l.b16 %v3440
      %v3833 = vunpack.c.l.b16 %v3441
      %v3834 = vunpack.c.l.b16 %v3442
      %v3835 = vunpack.c.l.b16 %v3443
      %v3836 = vunpack.c.l.b16 %v3444
      %v3837 = vunpack.c.l.b16 %v3445
      %v3838 = vunpack.c.l.b16 %v3446
      %v3839 = vunpack.c.l.b16 %v3447
      %v3840 = vunpack.c.l.b16 %v3448
      %v3841 = vunpack.c.l.b16 %v3449
      %v3842 = vunpack.c.l.b16 %v3450
      %v3843 = vunpack.c.l.b16 %v3451
      %v3844 = vunpack.c.l.b16 %v3452
      %v3845 = vunpack.c.l.b16 %v3453
      %v3846 = vunpack.c.l.b16 %v3454
      %v3847 = vunpack.c.l.b16 %v3455
      %v3848 = vunpack.c.l.b16 %v3456
      %v3849 = vunpack.c.l.b16 %v3457
      %v3850 = vunpack.c.l.b16 %v3458
      %v3851 = vunpack.c.l.b16 %v3459
      %v3852 = vunpack.c.l.b16 %v3460
      %v3853 = vunpack.c.l.b16 %v3461
      %v3854 = vunpack.c.l.b16 %v3462
      %v3855 = vunpack.c.l.b16 %v3463
      %v3856 = vunpack.c.l.b16 %v3464
      %v3857 = vunpack.c.l.b16 %v3465
      %v3858 = vunpack.c.l.b16 %v3466
      %v3859 = vunpack.c.l.b16 %v3467
      %v3860 = vunpack.c.l.b16 %v3468
      %v3861 = vunpack.c.l.b16 %v3469
      %v3862 = vunpack.c.l.b16 %v3470
      %v3863 = vunpack.c.l.b16 %v3471
      %v3864 = vunpack.c.l.b16 %v3472
      %v3865 = vunpack.c.l.b16 %v3473
      %v3866 = vunpack.c.l.b16 %v3474
      %v3867 = vunpack.c.l.b16 %v3475
      %v3868 = vunpack.c.l.b16 %v3476
      %v3869 = vunpack.c.l.b16 %v3477
      %v3870 = vunpack.c.l.b16 %v3478
      %v3871 = vunpack.c.l.b16 %v3479
      %v3872 = vunpack.c.l.b16 %v3480
      %v3873 = vunpack.c.l.b16 %v3481
      %v3874 = vunpack.c.l.b16 %v3482
      %v3875 = vpack.c.b16 %v3679, %v3679
      %v3876 = vpack.c.b16 %v3680, %v3680
      %v3877 = vpack.c.b16 %v3681, %v3681
      %v3878 = vpack.c.b16 %v3682, %v3682
      %v3879 = vpack.c.b16 %v3683, %v3683
      %v3880 = vpack.c.b16 %v3684, %v3684
      %v3881 = vpack.c.b16 %v3685, %v3685
      %v3882 = vpack.c.b16 %v3686, %v3686
      %v3883 = vpack.c.b16 %v3687, %v3687
      %v3884 = vpack.c.b16 %v3688, %v3688
      %v3885 = vpack.c.b16 %v3689, %v3689
      %v3886 = vpack.c.b16 %v3690, %v3690
      %v3887 = vpack.c.b16 %v3691, %v3691
      %v3888 = vpack.c.b16 %v3692, %v3692
      %v3889 = vpack.c.b16 %v3693, %v3693
      %v3890 = vpack.c.b16 %v3694, %v3694
      %v3891 = vpack.c.b16 %v3695, %v3695
      %v3892 = vpack.c.b16 %v3696, %v3696
      %v3893 = vpack.c.b16 %v3697, %v3697
      %v3894 = vpack.c.b16 %v3698, %v3698
      %v3895 = vpack.c.b16 %v3699, %v3699
      %v3896 = vpack.c.b16 %v3700, %v3700
      %v3897 = vpack.c.b16 %v3701, %v3701
      %v3898 = vpack.c.b16 %v3702, %v3702
      %v3899 = vpack.c.b16 %v3703, %v3703
      %v3900 = vpack.c.b16 %v3704, %v3704
      %v3901 = vpack.c.b16 %v3705, %v3705
      %v3902 = vpack.c.b16 %v3706, %v3706
      %v3903 = vpack.c.b16 %v3707, %v3707
      %v3904 = vpack.c.b16 %v3708, %v3708
      %v3905 = vpack.c.b16 %v3709, %v3709
      %v3906 = vpack.c.b16 %v3710, %v3710
      %v3907 = vpack.c.b16 %v3711, %v3711
      %v3908 = vpack.c.b16 %v3712, %v3712
      %v3909 = vpack.c.b16 %v3713, %v3713
      %v3910 = vpack.c.b16 %v3714, %v3714
      %v3911 = vpack.c.b16 %v3715, %v3715
      %v3912 = vpack.c.b16 %v3716, %v3716
      %v3913 = vpack.c.b16 %v3717, %v3717
      %v3914 = vpack.c.b16 %v3718, %v3718
      %v3915 = vpack.c.b16 %v3719, %v3719
      %v3916 = vpack.c.b16 %v3720, %v3720
      %v3917 = vpack.c.b16 %v3721, %v3721
      %v3918 = vpack.c.b16 %v3722, %v3722
      %v3919 = vpack.c.b16 %v3723, %v3723
      %v3920 = vpack.c.b16 %v3724, %v3724
      %v3921 = vpack.c.b16 %v3725, %v3725
      %v3922 = vpack.c.b16 %v3726, %v3726
      %v3923 = vpack.c.b16 %v3727, %v3727
      %v3924 = vpack.c.b16 %v3728, %v3728
      %v3925 = vpack.c.b16 %v3729, %v3729
      %v3926 = vpack.c.b16 %v3730, %v3730
      %v3927 = vpack.c.b16 %v3731, %v3731
      %v3928 = vpack.c.b16 %v3732, %v3732
      %v3929 = vpack.c.b16 %v3733, %v3733
      %v3930 = vpack.c.b16 %v3734, %v3734
      %v3931 = vpack.c.b16 %v3735, %v3735
      %v3932 = vpack.c.b16 %v3736, %v3736
      %v3933 = vpack.c.b16 %v3737, %v3737
      %v3934 = vpack.c.b16 %v3738, %v3738
      %v3935 = vpack.c.b16 %v3739, %v3739
      %v3936 = vpack.c.b16 %v3740, %v3740
      %v3937 = vpack.c.b16 %v3741, %v3741
      %v3938 = vpack.c.b16 %v3742, %v3742
      %v3939 = vpack.c.b16 %v3743, %v3743
      %v3940 = vpack.c.b16 %v3744, %v3744
      %v3941 = vpack.c.b16 %v3745, %v3745
      %v3942 = vpack.c.b16 %v3746, %v3746
      %v3943 = vpack.c.b16 %v3747, %v3747
      %v3944 = vpack.c.b16 %v3748, %v3748
      %v3945 = vpack.c.b16 %v3749, %v3749
      %v3946 = vpack.c.b16 %v3750, %v3750
      %v3947 = vpack.c.b16 %v3751, %v3751
      %v3948 = vpack.c.b16 %v3752, %v3752
      %v3949 = vpack.c.b16 %v3753, %v3753
      %v3950 = vpack.c.b16 %v3754, %v3754
      %v3951 = vpack.c.b16 %v3755, %v3755
      %v3952 = vpack.c.b16 %v3756, %v3756
      %v3953 = vpack.c.b16 %v3757, %v3757
      %v3954 = vpack.c.b16 %v3758, %v3758
      %v3955 = vpack.c.b16 %v3759, %v3759
      %v3956 = vpack.c.b16 %v3760, %v3760
      %v3957 = vpack.c.b16 %v3761, %v3761
      %v3958 = vpack.c.b16 %v3762, %v3762
      %v3959 = vpack.c.b16 %v3763, %v3763
      %v3960 = vpack.c.b16 %v3764, %v3764
      %v3961 = vpack.c.b16 %v3765, %v3765
      %v3962 = vpack.c.b16 %v3766, %v3766
      %v3963 = vpack.c.b16 %v3767, %v3767
      %v3964 = vpack.c.b16 %v3768, %v3768
      %v3965 = vpack.c.b16 %v3769, %v3769
      %v3966 = vpack.c.b16 %v3770, %v3770
      %v3967 = vpack.c.b16 %v3771, %v3771
      %v3968 = vpack.c.b16 %v3772, %v3772
      %v3969 = vpack.c.b16 %v3773, %v3773
      %v3970 = vpack.c.b16 %v3774, %v3774
      %v3971 = vpack.c.b16 %v3775, %v3775
      %v3972 = vpack.c.b16 %v3776, %v3776
      %v3973 = vpack.c.b16 %v3777, %v3777
      %v3974 = vpack.c.b16 %v3778, %v3778
      %v3975 = vpack.c.b16 %v3779, %v3779
      %v3976 = vpack.c.b16 %v3780, %v3780
      %v3977 = vpack.c.b16 %v3781, %v3781
      %v3978 = vpack.c.b16 %v3782, %v3782
      %v3979 = vpack.c.b16 %v3783, %v3783
      %v3980 = vpack.c.b16 %v3784, %v3784
      %v3981 = vpack.c.b16 %v3785, %v3785
      %v3982 = vpack.c.b16 %v3786, %v3786
      %v3983 = vpack.c.b16 %v3787, %v3787
      %v3984 = vpack.c.b16 %v3788, %v3788
      %v3985 = vpack.c.b16 %v3789, %v3789
      %v3986 = vpack.c.b16 %v3790, %v3790
      %v3987 = vpack.c.b16 %v3791, %v3791
      %v3988 = vpack.c.b16 %v3792, %v3792
      %v3989 = vpack.c.b16 %v3793, %v3793
      %v3990 = vpack.c.b16 %v3794, %v3794
      %v3991 = vpack.c.b16 %v3795, %v3795
      %v3992 = vpack.c.b16 %v3796, %v3796
      %v3993 = vpack.c.b16 %v3797, %v3797
      %v3994 = vpack.c.b16 %v3798, %v3798
      %v3995 = vpack.c.b16 %v3799, %v3799
      %v3996 = vpack.c.b16 %v3800, %v3800
      %v3997 = vpack.c.b16 %v3801, %v3801
      %v3998 = vpack.c.b16 %v3802, %v3802
      %v3999 = vpack.c.b16 %v3803, %v3803
      %v4000 = vpack.c.b16 %v3804, %v3804
      %v4001 = vpack.c.b16 %v3805, %v3805
      %v4002 = vpack.c.b16 %v3806, %v3806
      %v4003 = vpack.c.b16 %v3807, %v3807
      %v4004 = vpack.c.b16 %v3808, %v3808
      %v4005 = vpack.c.b16 %v3809, %v3809
      %v4006 = vpack.c.b16 %v3810, %v3810
      %v4007 = vpack.c.b16 %v3811, %v3811
      %v4008 = vpack.c.b16 %v3812, %v3812
      %v4009 = vpack.c.b16 %v3813, %v3813
      %v4010 = vpack.c.b16 %v3814, %v3814
      %v4011 = vpack.c.b16 %v3815, %v3815
      %v4012 = vpack.c.b16 %v3816, %v3816
      %v4013 = vpack.c.b16 %v3817, %v3817
      %v4014 = vpack.c.b16 %v3818, %v3818
      %v4015 = vpack.c.b16 %v3819, %v3819
      %v4016 = vpack.c.b16 %v3820, %v3820
      %v4017 = vpack.c.b16 %v3821, %v3821
      %v4018 = vpack.c.b16 %v3822, %v3822
      %v4019 = vpack.c.b16 %v3823, %v3823
      %v4020 = vpack.c.b16 %v3824, %v3824
      %v4021 = vpack.c.b16 %v3825, %v3825
      %v4022 = vpack.c.b16 %v3826, %v3826
      %v4023 = vpack.c.b16 %v3827, %v3827
      %v4024 = vpack.c.b16 %v3828, %v3828
      %v4025 = vpack.c.b16 %v3829, %v3829
      %v4026 = vpack.c.b16 %v3830, %v3830
      %v4027 = vpack.c.b16 %v3831, %v3831
      %v4028 = vpack.c.b16 %v3832, %v3832
      %v4029 = vpack.c.b16 %v3833, %v3833
      %v4030 = vpack.c.b16 %v3834, %v3834
      %v4031 = vpack.c.b16 %v3835, %v3835
      %v4032 = vpack.c.b16 %v3836, %v3836
      %v4033 = vpack.c.b16 %v3837, %v3837
      %v4034 = vpack.c.b16 %v3838, %v3838
      %v4035 = vpack.c.b16 %v3839, %v3839
      %v4036 = vpack.c.b16 %v3840, %v3840
      %v4037 = vpack.c.b16 %v3841, %v3841
      %v4038 = vpack.c.b16 %v3842, %v3842
      %v4039 = vpack.c.b16 %v3843, %v3843
      %v4040 = vpack.c.b16 %v3844, %v3844
      %v4041 = vpack.c.b16 %v3845, %v3845
      %v4042 = vpack.c.b16 %v3846, %v3846
      %v4043 = vpack.c.b16 %v3847, %v3847
      %v4044 = vpack.c.b16 %v3848, %v3848
      %v4045 = vpack.c.b16 %v3849, %v3849
      %v4046 = vpack.c.b16 %v3850, %v3850
      %v4047 = vpack.c.b16 %v3851, %v3851
      %v4048 = vpack.c.b16 %v3852, %v3852
      %v4049 = vpack.c.b16 %v3853, %v3853
      %v4050 = vpack.c.b16 %v3854, %v3854
      %v4051 = vpack.c.b16 %v3855, %v3855
      %v4052 = vpack.c.b16 %v3856, %v3856
      %v4053 = vpack.c.b16 %v3857, %v3857
      %v4054 = vpack.c.b16 %v3858, %v3858
      %v4055 = vpack.c.b16 %v3859, %v3859
      %v4056 = vpack.c.b16 %v3860, %v3860
      %v4057 = vpack.c.b16 %v3861, %v3861
      %v4058 = vpack.c.b16 %v3862, %v3862
      %v4059 = vpack.c.b16 %v3863, %v3863
      %v4060 = vpack.c.b16 %v3864, %v3864
      %v4061 = vpack.c.b16 %v3865, %v3865
      %v4062 = vpack.c.b16 %v3866, %v3866
      %v4063 = vpack.c.b16 %v3867, %v3867
      %v4064 = vpack.c.b16 %v3868, %v3868
      %v4065 = vpack.c.b16 %v3869, %v3869
      %v4066 = vpack.c.b16 %v3870, %v3870
      %v4067 = vpack.c.b16 %v3871, %v3871
      %v4068 = vpack.c.b16 %v3872, %v3872
      %v4069 = vpack.c.b16 %v3873, %v3873
      %v4070 = vpack.c.b16 %v3874, %v3874
      %v4071 = vunpack.c.l.b16 %v3875
      %v4072 = vunpack.c.l.b16 %v3876
      %v4073 = vunpack.c.l.b16 %v3877
      %v4074 = vunpack.c.l.b16 %v3878
      %v4075 = vunpack.c.l.b16 %v3879
      %v4076 = vunpack.c.l.b16 %v3880
      %v4077 = vunpack.c.l.b16 %v3881
      %v4078 = vunpack.c.l.b16 %v3882
      %v4079 = vunpack.c.l.b16 %v3883
      %v4080 = vunpack.c.l.b16 %v3884
      %v4081 = vunpack.c.l.b16 %v3885
      %v4082 = vunpack.c.l.b16 %v3886
      %v4083 = vunpack.c.l.b16 %v3887
      %v4084 = vunpack.c.l.b16 %v3888
      %v4085 = vunpack.c.l.b16 %v3889
      %v4086 = vunpack.c.l.b16 %v3890
      %v4087 = vunpack.c.l.b16 %v3891
      %v4088 = vunpack.c.l.b16 %v3892
      %v4089 = vunpack.c.l.b16 %v3893
      %v4090 = vunpack.c.l.b16 %v3894
      %v4091 = vunpack.c.l.b16 %v3895
      %v4092 = vunpack.c.l.b16 %v3896
      %v4093 = vunpack.c.l.b16 %v3897
      %v4094 = vunpack.c.l.b16 %v3898
      %v4095 = vunpack.c.l.b16 %v3899
      %v4096 = vunpack.c.l.b16 %v3900
      %v4097 = vunpack.c.l.b16 %v3901
      %v4098 = vunpack.c.l.b16 %v3902
      %v4099 = vunpack.c.l.b16 %v3903
      %v4100 = vunpack.c.l.b16 %v3904
      %v4101 = vunpack.c.l.b16 %v3905
      %v4102 = vunpack.c.l.b16 %v3906
      %v4103 = vunpack.c.l.b16 %v3907
      %v4104 = vunpack.c.l.b16 %v3908
      %v4105 = vunpack.c.l.b16 %v3909
      %v4106 = vunpack.c.l.b16 %v3910
      %v4107 = vunpack.c.l.b16 %v3911
      %v4108 = vunpack.c.l.b16 %v3912
      %v4109 = vunpack.c.l.b16 %v3913
      %v4110 = vunpack.c.l.b16 %v3914
      %v4111 = vunpack.c.l.b16 %v3915
      %v4112 = vunpack.c.l.b16 %v3916
      %v4113 = vunpack.c.l.b16 %v3917
      %v4114 = vunpack.c.l.b16 %v3918
      %v4115 = vunpack.c.l.b16 %v3919
      %v4116 = vunpack.c.l.b16 %v3920
      %v4117 = vunpack.c.l.b16 %v3921
      %v4118 = vunpack.c.l.b16 %v3922
      %v4119 = vunpack.c.l.b16 %v3923
      %v4120 = vunpack.c.l.b16 %v3924
      %v4121 = vunpack.c.l.b16 %v3925
      %v4122 = vunpack.c.l.b16 %v3926
      %v4123 = vunpack.c.l.b16 %v3927
      %v4124 = vunpack.c.l.b16 %v3928
      %v4125 = vunpack.c.l.b16 %v3929
      %v4126 = vunpack.c.l.b16 %v3930
      %v4127 = vunpack.c.l.b16 %v3931
      %v4128 = vunpack.c.l.b16 %v3932
      %v4129 = vunpack.c.l.b16 %v3933
      %v4130 = vunpack.c.l.b16 %v3934
      %v4131 = vunpack.c.l.b16 %v3935
      %v4132 = vunpack.c.l.b16 %v3936
      %v4133 = vunpack.c.l.b16 %v3937
      %v4134 = vunpack.c.l.b16 %v3938
      %v4135 = vunpack.c.l.b16 %v3939
      %v4136 = vunpack.c.l.b16 %v3940
      %v4137 = vunpack.c.l.b16 %v3941
      %v4138 = vunpack.c.l.b16 %v3942
      %v4139 = vunpack.c.l.b16 %v3943
      %v4140 = vunpack.c.l.b16 %v3944
      %v4141 = vunpack.c.l.b16 %v3945
      %v4142 = vunpack.c.l.b16 %v3946
      %v4143 = vunpack.c.l.b16 %v3947
      %v4144 = vunpack.c.l.b16 %v3948
      %v4145 = vunpack.c.l.b16 %v3949
      %v4146 = vunpack.c.l.b16 %v3950
      %v4147 = vunpack.c.l.b16 %v3951
      %v4148 = vunpack.c.l.b16 %v3952
      %v4149 = vunpack.c.l.b16 %v3953
      %v4150 = vunpack.c.l.b16 %v3954
      %v4151 = vunpack.c.l.b16 %v3955
      %v4152 = vunpack.c.l.b16 %v3956
      %v4153 = vunpack.c.l.b16 %v3957
      %v4154 = vunpack.c.l.b16 %v3958
      %v4155 = vunpack.c.l.b16 %v3959
      %v4156 = vunpack.c.l.b16 %v3960
      %v4157 = vunpack.c.l.b16 %v3961
      %v4158 = vunpack.c.l.b16 %v3962
      %v4159 = vunpack.c.l.b16 %v3963
      %v4160 = vunpack.c.l.b16 %v3964
      %v4161 = vunpack.c.l.b16 %v3965
      %v4162 = vunpack.c.l.b16 %v3966
      %v4163 = vunpack.c.l.b16 %v3967
      %v4164 = vunpack.c.l.b16 %v3968
      %v4165 = vunpack.c.l.b16 %v3969
      %v4166 = vunpack.c.l.b16 %v3970
      %v4167 = vunpack.c.l.b16 %v3971
      %v4168 = vunpack.c.l.b16 %v3972
      %v4169 = vunpack.c.l.b16 %v3973
      %v4170 = vunpack.c.l.b16 %v3974
      %v4171 = vunpack.c.l.b16 %v3975
      %v4172 = vunpack.c.l.b16 %v3976
      %v4173 = vunpack.c.l.b16 %v3977
      %v4174 = vunpack.c.l.b16 %v3978
      %v4175 = vunpack.c.l.b16 %v3979
      %v4176 = vunpack.c.l.b16 %v3980
      %v4177 = vunpack.c.l.b16 %v3981
      %v4178 = vunpack.c.l.b16 %v3982
      %v4179 = vunpack.c.l.b16 %v3983
      %v4180 = vunpack.c.l.b16 %v3984
      %v4181 = vunpack.c.l.b16 %v3985
      %v4182 = vunpack.c.l.b16 %v3986
      %v4183 = vunpack.c.l.b16 %v3987
      %v4184 = vunpack.c.l.b16 %v3988
      %v4185 = vunpack.c.l.b16 %v3989
      %v4186 = vunpack.c.l.b16 %v3990
      %v4187 = vunpack.c.l.b16 %v3991
      %v4188 = vunpack.c.l.b16 %v3992
      %v4189 = vunpack.c.l.b16 %v3993
      %v4190 = vunpack.c.l.b16 %v3994
      %v4191 = vunpack.c.l.b16 %v3995
      %v4192 = vunpack.c.l.b16 %v3996
      %v4193 = vunpack.c.l.b16 %v3997
      %v4194 = vunpack.c.l.b16 %v3998
      %v4195 = vunpack.c.l.b16 %v3999
      %v4196 = vunpack.c.l.b16 %v4000
      %v4197 = vunpack.c.l.b16 %v4001
      %v4198 = vunpack.c.l.b16 %v4002
      %v4199 = vunpack.c.l.b16 %v4003
      %v4200 = vunpack.c.l.b16 %v4004
      %v4201 = vunpack.c.l.b16 %v4005
      %v4202 = vunpack.c.l.b16 %v4006
      %v4203 = vunpack.c.l.b16 %v4007
      %v4204 = vunpack.c.l.b16 %v4008
      %v4205 = vunpack.c.l.b16 %v4009
      %v4206 = vunpack.c.l.b16 %v4010
      %v4207 = vunpack.c.l.b16 %v4011
      %v4208 = vunpack.c.l.b16 %v4012
      %v4209 = vunpack.c.l.b16 %v4013
      %v4210 = vunpack.c.l.b16 %v4014
      %v4211 = vunpack.c.l.b16 %v4015
      %v4212 = vunpack.c.l.b16 %v4016
      %v4213 = vunpack.c.l.b16 %v4017
      %v4214 = vunpack.c.l.b16 %v4018
      %v4215 = vunpack.c.l.b16 %v4019
      %v4216 = vunpack.c.l.b16 %v4020
      %v4217 = vunpack.c.l.b16 %v4021
      %v4218 = vunpack.c.l.b16 %v4022
      %v4219 = vunpack.c.l.b16 %v4023
      %v4220 = vunpack.c.l.b16 %v4024
      %v4221 = vunpack.c.l.b16 %v4025
      %v4222 = vunpack.c.l.b16 %v4026
      %v4223 = vunpack.c.l.b16 %v4027
      %v4224 = vunpack.c.l.b16 %v4028
      %v4225 = vunpack.c.l.b16 %v4029
      %v4226 = vunpack.c.l.b16 %v4030
      %v4227 = vunpack.c.l.b16 %v4031
      %v4228 = vunpack.c.l.b16 %v4032
      %v4229 = vunpack.c.l.b16 %v4033
      %v4230 = vunpack.c.l.b16 %v4034
      %v4231 = vunpack.c.l.b16 %v4035
      %v4232 = vunpack.c.l.b16 %v4036
      %v4233 = vunpack.c.l.b16 %v4037
      %v4234 = vunpack.c.l.b16 %v4038
      %v4235 = vunpack.c.l.b16 %v4039
      %v4236 = vunpack.c.l.b16 %v4040
      %v4237 = vunpack.c.l.b16 %v4041
      %v4238 = vunpack.c.l.b16 %v4042
      %v4239 = vunpack.c.l.b16 %v4043
      %v4240 = vunpack.c.l.b16 %v4044
      %v4241 = vunpack.c.l.b16 %v4045
      %v4242 = vunpack.c.l.b16 %v4046
      %v4243 = vunpack.c.l.b16 %v4047
      %v4244 = vunpack.c.l.b16 %v4048
      %v4245 = vunpack.c.l.b16 %v4049
      %v4246 = vunpack.c.l.b16 %v4050
      %v4247 = vunpack.c.l.b16 %v4051
      %v4248 = vunpack.c.l.b16 %v4052
      %v4249 = vunpack.c.l.b16 %v4053
      %v4250 = vunpack.c.l.b16 %v4054
      %v4251 = vunpack.c.l.b16 %v4055
      %v4252 = vunpack.c.l.b16 %v4056
      %v4253 = vunpack.c.l.b16 %v4057
      %v4254 = vunpack.c.l.b16 %v4058
      %v4255 = vunpack.c.l.b16 %v4059
      %v4256 = vunpack.c.l.b16 %v4060
      %v4257 = vunpack.c.l.b16 %v4061
      %v4258 = vunpack.c.l.b16 %v4062
      %v4259 = vunpack.c.l.b16 %v4063
      %v4260 = vunpack.c.l.b16 %v4064
      %v4261 = vunpack.c.l.b16 %v4065
      %v4262 = vunpack.c.l.b16 %v4066
      %v4263 = vunpack.c.l.b16 %v4067
      %v4264 = vunpack.c.l.b16 %v4068
      %v4265 = vunpack.c.l.b16 %v4069
      %v4266 = vunpack.c.l.b16 %v4070
      %v4267 = vrot.slane %v4072, 7
      %vm4268 = vcmask 1041409
      %v4269 = vsel %vm4268, %v4267, %v4071
      %v4270 = vrot.slane %v4073, 6
      %vm4271 = vcmask 1042434
      %v4272 = vsel %vm4271, %v4270, %v4269
      %v4273 = vrot.slane %v4074, 5
      %vm4274 = vcmask 1043459
      %v4275 = vsel %vm4274, %v4273, %v4272
      %v4276 = vrot.slane %v4075, 4
      %vm4277 = vcmask 1044484
      %v4278 = vsel %vm4277, %v4276, %v4275
      %v4279 = vrot.slane %v4076, 3
      %vm4280 = vcmask 1045509
      %v4281 = vsel %vm4280, %v4279, %v4278
      %v4282 = vrot.slane %v4077, 2
      %vm4283 = vcmask 1046534
      %v4284 = vsel %vm4283, %v4282, %v4281
      %v4285 = vrot.slane %v4078, 1
      %vm4286 = vcmask 1047559
      %v4287 = vsel %vm4286, %v4285, %v4284
      %v4288 = vrot.slane %v4080, 7
      %v4289 = vsel %vm4268, %v4288, %v4079
      %v4290 = vrot.slane %v4081, 6
      %v4291 = vsel %vm4271, %v4290, %v4289
      %v4292 = vrot.slane %v4082, 5
      %v4293 = vsel %vm4274, %v4292, %v4291
      %v4294 = vrot.slane %v4083, 4
      %v4295 = vsel %vm4277, %v4294, %v4293
      %v4296 = vrot.slane %v4084, 3
      %v4297 = vsel %vm4280, %v4296, %v4295
      %v4298 = vrot.slane %v4085, 2
      %v4299 = vsel %vm4283, %v4298, %v4297
      %v4300 = vrot.slane %v4086, 1
      %v4301 = vsel %vm4286, %v4300, %v4299
      %v4302 = vrot.slane %v4088, 7
      %v4303 = vsel %vm4268, %v4302, %v4087
      %v4304 = vrot.slane %v4089, 6
      %v4305 = vsel %vm4271, %v4304, %v4303
      %v4306 = vrot.slane %v4090, 5
      %v4307 = vsel %vm4274, %v4306, %v4305
      %v4308 = vrot.slane %v4091, 4
      %v4309 = vsel %vm4277, %v4308, %v4307
      %v4310 = vrot.slane %v4092, 3
      %v4311 = vsel %vm4280, %v4310, %v4309
      %v4312 = vrot.slane %v4093, 2
      %v4313 = vsel %vm4283, %v4312, %v4311
      %v4314 = vrot.slane %v4094, 1
      %v4315 = vsel %vm4286, %v4314, %v4313
      %v4316 = vrot.slane %v4096, 7
      %v4317 = vsel %vm4268, %v4316, %v4095
      %v4318 = vrot.slane %v4097, 6
      %v4319 = vsel %vm4271, %v4318, %v4317
      %v4320 = vrot.slane %v4098, 5
      %v4321 = vsel %vm4274, %v4320, %v4319
      %v4322 = vrot.slane %v4099, 4
      %v4323 = vsel %vm4277, %v4322, %v4321
      %v4324 = vrot.slane %v4100, 3
      %v4325 = vsel %vm4280, %v4324, %v4323
      %v4326 = vrot.slane %v4101, 2
      %v4327 = vsel %vm4283, %v4326, %v4325
      %v4328 = vrot.slane %v4102, 1
      %v4329 = vsel %vm4286, %v4328, %v4327
      %v4330 = vrot.slane %v4104, 7
      %v4331 = vsel %vm4268, %v4330, %v4103
      %v4332 = vrot.slane %v4105, 6
      %v4333 = vsel %vm4271, %v4332, %v4331
      %v4334 = vrot.slane %v4106, 5
      %v4335 = vsel %vm4274, %v4334, %v4333
      %v4336 = vrot.slane %v4107, 4
      %v4337 = vsel %vm4277, %v4336, %v4335
      %v4338 = vrot.slane %v4108, 3
      %v4339 = vsel %vm4280, %v4338, %v4337
      %v4340 = vrot.slane %v4109, 2
      %v4341 = vsel %vm4283, %v4340, %v4339
      %v4342 = vrot.slane %v4110, 1
      %v4343 = vsel %vm4286, %v4342, %v4341
      %v4344 = vrot.slane %v4112, 7
      %v4345 = vsel %vm4268, %v4344, %v4111
      %v4346 = vrot.slane %v4113, 6
      %v4347 = vsel %vm4271, %v4346, %v4345
      %v4348 = vrot.slane %v4114, 5
      %v4349 = vsel %vm4274, %v4348, %v4347
      %v4350 = vrot.slane %v4115, 4
      %v4351 = vsel %vm4277, %v4350, %v4349
      %v4352 = vrot.slane %v4116, 3
      %v4353 = vsel %vm4280, %v4352, %v4351
      %v4354 = vrot.slane %v4117, 2
      %v4355 = vsel %vm4283, %v4354, %v4353
      %v4356 = vrot.slane %v4118, 1
      %v4357 = vsel %vm4286, %v4356, %v4355
      %v4358 = vrot.slane %v4120, 7
      %v4359 = vsel %vm4268, %v4358, %v4119
      %v4360 = vrot.slane %v4121, 6
      %v4361 = vsel %vm4271, %v4360, %v4359
      %v4362 = vrot.slane %v4122, 5
      %v4363 = vsel %vm4274, %v4362, %v4361
      %v4364 = vrot.slane %v4123, 4
      %v4365 = vsel %vm4277, %v4364, %v4363
      %v4366 = vrot.slane %v4124, 3
      %v4367 = vsel %vm4280, %v4366, %v4365
      %v4368 = vrot.slane %v4125, 2
      %v4369 = vsel %vm4283, %v4368, %v4367
      %v4370 = vrot.slane %v4126, 1
      %v4371 = vsel %vm4286, %v4370, %v4369
      %v4372 = vrot.slane %v4128, 7
      %v4373 = vsel %vm4268, %v4372, %v4127
      %v4374 = vrot.slane %v4129, 6
      %v4375 = vsel %vm4271, %v4374, %v4373
      %v4376 = vrot.slane %v4130, 5
      %v4377 = vsel %vm4274, %v4376, %v4375
      %v4378 = vrot.slane %v4131, 4
      %v4379 = vsel %vm4277, %v4378, %v4377
      %v4380 = vrot.slane %v4132, 3
      %v4381 = vsel %vm4280, %v4380, %v4379
      %v4382 = vrot.slane %v4133, 2
      %v4383 = vsel %vm4283, %v4382, %v4381
      %v4384 = vrot.slane %v4134, 1
      %v4385 = vsel %vm4286, %v4384, %v4383
      %v4386 = vrot.slane %v4136, 7
      %v4387 = vsel %vm4268, %v4386, %v4135
      %v4388 = vrot.slane %v4137, 6
      %v4389 = vsel %vm4271, %v4388, %v4387
      %v4390 = vrot.slane %v4138, 5
      %v4391 = vsel %vm4274, %v4390, %v4389
      %v4392 = vrot.slane %v4139, 4
      %v4393 = vsel %vm4277, %v4392, %v4391
      %v4394 = vrot.slane %v4140, 3
      %v4395 = vsel %vm4280, %v4394, %v4393
      %v4396 = vrot.slane %v4141, 2
      %v4397 = vsel %vm4283, %v4396, %v4395
      %v4398 = vrot.slane %v4142, 1
      %v4399 = vsel %vm4286, %v4398, %v4397
      %v4400 = vrot.slane %v4144, 7
      %v4401 = vsel %vm4268, %v4400, %v4143
      %v4402 = vrot.slane %v4145, 6
      %v4403 = vsel %vm4271, %v4402, %v4401
      %v4404 = vrot.slane %v4146, 5
      %v4405 = vsel %vm4274, %v4404, %v4403
      %v4406 = vrot.slane %v4147, 4
      %v4407 = vsel %vm4277, %v4406, %v4405
      %v4408 = vrot.slane %v4148, 3
      %v4409 = vsel %vm4280, %v4408, %v4407
      %v4410 = vrot.slane %v4149, 2
      %v4411 = vsel %vm4283, %v4410, %v4409
      %v4412 = vrot.slane %v4150, 1
      %v4413 = vsel %vm4286, %v4412, %v4411
      %v4414 = vrot.slane %v4152, 7
      %v4415 = vsel %vm4268, %v4414, %v4151
      %v4416 = vrot.slane %v4153, 6
      %v4417 = vsel %vm4271, %v4416, %v4415
      %v4418 = vrot.slane %v4154, 5
      %v4419 = vsel %vm4274, %v4418, %v4417
      %v4420 = vrot.slane %v4155, 4
      %v4421 = vsel %vm4277, %v4420, %v4419
      %v4422 = vrot.slane %v4156, 3
      %v4423 = vsel %vm4280, %v4422, %v4421
      %v4424 = vrot.slane %v4157, 2
      %v4425 = vsel %vm4283, %v4424, %v4423
      %v4426 = vrot.slane %v4158, 1
      %v4427 = vsel %vm4286, %v4426, %v4425
      %v4428 = vrot.slane %v4160, 7
      %v4429 = vsel %vm4268, %v4428, %v4159
      %v4430 = vrot.slane %v4161, 6
      %v4431 = vsel %vm4271, %v4430, %v4429
      %v4432 = vrot.slane %v4162, 5
      %v4433 = vsel %vm4274, %v4432, %v4431
      %v4434 = vrot.slane %v4163, 4
      %v4435 = vsel %vm4277, %v4434, %v4433
      %v4436 = vrot.slane %v4164, 3
      %v4437 = vsel %vm4280, %v4436, %v4435
      %v4438 = vrot.slane %v4165, 2
      %v4439 = vsel %vm4283, %v4438, %v4437
      %v4440 = vrot.slane %v4166, 1
      %v4441 = vsel %vm4286, %v4440, %v4439
      %v4442 = vrot.slane %v4168, 7
      %v4443 = vsel %vm4268, %v4442, %v4167
      %v4444 = vrot.slane %v4169, 6
      %v4445 = vsel %vm4271, %v4444, %v4443
      %v4446 = vrot.slane %v4170, 5
      %v4447 = vsel %vm4274, %v4446, %v4445
      %v4448 = vrot.slane %v4171, 4
      %v4449 = vsel %vm4277, %v4448, %v4447
      %v4450 = vrot.slane %v4172, 3
      %v4451 = vsel %vm4280, %v4450, %v4449
      %v4452 = vrot.slane %v4173, 2
      %v4453 = vsel %vm4283, %v4452, %v4451
      %v4454 = vrot.slane %v4174, 1
      %v4455 = vsel %vm4286, %v4454, %v4453
      %v4456 = vrot.slane %v4176, 7
      %v4457 = vsel %vm4268, %v4456, %v4175
      %v4458 = vrot.slane %v4177, 6
      %v4459 = vsel %vm4271, %v4458, %v4457
      %v4460 = vrot.slane %v4178, 5
      %v4461 = vsel %vm4274, %v4460, %v4459
      %v4462 = vrot.slane %v4179, 4
      %v4463 = vsel %vm4277, %v4462, %v4461
      %v4464 = vrot.slane %v4180, 3
      %v4465 = vsel %vm4280, %v4464, %v4463
      %v4466 = vrot.slane %v4181, 2
      %v4467 = vsel %vm4283, %v4466, %v4465
      %v4468 = vrot.slane %v4182, 1
      %v4469 = vsel %vm4286, %v4468, %v4467
      %v4470 = vrot.slane %v4184, 7
      %v4471 = vsel %vm4268, %v4470, %v4183
      %v4472 = vrot.slane %v4185, 6
      %v4473 = vsel %vm4271, %v4472, %v4471
      %v4474 = vrot.slane %v4186, 5
      %v4475 = vsel %vm4274, %v4474, %v4473
      %v4476 = vrot.slane %v4187, 4
      %v4477 = vsel %vm4277, %v4476, %v4475
      %v4478 = vrot.slane %v4188, 3
      %v4479 = vsel %vm4280, %v4478, %v4477
      %v4480 = vrot.slane %v4189, 2
      %v4481 = vsel %vm4283, %v4480, %v4479
      %v4482 = vrot.slane %v4190, 1
      %v4483 = vsel %vm4286, %v4482, %v4481
      %v4484 = vrot.slane %v4192, 7
      %v4485 = vsel %vm4268, %v4484, %v4191
      %v4486 = vrot.slane %v4193, 6
      %v4487 = vsel %vm4271, %v4486, %v4485
      %v4488 = vrot.slane %v4194, 5
      %v4489 = vsel %vm4274, %v4488, %v4487
      %v4490 = vrot.slane %v4195, 4
      %v4491 = vsel %vm4277, %v4490, %v4489
      %v4492 = vrot.slane %v4196, 3
      %v4493 = vsel %vm4280, %v4492, %v4491
      %v4494 = vrot.slane %v4197, 2
      %v4495 = vsel %vm4283, %v4494, %v4493
      %v4496 = vrot.slane %v4198, 1
      %v4497 = vsel %vm4286, %v4496, %v4495
      %v4498 = vrot.slane %v4200, 7
      %v4499 = vsel %vm4268, %v4498, %v4199
      %v4500 = vrot.slane %v4201, 6
      %v4501 = vsel %vm4271, %v4500, %v4499
      %v4502 = vrot.slane %v4202, 5
      %v4503 = vsel %vm4274, %v4502, %v4501
      %v4504 = vrot.slane %v4203, 4
      %v4505 = vsel %vm4277, %v4504, %v4503
      %v4506 = vrot.slane %v4204, 3
      %v4507 = vsel %vm4280, %v4506, %v4505
      %v4508 = vrot.slane %v4205, 2
      %v4509 = vsel %vm4283, %v4508, %v4507
      %v4510 = vrot.slane %v4206, 1
      %v4511 = vsel %vm4286, %v4510, %v4509
      %v4512 = vrot.slane %v4208, 7
      %v4513 = vsel %vm4268, %v4512, %v4207
      %v4514 = vrot.slane %v4209, 6
      %v4515 = vsel %vm4271, %v4514, %v4513
      %v4516 = vrot.slane %v4210, 5
      %v4517 = vsel %vm4274, %v4516, %v4515
      %v4518 = vrot.slane %v4211, 4
      %v4519 = vsel %vm4277, %v4518, %v4517
      %v4520 = vrot.slane %v4212, 3
      %v4521 = vsel %vm4280, %v4520, %v4519
      %v4522 = vrot.slane %v4213, 2
      %v4523 = vsel %vm4283, %v4522, %v4521
      %v4524 = vrot.slane %v4214, 1
      %v4525 = vsel %vm4286, %v4524, %v4523
      %v4526 = vrot.slane %v4216, 7
      %v4527 = vsel %vm4268, %v4526, %v4215
      %v4528 = vrot.slane %v4217, 6
      %v4529 = vsel %vm4271, %v4528, %v4527
      %v4530 = vrot.slane %v4218, 5
      %v4531 = vsel %vm4274, %v4530, %v4529
      %v4532 = vrot.slane %v4219, 4
      %v4533 = vsel %vm4277, %v4532, %v4531
      %v4534 = vrot.slane %v4220, 3
      %v4535 = vsel %vm4280, %v4534, %v4533
      %v4536 = vrot.slane %v4221, 2
      %v4537 = vsel %vm4283, %v4536, %v4535
      %v4538 = vrot.slane %v4222, 1
      %v4539 = vsel %vm4286, %v4538, %v4537
      %v4540 = vrot.slane %v4224, 7
      %v4541 = vsel %vm4268, %v4540, %v4223
      %v4542 = vrot.slane %v4225, 6
      %v4543 = vsel %vm4271, %v4542, %v4541
      %v4544 = vrot.slane %v4226, 5
      %v4545 = vsel %vm4274, %v4544, %v4543
      %v4546 = vrot.slane %v4227, 4
      %v4547 = vsel %vm4277, %v4546, %v4545
      %v4548 = vrot.slane %v4228, 3
      %v4549 = vsel %vm4280, %v4548, %v4547
      %v4550 = vrot.slane %v4229, 2
      %v4551 = vsel %vm4283, %v4550, %v4549
      %v4552 = vrot.slane %v4230, 1
      %v4553 = vsel %vm4286, %v4552, %v4551
      %v4554 = vrot.slane %v4232, 7
      %v4555 = vsel %vm4268, %v4554, %v4231
      %v4556 = vrot.slane %v4233, 6
      %v4557 = vsel %vm4271, %v4556, %v4555
      %v4558 = vrot.slane %v4234, 5
      %v4559 = vsel %vm4274, %v4558, %v4557
      %v4560 = vrot.slane %v4235, 4
      %v4561 = vsel %vm4277, %v4560, %v4559
      %v4562 = vrot.slane %v4236, 3
      %v4563 = vsel %vm4280, %v4562, %v4561
      %v4564 = vrot.slane %v4237, 2
      %v4565 = vsel %vm4283, %v4564, %v4563
      %v4566 = vrot.slane %v4238, 1
      %v4567 = vsel %vm4286, %v4566, %v4565
      %v4568 = vrot.slane %v4240, 7
      %v4569 = vsel %vm4268, %v4568, %v4239
      %v4570 = vrot.slane %v4241, 6
      %v4571 = vsel %vm4271, %v4570, %v4569
      %v4572 = vrot.slane %v4242, 5
      %v4573 = vsel %vm4274, %v4572, %v4571
      %v4574 = vrot.slane %v4243, 4
      %v4575 = vsel %vm4277, %v4574, %v4573
      %v4576 = vrot.slane %v4244, 3
      %v4577 = vsel %vm4280, %v4576, %v4575
      %v4578 = vrot.slane %v4245, 2
      %v4579 = vsel %vm4283, %v4578, %v4577
      %v4580 = vrot.slane %v4246, 1
      %v4581 = vsel %vm4286, %v4580, %v4579
      %v4582 = vrot.slane %v4248, 7
      %v4583 = vsel %vm4268, %v4582, %v4247
      %v4584 = vrot.slane %v4249, 6
      %v4585 = vsel %vm4271, %v4584, %v4583
      %v4586 = vrot.slane %v4250, 5
      %v4587 = vsel %vm4274, %v4586, %v4585
      %v4588 = vrot.slane %v4251, 4
      %v4589 = vsel %vm4277, %v4588, %v4587
      %v4590 = vrot.slane %v4252, 3
      %v4591 = vsel %vm4280, %v4590, %v4589
      %v4592 = vrot.slane %v4253, 2
      %v4593 = vsel %vm4283, %v4592, %v4591
      %v4594 = vrot.slane %v4254, 1
      %v4595 = vsel %vm4286, %v4594, %v4593
      %v4596 = vrot.slane %v4256, 7
      %v4597 = vsel %vm4268, %v4596, %v4255
      %v4598 = vrot.slane %v4257, 6
      %v4599 = vsel %vm4271, %v4598, %v4597
      %v4600 = vrot.slane %v4258, 5
      %v4601 = vsel %vm4274, %v4600, %v4599
      %v4602 = vrot.slane %v4259, 4
      %v4603 = vsel %vm4277, %v4602, %v4601
      %v4604 = vrot.slane %v4260, 3
      %v4605 = vsel %vm4280, %v4604, %v4603
      %v4606 = vrot.slane %v4261, 2
      %v4607 = vsel %vm4283, %v4606, %v4605
      %v4608 = vrot.slane %v4262, 1
      %v4609 = vsel %vm4286, %v4608, %v4607
      %v4610 = vrot.slane %v4264, 7
      %v4611 = vsel %vm4268, %v4610, %v4263
      %v4612 = vrot.slane %v4265, 6
      %v4613 = vsel %vm4271, %v4612, %v4611
      %v4614 = vrot.slane %v4266, 5
      %v4615 = vsel %vm4274, %v4614, %v4613
      %v4616 = vpack.c.b16 %v4287, %v4287
      %v4617 = vpack.c.b16 %v4301, %v4301
      %v4618 = vpack.c.b16 %v4315, %v4315
      %v4619 = vpack.c.b16 %v4329, %v4329
      %v4620 = vpack.c.b16 %v4343, %v4343
      %v4621 = vpack.c.b16 %v4357, %v4357
      %v4622 = vpack.c.b16 %v4371, %v4371
      %v4623 = vpack.c.b16 %v4385, %v4385
      %v4624 = vpack.c.b16 %v4399, %v4399
      %v4625 = vpack.c.b16 %v4413, %v4413
      %v4626 = vpack.c.b16 %v4427, %v4427
      %v4627 = vpack.c.b16 %v4441, %v4441
      %v4628 = vpack.c.b16 %v4455, %v4455
      %v4629 = vpack.c.b16 %v4469, %v4469
      %v4630 = vpack.c.b16 %v4483, %v4483
      %v4631 = vpack.c.b16 %v4497, %v4497
      %v4632 = vpack.c.b16 %v4511, %v4511
      %v4633 = vpack.c.b16 %v4525, %v4525
      %v4634 = vpack.c.b16 %v4539, %v4539
      %v4635 = vpack.c.b16 %v4553, %v4553
      %v4636 = vpack.c.b16 %v4567, %v4567
      %v4637 = vpack.c.b16 %v4581, %v4581
      %v4638 = vpack.c.b16 %v4595, %v4595
      %v4639 = vpack.c.b16 %v4609, %v4609
      %v4640 = vpack.c.b16 %v4615, %v4615
      %4666 = vst [vmem:[%s170] sm:$0xf] %v4616
      %4667 = vst [vmem:[%s170 + $0x4] sm:$0xf] %v4617
      %4668 = vst [vmem:[%s170 + $0x8] sm:$0xf] %v4618
      %4669 = vst [vmem:[%s170 + $0xc] sm:$0xf] %v4619
      %4670 = vst [vmem:[%s170 + $0x10] sm:$0xf] %v4620
      %4671 = vst [vmem:[%s170 + $0x14] sm:$0xf] %v4621
      %4672 = vst [vmem:[%s170 + $0x18] sm:$0xf] %v4622
      %4673 = vst [vmem:[%s170 + $0x1c] sm:$0xf] %v4623
      %4674 = vst [vmem:[%s170 + $0x20] sm:$0xf] %v4624
      %4675 = vst [vmem:[%s170 + $0x24] sm:$0xf] %v4625
      %4676 = vst [vmem:[%s170 + $0x28] sm:$0xf] %v4626
      %4677 = vst [vmem:[%s170 + $0x2c] sm:$0xf] %v4627
      %4678 = vst [vmem:[%s170 + $0x30] sm:$0xf] %v4628
      %4679 = vst [vmem:[%s170 + $0x34] sm:$0xf] %v4629
      %4680 = vst [vmem:[%s170 + $0x38] sm:$0xf] %v4630
      %4681 = vst [vmem:[%s170 + $0x3c] sm:$0xf] %v4631
      %4682 = vst [vmem:[%s170 + $0x40] sm:$0xf] %v4632
      %4683 = vst [vmem:[%s170 + $0x44] sm:$0xf] %v4633
      %4684 = vst [vmem:[%s170 + $0x48] sm:$0xf] %v4634
      %4685 = vst [vmem:[%s170 + $0x4c] sm:$0xf] %v4635
      %4686 = vst [vmem:[%s170 + $0x50] sm:$0xf] %v4636
      %4687 = vst [vmem:[%s170 + $0x54] sm:$0xf] %v4637
      %4688 = vst [vmem:[%s170 + $0x58] sm:$0xf] %v4638
      %4689 = vst [vmem:[%s170 + $0x5c] sm:$0xf] %v4639
      %4690 = vst [vmem:[%s170 + $0x60] sm:$0x3] %v4640
      %p4691 = scmp.lt.s32.totalorder %s14, 1
      %s4692 = scalar_select %p4691, %s14, 1
      %s4693 = smul.addr %s4692, 25
      %s4694 = smul.addr %s4693, 4
      %s4695 = scalar_lea.vmem %s3, %s4694
      // Predicated region
      $region33: #{cnn_forward.4} parent=31 // pred_check
        %p4696 = pneg %p100
      $region34: #{cnn_forward.4} parent=31 // pred_check_branch
        %4698 = sbr.rel (%p4696) target = $region36
      $region35: #{cnn_forward.4} parent=31 // pred_region
        _
      $region36: #{cnn_forward.4} parent=31 // pred_fallthru
        _
    $region32: #{cnn_forward.4} parent=5 // pred_fallthru
      _
    %p4699 = scmp.le.s32.totalorder 2, %s9
    // Predicated region
    $region37: #{cnn_forward.4} parent=5 // pred_check
      %p4700 = pneg %p4699
    $region38: #{cnn_forward.4} parent=5 // pred_check_branch
      %4702 = sbr.rel (%p4700) target = $region40
    $region39: #{cnn_forward.4} parent=5 // pred_region
      %s4703 = ssub.s32 %s9, 2
      // Predicated region
      $region41: #{cnn_forward.4} parent=39 // pred_check
        %p4704 = pneg %p106
      $region42: #{cnn_forward.4} parent=39 // pred_check_branch
        %4706 = sbr.rel (%p4704) target = $region44
      $region43: #{cnn_forward.4} parent=39 // pred_region
        %p4707 = scmp.lt.s32.totalorder %s15, 1
        %s4708 = scalar_select %p4707, %s15, 1
        %s4709 = smul.addr %s4708, 25
        %s4710 = smul.addr %s4709, 4
        %s4711 = scalar_lea.vmem %s3, %s4710
      $region44: #{cnn_forward.4} parent=39 // pred_fallthru
        _
    $region40: #{cnn_forward.4} parent=5 // pred_fallthru
      _
  $region6: #{cnn_forward.4} parent=0 // loop_footer
    %s13 = sadd.s32 1, %s9
  $region7: #{cnn_forward.4} parent=0 // loop_footer_branch
    %8 = sbr.rel target = $region3
  $region8: #{cnn_forward.4} parent=0 // loop_exit
    _

// kernel: cnn_forward.5
$region0: #{cnn_forward.5}
  #allocation0 [shape = 'u32[]', space=smem, size = 0x4, offset = 0x4, fixed_abs, tag = 'smem constant byte address 0x4 - core index']
  #allocation1 [shape = 'u32[144,128]{1,0:T(1,128)}', space=vmem, size = 0x12000, scoped, tag = 'internal scratch']
  %s0 = inlined_call_operand.vmem [shape: bf16[2,196,896], index: 0, kind: input, shape index: {}]
  %s1 = inlined_call_operand.vmem [shape: bf16[896,128], index: 1, kind: input, shape index: {}]
  %s2 = inlined_call_operand.vmem [shape: f32[1,128], index: 2, kind: input, shape index: {}]
  %s3 = inlined_call_operand.vmem [shape: bf16[2,49,128], index: 3, kind: output, shape index: {}]
  %s4 = sld [smem:[#allocation0]]
  $region45: #{cnn_forward.5} parent=0
    _
  %s6 = ssub.s32 1, %s4
  %s7 = scalar_select 0, %s6, %s4
  loop: start=0, step=1, limit=4
  $region2: #{cnn_forward.5} parent=0 // loop_pre_header
    _
  $region3: #{cnn_forward.5} parent=0 // loop_header
    %s9 = sphi 0, %s13
    %p10 = scmp.ge.s32.totalorder %s9, 4
    %s19 = sphi 0, %s21
    %s22 = sphi 0, %s19
    %s23 = sphi 0, %s22
    %s39 = sphi 0, %s23
    %s43 = sphi 0, %s43
    %s45 = sphi 0, %s43
    %s46 = sphi 0, %s45
    %s60 = sphi 0, %s46
    %s64 = sphi 0, %s64
    %s66 = sphi 0, %s64
    %s67 = sphi 0, %s66
    %s81 = sphi 0, %s67
    %s87 = sphi 0, %s89
    %s90 = sphi 0, %s87
    %s91 = sphi 0, %s90
    %s107 = sphi 0, %s91
  $region4: #{cnn_forward.5} parent=0 // loop_header_branch
    %12 = sbr.rel (%p10) target = $region8
  $region5: #{cnn_forward.5} parent=0 // loop_body
    %s14 = ssub.s32 %s9, 1
    %s15 = ssub.s32 %s9, 2
    %s16 = sadd.s32 %s9, 1
    %s17 = ssub.s32 %s9, %s16
    %p18 = scmp.eq.s32.totalorder %s17, 0
    %s20 = sadd.s32 %s19, 1
    %s21 = scalar_select %p18, %s19, %s20
    %p24 = pneg %p18
    %p25 = scmp.eq.s32.totalorder %s9, 1
    %p26 = por %p24, %p25
    %p27 = scmp.ne.s32.totalorder %s19, %s22
    %p28 = scmp.eq.s32.totalorder %s9, 0
    %p29 = por %p27, %p28
    %p30 = scmp.ne.s32.totalorder %s19, %s22
    %p31 = scmp.eq.s32.totalorder %s14, 1
    %p32 = por %p30, %p31
    %p33 = scmp.ne.s32.totalorder %s22, %s23
    %p34 = scmp.eq.s32.totalorder %s14, 0
    %p35 = por %p33, %p34
    %p36 = scmp.ne.s32.totalorder %s22, %s23
    %p37 = scmp.eq.s32.totalorder %s15, 1
    %p38 = por %p36, %p37
    %p40 = scmp.ne.s32.totalorder %s23, %s39
    %p41 = scmp.eq.s32.totalorder %s15, 0
    %p42 = por %p40, %p41
    %s44 = sadd.s32 %s43, 1
    %p47 = scmp.eq.s32.totalorder %s9, 1
    %p48 = scmp.ne.s32.totalorder %s43, %s45
    %p49 = scmp.eq.s32.totalorder %s9, 0
    %p50 = por %p48, %p49
    %p51 = scmp.ne.s32.totalorder %s43, %s45
    %p52 = scmp.eq.s32.totalorder %s14, 1
    %p53 = por %p51, %p52
    %p54 = scmp.ne.s32.totalorder %s45, %s46
    %p55 = scmp.eq.s32.totalorder %s14, 0
    %p56 = por %p54, %p55
    %p57 = scmp.ne.s32.totalorder %s45, %s46
    %p58 = scmp.eq.s32.totalorder %s15, 1
    %p59 = por %p57, %p58
    %p61 = scmp.ne.s32.totalorder %s46, %s60
    %p62 = scmp.eq.s32.totalorder %s15, 0
    %p63 = por %p61, %p62
    %s65 = sadd.s32 %s64, 1
    %p68 = scmp.eq.s32.totalorder %s9, 1
    %p69 = scmp.ne.s32.totalorder %s64, %s66
    %p70 = scmp.eq.s32.totalorder %s9, 0
    %p71 = por %p69, %p70
    %p72 = scmp.ne.s32.totalorder %s64, %s66
    %p73 = scmp.eq.s32.totalorder %s14, 1
    %p74 = por %p72, %p73
    %p75 = scmp.ne.s32.totalorder %s66, %s67
    %p76 = scmp.eq.s32.totalorder %s14, 0
    %p77 = por %p75, %p76
    %p78 = scmp.ne.s32.totalorder %s66, %s67
    %p79 = scmp.eq.s32.totalorder %s15, 1
    %p80 = por %p78, %p79
    %p82 = scmp.ne.s32.totalorder %s67, %s81
    %p83 = scmp.eq.s32.totalorder %s15, 0
    %p84 = por %p82, %p83
    %s85 = ssub.s32 %s9, %s16
    %p86 = scmp.eq.s32.totalorder %s85, 0
    %s88 = sadd.s32 %s87, 1
    %s89 = scalar_select %p86, %s87, %s88
    %p92 = pneg %p86
    %p93 = scmp.eq.s32.totalorder %s9, 1
    %p94 = por %p92, %p93
    %p95 = scmp.ne.s32.totalorder %s87, %s90
    %p96 = scmp.eq.s32.totalorder %s9, 0
    %p97 = por %p95, %p96
    %p98 = scmp.ne.s32.totalorder %s87, %s90
    %p99 = scmp.eq.s32.totalorder %s14, 1
    %p100 = por %p98, %p99
    %p101 = scmp.ne.s32.totalorder %s90, %s91
    %p102 = scmp.eq.s32.totalorder %s14, 0
    %p103 = por %p101, %p102
    %p104 = scmp.ne.s32.totalorder %s90, %s91
    %p105 = scmp.eq.s32.totalorder %s15, 1
    %p106 = por %p104, %p105
    %p108 = scmp.ne.s32.totalorder %s91, %s107
    %p109 = scmp.eq.s32.totalorder %s15, 0
    %p110 = por %p108, %p109
    %p111 = scmp.le.s32.totalorder 1, %s9
    %p112 = scmp.lt.s32.totalorder %s9, 3
    %p113 = pnand %p111, %p112
    %p114 = pneg %p113
    // Predicated region
    $region9: #{cnn_forward.5} parent=5 // pred_check
      _
    $region10: #{cnn_forward.5} parent=5 // pred_check_branch
      %116 = sbr.rel (%p113) target = $region12
    $region11: #{cnn_forward.5} parent=5 // pred_region
      %s117 = ssub.s32 %s9, 1
      // Predicated region
      $region13: #{cnn_forward.5} parent=11 // pred_check
        %p118 = pneg %p56
      $region14: #{cnn_forward.5} parent=11 // pred_check_branch
        %120 = sbr.rel (%p118) target = $region16
      $region15: #{cnn_forward.5} parent=11 // pred_region
        _
      $region16: #{cnn_forward.5} parent=11 // pred_fallthru
        _
      // Predicated region
      $region17: #{cnn_forward.5} parent=11 // pred_check
        %p121 = pneg %p77
      $region18: #{cnn_forward.5} parent=11 // pred_check_branch
        %123 = sbr.rel (%p121) target = $region20
      $region19: #{cnn_forward.5} parent=11 // pred_region
        _
      $region20: #{cnn_forward.5} parent=11 // pred_fallthru
        _
    $region12: #{cnn_forward.5} parent=5 // pred_fallthru
      _
    %p124 = scmp.lt.s32.totalorder %s9, 2
    // Predicated region
    $region21: #{cnn_forward.5} parent=5 // pred_check
      %p125 = pneg %p124
    $region22: #{cnn_forward.5} parent=5 // pred_check_branch
      %127 = sbr.rel (%p125) target = $region24
    $region23: #{cnn_forward.5} parent=5 // pred_region
      // Predicated region
      $region25: #{cnn_forward.5} parent=23 // pred_check
        %p128 = pneg %p29
      $region26: #{cnn_forward.5} parent=23 // pred_check_branch
        %130 = sbr.rel (%p128) target = $region28
      $region27: #{cnn_forward.5} parent=23 // pred_region
        %p131 = scmp.lt.s32.totalorder %s9, 1
        %s132 = scalar_select %p131, %s9, 1
        %s133 = smul.addr %s132, 175
        %s134 = smul.addr %s133, 4
        %s135 = scalar_lea.vmem %s0, %s134
      $region28: #{cnn_forward.5} parent=23 // pred_fallthru
        _
    $region24: #{cnn_forward.5} parent=5 // pred_fallthru
      _
    %p136 = scmp.le.s32.totalorder 1, %s9
    %p137 = scmp.lt.s32.totalorder %s9, 3
    %p138 = pnand %p136, %p137
    %p139 = pneg %p138
    // Predicated region
    $region29: #{cnn_forward.5} parent=5 // pred_check
      _
    $region30: #{cnn_forward.5} parent=5 // pred_check_branch
      %141 = sbr.rel (%p138) target = $region32
    $region31: #{cnn_forward.5} parent=5 // pred_region
      %s142 = ssub.s32 %s9, 1
      %p143 = scmp.lt.s32.totalorder %s14, 1
      %s144 = scalar_select %p143, %s14, 1
      %s145 = smul.addr %s144, 175
      %s146 = smul.addr %s145, 4
      %s147 = scalar_lea.vmem %s0, %s146
      %p148 = pneg %p35
      %p149 = pneg %p32
      %p150 = pneg %p56
      %p151 = pneg %p53
      %p152 = pneg %p77
      %p153 = pneg %p74
      %p154 = pneg %p103
      %p155 = pneg %p100
      %p156 = scmp.lt.s32.totalorder %s14, 1
      %s157 = scalar_select %p156, %s14, 1
      %s158 = smul.addr %s157, 7
      %s159 = smul.addr %s158, 4
      %s160 = scalar_lea.vmem %s3, %s159
      %p161 = scmp.lt.s32.totalorder %s14, 1
      %s162 = scalar_select %p161, %s14, 1
      %s163 = smul.addr %s162, 175
      %s164 = smul.addr %s163, 4
      %s165 = scalar_lea.vmem %s0, %s164
      %p166 = scmp.lt.s32.totalorder %s14, 1
      %s167 = scalar_select %p166, %s14, 1
      %s168 = smul.addr %s167, 7
      %s169 = smul.addr %s168, 4
      %s170 = scalar_lea.vmem %s3, %s169
      %v172 = vld [vmem:[%s165] sm:$0xff]
      %v173 = vld [vmem:[%s165 + $0x8] sm:$0xff]
      %v174 = vld [vmem:[%s165 + $0x10] sm:$0xff]
      %v175 = vld [vmem:[%s165 + $0x18] sm:$0xf]
      %v176 = vld [vmem:[%s165 + $0x1c] sm:$0xff]
      %v177 = vld [vmem:[%s165 + $0x24] sm:$0xff]
      %v178 = vld [vmem:[%s165 + $0x2c] sm:$0xff]
      %v179 = vld [vmem:[%s165 + $0x34] sm:$0xf]
      %v180 = vld [vmem:[%s165 + $0x38] sm:$0xff]
      %v181 = vld [vmem:[%s165 + $0x40] sm:$0xff]
      %v182 = vld [vmem:[%s165 + $0x48] sm:$0xff]
      %v183 = vld [vmem:[%s165 + $0x50] sm:$0xf]
      %v184 = vld [vmem:[%s165 + $0x54] sm:$0xff]
      %v185 = vld [vmem:[%s165 + $0x5c] sm:$0xff]
      %v186 = vld [vmem:[%s165 + $0x64] sm:$0xff]
      %v187 = vld [vmem:[%s165 + $0x6c] sm:$0xf]
      %v188 = vld [vmem:[%s165 + $0x70] sm:$0xff]
      %v189 = vld [vmem:[%s165 + $0x78] sm:$0xff]
      %v190 = vld [vmem:[%s165 + $0x80] sm:$0xff]
      %v191 = vld [vmem:[%s165 + $0x88] sm:$0xf]
      %v192 = vld [vmem:[%s165 + $0x8c] sm:$0xff]
      %v193 = vld [vmem:[%s165 + $0x94] sm:$0xff]
      %v194 = vld [vmem:[%s165 + $0x9c] sm:$0xff]
      %v195 = vld [vmem:[%s165 + $0xa4] sm:$0xf]
      %v196 = vld [vmem:[%s165 + $0xa8] sm:$0xff]
      %v197 = vld [vmem:[%s165 + $0xb0] sm:$0xff]
      %v198 = vld [vmem:[%s165 + $0xb8] sm:$0xff]
      %v199 = vld [vmem:[%s165 + $0xc0] sm:$0xf]
      %v200 = vld [vmem:[%s165 + $0xc4] sm:$0xff]
      %v201 = vld [vmem:[%s165 + $0xcc] sm:$0xff]
      %v202 = vld [vmem:[%s165 + $0xd4] sm:$0xff]
      %v203 = vld [vmem:[%s165 + $0xdc] sm:$0xf]
      %v204 = vld [vmem:[%s165 + $0xe0] sm:$0xff]
      %v205 = vld [vmem:[%s165 + $0xe8] sm:$0xff]
      %v206 = vld [vmem:[%s165 + $0xf0] sm:$0xff]
      %v207 = vld [vmem:[%s165 + $0xf8] sm:$0xf]
      %v208 = vld [vmem:[%s165 + $0xfc] sm:$0xff]
      %v209 = vld [vmem:[%s165 + $0x104] sm:$0xff]
      %v210 = vld [vmem:[%s165 + $0x10c] sm:$0xff]
      %v211 = vld [vmem:[%s165 + $0x114] sm:$0xf]
      %v212 = vld [vmem:[%s165 + $0x118] sm:$0xff]
      %v213 = vld [vmem:[%s165 + $0x120] sm:$0xff]
      %v214 = vld [vmem:[%s165 + $0x128] sm:$0xff]
      %v215 = vld [vmem:[%s165 + $0x130] sm:$0xf]
      %v216 = vld [vmem:[%s165 + $0x134] sm:$0xff]
      %v217 = vld [vmem:[%s165 + $0x13c] sm:$0xff]
      %v218 = vld [vmem:[%s165 + $0x144] sm:$0xff]
      %v219 = vld [vmem:[%s165 + $0x14c] sm:$0xf]
      %v220 = vld [vmem:[%s165 + $0x150] sm:$0xff]
      %v221 = vld [vmem:[%s165 + $0x158] sm:$0xff]
      %v222 = vld [vmem:[%s165 + $0x160] sm:$0xff]
      %v223 = vld [vmem:[%s165 + $0x168] sm:$0xf]
      %v224 = vld [vmem:[%s165 + $0x16c] sm:$0xff]
      %v225 = vld [vmem:[%s165 + $0x174] sm:$0xff]
      %v226 = vld [vmem:[%s165 + $0x17c] sm:$0xff]
      %v227 = vld [vmem:[%s165 + $0x184] sm:$0xf]
      %v228 = vld [vmem:[%s165 + $0x188] sm:$0xff]
      %v229 = vld [vmem:[%s165 + $0x190] sm:$0xff]
      %v230 = vld [vmem:[%s165 + $0x198] sm:$0xff]
      %v231 = vld [vmem:[%s165 + $0x1a0] sm:$0xf]
      %v232 = vld [vmem:[%s165 + $0x1a4] sm:$0xff]
      %v233 = vld [vmem:[%s165 + $0x1ac] sm:$0xff]
      %v234 = vld [vmem:[%s165 + $0x1b4] sm:$0xff]
      %v235 = vld [vmem:[%s165 + $0x1bc] sm:$0xf]
      %v236 = vld [vmem:[%s165 + $0x1c0] sm:$0xff]
      %v237 = vld [vmem:[%s165 + $0x1c8] sm:$0xff]
      %v238 = vld [vmem:[%s165 + $0x1d0] sm:$0xff]
      %v239 = vld [vmem:[%s165 + $0x1d8] sm:$0xf]
      %v240 = vld [vmem:[%s165 + $0x1dc] sm:$0xff]
      %v241 = vld [vmem:[%s165 + $0x1e4] sm:$0xff]
      %v242 = vld [vmem:[%s165 + $0x1ec] sm:$0xff]
      %v243 = vld [vmem:[%s165 + $0x1f4] sm:$0xf]
      %v244 = vld [vmem:[%s165 + $0x1f8] sm:$0xff]
      %v245 = vld [vmem:[%s165 + $0x200] sm:$0xff]
      %v246 = vld [vmem:[%s165 + $0x208] sm:$0xff]
      %v247 = vld [vmem:[%s165 + $0x210] sm:$0xf]
      %v248 = vld [vmem:[%s165 + $0x214] sm:$0xff]
      %v249 = vld [vmem:[%s165 + $0x21c] sm:$0xff]
      %v250 = vld [vmem:[%s165 + $0x224] sm:$0xff]
      %v251 = vld [vmem:[%s165 + $0x22c] sm:$0xf]
      %v252 = vld [vmem:[%s165 + $0x230] sm:$0xff]
      %v253 = vld [vmem:[%s165 + $0x238] sm:$0xff]
      %v254 = vld [vmem:[%s165 + $0x240] sm:$0xff]
      %v255 = vld [vmem:[%s165 + $0x248] sm:$0xf]
      %v256 = vld [vmem:[%s165 + $0x24c] sm:$0xff]
      %v257 = vld [vmem:[%s165 + $0x254] sm:$0xff]
      %v258 = vld [vmem:[%s165 + $0x25c] sm:$0xff]
      %v259 = vld [vmem:[%s165 + $0x264] sm:$0xf]
      %v260 = vld [vmem:[%s165 + $0x268] sm:$0xff]
      %v261 = vld [vmem:[%s165 + $0x270] sm:$0xff]
      %v262 = vld [vmem:[%s165 + $0x278] sm:$0xff]
      %v263 = vld [vmem:[%s165 + $0x280] sm:$0xf]
      %v264 = vld [vmem:[%s165 + $0x284] sm:$0xff]
      %v265 = vld [vmem:[%s165 + $0x28c] sm:$0xff]
      %v266 = vld [vmem:[%s165 + $0x294] sm:$0xff]
      %v267 = vld [vmem:[%s165 + $0x29c] sm:$0xf]
      %v268 = vld [vmem:[%s165 + $0x2a0] sm:$0x33]
      %v269 = vld [vmem:[%s165 + $0x2a8] sm:$0x33]
      %v270 = vld [vmem:[%s165 + $0x2b0] sm:$0x33]
      %v271 = vld [vmem:[%s165 + $0x2b8] sm:$0x3]
      %v272 = vld [vmem:[%s1] sm:$0xf]
      %v273 = vld [vmem:[%s1 + $0x4] sm:$0xf]
      %v274 = vld [vmem:[%s1 + $0x8] sm:$0xf]
      %v275 = vld [vmem:[%s1 + $0xc] sm:$0xf]
      %v276 = vld [vmem:[%s1 + $0x10] sm:$0xf]
      %v277 = vld [vmem:[%s1 + $0x14] sm:$0xf]
      %v278 = vld [vmem:[%s1 + $0x18] sm:$0xf]
      %v279 = vld [vmem:[%s1 + $0x1c] sm:$0xf]
      %v280 = vld [vmem:[%s1 + $0x20] sm:$0xf]
      %v281 = vld [vmem:[%s1 + $0x24] sm:$0xf]
      %v282 = vld [vmem:[%s1 + $0x28] sm:$0xf]
      %v283 = vld [vmem:[%s1 + $0x2c] sm:$0xf]
      %v284 = vld [vmem:[%s1 + $0x30] sm:$0xf]
      %v285 = vld [vmem:[%s1 + $0x34] sm:$0xf]
      %v286 = vld [vmem:[%s1 + $0x38] sm:$0xf]
      %v287 = vld [vmem:[%s1 + $0x3c] sm:$0xf]
      %v288 = vld [vmem:[%s1 + $0x40] sm:$0xf]
      %v289 = vld [vmem:[%s1 + $0x44] sm:$0xf]
      %v290 = vld [vmem:[%s1 + $0x48] sm:$0xf]
      %v291 = vld [vmem:[%s1 + $0x4c] sm:$0xf]
      %v292 = vld [vmem:[%s1 + $0x50] sm:$0xf]
      %v293 = vld [vmem:[%s1 + $0x54] sm:$0xf]
      %v294 = vld [vmem:[%s1 + $0x58] sm:$0xf]
      %v295 = vld [vmem:[%s1 + $0x5c] sm:$0xf]
      %v296 = vld [vmem:[%s1 + $0x60] sm:$0xf]
      %v297 = vld [vmem:[%s1 + $0x64] sm:$0xf]
      %v298 = vld [vmem:[%s1 + $0x68] sm:$0xf]
      %v299 = vld [vmem:[%s1 + $0x6c] sm:$0xf]
      %v300 = vld [vmem:[%s1 + $0x70] sm:$0xf]
      %v301 = vld [vmem:[%s1 + $0x74] sm:$0xf]
      %v302 = vld [vmem:[%s1 + $0x78] sm:$0xf]
      %v303 = vld [vmem:[%s1 + $0x7c] sm:$0xf]
      %v304 = vld [vmem:[%s1 + $0x80] sm:$0xf]
      %v305 = vld [vmem:[%s1 + $0x84] sm:$0xf]
      %v306 = vld [vmem:[%s1 + $0x88] sm:$0xf]
      %v307 = vld [vmem:[%s1 + $0x8c] sm:$0xf]
      %v308 = vld [vmem:[%s1 + $0x90] sm:$0xf]
      %v309 = vld [vmem:[%s1 + $0x94] sm:$0xf]
      %v310 = vld [vmem:[%s1 + $0x98] sm:$0xf]
      %v311 = vld [vmem:[%s1 + $0x9c] sm:$0xf]
      %v312 = vld [vmem:[%s1 + $0xa0] sm:$0xf]
      %v313 = vld [vmem:[%s1 + $0xa4] sm:$0xf]
      %v314 = vld [vmem:[%s1 + $0xa8] sm:$0xf]
      %v315 = vld [vmem:[%s1 + $0xac] sm:$0xf]
      %v316 = vld [vmem:[%s1 + $0xb0] sm:$0xf]
      %v317 = vld [vmem:[%s1 + $0xb4] sm:$0xf]
      %v318 = vld [vmem:[%s1 + $0xb8] sm:$0xf]
      %v319 = vld [vmem:[%s1 + $0xbc] sm:$0xf]
      %v320 = vld [vmem:[%s1 + $0xc0] sm:$0xf]
      %v321 = vld [vmem:[%s1 + $0xc4] sm:$0xf]
      %v322 = vld [vmem:[%s1 + $0xc8] sm:$0xf]
      %v323 = vld [vmem:[%s1 + $0xcc] sm:$0xf]
      %v324 = vld [vmem:[%s1 + $0xd0] sm:$0xf]
      %v325 = vld [vmem:[%s1 + $0xd4] sm:$0xf]
      %v326 = vld [vmem:[%s1 + $0xd8] sm:$0xf]
      %v327 = vld [vmem:[%s1 + $0xdc] sm:$0xf]
      %v328 = vld [vmem:[%s1 + $0xe0] sm:$0xf]
      %v329 = vld [vmem:[%s1 + $0xe4] sm:$0xf]
      %v330 = vld [vmem:[%s1 + $0xe8] sm:$0xf]
      %v331 = vld [vmem:[%s1 + $0xec] sm:$0xf]
      %v332 = vld [vmem:[%s1 + $0xf0] sm:$0xf]
      %v333 = vld [vmem:[%s1 + $0xf4] sm:$0xf]
      %v334 = vld [vmem:[%s1 + $0xf8] sm:$0xf]
      %v335 = vld [vmem:[%s1 + $0xfc] sm:$0xf]
      %v336 = vld [vmem:[%s1 + $0x100] sm:$0xf]
      %v337 = vld [vmem:[%s1 + $0x104] sm:$0xf]
      %v338 = vld [vmem:[%s1 + $0x108] sm:$0xf]
      %v339 = vld [vmem:[%s1 + $0x10c] sm:$0xf]
      %v340 = vld [vmem:[%s1 + $0x110] sm:$0xf]
      %v341 = vld [vmem:[%s1 + $0x114] sm:$0xf]
      %v342 = vld [vmem:[%s1 + $0x118] sm:$0xf]
      %v343 = vld [vmem:[%s1 + $0x11c] sm:$0xf]
      %v344 = vld [vmem:[%s1 + $0x120] sm:$0xf]
      %v345 = vld [vmem:[%s1 + $0x124] sm:$0xf]
      %v346 = vld [vmem:[%s1 + $0x128] sm:$0xf]
      %v347 = vld [vmem:[%s1 + $0x12c] sm:$0xf]
      %v348 = vld [vmem:[%s1 + $0x130] sm:$0xf]
      %v349 = vld [vmem:[%s1 + $0x134] sm:$0xf]
      %v350 = vld [vmem:[%s1 + $0x138] sm:$0xf]
      %v351 = vld [vmem:[%s1 + $0x13c] sm:$0xf]
      %v352 = vld [vmem:[%s1 + $0x140] sm:$0xf]
      %v353 = vld [vmem:[%s1 + $0x144] sm:$0xf]
      %v354 = vld [vmem:[%s1 + $0x148] sm:$0xf]
      %v355 = vld [vmem:[%s1 + $0x14c] sm:$0xf]
      %v356 = vld [vmem:[%s1 + $0x150] sm:$0xf]
      %v357 = vld [vmem:[%s1 + $0x154] sm:$0xf]
      %v358 = vld [vmem:[%s1 + $0x158] sm:$0xf]
      %v359 = vld [vmem:[%s1 + $0x15c] sm:$0xf]
      %v360 = vld [vmem:[%s1 + $0x160] sm:$0xf]
      %v361 = vld [vmem:[%s1 + $0x164] sm:$0xf]
      %v362 = vld [vmem:[%s1 + $0x168] sm:$0xf]
      %v363 = vld [vmem:[%s1 + $0x16c] sm:$0xf]
      %v364 = vld [vmem:[%s1 + $0x170] sm:$0xf]
      %v365 = vld [vmem:[%s1 + $0x174] sm:$0xf]
      %v366 = vld [vmem:[%s1 + $0x178] sm:$0xf]
      %v367 = vld [vmem:[%s1 + $0x17c] sm:$0xf]
      %v368 = vld [vmem:[%s1 + $0x180] sm:$0xf]
      %v369 = vld [vmem:[%s1 + $0x184] sm:$0xf]
      %v370 = vld [vmem:[%s1 + $0x188] sm:$0xf]
      %v371 = vld [vmem:[%s1 + $0x18c] sm:$0xf]
      %v372 = vld [vmem:[%s1 + $0x190] sm:$0xf]
      %v373 = vld [vmem:[%s1 + $0x194] sm:$0xf]
      %v374 = vld [vmem:[%s1 + $0x198] sm:$0xf]
      %v375 = vld [vmem:[%s1 + $0x19c] sm:$0xf]
      %v376 = vld [vmem:[%s1 + $0x1a0] sm:$0xf]
      %v377 = vld [vmem:[%s1 + $0x1a4] sm:$0xf]
      %v378 = vld [vmem:[%s1 + $0x1a8] sm:$0xf]
      %v379 = vld [vmem:[%s1 + $0x1ac] sm:$0xf]
      %v380 = vld [vmem:[%s1 + $0x1b0] sm:$0xf]
      %v381 = vld [vmem:[%s1 + $0x1b4] sm:$0xf]
      %v382 = vld [vmem:[%s1 + $0x1b8] sm:$0xf]
      %v383 = vld [vmem:[%s1 + $0x1bc] sm:$0xf]
      %v384 = vld [vmem:[%s2] sm:$0x1]
      %v386 = vlaneseq
      %v387 = vshrl.u32 %v386, 7
      %v388 = vsub.s32 0, %v387
      %v389 = vrot.slane %v384, %v388
      %v491 = vunpack.c.l.b16 %v172
      %v492 = vunpack.c.h.b16 %v172
      %v493 = vunpack.c.l.b16 %v173
      %v494 = vunpack.c.h.b16 %v173
      %v495 = vunpack.c.l.b16 %v174
      %v496 = vunpack.c.h.b16 %v174
      %v497 = vunpack.c.l.b16 %v175
      %v498 = vunpack.c.l.b16 %v176
      %v499 = vunpack.c.h.b16 %v176
      %v500 = vunpack.c.l.b16 %v177
      %v501 = vunpack.c.h.b16 %v177
      %v502 = vunpack.c.l.b16 %v178
      %v503 = vunpack.c.h.b16 %v178
      %v504 = vunpack.c.l.b16 %v179
      %v505 = vunpack.c.l.b16 %v180
      %v506 = vunpack.c.h.b16 %v180
      %v507 = vunpack.c.l.b16 %v181
      %v508 = vunpack.c.h.b16 %v181
      %v509 = vunpack.c.l.b16 %v182
      %v510 = vunpack.c.h.b16 %v182
      %v511 = vunpack.c.l.b16 %v183
      %v512 = vunpack.c.l.b16 %v184
      %v513 = vunpack.c.h.b16 %v184
      %v514 = vunpack.c.l.b16 %v185
      %v515 = vunpack.c.h.b16 %v185
      %v516 = vunpack.c.l.b16 %v186
      %v517 = vunpack.c.h.b16 %v186
      %v518 = vunpack.c.l.b16 %v187
      %v519 = vunpack.c.l.b16 %v188
      %v520 = vunpack.c.h.b16 %v188
      %v521 = vunpack.c.l.b16 %v189
      %v522 = vunpack.c.h.b16 %v189
      %v523 = vunpack.c.l.b16 %v190
      %v524 = vunpack.c.h.b16 %v190
      %v525 = vunpack.c.l.b16 %v191
      %v526 = vunpack.c.l.b16 %v192
      %v527 = vunpack.c.h.b16 %v192
      %v528 = vunpack.c.l.b16 %v193
      %v529 = vunpack.c.h.b16 %v193
      %v530 = vunpack.c.l.b16 %v194
      %v531 = vunpack.c.h.b16 %v194
      %v532 = vunpack.c.l.b16 %v195
      %v533 = vunpack.c.l.b16 %v196
      %v534 = vunpack.c.h.b16 %v196
      %v535 = vunpack.c.l.b16 %v197
      %v536 = vunpack.c.h.b16 %v197
      %v537 = vunpack.c.l.b16 %v198
      %v538 = vunpack.c.h.b16 %v198
      %v539 = vunpack.c.l.b16 %v199
      %v540 = vunpack.c.l.b16 %v200
      %v541 = vunpack.c.h.b16 %v200
      %v542 = vunpack.c.l.b16 %v201
      %v543 = vunpack.c.h.b16 %v201
      %v544 = vunpack.c.l.b16 %v202
      %v545 = vunpack.c.h.b16 %v202
      %v546 = vunpack.c.l.b16 %v203
      %v547 = vunpack.c.l.b16 %v204
      %v548 = vunpack.c.h.b16 %v204
      %v549 = vunpack.c.l.b16 %v205
      %v550 = vunpack.c.h.b16 %v205
      %v551 = vunpack.c.l.b16 %v206
      %v552 = vunpack.c.h.b16 %v206
      %v553 = vunpack.c.l.b16 %v207
      %v554 = vunpack.c.l.b16 %v208
      %v555 = vunpack.c.h.b16 %v208
      %v556 = vunpack.c.l.b16 %v209
      %v557 = vunpack.c.h.b16 %v209
      %v558 = vunpack.c.l.b16 %v210
      %v559 = vunpack.c.h.b16 %v210
      %v560 = vunpack.c.l.b16 %v211
      %v561 = vunpack.c.l.b16 %v212
      %v562 = vunpack.c.h.b16 %v212
      %v563 = vunpack.c.l.b16 %v213
      %v564 = vunpack.c.h.b16 %v213
      %v565 = vunpack.c.l.b16 %v214
      %v566 = vunpack.c.h.b16 %v214
      %v567 = vunpack.c.l.b16 %v215
      %v568 = vunpack.c.l.b16 %v216
      %v569 = vunpack.c.h.b16 %v216
      %v570 = vunpack.c.l.b16 %v217
      %v571 = vunpack.c.h.b16 %v217
      %v572 = vunpack.c.l.b16 %v218
      %v573 = vunpack.c.h.b16 %v218
      %v574 = vunpack.c.l.b16 %v219
      %v575 = vunpack.c.l.b16 %v220
      %v576 = vunpack.c.h.b16 %v220
      %v577 = vunpack.c.l.b16 %v221
      %v578 = vunpack.c.h.b16 %v221
      %v579 = vunpack.c.l.b16 %v222
      %v580 = vunpack.c.h.b16 %v222
      %v581 = vunpack.c.l.b16 %v223
      %v582 = vunpack.c.l.b16 %v224
      %v583 = vunpack.c.h.b16 %v224
      %v584 = vunpack.c.l.b16 %v225
      %v585 = vunpack.c.h.b16 %v225
      %v586 = vunpack.c.l.b16 %v226
      %v587 = vunpack.c.h.b16 %v226
      %v588 = vunpack.c.l.b16 %v227
      %v589 = vunpack.c.l.b16 %v228
      %v590 = vunpack.c.h.b16 %v228
      %v591 = vunpack.c.l.b16 %v229
      %v592 = vunpack.c.h.b16 %v229
      %v593 = vunpack.c.l.b16 %v230
      %v594 = vunpack.c.h.b16 %v230
      %v595 = vunpack.c.l.b16 %v231
      %v596 = vunpack.c.l.b16 %v232
      %v597 = vunpack.c.h.b16 %v232
      %v598 = vunpack.c.l.b16 %v233
      %v599 = vunpack.c.h.b16 %v233
      %v600 = vunpack.c.l.b16 %v234
      %v601 = vunpack.c.h.b16 %v234
      %v602 = vunpack.c.l.b16 %v235
      %v603 = vunpack.c.l.b16 %v236
      %v604 = vunpack.c.h.b16 %v236
      %v605 = vunpack.c.l.b16 %v237
      %v606 = vunpack.c.h.b16 %v237
      %v607 = vunpack.c.l.b16 %v238
      %v608 = vunpack.c.h.b16 %v238
      %v609 = vunpack.c.l.b16 %v239
      %v610 = vunpack.c.l.b16 %v240
      %v611 = vunpack.c.h.b16 %v240
      %v612 = vunpack.c.l.b16 %v241
      %v613 = vunpack.c.h.b16 %v241
      %v614 = vunpack.c.l.b16 %v242
      %v615 = vunpack.c.h.b16 %v242
      %v616 = vunpack.c.l.b16 %v243
      %v617 = vunpack.c.l.b16 %v244
      %v618 = vunpack.c.h.b16 %v244
      %v619 = vunpack.c.l.b16 %v245
      %v620 = vunpack.c.h.b16 %v245
      %v621 = vunpack.c.l.b16 %v246
      %v622 = vunpack.c.h.b16 %v246
      %v623 = vunpack.c.l.b16 %v247
      %v624 = vunpack.c.l.b16 %v248
      %v625 = vunpack.c.h.b16 %v248
      %v626 = vunpack.c.l.b16 %v249
      %v627 = vunpack.c.h.b16 %v249
      %v628 = vunpack.c.l.b16 %v250
      %v629 = vunpack.c.h.b16 %v250
      %v630 = vunpack.c.l.b16 %v251
      %v631 = vunpack.c.l.b16 %v252
      %v632 = vunpack.c.h.b16 %v252
      %v633 = vunpack.c.l.b16 %v253
      %v634 = vunpack.c.h.b16 %v253
      %v635 = vunpack.c.l.b16 %v254
      %v636 = vunpack.c.h.b16 %v254
      %v637 = vunpack.c.l.b16 %v255
      %v638 = vunpack.c.l.b16 %v256
      %v639 = vunpack.c.h.b16 %v256
      %v640 = vunpack.c.l.b16 %v257
      %v641 = vunpack.c.h.b16 %v257
      %v642 = vunpack.c.l.b16 %v258
      %v643 = vunpack.c.h.b16 %v258
      %v644 = vunpack.c.l.b16 %v259
      %v645 = vunpack.c.l.b16 %v260
      %v646 = vunpack.c.h.b16 %v260
      %v647 = vunpack.c.l.b16 %v261
      %v648 = vunpack.c.h.b16 %v261
      %v649 = vunpack.c.l.b16 %v262
      %v650 = vunpack.c.h.b16 %v262
      %v651 = vunpack.c.l.b16 %v263
      %v652 = vunpack.c.l.b16 %v264
      %v653 = vunpack.c.h.b16 %v264
      %v654 = vunpack.c.l.b16 %v265
      %v655 = vunpack.c.h.b16 %v265
      %v656 = vunpack.c.l.b16 %v266
      %v657 = vunpack.c.h.b16 %v266
      %v658 = vunpack.c.l.b16 %v267
      %v659 = vunpack.c.l.b16 %v268
      %v660 = vunpack.c.h.b16 %v268
      %v661 = vunpack.c.l.b16 %v269
      %v662 = vunpack.c.h.b16 %v269
      %v663 = vunpack.c.l.b16 %v270
      %v664 = vunpack.c.h.b16 %v270
      %v665 = vunpack.c.l.b16 %v271
      %v666 = vpack.c.b16 %v498, %v491
      %v667 = vpack.c.b16 %v499, %v492
      %v668 = vpack.c.b16 %v500, %v493
      %v669 = vpack.c.b16 %v501, %v494
      %v670 = vpack.c.b16 %v502, %v495
      %v671 = vpack.c.b16 %v503, %v496
      %v672 = vpack.c.b16 %v504, %v497
      %v673 = vpack.c.b16 %v512, %v505
      %v674 = vpack.c.b16 %v513, %v506
      %v675 = vpack.c.b16 %v514, %v507
      %v676 = vpack.c.b16 %v515, %v508
      %v677 = vpack.c.b16 %v516, %v509
      %v678 = vpack.c.b16 %v517, %v510
      %v679 = vpack.c.b16 %v518, %v511
      %v680 = vpack.c.b16 %v526, %v519
      %v681 = vpack.c.b16 %v527, %v520
      %v682 = vpack.c.b16 %v528, %v521
      %v683 = vpack.c.b16 %v529, %v522
      %v684 = vpack.c.b16 %v530, %v523
      %v685 = vpack.c.b16 %v531, %v524
      %v686 = vpack.c.b16 %v532, %v525
      %v687 = vpack.c.b16 %v540, %v533
      %v688 = vpack.c.b16 %v541, %v534
      %v689 = vpack.c.b16 %v542, %v535
      %v690 = vpack.c.b16 %v543, %v536
      %v691 = vpack.c.b16 %v544, %v537
      %v692 = vpack.c.b16 %v545, %v538
      %v693 = vpack.c.b16 %v546, %v539
      %v694 = vpack.c.b16 %v554, %v547
      %v695 = vpack.c.b16 %v555, %v548
      %v696 = vpack.c.b16 %v556, %v549
      %v697 = vpack.c.b16 %v557, %v550
      %v698 = vpack.c.b16 %v558, %v551
      %v699 = vpack.c.b16 %v559, %v552
      %v700 = vpack.c.b16 %v560, %v553
      %v701 = vpack.c.b16 %v568, %v561
      %v702 = vpack.c.b16 %v569, %v562
      %v703 = vpack.c.b16 %v570, %v563
      %v704 = vpack.c.b16 %v571, %v564
      %v705 = vpack.c.b16 %v572, %v565
      %v706 = vpack.c.b16 %v573, %v566
      %v707 = vpack.c.b16 %v574, %v567
      %v708 = vpack.c.b16 %v582, %v575
      %v709 = vpack.c.b16 %v583, %v576
      %v710 = vpack.c.b16 %v584, %v577
      %v711 = vpack.c.b16 %v585, %v578
      %v712 = vpack.c.b16 %v586, %v579
      %v713 = vpack.c.b16 %v587, %v580
      %v714 = vpack.c.b16 %v588, %v581
      %v715 = vpack.c.b16 %v596, %v589
      %v716 = vpack.c.b16 %v597, %v590
      %v717 = vpack.c.b16 %v598, %v591
      %v718 = vpack.c.b16 %v599, %v592
      %v719 = vpack.c.b16 %v600, %v593
      %v720 = vpack.c.b16 %v601, %v594
      %v721 = vpack.c.b16 %v602, %v595
      %v722 = vpack.c.b16 %v610, %v603
      %v723 = vpack.c.b16 %v611, %v604
      %v724 = vpack.c.b16 %v612, %v605
      %v725 = vpack.c.b16 %v613, %v606
      %v726 = vpack.c.b16 %v614, %v607
      %v727 = vpack.c.b16 %v615, %v608
      %v728 = vpack.c.b16 %v616, %v609
      %v729 = vpack.c.b16 %v624, %v617
      %v730 = vpack.c.b16 %v625, %v618
      %v731 = vpack.c.b16 %v626, %v619
      %v732 = vpack.c.b16 %v627, %v620
      %v733 = vpack.c.b16 %v628, %v621
      %v734 = vpack.c.b16 %v629, %v622
      %v735 = vpack.c.b16 %v630, %v623
      %v736 = vpack.c.b16 %v638, %v631
      %v737 = vpack.c.b16 %v639, %v632
      %v738 = vpack.c.b16 %v640, %v633
      %v739 = vpack.c.b16 %v641, %v634
      %v740 = vpack.c.b16 %v642, %v635
      %v741 = vpack.c.b16 %v643, %v636
      %v742 = vpack.c.b16 %v644, %v637
      %v743 = vpack.c.b16 %v652, %v645
      %v744 = vpack.c.b16 %v653, %v646
      %v745 = vpack.c.b16 %v654, %v647
      %v746 = vpack.c.b16 %v655, %v648
      %v747 = vpack.c.b16 %v656, %v649
      %v748 = vpack.c.b16 %v657, %v650
      %v749 = vpack.c.b16 %v658, %v651
      %v750 = vpack.c.b16 %v659, %v659
      %v751 = vpack.c.b16 %v660, %v660
      %v752 = vpack.c.b16 %v661, %v661
      %v753 = vpack.c.b16 %v662, %v662
      %v754 = vpack.c.b16 %v663, %v663
      %v755 = vpack.c.b16 %v664, %v664
      %v756 = vpack.c.b16 %v665, %v665
      %v960 = vunpack.c.l.b16 %v272
      %v961 = vunpack.c.l.b16 %v273
      %v962 = vunpack.c.l.b16 %v274
      %v963 = vunpack.c.l.b16 %v275
      %v964 = vunpack.c.l.b16 %v276
      %v965 = vunpack.c.l.b16 %v277
      %v966 = vunpack.c.l.b16 %v278
      %v967 = vunpack.c.l.b16 %v279
      %v968 = vunpack.c.l.b16 %v280
      %v969 = vunpack.c.l.b16 %v281
      %v970 = vunpack.c.l.b16 %v282
      %v971 = vunpack.c.l.b16 %v283
      %v972 = vunpack.c.l.b16 %v284
      %v973 = vunpack.c.l.b16 %v285
      %v974 = vunpack.c.l.b16 %v286
      %v975 = vunpack.c.l.b16 %v287
      %v976 = vunpack.c.l.b16 %v288
      %v977 = vunpack.c.l.b16 %v289
      %v978 = vunpack.c.l.b16 %v290
      %v979 = vunpack.c.l.b16 %v291
      %v980 = vunpack.c.l.b16 %v292
      %v981 = vunpack.c.l.b16 %v293
      %v982 = vunpack.c.l.b16 %v294
      %v983 = vunpack.c.l.b16 %v295
      %v984 = vunpack.c.l.b16 %v296
      %v985 = vunpack.c.l.b16 %v297
      %v986 = vunpack.c.l.b16 %v298
      %v987 = vunpack.c.l.b16 %v299
      %v988 = vunpack.c.l.b16 %v300
      %v989 = vunpack.c.l.b16 %v301
      %v990 = vunpack.c.l.b16 %v302
      %v991 = vunpack.c.l.b16 %v303
      %v992 = vunpack.c.l.b16 %v304
      %v993 = vunpack.c.l.b16 %v305
      %v994 = vunpack.c.l.b16 %v306
      %v995 = vunpack.c.l.b16 %v307
      %v996 = vunpack.c.l.b16 %v308
      %v997 = vunpack.c.l.b16 %v309
      %v998 = vunpack.c.l.b16 %v310
      %v999 = vunpack.c.l.b16 %v311
      %v1000 = vunpack.c.l.b16 %v312
      %v1001 = vunpack.c.l.b16 %v313
      %v1002 = vunpack.c.l.b16 %v314
      %v1003 = vunpack.c.l.b16 %v315
      %v1004 = vunpack.c.l.b16 %v316
      %v1005 = vunpack.c.l.b16 %v317
      %v1006 = vunpack.c.l.b16 %v318
      %v1007 = vunpack.c.l.b16 %v319
      %v1008 = vunpack.c.l.b16 %v320
      %v1009 = vunpack.c.l.b16 %v321
      %v1010 = vunpack.c.l.b16 %v322
      %v1011 = vunpack.c.l.b16 %v323
      %v1012 = vunpack.c.l.b16 %v324
      %v1013 = vunpack.c.l.b16 %v325
      %v1014 = vunpack.c.l.b16 %v326
      %v1015 = vunpack.c.l.b16 %v327
      %v1016 = vunpack.c.l.b16 %v328
      %v1017 = vunpack.c.l.b16 %v329
      %v1018 = vunpack.c.l.b16 %v330
      %v1019 = vunpack.c.l.b16 %v331
      %v1020 = vunpack.c.l.b16 %v332
      %v1021 = vunpack.c.l.b16 %v333
      %v1022 = vunpack.c.l.b16 %v334
      %v1023 = vunpack.c.l.b16 %v335
      %v1024 = vunpack.c.l.b16 %v336
      %v1025 = vunpack.c.l.b16 %v337
      %v1026 = vunpack.c.l.b16 %v338
      %v1027 = vunpack.c.l.b16 %v339
      %v1028 = vunpack.c.l.b16 %v340
      %v1029 = vunpack.c.l.b16 %v341
      %v1030 = vunpack.c.l.b16 %v342
      %v1031 = vunpack.c.l.b16 %v343
      %v1032 = vunpack.c.l.b16 %v344
      %v1033 = vunpack.c.l.b16 %v345
      %v1034 = vunpack.c.l.b16 %v346
      %v1035 = vunpack.c.l.b16 %v347
      %v1036 = vunpack.c.l.b16 %v348
      %v1037 = vunpack.c.l.b16 %v349
      %v1038 = vunpack.c.l.b16 %v350
      %v1039 = vunpack.c.l.b16 %v351
      %v1040 = vunpack.c.l.b16 %v352
      %v1041 = vunpack.c.l.b16 %v353
      %v1042 = vunpack.c.l.b16 %v354
      %v1043 = vunpack.c.l.b16 %v355
      %v1044 = vunpack.c.l.b16 %v356
      %v1045 = vunpack.c.l.b16 %v357
      %v1046 = vunpack.c.l.b16 %v358
      %v1047 = vunpack.c.l.b16 %v359
      %v1048 = vunpack.c.l.b16 %v360
      %v1049 = vunpack.c.l.b16 %v361
      %v1050 = vunpack.c.l.b16 %v362
      %v1051 = vunpack.c.l.b16 %v363
      %v1052 = vunpack.c.l.b16 %v364
      %v1053 = vunpack.c.l.b16 %v365
      %v1054 = vunpack.c.l.b16 %v366
      %v1055 = vunpack.c.l.b16 %v367
      %v1056 = vunpack.c.l.b16 %v368
      %v1057 = vunpack.c.l.b16 %v369
      %v1058 = vunpack.c.l.b16 %v370
      %v1059 = vunpack.c.l.b16 %v371
      %v1060 = vunpack.c.l.b16 %v372
      %v1061 = vunpack.c.l.b16 %v373
      %v1062 = vunpack.c.l.b16 %v374
      %v1063 = vunpack.c.l.b16 %v375
      %v1064 = vunpack.c.l.b16 %v376
      %v1065 = vunpack.c.l.b16 %v377
      %v1066 = vunpack.c.l.b16 %v378
      %v1067 = vunpack.c.l.b16 %v379
      %v1068 = vunpack.c.l.b16 %v380
      %v1069 = vunpack.c.l.b16 %v381
      %v1070 = vunpack.c.l.b16 %v382
      %v1071 = vunpack.c.l.b16 %v383
      %v1072 = vpack.c.b16 %v961, %v960
      %v1073 = vpack.c.b16 %v963, %v962
      %v1074 = vpack.c.b16 %v965, %v964
      %v1075 = vpack.c.b16 %v967, %v966
      %v1076 = vpack.c.b16 %v969, %v968
      %v1077 = vpack.c.b16 %v971, %v970
      %v1078 = vpack.c.b16 %v973, %v972
      %v1079 = vpack.c.b16 %v975, %v974
      %v1080 = vpack.c.b16 %v977, %v976
      %v1081 = vpack.c.b16 %v979, %v978
      %v1082 = vpack.c.b16 %v981, %v980
      %v1083 = vpack.c.b16 %v983, %v982
      %v1084 = vpack.c.b16 %v985, %v984
      %v1085 = vpack.c.b16 %v987, %v986
      %v1086 = vpack.c.b16 %v989, %v988
      %v1087 = vpack.c.b16 %v991, %v990
      %v1088 = vpack.c.b16 %v993, %v992
      %v1089 = vpack.c.b16 %v995, %v994
      %v1090 = vpack.c.b16 %v997, %v996
      %v1091 = vpack.c.b16 %v999, %v998
      %v1092 = vpack.c.b16 %v1001, %v1000
      %v1093 = vpack.c.b16 %v1003, %v1002
      %v1094 = vpack.c.b16 %v1005, %v1004
      %v1095 = vpack.c.b16 %v1007, %v1006
      %v1096 = vpack.c.b16 %v1009, %v1008
      %v1097 = vpack.c.b16 %v1011, %v1010
      %v1098 = vpack.c.b16 %v1013, %v1012
      %v1099 = vpack.c.b16 %v1015, %v1014
      %v1100 = vpack.c.b16 %v1017, %v1016
      %v1101 = vpack.c.b16 %v1019, %v1018
      %v1102 = vpack.c.b16 %v1021, %v1020
      %v1103 = vpack.c.b16 %v1023, %v1022
      %v1104 = vpack.c.b16 %v1025, %v1024
      %v1105 = vpack.c.b16 %v1027, %v1026
      %v1106 = vpack.c.b16 %v1029, %v1028
      %v1107 = vpack.c.b16 %v1031, %v1030
      %v1108 = vpack.c.b16 %v1033, %v1032
      %v1109 = vpack.c.b16 %v1035, %v1034
      %v1110 = vpack.c.b16 %v1037, %v1036
      %v1111 = vpack.c.b16 %v1039, %v1038
      %v1112 = vpack.c.b16 %v1041, %v1040
      %v1113 = vpack.c.b16 %v1043, %v1042
      %v1114 = vpack.c.b16 %v1045, %v1044
      %v1115 = vpack.c.b16 %v1047, %v1046
      %v1116 = vpack.c.b16 %v1049, %v1048
      %v1117 = vpack.c.b16 %v1051, %v1050
      %v1118 = vpack.c.b16 %v1053, %v1052
      %v1119 = vpack.c.b16 %v1055, %v1054
      %v1120 = vpack.c.b16 %v1057, %v1056
      %v1121 = vpack.c.b16 %v1059, %v1058
      %v1122 = vpack.c.b16 %v1061, %v1060
      %v1123 = vpack.c.b16 %v1063, %v1062
      %v1124 = vpack.c.b16 %v1065, %v1064
      %v1125 = vpack.c.b16 %v1067, %v1066
      %v1126 = vpack.c.b16 %v1069, %v1068
      %v1127 = vpack.c.b16 %v1071, %v1070
      %1184 = vmatprep.subr.bf16.mxu0 0
      %1185 = vmatpush1.bf16.msra.mxu0 %v1072
      %1186 = vmatprep.subr.bf16.mxu0 0
      %1187 = vmatpush1.bf16.msra.mxu0 %v1073
      %1188 = vmatprep.subr.bf16.mxu0 0
      %1189 = vmatpush1.bf16.msra.mxu0 %v1074
      %1190 = vmatprep.subr.bf16.mxu0 0
      %1191 = vmatpush1.bf16.msra.mxu0 %v1075
      %1192 = vmatprep.subr.bf16.mxu0 0
      %1193 = vmatpush1.bf16.msra.mxu0 %v1076
      %1194 = vmatprep.subr.bf16.mxu0 0
      %1195 = vmatpush1.bf16.msra.mxu0 %v1077
      %1196 = vmatprep.subr.bf16.mxu0 0
      %1197 = vmatpush1.bf16.msra.mxu0 %v1078
      %1198 = vmatprep.subr.bf16.mxu0 0
      %1199 = vmatpush1.bf16.msra.mxu0 %v1079
      %1200 = vmatprep.subr.bf16.mxu0 0
      %1201 = vmatpush1.bf16.msra.mxu0 %v1080
      %1202 = vmatprep.subr.bf16.mxu0 0
      %1203 = vmatpush1.bf16.msra.mxu0 %v1081
      %1204 = vmatprep.subr.bf16.mxu0 0
      %1205 = vmatpush1.bf16.msra.mxu0 %v1082
      %1206 = vmatprep.subr.bf16.mxu0 0
      %1207 = vmatpush1.bf16.msra.mxu0 %v1083
      %1208 = vmatprep.subr.bf16.mxu0 0
      %1209 = vmatpush1.bf16.msra.mxu0 %v1084
      %1210 = vmatprep.subr.bf16.mxu0 0
      %1211 = vmatpush1.bf16.msra.mxu0 %v1085
      %1212 = vmatprep.subr.bf16.mxu0 0
      %1213 = vmatpush1.bf16.msra.mxu0 %v1086
      %1214 = vmatprep.subr.bf16.mxu0 0
      %1215 = vmatpush1.bf16.msra.mxu0 %v1087
      %1216 = vmatprep.mubr.bf16.mxu0 %v667
      %1217 = vmatmul.mubr.bf16.gmra.mrb[0].mxu0 %v666
      %v1218 = vpop.f32.mrb[0].mxu0
      %v1219 = vadd.f32 %v389, %v1218
      %v1220 = vpop.f32.mrb[0].mxu0
      %v1221 = vpop.f32.mrb[0].mxu0
      %v1222 = vadd.f32 %v389, %v1221
      %v1223 = vpop.f32.mrb[0].mxu0
      %1224 = vmatprep.mubr.bf16.mxu0 %v674
      %1225 = vmatmul.mubr.bf16.gmra.mrb[0].mxu0 %v673
      %v1226 = vpop.f32.mrb[0].mxu0
      %v1227 = vadd.f32 %v389, %v1226
      %v1228 = vpop.f32.mrb[0].mxu0
      %v1229 = vpop.f32.mrb[0].mxu0
      %v1230 = vadd.f32 %v389, %v1229
      %v1231 = vpop.f32.mrb[0].mxu0
      %1232 = vmatprep.mubr.bf16.mxu0 %v681
      %1233 = vmatmul.mubr.bf16.gmra.mrb[0].mxu0 %v680
      %v1234 = vpop.f32.mrb[0].mxu0
      %v1235 = vadd.f32 %v389, %v1234
      %v1236 = vpop.f32.mrb[0].mxu0
      %v1237 = vpop.f32.mrb[0].mxu0
      %v1238 = vadd.f32 %v389, %v1237
      %v1239 = vpop.f32.mrb[0].mxu0
      %1240 = vmatprep.mubr.bf16.mxu0 %v688
      %1241 = vmatmul.mubr.bf16.gmra.mrb[0].mxu0 %v687
      %v1242 = vpop.f32.mrb[0].mxu0
      %v1243 = vadd.f32 %v389, %v1242
      %v1244 = vpop.f32.mrb[0].mxu0
      %v1245 = vpop.f32.mrb[0].mxu0
      %v1246 = vadd.f32 %v389, %v1245
      %v1247 = vpop.f32.mrb[0].mxu0
      %1248 = vmatprep.mubr.bf16.mxu0 %v695
      %1249 = vmatmul.mubr.bf16.gmra.mrb[0].mxu0 %v694
      %v1250 = vpop.f32.mrb[0].mxu0
      %v1251 = vadd.f32 %v389, %v1250
      %v1252 = vpop.f32.mrb[0].mxu0
      %v1253 = vpop.f32.mrb[0].mxu0
      %v1254 = vadd.f32 %v389, %v1253
      %v1255 = vpop.f32.mrb[0].mxu0
      %1256 = vmatprep.mubr.bf16.mxu0 %v702
      %1257 = vmatmul.mubr.bf16.gmra.mrb[0].mxu0 %v701
      %v1258 = vpop.f32.mrb[0].mxu0
      %v1259 = vadd.f32 %v389, %v1258
      %v1260 = vpop.f32.mrb[0].mxu0
      %v1261 = vpop.f32.mrb[0].mxu0
      %v1262 = vadd.f32 %v389, %v1261
      %v1263 = vpop.f32.mrb[0].mxu0
      %1264 = vmatprep.mubr.bf16.mxu0 %v709
      %1265 = vmatmul.mubr.bf16.gmra.mrb[0].mxu0 %v708
      %v1266 = vpop.f32.mrb[0].mxu0
      %v1267 = vadd.f32 %v389, %v1266
      %v1268 = vpop.f32.mrb[0].mxu0
      %v1269 = vpop.f32.mrb[0].mxu0
      %v1270 = vadd.f32 %v389, %v1269
      %v1271 = vpop.f32.mrb[0].mxu0
      %1272 = vmatprep.mubr.bf16.mxu0 %v716
      %1273 = vmatmul.mubr.bf16.gmra.mrb[0].mxu0 %v715
      %v1274 = vpop.f32.mrb[0].mxu0
      %v1275 = vadd.f32 %v389, %v1274
      %v1276 = vpop.f32.mrb[0].mxu0
      %v1277 = vpop.f32.mrb[0].mxu0
      %v1278 = vadd.f32 %v389, %v1277
      %v1279 = vpop.f32.mrb[0].mxu0
      %1280 = vmatprep.mubr.bf16.mxu0 %v723
      %1281 = vmatmul.mubr.bf16.gmra.mrb[0].mxu0 %v722
      %v1282 = vpop.f32.mrb[0].mxu0
      %v1283 = vadd.f32 %v389, %v1282
      %v1284 = vpop.f32.mrb[0].mxu0
      %v1285 = vpop.f32.mrb[0].mxu0
      %v1286 = vadd.f32 %v389, %v1285
      %v1287 = vpop.f32.mrb[0].mxu0
      %1288 = vmatprep.mubr.bf16.mxu0 %v730
      %1289 = vmatmul.mubr.bf16.gmra.mrb[0].mxu0 %v729
      %v1290 = vpop.f32.mrb[0].mxu0
      %v1291 = vadd.f32 %v389, %v1290
      %v1292 = vpop.f32.mrb[0].mxu0
      %v1293 = vpop.f32.mrb[0].mxu0
      %v1294 = vadd.f32 %v389, %v1293
      %v1295 = vpop.f32.mrb[0].mxu0
      %1296 = vmatprep.mubr.bf16.mxu0 %v737
      %1297 = vmatmul.mubr.bf16.gmra.mrb[0].mxu0 %v736
      %v1298 = vpop.f32.mrb[0].mxu0
      %v1299 = vadd.f32 %v389, %v1298
      %v1300 = vpop.f32.mrb[0].mxu0
      %v1301 = vpop.f32.mrb[0].mxu0
      %v1302 = vadd.f32 %v389, %v1301
      %v1303 = vpop.f32.mrb[0].mxu0
      %1304 = vmatprep.mubr.bf16.mxu0 %v744
      %1305 = vmatmul.mubr.bf16.gmra.mrb[0].mxu0 %v743
      %v1306 = vpop.f32.mrb[0].mxu0
      %v1307 = vadd.f32 %v389, %v1306
      %v1308 = vpop.f32.mrb[0].mxu0
      %v1309 = vpop.f32.mrb[0].mxu0
      %v1310 = vadd.f32 %v389, %v1309
      %v1311 = vpop.f32.mrb[0].mxu0
      %1312 = vmatprep.mubr.bf16.mxu0 %v751
      %1313 = vmatmul.mubr.bf16.gmra.mrb[0].mxu0 %v750
      %v1314 = vpop.f32.mrb[0].mxu0
      %v1315 = vadd.f32 %v389, %v1314
      %v1316 = vpop.f32.mrb[0].mxu0
      %v1317 = vpop.f32.mrb[0].mxu0
      %v1318 = vpop.f32.mrb[0].mxu0
      %1319 = vdwg.mxu0
      %1320 = vmatprep.subr.bf16.mxu0 0
      %1321 = vmatpush1.bf16.msra.mxu0 %v1088
      %1322 = vmatprep.subr.bf16.mxu0 0
      %1323 = vmatpush1.bf16.msra.mxu0 %v1089
      %1324 = vmatprep.subr.bf16.mxu0 0
      %1325 = vmatpush1.bf16.msra.mxu0 %v1090
      %1326 = vmatprep.subr.bf16.mxu0 0
      %1327 = vmatpush1.bf16.msra.mxu0 %v1091
      %1328 = vmatprep.subr.bf16.mxu0 0
      %1329 = vmatpush1.bf16.msra.mxu0 %v1092
      %1330 = vmatprep.subr.bf16.mxu0 0
      %1331 = vmatpush1.bf16.msra.mxu0 %v1093
      %1332 = vmatprep.subr.bf16.mxu0 0
      %1333 = vmatpush1.bf16.msra.mxu0 %v1094
      %1334 = vmatprep.subr.bf16.mxu0 0
      %1335 = vmatpush1.bf16.msra.mxu0 %v1095
      %1336 = vmatprep.subr.bf16.mxu0 0
      %1337 = vmatpush1.bf16.msra.mxu0 %v1096
      %1338 = vmatprep.subr.bf16.mxu0 0
      %1339 = vmatpush1.bf16.msra.mxu0 %v1097
      %1340 = vmatprep.subr.bf16.mxu0 0
      %1341 = vmatpush1.bf16.msra.mxu0 %v1098
      %1342 = vmatprep.subr.bf16.mxu0 0
      %1343 = vmatpush1.bf16.msra.mxu0 %v1099
      %1344 = vmatprep.subr.bf16.mxu0 0
      %1345 = vmatpush1.bf16.msra.mxu0 %v1100
      %1346 = vmatprep.subr.bf16.mxu0 0
      %1347 = vmatpush1.bf16.msra.mxu0 %v1101
      %1348 = vmatprep.subr.bf16.mxu0 0
      %1349 = vmatpush1.bf16.msra.mxu0 %v1102
      %1350 = vmatprep.subr.bf16.mxu0 0
      %1351 = vmatpush1.bf16.msra.mxu0 %v1103
      %1352 = vmatprep.mubr.bf16.mxu0 %v669
      %1353 = vmatmul.mubr.bf16.gmra.mrb[0].mxu0 %v668
      %v1354 = vpop.f32.mrb[0].mxu0
      %v1355 = vadd.f32 %v1219, %v1354
      %v1356 = vpop.f32.mrb[0].mxu0
      %v1357 = vpop.f32.mrb[0].mxu0
      %v1358 = vadd.f32 %v1222, %v1357
      %v1359 = vpop.f32.mrb[0].mxu0
      %1360 = vmatprep.mubr.bf16.mxu0 %v676
      %1361 = vmatmul.mubr.bf16.gmra.mrb[0].mxu0 %v675
      %v1362 = vpop.f32.mrb[0].mxu0
      %v1363 = vadd.f32 %v1227, %v1362
      %v1364 = vpop.f32.mrb[0].mxu0
      %v1365 = vpop.f32.mrb[0].mxu0
      %v1366 = vadd.f32 %v1230, %v1365
      %v1367 = vpop.f32.mrb[0].mxu0
      %1368 = vmatprep.mubr.bf16.mxu0 %v683
      %1369 = vmatmul.mubr.bf16.gmra.mrb[0].mxu0 %v682
      %v1370 = vpop.f32.mrb[0].mxu0
      %v1371 = vadd.f32 %v1235, %v1370
      %v1372 = vpop.f32.mrb[0].mxu0
      %v1373 = vpop.f32.mrb[0].mxu0
      %v1374 = vadd.f32 %v1238, %v1373
      %v1375 = vpop.f32.mrb[0].mxu0
      %1376 = vmatprep.mubr.bf16.mxu0 %v690
      %1377 = vmatmul.mubr.bf16.gmra.mrb[0].mxu0 %v689
      %v1378 = vpop.f32.mrb[0].mxu0
      %v1379 = vadd.f32 %v1243, %v1378
      %v1380 = vpop.f32.mrb[0].mxu0
      %v1381 = vpop.f32.mrb[0].mxu0
      %v1382 = vadd.f32 %v1246, %v1381
      %v1383 = vpop.f32.mrb[0].mxu0
      %1384 = vmatprep.mubr.bf16.mxu0 %v697
      %1385 = vmatmul.mubr.bf16.gmra.mrb[0].mxu0 %v696
      %v1386 = vpop.f32.mrb[0].mxu0
      %v1387 = vadd.f32 %v1251, %v1386
      %v1388 = vpop.f32.mrb[0].mxu0
      %v1389 = vpop.f32.mrb[0].mxu0
      %v1390 = vadd.f32 %v1254, %v1389
      %v1391 = vpop.f32.mrb[0].mxu0
      %1392 = vmatprep.mubr.bf16.mxu0 %v704
      %1393 = vmatmul.mubr.bf16.gmra.mrb[0].mxu0 %v703
      %v1394 = vpop.f32.mrb[0].mxu0
      %v1395 = vadd.f32 %v1259, %v1394
      %v1396 = vpop.f32.mrb[0].mxu0
      %v1397 = vpop.f32.mrb[0].mxu0
      %v1398 = vadd.f32 %v1262, %v1397
      %v1399 = vpop.f32.mrb[0].mxu0
      %1400 = vmatprep.mubr.bf16.mxu0 %v711
      %1401 = vmatmul.mubr.bf16.gmra.mrb[0].mxu0 %v710
      %v1402 = vpop.f32.mrb[0].mxu0
      %v1403 = vadd.f32 %v1267, %v1402
      %v1404 = vpop.f32.mrb[0].mxu0
      %v1405 = vpop.f32.mrb[0].mxu0
      %v1406 = vadd.f32 %v1270, %v1405
      %v1407 = vpop.f32.mrb[0].mxu0
      %1408 = vmatprep.mubr.bf16.mxu0 %v718
      %1409 = vmatmul.mubr.bf16.gmra.mrb[0].mxu0 %v717
      %v1410 = vpop.f32.mrb[0].mxu0
      %v1411 = vadd.f32 %v1275, %v1410
      %v1412 = vpop.f32.mrb[0].mxu0
      %v1413 = vpop.f32.mrb[0].mxu0
      %v1414 = vadd.f32 %v1278, %v1413
      %v1415 = vpop.f32.mrb[0].mxu0
      %1416 = vmatprep.mubr.bf16.mxu0 %v725
      %1417 = vmatmul.mubr.bf16.gmra.mrb[0].mxu0 %v724
      %v1418 = vpop.f32.mrb[0].mxu0
      %v1419 = vadd.f32 %v1283, %v1418
      %v1420 = vpop.f32.mrb[0].mxu0
      %v1421 = vpop.f32.mrb[0].mxu0
      %v1422 = vadd.f32 %v1286, %v1421
      %v1423 = vpop.f32.mrb[0].mxu0
      %1424 = vmatprep.mubr.bf16.mxu0 %v732
      %1425 = vmatmul.mubr.bf16.gmra.mrb[0].mxu0 %v731
      %v1426 = vpop.f32.mrb[0].mxu0
      %v1427 = vadd.f32 %v1291, %v1426
      %v1428 = vpop.f32.mrb[0].mxu0
      %v1429 = vpop.f32.mrb[0].mxu0
      %v1430 = vadd.f32 %v1294, %v1429
      %v1431 = vpop.f32.mrb[0].mxu0
      %1432 = vmatprep.mubr.bf16.mxu0 %v739
      %1433 = vmatmul.mubr.bf16.gmra.mrb[0].mxu0 %v738
      %v1434 = vpop.f32.mrb[0].mxu0
      %v1435 = vadd.f32 %v1299, %v1434
      %v1436 = vpop.f32.mrb[0].mxu0
      %v1437 = vpop.f32.mrb[0].mxu0
      %v1438 = vadd.f32 %v1302, %v1437
      %v1439 = vpop.f32.mrb[0].mxu0
      %1440 = vmatprep.mubr.bf16.mxu0 %v746
      %1441 = vmatmul.mubr.bf16.gmra.mrb[0].mxu0 %v745
      %v1442 = vpop.f32.mrb[0].mxu0
      %v1443 = vadd.f32 %v1307, %v1442
      %v1444 = vpop.f32.mrb[0].mxu0
      %v1445 = vpop.f32.mrb[0].mxu0
      %v1446 = vadd.f32 %v1310, %v1445
      %v1447 = vpop.f32.mrb[0].mxu0
      %1448 = vmatprep.mubr.bf16.mxu0 %v753
      %1449 = vmatmul.mubr.bf16.gmra.mrb[0].mxu0 %v752
      %v1450 = vpop.f32.mrb[0].mxu0
      %v1451 = vadd.f32 %v1315, %v1450
      %v1452 = vpop.f32.mrb[0].mxu0
      %v1453 = vpop.f32.mrb[0].mxu0
      %v1454 = vpop.f32.mrb[0].mxu0
      %1455 = vdwg.mxu0
      %1456 = vmatprep.subr.bf16.mxu0 0
      %1457 = vmatpush1.bf16.msra.mxu0 %v1104
      %1458 = vmatprep.subr.bf16.mxu0 0
      %1459 = vmatpush1.bf16.msra.mxu0 %v1105
      %1460 = vmatprep.subr.bf16.mxu0 0
      %1461 = vmatpush1.bf16.msra.mxu0 %v1106
      %1462 = vmatprep.subr.bf16.mxu0 0
      %1463 = vmatpush1.bf16.msra.mxu0 %v1107
      %1464 = vmatprep.subr.bf16.mxu0 0
      %1465 = vmatpush1.bf16.msra.mxu0 %v1108
      %1466 = vmatprep.subr.bf16.mxu0 0
      %1467 = vmatpush1.bf16.msra.mxu0 %v1109
      %1468 = vmatprep.subr.bf16.mxu0 0
      %1469 = vmatpush1.bf16.msra.mxu0 %v1110
      %1470 = vmatprep.subr.bf16.mxu0 0
      %1471 = vmatpush1.bf16.msra.mxu0 %v1111
      %1472 = vmatprep.subr.bf16.mxu0 0
      %1473 = vmatpush1.bf16.msra.mxu0 %v1112
      %1474 = vmatprep.subr.bf16.mxu0 0
      %1475 = vmatpush1.bf16.msra.mxu0 %v1113
      %1476 = vmatprep.subr.bf16.mxu0 0
      %1477 = vmatpush1.bf16.msra.mxu0 %v1114
      %1478 = vmatprep.subr.bf16.mxu0 0
      %1479 = vmatpush1.bf16.msra.mxu0 %v1115
      %1480 = vmatprep.subr.bf16.mxu0 0
      %1481 = vmatpush1.bf16.msra.mxu0 %v1116
      %1482 = vmatprep.subr.bf16.mxu0 0
      %1483 = vmatpush1.bf16.msra.mxu0 %v1117
      %1484 = vmatprep.subr.bf16.mxu0 0
      %1485 = vmatpush1.bf16.msra.mxu0 %v1118
      %1486 = vmatprep.subr.bf16.mxu0 0
      %1487 = vmatpush1.bf16.msra.mxu0 %v1119
      %1488 = vmatprep.mubr.bf16.mxu0 %v671
      %1489 = vmatmul.mubr.bf16.gmra.mrb[0].mxu0 %v670
      %v1490 = vpop.f32.mrb[0].mxu0
      %v1491 = vadd.f32 %v1355, %v1490
      %v1492 = vpop.f32.mrb[0].mxu0
      %v1493 = vpop.f32.mrb[0].mxu0
      %v1494 = vadd.f32 %v1358, %v1493
      %v1495 = vpop.f32.mrb[0].mxu0
      %1496 = vmatprep.mubr.bf16.mxu0 %v678
      %1497 = vmatmul.mubr.bf16.gmra.mrb[0].mxu0 %v677
      %v1498 = vpop.f32.mrb[0].mxu0
      %v1499 = vadd.f32 %v1363, %v1498
      %v1500 = vpop.f32.mrb[0].mxu0
      %v1501 = vpop.f32.mrb[0].mxu0
      %v1502 = vadd.f32 %v1366, %v1501
      %v1503 = vpop.f32.mrb[0].mxu0
      %1504 = vmatprep.mubr.bf16.mxu0 %v685
      %1505 = vmatmul.mubr.bf16.gmra.mrb[0].mxu0 %v684
      %v1506 = vpop.f32.mrb[0].mxu0
      %v1507 = vadd.f32 %v1371, %v1506
      %v1508 = vpop.f32.mrb[0].mxu0
      %v1509 = vpop.f32.mrb[0].mxu0
      %v1510 = vadd.f32 %v1374, %v1509
      %v1511 = vpop.f32.mrb[0].mxu0
      %1512 = vmatprep.mubr.bf16.mxu0 %v692
      %1513 = vmatmul.mubr.bf16.gmra.mrb[0].mxu0 %v691
      %v1514 = vpop.f32.mrb[0].mxu0
      %v1515 = vadd.f32 %v1379, %v1514
      %v1516 = vpop.f32.mrb[0].mxu0
      %v1517 = vpop.f32.mrb[0].mxu0
      %v1518 = vadd.f32 %v1382, %v1517
      %v1519 = vpop.f32.mrb[0].mxu0
      %1520 = vmatprep.mubr.bf16.mxu0 %v699
      %1521 = vmatmul.mubr.bf16.gmra.mrb[0].mxu0 %v698
      %v1522 = vpop.f32.mrb[0].mxu0
      %v1523 = vadd.f32 %v1387, %v1522
      %v1524 = vpop.f32.mrb[0].mxu0
      %v1525 = vpop.f32.mrb[0].mxu0
      %v1526 = vadd.f32 %v1390, %v1525
      %v1527 = vpop.f32.mrb[0].mxu0
      %1528 = vmatprep.mubr.bf16.mxu0 %v706
      %1529 = vmatmul.mubr.bf16.gmra.mrb[0].mxu0 %v705
      %v1530 = vpop.f32.mrb[0].mxu0
      %v1531 = vadd.f32 %v1395, %v1530
      %v1532 = vpop.f32.mrb[0].mxu0
      %v1533 = vpop.f32.mrb[0].mxu0
      %v1534 = vadd.f32 %v1398, %v1533
      %v1535 = vpop.f32.mrb[0].mxu0
      %1536 = vmatprep.mubr.bf16.mxu0 %v713
      %1537 = vmatmul.mubr.bf16.gmra.mrb[0].mxu0 %v712
      %v1538 = vpop.f32.mrb[0].mxu0
      %v1539 = vadd.f32 %v1403, %v1538
      %v1540 = vpop.f32.mrb[0].mxu0
      %v1541 = vpop.f32.mrb[0].mxu0
      %v1542 = vadd.f32 %v1406, %v1541
      %v1543 = vpop.f32.mrb[0].mxu0
      %1544 = vmatprep.mubr.bf16.mxu0 %v720
      %1545 = vmatmul.mubr.bf16.gmra.mrb[0].mxu0 %v719
      %v1546 = vpop.f32.mrb[0].mxu0
      %v1547 = vadd.f32 %v1411, %v1546
      %v1548 = vpop.f32.mrb[0].mxu0
      %v1549 = vpop.f32.mrb[0].mxu0
      %v1550 = vadd.f32 %v1414, %v1549
      %v1551 = vpop.f32.mrb[0].mxu0
      %1552 = vmatprep.mubr.bf16.mxu0 %v727
      %1553 = vmatmul.mubr.bf16.gmra.mrb[0].mxu0 %v726
      %v1554 = vpop.f32.mrb[0].mxu0
      %v1555 = vadd.f32 %v1419, %v1554
      %v1556 = vpop.f32.mrb[0].mxu0
      %v1557 = vpop.f32.mrb[0].mxu0
      %v1558 = vadd.f32 %v1422, %v1557
      %v1559 = vpop.f32.mrb[0].mxu0
      %1560 = vmatprep.mubr.bf16.mxu0 %v734
      %1561 = vmatmul.mubr.bf16.gmra.mrb[0].mxu0 %v733
      %v1562 = vpop.f32.mrb[0].mxu0
      %v1563 = vadd.f32 %v1427, %v1562
      %v1564 = vpop.f32.mrb[0].mxu0
      %v1565 = vpop.f32.mrb[0].mxu0
      %v1566 = vadd.f32 %v1430, %v1565
      %v1567 = vpop.f32.mrb[0].mxu0
      %1568 = vmatprep.mubr.bf16.mxu0 %v741
      %1569 = vmatmul.mubr.bf16.gmra.mrb[0].mxu0 %v740
      %v1570 = vpop.f32.mrb[0].mxu0
      %v1571 = vadd.f32 %v1435, %v1570
      %v1572 = vpop.f32.mrb[0].mxu0
      %v1573 = vpop.f32.mrb[0].mxu0
      %v1574 = vadd.f32 %v1438, %v1573
      %v1575 = vpop.f32.mrb[0].mxu0
      %1576 = vmatprep.mubr.bf16.mxu0 %v748
      %1577 = vmatmul.mubr.bf16.gmra.mrb[0].mxu0 %v747
      %v1578 = vpop.f32.mrb[0].mxu0
      %v1579 = vadd.f32 %v1443, %v1578
      %v1580 = vpop.f32.mrb[0].mxu0
      %v1581 = vpop.f32.mrb[0].mxu0
      %v1582 = vadd.f32 %v1446, %v1581
      %v1583 = vpop.f32.mrb[0].mxu0
      %1584 = vmatprep.mubr.bf16.mxu0 %v755
      %1585 = vmatmul.mubr.bf16.gmra.mrb[0].mxu0 %v754
      %v1586 = vpop.f32.mrb[0].mxu0
      %v1587 = vadd.f32 %v1451, %v1586
      %v1588 = vpop.f32.mrb[0].mxu0
      %v1589 = vpop.f32.mrb[0].mxu0
      %v1590 = vpop.f32.mrb[0].mxu0
      %1591 = vdwg.mxu0
      %1592 = vmatprep.subr.bf16.mxu0 0
      %1593 = vmatpush1.bf16.msra.mxu0 %v1120
      %1594 = vmatprep.subr.bf16.mxu0 0
      %1595 = vmatpush1.bf16.msra.mxu0 %v1121
      %1596 = vmatprep.subr.bf16.mxu0 0
      %1597 = vmatpush1.bf16.msra.mxu0 %v1122
      %1598 = vmatprep.subr.bf16.mxu0 0
      %1599 = vmatpush1.bf16.msra.mxu0 %v1123
      %1600 = vmatprep.subr.bf16.mxu0 0
      %1601 = vmatpush1.bf16.msra.mxu0 %v1124
      %1602 = vmatprep.subr.bf16.mxu0 0
      %1603 = vmatpush1.bf16.msra.mxu0 %v1125
      %1604 = vmatprep.subr.bf16.mxu0 0
      %1605 = vmatpush1.bf16.msra.mxu0 %v1126
      %1606 = vmatprep.subr.bf16.mxu0 0
      %1607 = vmatpush1.bf16.msra.mxu0 %v1127
      %1608 = vmatprep.subr.bf16.mxu0 0
      %1609 = vmatpush1.bf16.msra.mxu0 0
      %1610 = vmatprep.subr.bf16.mxu0 0
      %1611 = vmatpush1.bf16.msra.mxu0 0
      %1612 = vmatprep.subr.bf16.mxu0 0
      %1613 = vmatpush1.bf16.msra.mxu0 0
      %1614 = vmatprep.subr.bf16.mxu0 0
      %1615 = vmatpush1.bf16.msra.mxu0 0
      %1616 = vmatprep.subr.bf16.mxu0 0
      %1617 = vmatpush1.bf16.msra.mxu0 0
      %1618 = vmatprep.subr.bf16.mxu0 0
      %1619 = vmatpush1.bf16.msra.mxu0 0
      %1620 = vmatprep.subr.bf16.mxu0 0
      %1621 = vmatpush1.bf16.msra.mxu0 0
      %1622 = vmatprep.subr.bf16.mxu0 0
      %1623 = vmatpush1.bf16.msra.mxu0 0
      %1624 = vmatprep.mubr.bf16.mxu0 0
      %1625 = vmatmul.mubr.bf16.gmra.mrb[0].mxu0 %v672
      %v1626 = vpop.f32.mrb[0].mxu0
      %v1627 = vadd.f32 %v1491, %v1626
      %v1628 = vpop.f32.mrb[0].mxu0
      %v1629 = vpop.f32.mrb[0].mxu0
      %v1630 = vadd.f32 %v1494, %v1629
      %v1631 = vpop.f32.mrb[0].mxu0
      %1632 = vmatprep.mubr.bf16.mxu0 0
      %1633 = vmatmul.mubr.bf16.gmra.mrb[0].mxu0 %v679
      %v1634 = vpop.f32.mrb[0].mxu0
      %v1635 = vadd.f32 %v1499, %v1634
      %v1636 = vpop.f32.mrb[0].mxu0
      %v1637 = vpop.f32.mrb[0].mxu0
      %v1638 = vadd.f32 %v1502, %v1637
      %v1639 = vpop.f32.mrb[0].mxu0
      %1640 = vmatprep.mubr.bf16.mxu0 0
      %1641 = vmatmul.mubr.bf16.gmra.mrb[0].mxu0 %v686
      %v1642 = vpop.f32.mrb[0].mxu0
      %v1643 = vadd.f32 %v1507, %v1642
      %v1644 = vpop.f32.mrb[0].mxu0
      %v1645 = vpop.f32.mrb[0].mxu0
      %v1646 = vadd.f32 %v1510, %v1645
      %v1647 = vpop.f32.mrb[0].mxu0
      %1648 = vmatprep.mubr.bf16.mxu0 0
      %1649 = vmatmul.mubr.bf16.gmra.mrb[0].mxu0 %v693
      %v1650 = vpop.f32.mrb[0].mxu0
      %v1651 = vadd.f32 %v1515, %v1650
      %v1652 = vpop.f32.mrb[0].mxu0
      %v1653 = vpop.f32.mrb[0].mxu0
      %v1654 = vadd.f32 %v1518, %v1653
      %v1655 = vpop.f32.mrb[0].mxu0
      %1656 = vmatprep.mubr.bf16.mxu0 0
      %1657 = vmatmul.mubr.bf16.gmra.mrb[0].mxu0 %v700
      %v1658 = vpop.f32.mrb[0].mxu0
      %v1659 = vadd.f32 %v1523, %v1658
      %v1660 = vpop.f32.mrb[0].mxu0
      %v1661 = vpop.f32.mrb[0].mxu0
      %v1662 = vadd.f32 %v1526, %v1661
      %v1663 = vpop.f32.mrb[0].mxu0
      %1664 = vmatprep.mubr.bf16.mxu0 0
      %1665 = vmatmul.mubr.bf16.gmra.mrb[0].mxu0 %v707
      %v1666 = vpop.f32.mrb[0].mxu0
      %v1667 = vadd.f32 %v1531, %v1666
      %v1668 = vpop.f32.mrb[0].mxu0
      %v1669 = vpop.f32.mrb[0].mxu0
      %v1670 = vadd.f32 %v1534, %v1669
      %v1671 = vpop.f32.mrb[0].mxu0
      %1672 = vmatprep.mubr.bf16.mxu0 0
      %1673 = vmatmul.mubr.bf16.gmra.mrb[0].mxu0 %v714
      %v1674 = vpop.f32.mrb[0].mxu0
      %v1675 = vadd.f32 %v1539, %v1674
      %v1676 = vpop.f32.mrb[0].mxu0
      %v1677 = vpop.f32.mrb[0].mxu0
      %v1678 = vadd.f32 %v1542, %v1677
      %v1679 = vpop.f32.mrb[0].mxu0
      %1680 = vmatprep.mubr.bf16.mxu0 0
      %1681 = vmatmul.mubr.bf16.gmra.mrb[0].mxu0 %v721
      %v1682 = vpop.f32.mrb[0].mxu0
      %v1683 = vadd.f32 %v1547, %v1682
      %v1684 = vpop.f32.mrb[0].mxu0
      %v1685 = vpop.f32.mrb[0].mxu0
      %v1686 = vadd.f32 %v1550, %v1685
      %v1687 = vpop.f32.mrb[0].mxu0
      %1688 = vmatprep.mubr.bf16.mxu0 0
      %1689 = vmatmul.mubr.bf16.gmra.mrb[0].mxu0 %v728
      %v1690 = vpop.f32.mrb[0].mxu0
      %v1691 = vadd.f32 %v1555, %v1690
      %v1692 = vpop.f32.mrb[0].mxu0
      %v1693 = vpop.f32.mrb[0].mxu0
      %v1694 = vadd.f32 %v1558, %v1693
      %v1695 = vpop.f32.mrb[0].mxu0
      %1696 = vmatprep.mubr.bf16.mxu0 0
      %1697 = vmatmul.mubr.bf16.gmra.mrb[0].mxu0 %v735
      %v1698 = vpop.f32.mrb[0].mxu0
      %v1699 = vadd.f32 %v1563, %v1698
      %v1700 = vpop.f32.mrb[0].mxu0
      %v1701 = vpop.f32.mrb[0].mxu0
      %v1702 = vadd.f32 %v1566, %v1701
      %v1703 = vpop.f32.mrb[0].mxu0
      %1704 = vmatprep.mubr.bf16.mxu0 0
      %1705 = vmatmul.mubr.bf16.gmra.mrb[0].mxu0 %v742
      %v1706 = vpop.f32.mrb[0].mxu0
      %v1707 = vadd.f32 %v1571, %v1706
      %v1708 = vpop.f32.mrb[0].mxu0
      %v1709 = vpop.f32.mrb[0].mxu0
      %v1710 = vadd.f32 %v1574, %v1709
      %v1711 = vpop.f32.mrb[0].mxu0
      %1712 = vmatprep.mubr.bf16.mxu0 0
      %1713 = vmatmul.mubr.bf16.gmra.mrb[0].mxu0 %v749
      %v1714 = vpop.f32.mrb[0].mxu0
      %v1715 = vadd.f32 %v1579, %v1714
      %v1716 = vpop.f32.mrb[0].mxu0
      %v1717 = vpop.f32.mrb[0].mxu0
      %v1718 = vadd.f32 %v1582, %v1717
      %v1719 = vpop.f32.mrb[0].mxu0
      %1720 = vmatprep.mubr.bf16.mxu0 0
      %1721 = vmatmul.mubr.bf16.gmra.mrb[0].mxu0 %v756
      %v1722 = vpop.f32.mrb[0].mxu0
      %v1723 = vadd.f32 %v1587, %v1722
      %v1724 = vpop.f32.mrb[0].mxu0
      %v1725 = vpop.f32.mrb[0].mxu0
      %v1726 = vpop.f32.mrb[0].mxu0
      %1727 = vdwg.mxu0
      %v1728 = vmax.f32 %v1627, 0.0
      %v1729 = vmax.f32 %v1630, 0.0
      %v1730 = vmax.f32 %v1635, 0.0
      %v1731 = vmax.f32 %v1638, 0.0
      %v1732 = vmax.f32 %v1643, 0.0
      %v1733 = vmax.f32 %v1646, 0.0
      %v1734 = vmax.f32 %v1651, 0.0
      %v1735 = vmax.f32 %v1654, 0.0
      %v1736 = vmax.f32 %v1659, 0.0
      %v1737 = vmax.f32 %v1662, 0.0
      %v1738 = vmax.f32 %v1667, 0.0
      %v1739 = vmax.f32 %v1670, 0.0
      %v1740 = vmax.f32 %v1675, 0.0
      %v1741 = vmax.f32 %v1678, 0.0
      %v1742 = vmax.f32 %v1683, 0.0
      %v1743 = vmax.f32 %v1686, 0.0
      %v1744 = vmax.f32 %v1691, 0.0
      %v1745 = vmax.f32 %v1694, 0.0
      %v1746 = vmax.f32 %v1699, 0.0
      %v1747 = vmax.f32 %v1702, 0.0
      %v1748 = vmax.f32 %v1707, 0.0
      %v1749 = vmax.f32 %v1710, 0.0
      %v1750 = vmax.f32 %v1715, 0.0
      %v1751 = vmax.f32 %v1718, 0.0
      %v1752 = vmax.f32 %v1723, 0.0
      %v1778 = vcombine.high %v1728, %v1728
      %v1779 = vcombine.high %v1729, %v1729
      %v1780 = vcombine.high %v1730, %v1730
      %v1781 = vcombine.high %v1731, %v1731
      %v1782 = vcombine.high %v1732, %v1732
      %v1783 = vcombine.high %v1733, %v1733
      %v1784 = vcombine.high %v1734, %v1734
      %v1785 = vcombine.high %v1735, %v1735
      %v1786 = vcombine.high %v1736, %v1736
      %v1787 = vcombine.high %v1737, %v1737
      %v1788 = vcombine.high %v1738, %v1738
      %v1789 = vcombine.high %v1739, %v1739
      %v1790 = vcombine.high %v1740, %v1740
      %v1791 = vcombine.high %v1741, %v1741
      %v1792 = vcombine.high %v1742, %v1742
      %v1793 = vcombine.high %v1743, %v1743
      %v1794 = vcombine.high %v1744, %v1744
      %v1795 = vcombine.high %v1745, %v1745
      %v1796 = vcombine.high %v1746, %v1746
      %v1797 = vcombine.high %v1747, %v1747
      %v1798 = vcombine.high %v1748, %v1748
      %v1799 = vcombine.high %v1749, %v1749
      %v1800 = vcombine.high %v1750, %v1750
      %v1801 = vcombine.high %v1751, %v1751
      %vm1816 = vcmask 1041408
      %vm1817 = vcmask 1045508
      %vm1818 = vmor %vm1816, %vm1817
      %v1819 = vrot.slane %v1779, 6
      %v1820 = vrot.slane %v1819, 4
      %v1821 = vrot.slane %v1730, 6
      %v1822 = vsel %vm1818, %v1820, %v1821
      %v1823 = vrot.slane %v1821, 4
      %v1824 = vrot.slane %v1780, 6
      %v1825 = vsel %vm1818, %v1823, %v1824
      %v1826 = vrot.slane %v1824, 4
      %v1827 = vrot.slane %v1731, 6
      %v1828 = vsel %vm1818, %v1826, %v1827
      %v1829 = vrot.slane %v1827, 4
      %v1830 = vrot.slane %v1733, 6
      %v1831 = vrot.slane %v1830, 4
      %v1832 = vrot.slane %v1783, 6
      %v1833 = vsel %vm1818, %v1831, %v1832
      %v1834 = vrot.slane %v1832, 4
      %v1835 = vrot.slane %v1734, 6
      %v1836 = vsel %vm1818, %v1834, %v1835
      %v1837 = vrot.slane %v1835, 4
      %v1838 = vrot.slane %v1784, 6
      %v1839 = vsel %vm1818, %v1837, %v1838
      %v1840 = vrot.slane %v1838, 4
      %v1841 = vrot.slane %v1786, 6
      %v1842 = vrot.slane %v1841, 4
      %v1843 = vrot.slane %v1737, 6
      %v1844 = vsel %vm1818, %v1842, %v1843
      %v1845 = vrot.slane %v1843, 4
      %v1846 = vrot.slane %v1787, 6
      %v1847 = vsel %vm1818, %v1845, %v1846
      %v1848 = vrot.slane %v1846, 4
      %v1849 = vrot.slane %v1738, 6
      %v1850 = vsel %vm1818, %v1848, %v1849
      %v1851 = vrot.slane %v1849, 4
      %v1852 = vrot.slane %v1740, 6
      %v1853 = vrot.slane %v1852, 4
      %v1854 = vrot.slane %v1790, 6
      %v1855 = vsel %vm1818, %v1853, %v1854
      %v1856 = vrot.slane %v1854, 4
      %v1857 = vrot.slane %v1741, 6
      %v1858 = vsel %vm1818, %v1856, %v1857
      %v1859 = vrot.slane %v1857, 4
      %v1860 = vrot.slane %v1791, 6
      %v1861 = vsel %vm1818, %v1859, %v1860
      %v1862 = vrot.slane %v1860, 4
      %v1863 = vrot.slane %v1793, 6
      %v1864 = vrot.slane %v1863, 4
      %v1865 = vrot.slane %v1744, 6
      %v1866 = vsel %vm1818, %v1864, %v1865
      %v1867 = vrot.slane %v1865, 4
      %v1868 = vrot.slane %v1794, 6
      %v1869 = vsel %vm1818, %v1867, %v1868
      %v1870 = vrot.slane %v1868, 4
      %v1871 = vrot.slane %v1745, 6
      %v1872 = vsel %vm1818, %v1870, %v1871
      %v1873 = vrot.slane %v1871, 4
      %v1874 = vrot.slane %v1747, 6
      %v1875 = vrot.slane %v1874, 4
      %v1876 = vrot.slane %v1797, 6
      %v1877 = vsel %vm1818, %v1875, %v1876
      %v1878 = vrot.slane %v1876, 4
      %v1879 = vrot.slane %v1748, 6
      %v1880 = vsel %vm1818, %v1878, %v1879
      %v1881 = vrot.slane %v1879, 4
      %v1882 = vrot.slane %v1798, 6
      %v1883 = vsel %vm1818, %v1881, %v1882
      %v1884 = vrot.slane %v1882, 4
      %v1885 = vrot.slane %v1800, 6
      %v1886 = vrot.slane %v1885, 4
      %v1887 = vrot.slane %v1751, 6
      %v1888 = vsel %vm1818, %v1886, %v1887
      %v1889 = vrot.slane %v1887, 4
      %v1890 = vrot.slane %v1801, 6
      %v1891 = vsel %vm1818, %v1889, %v1890
      %v1892 = vrot.slane %v1890, 4
      %v1893 = vrot.slane %v1752, 6
      %v1894 = vsel %vm1818, %v1892, %v1893
      %v1895 = vrot.slane %v1893, 4
      %v1924 = vmax.f32 %v1728, %v1822
      %v1925 = vmax.f32 %v1778, %v1825
      %v1926 = vmax.f32 %v1729, %v1828
      %v1927 = vmax.f32 %v1779, %v1829
      %v1928 = vmax.f32 %v1781, %v1833
      %v1929 = vmax.f32 %v1732, %v1836
      %v1930 = vmax.f32 %v1782, %v1839
      %v1931 = vmax.f32 %v1733, %v1840
      %v1932 = vmax.f32 %v1735, %v1844
      %v1933 = vmax.f32 %v1785, %v1847
      %v1934 = vmax.f32 %v1736, %v1850
      %v1935 = vmax.f32 %v1786, %v1851
      %v1936 = vmax.f32 %v1788, %v1855
      %v1937 = vmax.f32 %v1739, %v1858
      %v1938 = vmax.f32 %v1789, %v1861
      %v1939 = vmax.f32 %v1740, %v1862
      %v1940 = vmax.f32 %v1742, %v1866
      %v1941 = vmax.f32 %v1792, %v1869
      %v1942 = vmax.f32 %v1743, %v1872
      %v1943 = vmax.f32 %v1793, %v1873
      %v1944 = vmax.f32 %v1795, %v1877
      %v1945 = vmax.f32 %v1746, %v1880
      %v1946 = vmax.f32 %v1796, %v1883
      %v1947 = vmax.f32 %v1747, %v1884
      %v1948 = vmax.f32 %v1749, %v1888
      %v1949 = vmax.f32 %v1799, %v1891
      %v1950 = vmax.f32 %v1750, %v1894
      %v1951 = vmax.f32 %v1800, %v1895
      %v1981 = vunpack.c.l.s4 1983009808
      %v1982 = vunpack.c.0.s8 %v1981
      %v1983 = vlaneseq
      %v1984 = vshrl.u32 %v1983, 7
      %v1985 = vsub.s32 %v1982, %v1984
      %v1986 = vrot.slane %v1924, %v1985
      %v1987 = vcombine.high %v1986, %v1986
      %v1989 = vunpack.c.l.s4 1983009808
      %v1990 = vunpack.c.0.s8 %v1989
      %v1991 = vlaneseq
      %v1992 = vshrl.u32 %v1991, 7
      %v1993 = vsub.s32 %v1990, %v1992
      %v1994 = vrot.slane %v1925, %v1993
      %v1995 = vcombine.high %v1994, %v1994
      %v1997 = vunpack.c.l.s4 1983009808
      %v1998 = vunpack.c.0.s8 %v1997
      %v1999 = vlaneseq
      %v2000 = vshrl.u32 %v1999, 7
      %v2001 = vsub.s32 %v1998, %v2000
      %v2002 = vrot.slane %v1926, %v2001
      %v2003 = vcombine.high %v2002, %v2002
      %v2005 = vunpack.c.l.s4 1983009808
      %v2006 = vunpack.c.0.s8 %v2005
      %v2007 = vlaneseq
      %v2008 = vshrl.u32 %v2007, 7
      %v2009 = vsub.s32 %v2006, %v2008
      %v2010 = vrot.slane %v1927, %v2009
      %v2012 = vunpack.c.l.s4 1983009808
      %v2013 = vunpack.c.0.s8 %v2012
      %v2014 = vlaneseq
      %v2015 = vshrl.u32 %v2014, 7
      %v2016 = vsub.s32 %v2013, %v2015
      %v2017 = vrot.slane %v1928, %v2016
      %v2018 = vcombine.high %v2017, %v2017
      %v2020 = vunpack.c.l.s4 1983009808
      %v2021 = vunpack.c.0.s8 %v2020
      %v2022 = vlaneseq
      %v2023 = vshrl.u32 %v2022, 7
      %v2024 = vsub.s32 %v2021, %v2023
      %v2025 = vrot.slane %v1929, %v2024
      %v2026 = vcombine.high %v2025, %v2025
      %v2028 = vunpack.c.l.s4 1983009808
      %v2029 = vunpack.c.0.s8 %v2028
      %v2030 = vlaneseq
      %v2031 = vshrl.u32 %v2030, 7
      %v2032 = vsub.s32 %v2029, %v2031
      %v2033 = vrot.slane %v1930, %v2032
      %v2034 = vcombine.high %v2033, %v2033
      %v2036 = vunpack.c.l.s4 1983009808
      %v2037 = vunpack.c.0.s8 %v2036
      %v2038 = vlaneseq
      %v2039 = vshrl.u32 %v2038, 7
      %v2040 = vsub.s32 %v2037, %v2039
      %v2041 = vrot.slane %v1931, %v2040
      %v2043 = vunpack.c.l.s4 1983009808
      %v2044 = vunpack.c.0.s8 %v2043
      %v2045 = vlaneseq
      %v2046 = vshrl.u32 %v2045, 7
      %v2047 = vsub.s32 %v2044, %v2046
      %v2048 = vrot.slane %v1932, %v2047
      %v2049 = vcombine.high %v2048, %v2048
      %v2051 = vunpack.c.l.s4 1983009808
      %v2052 = vunpack.c.0.s8 %v2051
      %v2053 = vlaneseq
      %v2054 = vshrl.u32 %v2053, 7
      %v2055 = vsub.s32 %v2052, %v2054
      %v2056 = vrot.slane %v1933, %v2055
      %v2057 = vcombine.high %v2056, %v2056
      %v2059 = vunpack.c.l.s4 1983009808
      %v2060 = vunpack.c.0.s8 %v2059
      %v2061 = vlaneseq
      %v2062 = vshrl.u32 %v2061, 7
      %v2063 = vsub.s32 %v2060, %v2062
      %v2064 = vrot.slane %v1934, %v2063
      %v2065 = vcombine.high %v2064, %v2064
      %v2067 = vunpack.c.l.s4 1983009808
      %v2068 = vunpack.c.0.s8 %v2067
      %v2069 = vlaneseq
      %v2070 = vshrl.u32 %v2069, 7
      %v2071 = vsub.s32 %v2068, %v2070
      %v2072 = vrot.slane %v1935, %v2071
      %v2074 = vunpack.c.l.s4 1983009808
      %v2075 = vunpack.c.0.s8 %v2074
      %v2076 = vlaneseq
      %v2077 = vshrl.u32 %v2076, 7
      %v2078 = vsub.s32 %v2075, %v2077
      %v2079 = vrot.slane %v1936, %v2078
      %v2080 = vcombine.high %v2079, %v2079
      %v2082 = vunpack.c.l.s4 1983009808
      %v2083 = vunpack.c.0.s8 %v2082
      %v2084 = vlaneseq
      %v2085 = vshrl.u32 %v2084, 7
      %v2086 = vsub.s32 %v2083, %v2085
      %v2087 = vrot.slane %v1937, %v2086
      %v2088 = vcombine.high %v2087, %v2087
      %v2090 = vunpack.c.l.s4 1983009808
      %v2091 = vunpack.c.0.s8 %v2090
      %v2092 = vlaneseq
      %v2093 = vshrl.u32 %v2092, 7
      %v2094 = vsub.s32 %v2091, %v2093
      %v2095 = vrot.slane %v1938, %v2094
      %v2096 = vcombine.high %v2095, %v2095
      %v2098 = vunpack.c.l.s4 1983009808
      %v2099 = vunpack.c.0.s8 %v2098
      %v2100 = vlaneseq
      %v2101 = vshrl.u32 %v2100, 7
      %v2102 = vsub.s32 %v2099, %v2101
      %v2103 = vrot.slane %v1939, %v2102
      %v2105 = vunpack.c.l.s4 1983009808
      %v2106 = vunpack.c.0.s8 %v2105
      %v2107 = vlaneseq
      %v2108 = vshrl.u32 %v2107, 7
      %v2109 = vsub.s32 %v2106, %v2108
      %v2110 = vrot.slane %v1940, %v2109
      %v2111 = vcombine.high %v2110, %v2110
      %v2113 = vunpack.c.l.s4 1983009808
      %v2114 = vunpack.c.0.s8 %v2113
      %v2115 = vlaneseq
      %v2116 = vshrl.u32 %v2115, 7
      %v2117 = vsub.s32 %v2114, %v2116
      %v2118 = vrot.slane %v1941, %v2117
      %v2119 = vcombine.high %v2118, %v2118
      %v2121 = vunpack.c.l.s4 1983009808
      %v2122 = vunpack.c.0.s8 %v2121
      %v2123 = vlaneseq
      %v2124 = vshrl.u32 %v2123, 7
      %v2125 = vsub.s32 %v2122, %v2124
      %v2126 = vrot.slane %v1942, %v2125
      %v2127 = vcombine.high %v2126, %v2126
      %v2129 = vunpack.c.l.s4 1983009808
      %v2130 = vunpack.c.0.s8 %v2129
      %v2131 = vlaneseq
      %v2132 = vshrl.u32 %v2131, 7
      %v2133 = vsub.s32 %v2130, %v2132
      %v2134 = vrot.slane %v1943, %v2133
      %v2136 = vunpack.c.l.s4 1983009808
      %v2137 = vunpack.c.0.s8 %v2136
      %v2138 = vlaneseq
      %v2139 = vshrl.u32 %v2138, 7
      %v2140 = vsub.s32 %v2137, %v2139
      %v2141 = vrot.slane %v1944, %v2140
      %v2142 = vcombine.high %v2141, %v2141
      %v2144 = vunpack.c.l.s4 1983009808
      %v2145 = vunpack.c.0.s8 %v2144
      %v2146 = vlaneseq
      %v2147 = vshrl.u32 %v2146, 7
      %v2148 = vsub.s32 %v2145, %v2147
      %v2149 = vrot.slane %v1945, %v2148
      %v2150 = vcombine.high %v2149, %v2149
      %v2152 = vunpack.c.l.s4 1983009808
      %v2153 = vunpack.c.0.s8 %v2152
      %v2154 = vlaneseq
      %v2155 = vshrl.u32 %v2154, 7
      %v2156 = vsub.s32 %v2153, %v2155
      %v2157 = vrot.slane %v1946, %v2156
      %v2158 = vcombine.high %v2157, %v2157
      %v2160 = vunpack.c.l.s4 1983009808
      %v2161 = vunpack.c.0.s8 %v2160
      %v2162 = vlaneseq
      %v2163 = vshrl.u32 %v2162, 7
      %v2164 = vsub.s32 %v2161, %v2163
      %v2165 = vrot.slane %v1947, %v2164
      %v2167 = vunpack.c.l.s4 1983009808
      %v2168 = vunpack.c.0.s8 %v2167
      %v2169 = vlaneseq
      %v2170 = vshrl.u32 %v2169, 7
      %v2171 = vsub.s32 %v2168, %v2170
      %v2172 = vrot.slane %v1948, %v2171
      %v2173 = vcombine.high %v2172, %v2172
      %v2175 = vunpack.c.l.s4 1983009808
      %v2176 = vunpack.c.0.s8 %v2175
      %v2177 = vlaneseq
      %v2178 = vshrl.u32 %v2177, 7
      %v2179 = vsub.s32 %v2176, %v2178
      %v2180 = vrot.slane %v1949, %v2179
      %v2181 = vcombine.high %v2180, %v2180
      %v2183 = vunpack.c.l.s4 1983009808
      %v2184 = vunpack.c.0.s8 %v2183
      %v2185 = vlaneseq
      %v2186 = vshrl.u32 %v2185, 7
      %v2187 = vsub.s32 %v2184, %v2186
      %v2188 = vrot.slane %v1950, %v2187
      %v2189 = vcombine.high %v2188, %v2188
      %v2191 = vunpack.c.l.s4 1983009808
      %v2192 = vunpack.c.0.s8 %v2191
      %v2193 = vlaneseq
      %v2194 = vshrl.u32 %v2193, 7
      %v2195 = vsub.s32 %v2192, %v2194
      %v2196 = vrot.slane %v1951, %v2195
      %v2246 = vrot.slane %v1986, 7
      %v2247 = vrot.slane %v2246, 2
      %v2248 = vrot.slane %v1987, 7
      %v2249 = vrot.slane %v2248, 2
      %v2250 = vrot.slane %v1994, 7
      %v2251 = vrot.slane %v2250, 2
      %v2252 = vrot.slane %v1995, 7
      %v2253 = vrot.slane %v2252, 2
      %v2254 = vrot.slane %v2002, 7
      %v2255 = vrot.slane %v2254, 2
      %v2256 = vrot.slane %v2003, 7
      %v2257 = vrot.slane %v2256, 2
      %v2258 = vrot.slane %v2010, 7
      %v2259 = vrot.slane %v2258, 2
      %v2260 = vrot.slane %v2017, 7
      %v2261 = vrot.slane %v2260, 2
      %v2262 = vrot.slane %v2018, 7
      %v2263 = vrot.slane %v2262, 2
      %v2264 = vrot.slane %v2025, 7
      %v2265 = vrot.slane %v2264, 2
      %v2266 = vrot.slane %v2026, 7
      %v2267 = vrot.slane %v2266, 2
      %v2268 = vrot.slane %v2033, 7
      %v2269 = vrot.slane %v2268, 2
      %v2270 = vrot.slane %v2034, 7
      %v2271 = vrot.slane %v2270, 2
      %v2272 = vrot.slane %v2041, 7
      %v2273 = vrot.slane %v2272, 2
      %v2274 = vrot.slane %v2048, 7
      %v2275 = vrot.slane %v2274, 2
      %v2276 = vrot.slane %v2049, 7
      %v2277 = vrot.slane %v2276, 2
      %v2278 = vrot.slane %v2056, 7
      %v2279 = vrot.slane %v2278, 2
      %v2280 = vrot.slane %v2057, 7
      %v2281 = vrot.slane %v2280, 2
      %v2282 = vrot.slane %v2064, 7
      %v2283 = vrot.slane %v2282, 2
      %v2284 = vrot.slane %v2065, 7
      %v2285 = vrot.slane %v2284, 2
      %v2286 = vrot.slane %v2072, 7
      %v2287 = vrot.slane %v2286, 2
      %v2288 = vrot.slane %v2079, 7
      %v2289 = vrot.slane %v2288, 2
      %v2290 = vrot.slane %v2080, 7
      %v2291 = vrot.slane %v2290, 2
      %v2292 = vrot.slane %v2087, 7
      %v2293 = vrot.slane %v2292, 2
      %v2294 = vrot.slane %v2088, 7
      %v2295 = vrot.slane %v2294, 2
      %v2296 = vrot.slane %v2095, 7
      %v2297 = vrot.slane %v2296, 2
      %v2298 = vrot.slane %v2096, 7
      %v2299 = vrot.slane %v2298, 2
      %v2300 = vrot.slane %v2103, 7
      %v2301 = vrot.slane %v2300, 2
      %v2302 = vrot.slane %v2110, 7
      %v2303 = vrot.slane %v2302, 2
      %v2304 = vrot.slane %v2111, 7
      %v2305 = vrot.slane %v2304, 2
      %v2306 = vrot.slane %v2118, 7
      %v2307 = vrot.slane %v2306, 2
      %v2308 = vrot.slane %v2119, 7
      %v2309 = vrot.slane %v2308, 2
      %v2310 = vrot.slane %v2126, 7
      %v2311 = vrot.slane %v2310, 2
      %v2312 = vrot.slane %v2127, 7
      %v2313 = vrot.slane %v2312, 2
      %v2314 = vrot.slane %v2134, 7
      %v2315 = vrot.slane %v2314, 2
      %v2316 = vrot.slane %v2141, 7
      %v2317 = vrot.slane %v2316, 2
      %v2318 = vrot.slane %v2142, 7
      %v2319 = vrot.slane %v2318, 2
      %v2320 = vrot.slane %v2149, 7
      %v2321 = vrot.slane %v2320, 2
      %v2322 = vrot.slane %v2150, 7
      %v2323 = vrot.slane %v2322, 2
      %v2324 = vrot.slane %v2157, 7
      %v2325 = vrot.slane %v2324, 2
      %v2326 = vrot.slane %v2158, 7
      %v2327 = vrot.slane %v2326, 2
      %v2328 = vrot.slane %v2165, 7
      %v2329 = vrot.slane %v2328, 2
      %v2330 = vrot.slane %v2172, 7
      %v2331 = vrot.slane %v2330, 2
      %v2332 = vrot.slane %v2173, 7
      %v2333 = vrot.slane %v2332, 2
      %v2334 = vrot.slane %v2180, 7
      %v2335 = vrot.slane %v2334, 2
      %v2336 = vrot.slane %v2181, 7
      %v2337 = vrot.slane %v2336, 2
      %v2338 = vrot.slane %v2188, 7
      %v2339 = vrot.slane %v2338, 2
      %v2340 = vrot.slane %v2189, 7
      %v2341 = vrot.slane %v2340, 2
      %v2342 = vrot.slane %v2196, 7
      %v2343 = vrot.slane %v2342, 2
      %v2393 = vmax.f32 %v1986, %v2247
      %v2394 = vmax.f32 %v1987, %v2249
      %v2395 = vmax.f32 %v1994, %v2251
      %v2396 = vmax.f32 %v1995, %v2253
      %v2397 = vmax.f32 %v2002, %v2255
      %v2398 = vmax.f32 %v2003, %v2257
      %v2399 = vmax.f32 %v2010, %v2259
      %v2400 = vmax.f32 %v2017, %v2261
      %v2401 = vmax.f32 %v2018, %v2263
      %v2402 = vmax.f32 %v2025, %v2265
      %v2403 = vmax.f32 %v2026, %v2267
      %v2404 = vmax.f32 %v2033, %v2269
      %v2405 = vmax.f32 %v2034, %v2271
      %v2406 = vmax.f32 %v2041, %v2273
      %v2407 = vmax.f32 %v2048, %v2275
      %v2408 = vmax.f32 %v2049, %v2277
      %v2409 = vmax.f32 %v2056, %v2279
      %v2410 = vmax.f32 %v2057, %v2281
      %v2411 = vmax.f32 %v2064, %v2283
      %v2412 = vmax.f32 %v2065, %v2285
      %v2413 = vmax.f32 %v2072, %v2287
      %v2414 = vmax.f32 %v2079, %v2289
      %v2415 = vmax.f32 %v2080, %v2291
      %v2416 = vmax.f32 %v2087, %v2293
      %v2417 = vmax.f32 %v2088, %v2295
      %v2418 = vmax.f32 %v2095, %v2297
      %v2419 = vmax.f32 %v2096, %v2299
      %v2420 = vmax.f32 %v2103, %v2301
      %v2421 = vmax.f32 %v2110, %v2303
      %v2422 = vmax.f32 %v2111, %v2305
      %v2423 = vmax.f32 %v2118, %v2307
      %v2424 = vmax.f32 %v2119, %v2309
      %v2425 = vmax.f32 %v2126, %v2311
      %v2426 = vmax.f32 %v2127, %v2313
      %v2427 = vmax.f32 %v2134, %v2315
      %v2428 = vmax.f32 %v2141, %v2317
      %v2429 = vmax.f32 %v2142, %v2319
      %v2430 = vmax.f32 %v2149, %v2321
      %v2431 = vmax.f32 %v2150, %v2323
      %v2432 = vmax.f32 %v2157, %v2325
      %v2433 = vmax.f32 %v2158, %v2327
      %v2434 = vmax.f32 %v2165, %v2329
      %v2435 = vmax.f32 %v2172, %v2331
      %v2436 = vmax.f32 %v2173, %v2333
      %v2437 = vmax.f32 %v2180, %v2335
      %v2438 = vmax.f32 %v2181, %v2337
      %v2439 = vmax.f32 %v2188, %v2339
      %v2440 = vmax.f32 %v2189, %v2341
      %v2441 = vmax.f32 %v2196, %v2343
      %v2442 = vpack.c.bf16 %v2393, %v2393
      %v2443 = vpack.c.bf16 %v2394, %v2394
      %v2444 = vpack.c.bf16 %v2395, %v2395
      %v2445 = vpack.c.bf16 %v2396, %v2396
      %v2446 = vpack.c.bf16 %v2397, %v2397
      %v2447 = vpack.c.bf16 %v2398, %v2398
      %v2448 = vpack.c.bf16 %v2399, %v2399
      %v2449 = vpack.c.bf16 %v2400, %v2400
      %v2450 = vpack.c.bf16 %v2401, %v2401
      %v2451 = vpack.c.bf16 %v2402, %v2402
      %v2452 = vpack.c.bf16 %v2403, %v2403
      %v2453 = vpack.c.bf16 %v2404, %v2404
      %v2454 = vpack.c.bf16 %v2405, %v2405
      %v2455 = vpack.c.bf16 %v2406, %v2406
      %v2456 = vpack.c.bf16 %v2407, %v2407
      %v2457 = vpack.c.bf16 %v2408, %v2408
      %v2458 = vpack.c.bf16 %v2409, %v2409
      %v2459 = vpack.c.bf16 %v2410, %v2410
      %v2460 = vpack.c.bf16 %v2411, %v2411
      %v2461 = vpack.c.bf16 %v2412, %v2412
      %v2462 = vpack.c.bf16 %v2413, %v2413
      %v2463 = vpack.c.bf16 %v2414, %v2414
      %v2464 = vpack.c.bf16 %v2415, %v2415
      %v2465 = vpack.c.bf16 %v2416, %v2416
      %v2466 = vpack.c.bf16 %v2417, %v2417
      %v2467 = vpack.c.bf16 %v2418, %v2418
      %v2468 = vpack.c.bf16 %v2419, %v2419
      %v2469 = vpack.c.bf16 %v2420, %v2420
      %v2470 = vpack.c.bf16 %v2421, %v2421
      %v2471 = vpack.c.bf16 %v2422, %v2422
      %v2472 = vpack.c.bf16 %v2423, %v2423
      %v2473 = vpack.c.bf16 %v2424, %v2424
      %v2474 = vpack.c.bf16 %v2425, %v2425
      %v2475 = vpack.c.bf16 %v2426, %v2426
      %v2476 = vpack.c.bf16 %v2427, %v2427
      %v2477 = vpack.c.bf16 %v2428, %v2428
      %v2478 = vpack.c.bf16 %v2429, %v2429
      %v2479 = vpack.c.bf16 %v2430, %v2430
      %v2480 = vpack.c.bf16 %v2431, %v2431
      %v2481 = vpack.c.bf16 %v2432, %v2432
      %v2482 = vpack.c.bf16 %v2433, %v2433
      %v2483 = vpack.c.bf16 %v2434, %v2434
      %v2484 = vpack.c.bf16 %v2435, %v2435
      %v2485 = vpack.c.bf16 %v2436, %v2436
      %v2486 = vpack.c.bf16 %v2437, %v2437
      %v2487 = vpack.c.bf16 %v2438, %v2438
      %v2488 = vpack.c.bf16 %v2439, %v2439
      %v2489 = vpack.c.bf16 %v2440, %v2440
      %v2490 = vpack.c.bf16 %v2441, %v2441
      %v2540 = vunpack.c.l.b16 %v2442
      %v2541 = vunpack.c.l.b16 %v2443
      %v2542 = vunpack.c.l.b16 %v2444
      %v2543 = vunpack.c.l.b16 %v2445
      %v2544 = vunpack.c.l.b16 %v2446
      %v2545 = vunpack.c.l.b16 %v2447
      %v2546 = vunpack.c.l.b16 %v2448
      %v2547 = vunpack.c.l.b16 %v2449
      %v2548 = vunpack.c.l.b16 %v2450
      %v2549 = vunpack.c.l.b16 %v2451
      %v2550 = vunpack.c.l.b16 %v2452
      %v2551 = vunpack.c.l.b16 %v2453
      %v2552 = vunpack.c.l.b16 %v2454
      %v2553 = vunpack.c.l.b16 %v2455
      %v2554 = vunpack.c.l.b16 %v2456
      %v2555 = vunpack.c.l.b16 %v2457
      %v2556 = vunpack.c.l.b16 %v2458
      %v2557 = vunpack.c.l.b16 %v2459
      %v2558 = vunpack.c.l.b16 %v2460
      %v2559 = vunpack.c.l.b16 %v2461
      %v2560 = vunpack.c.l.b16 %v2462
      %v2561 = vunpack.c.l.b16 %v2463
      %v2562 = vunpack.c.l.b16 %v2464
      %v2563 = vunpack.c.l.b16 %v2465
      %v2564 = vunpack.c.l.b16 %v2466
      %v2565 = vunpack.c.l.b16 %v2467
      %v2566 = vunpack.c.l.b16 %v2468
      %v2567 = vunpack.c.l.b16 %v2469
      %v2568 = vunpack.c.l.b16 %v2470
      %v2569 = vunpack.c.l.b16 %v2471
      %v2570 = vunpack.c.l.b16 %v2472
      %v2571 = vunpack.c.l.b16 %v2473
      %v2572 = vunpack.c.l.b16 %v2474
      %v2573 = vunpack.c.l.b16 %v2475
      %v2574 = vunpack.c.l.b16 %v2476
      %v2575 = vunpack.c.l.b16 %v2477
      %v2576 = vunpack.c.l.b16 %v2478
      %v2577 = vunpack.c.l.b16 %v2479
      %v2578 = vunpack.c.l.b16 %v2480
      %v2579 = vunpack.c.l.b16 %v2481
      %v2580 = vunpack.c.l.b16 %v2482
      %v2581 = vunpack.c.l.b16 %v2483
      %v2582 = vunpack.c.l.b16 %v2484
      %v2583 = vunpack.c.l.b16 %v2485
      %v2584 = vunpack.c.l.b16 %v2486
      %v2585 = vunpack.c.l.b16 %v2487
      %v2586 = vunpack.c.l.b16 %v2488
      %v2587 = vunpack.c.l.b16 %v2489
      %v2588 = vunpack.c.l.b16 %v2490
      %v2589 = vpack.c.b16 %v2540, %v2540
      %v2590 = vpack.c.b16 %v2541, %v2541
      %v2591 = vpack.c.b16 %v2542, %v2542
      %v2592 = vpack.c.b16 %v2543, %v2543
      %v2593 = vpack.c.b16 %v2544, %v2544
      %v2594 = vpack.c.b16 %v2545, %v2545
      %v2595 = vpack.c.b16 %v2546, %v2546
      %v2596 = vpack.c.b16 %v2547, %v2547
      %v2597 = vpack.c.b16 %v2548, %v2548
      %v2598 = vpack.c.b16 %v2549, %v2549
      %v2599 = vpack.c.b16 %v2550, %v2550
      %v2600 = vpack.c.b16 %v2551, %v2551
      %v2601 = vpack.c.b16 %v2552, %v2552
      %v2602 = vpack.c.b16 %v2553, %v2553
      %v2603 = vpack.c.b16 %v2554, %v2554
      %v2604 = vpack.c.b16 %v2555, %v2555
      %v2605 = vpack.c.b16 %v2556, %v2556
      %v2606 = vpack.c.b16 %v2557, %v2557
      %v2607 = vpack.c.b16 %v2558, %v2558
      %v2608 = vpack.c.b16 %v2559, %v2559
      %v2609 = vpack.c.b16 %v2560, %v2560
      %v2610 = vpack.c.b16 %v2561, %v2561
      %v2611 = vpack.c.b16 %v2562, %v2562
      %v2612 = vpack.c.b16 %v2563, %v2563
      %v2613 = vpack.c.b16 %v2564, %v2564
      %v2614 = vpack.c.b16 %v2565, %v2565
      %v2615 = vpack.c.b16 %v2566, %v2566
      %v2616 = vpack.c.b16 %v2567, %v2567
      %v2617 = vpack.c.b16 %v2568, %v2568
      %v2618 = vpack.c.b16 %v2569, %v2569
      %v2619 = vpack.c.b16 %v2570, %v2570
      %v2620 = vpack.c.b16 %v2571, %v2571
      %v2621 = vpack.c.b16 %v2572, %v2572
      %v2622 = vpack.c.b16 %v2573, %v2573
      %v2623 = vpack.c.b16 %v2574, %v2574
      %v2624 = vpack.c.b16 %v2575, %v2575
      %v2625 = vpack.c.b16 %v2576, %v2576
      %v2626 = vpack.c.b16 %v2577, %v2577
      %v2627 = vpack.c.b16 %v2578, %v2578
      %v2628 = vpack.c.b16 %v2579, %v2579
      %v2629 = vpack.c.b16 %v2580, %v2580
      %v2630 = vpack.c.b16 %v2581, %v2581
      %v2631 = vpack.c.b16 %v2582, %v2582
      %v2632 = vpack.c.b16 %v2583, %v2583
      %v2633 = vpack.c.b16 %v2584, %v2584
      %v2634 = vpack.c.b16 %v2585, %v2585
      %v2635 = vpack.c.b16 %v2586, %v2586
      %v2636 = vpack.c.b16 %v2587, %v2587
      %v2637 = vpack.c.b16 %v2588, %v2588
      %v2638 = vunpack.c.l.b16 %v2589
      %v2639 = vunpack.c.l.b16 %v2590
      %v2640 = vunpack.c.l.b16 %v2591
      %v2641 = vunpack.c.l.b16 %v2592
      %v2642 = vunpack.c.l.b16 %v2593
      %v2643 = vunpack.c.l.b16 %v2594
      %v2644 = vunpack.c.l.b16 %v2595
      %v2645 = vunpack.c.l.b16 %v2596
      %v2646 = vunpack.c.l.b16 %v2597
      %v2647 = vunpack.c.l.b16 %v2598
      %v2648 = vunpack.c.l.b16 %v2599
      %v2649 = vunpack.c.l.b16 %v2600
      %v2650 = vunpack.c.l.b16 %v2601
      %v2651 = vunpack.c.l.b16 %v2602
      %v2652 = vunpack.c.l.b16 %v2603
      %v2653 = vunpack.c.l.b16 %v2604
      %v2654 = vunpack.c.l.b16 %v2605
      %v2655 = vunpack.c.l.b16 %v2606
      %v2656 = vunpack.c.l.b16 %v2607
      %v2657 = vunpack.c.l.b16 %v2608
      %v2658 = vunpack.c.l.b16 %v2609
      %v2659 = vunpack.c.l.b16 %v2610
      %v2660 = vunpack.c.l.b16 %v2611
      %v2661 = vunpack.c.l.b16 %v2612
      %v2662 = vunpack.c.l.b16 %v2613
      %v2663 = vunpack.c.l.b16 %v2614
      %v2664 = vunpack.c.l.b16 %v2615
      %v2665 = vunpack.c.l.b16 %v2616
      %v2666 = vunpack.c.l.b16 %v2617
      %v2667 = vunpack.c.l.b16 %v2618
      %v2668 = vunpack.c.l.b16 %v2619
      %v2669 = vunpack.c.l.b16 %v2620
      %v2670 = vunpack.c.l.b16 %v2621
      %v2671 = vunpack.c.l.b16 %v2622
      %v2672 = vunpack.c.l.b16 %v2623
      %v2673 = vunpack.c.l.b16 %v2624
      %v2674 = vunpack.c.l.b16 %v2625
      %v2675 = vunpack.c.l.b16 %v2626
      %v2676 = vunpack.c.l.b16 %v2627
      %v2677 = vunpack.c.l.b16 %v2628
      %v2678 = vunpack.c.l.b16 %v2629
      %v2679 = vunpack.c.l.b16 %v2630
      %v2680 = vunpack.c.l.b16 %v2631
      %v2681 = vunpack.c.l.b16 %v2632
      %v2682 = vunpack.c.l.b16 %v2633
      %v2683 = vunpack.c.l.b16 %v2634
      %v2684 = vunpack.c.l.b16 %v2635
      %v2685 = vunpack.c.l.b16 %v2636
      %v2686 = vunpack.c.l.b16 %v2637
      %v2687 = vrot.slane %v2639, 7
      %vm2688 = vcmask 1041409
      %v2689 = vsel %vm2688, %v2687, %v2638
      %v2690 = vrot.slane %v2640, 6
      %vm2691 = vcmask 1042434
      %v2692 = vsel %vm2691, %v2690, %v2689
      %v2693 = vrot.slane %v2641, 5
      %vm2694 = vcmask 1043459
      %v2695 = vsel %vm2694, %v2693, %v2692
      %v2696 = vrot.slane %v2642, 4
      %vm2697 = vcmask 1044484
      %v2698 = vsel %vm2697, %v2696, %v2695
      %v2699 = vrot.slane %v2643, 3
      %vm2700 = vcmask 1045509
      %v2701 = vsel %vm2700, %v2699, %v2698
      %v2702 = vrot.slane %v2644, 2
      %vm2703 = vcmask 1046534
      %v2704 = vsel %vm2703, %v2702, %v2701
      %v2705 = vrot.slane %v2645, 1
      %vm2706 = vcmask 1047559
      %v2707 = vsel %vm2706, %v2705, %v2704
      %v2708 = vrot.slane %v2647, 7
      %v2709 = vsel %vm2688, %v2708, %v2646
      %v2710 = vrot.slane %v2648, 6
      %v2711 = vsel %vm2691, %v2710, %v2709
      %v2712 = vrot.slane %v2649, 5
      %v2713 = vsel %vm2694, %v2712, %v2711
      %v2714 = vrot.slane %v2650, 4
      %v2715 = vsel %vm2697, %v2714, %v2713
      %v2716 = vrot.slane %v2651, 3
      %v2717 = vsel %vm2700, %v2716, %v2715
      %v2718 = vrot.slane %v2652, 2
      %v2719 = vsel %vm2703, %v2718, %v2717
      %v2720 = vrot.slane %v2653, 1
      %v2721 = vsel %vm2706, %v2720, %v2719
      %v2722 = vrot.slane %v2655, 7
      %v2723 = vsel %vm2688, %v2722, %v2654
      %v2724 = vrot.slane %v2656, 6
      %v2725 = vsel %vm2691, %v2724, %v2723
      %v2726 = vrot.slane %v2657, 5
      %v2727 = vsel %vm2694, %v2726, %v2725
      %v2728 = vrot.slane %v2658, 4
      %v2729 = vsel %vm2697, %v2728, %v2727
      %v2730 = vrot.slane %v2659, 3
      %v2731 = vsel %vm2700, %v2730, %v2729
      %v2732 = vrot.slane %v2660, 2
      %v2733 = vsel %vm2703, %v2732, %v2731
      %v2734 = vrot.slane %v2661, 1
      %v2735 = vsel %vm2706, %v2734, %v2733
      %v2736 = vrot.slane %v2663, 7
      %v2737 = vsel %vm2688, %v2736, %v2662
      %v2738 = vrot.slane %v2664, 6
      %v2739 = vsel %vm2691, %v2738, %v2737
      %v2740 = vrot.slane %v2665, 5
      %v2741 = vsel %vm2694, %v2740, %v2739
      %v2742 = vrot.slane %v2666, 4
      %v2743 = vsel %vm2697, %v2742, %v2741
      %v2744 = vrot.slane %v2667, 3
      %v2745 = vsel %vm2700, %v2744, %v2743
      %v2746 = vrot.slane %v2668, 2
      %v2747 = vsel %vm2703, %v2746, %v2745
      %v2748 = vrot.slane %v2669, 1
      %v2749 = vsel %vm2706, %v2748, %v2747
      %v2750 = vrot.slane %v2671, 7
      %v2751 = vsel %vm2688, %v2750, %v2670
      %v2752 = vrot.slane %v2672, 6
      %v2753 = vsel %vm2691, %v2752, %v2751
      %v2754 = vrot.slane %v2673, 5
      %v2755 = vsel %vm2694, %v2754, %v2753
      %v2756 = vrot.slane %v2674, 4
      %v2757 = vsel %vm2697, %v2756, %v2755
      %v2758 = vrot.slane %v2675, 3
      %v2759 = vsel %vm2700, %v2758, %v2757
      %v2760 = vrot.slane %v2676, 2
      %v2761 = vsel %vm2703, %v2760, %v2759
      %v2762 = vrot.slane %v2677, 1
      %v2763 = vsel %vm2706, %v2762, %v2761
      %v2764 = vrot.slane %v2679, 7
      %v2765 = vsel %vm2688, %v2764, %v2678
      %v2766 = vrot.slane %v2680, 6
      %v2767 = vsel %vm2691, %v2766, %v2765
      %v2768 = vrot.slane %v2681, 5
      %v2769 = vsel %vm2694, %v2768, %v2767
      %v2770 = vrot.slane %v2682, 4
      %v2771 = vsel %vm2697, %v2770, %v2769
      %v2772 = vrot.slane %v2683, 3
      %v2773 = vsel %vm2700, %v2772, %v2771
      %v2774 = vrot.slane %v2684, 2
      %v2775 = vsel %vm2703, %v2774, %v2773
      %v2776 = vrot.slane %v2685, 1
      %v2777 = vsel %vm2706, %v2776, %v2775
      %v2778 = vpack.c.b16 %v2707, %v2707
      %v2779 = vpack.c.b16 %v2721, %v2721
      %v2780 = vpack.c.b16 %v2735, %v2735
      %v2781 = vpack.c.b16 %v2749, %v2749
      %v2782 = vpack.c.b16 %v2763, %v2763
      %v2783 = vpack.c.b16 %v2777, %v2777
      %v2784 = vpack.c.b16 %v2686, %v2686
      %2792 = vst [vmem:[%s170] sm:$0xf] %v2778
      %2793 = vst [vmem:[%s170 + $0x4] sm:$0xf] %v2779
      %2794 = vst [vmem:[%s170 + $0x8] sm:$0xf] %v2780
      %2795 = vst [vmem:[%s170 + $0xc] sm:$0xf] %v2781
      %2796 = vst [vmem:[%s170 + $0x10] sm:$0xf] %v2782
      %2797 = vst [vmem:[%s170 + $0x14] sm:$0xf] %v2783
      %vm2798 = vcmask 1040384
      %vm2799 = vsmask.f32 256
      %vm2800 = vmand %vm2798, %vm2799
      %v2801 = vld [vmem:[%s170 + $0x18] sm:$0x1]
      %v2802 = vsel %vm2800, %v2784, %v2801
      %2803 = vst [vmem:[%s170 + $0x18] sm:$0x1] %v2802
      %p2804 = scmp.lt.s32.totalorder %s14, 1
      %s2805 = scalar_select %p2804, %s14, 1
      %s2806 = smul.addr %s2805, 7
      %s2807 = smul.addr %s2806, 4
      %s2808 = scalar_lea.vmem %s3, %s2807
      // Predicated region
      $region33: #{cnn_forward.5} parent=31 // pred_check
        %p2809 = pneg %p100
      $region34: #{cnn_forward.5} parent=31 // pred_check_branch
        %2811 = sbr.rel (%p2809) target = $region36
      $region35: #{cnn_forward.5} parent=31 // pred_region
        _
      $region36: #{cnn_forward.5} parent=31 // pred_fallthru
        _
    $region32: #{cnn_forward.5} parent=5 // pred_fallthru
      _
    %p2812 = scmp.le.s32.totalorder 2, %s9
    // Predicated region
    $region37: #{cnn_forward.5} parent=5 // pred_check
      %p2813 = pneg %p2812
    $region38: #{cnn_forward.5} parent=5 // pred_check_branch
      %2815 = sbr.rel (%p2813) target = $region40
    $region39: #{cnn_forward.5} parent=5 // pred_region
      %s2816 = ssub.s32 %s9, 2
      // Predicated region
      $region41: #{cnn_forward.5} parent=39 // pred_check
        %p2817 = pneg %p106
      $region42: #{cnn_forward.5} parent=39 // pred_check_branch
        %2819 = sbr.rel (%p2817) target = $region44
      $region43: #{cnn_forward.5} parent=39 // pred_region
        %p2820 = scmp.lt.s32.totalorder %s15, 1
        %s2821 = scalar_select %p2820, %s15, 1
        %s2822 = smul.addr %s2821, 7
        %s2823 = smul.addr %s2822, 4
        %s2824 = scalar_lea.vmem %s3, %s2823
      $region44: #{cnn_forward.5} parent=39 // pred_fallthru
        _
    $region40: #{cnn_forward.5} parent=5 // pred_fallthru
      _
  $region6: #{cnn_forward.5} parent=0 // loop_footer
    %s13 = sadd.s32 1, %s9
  $region7: #{cnn_forward.5} parent=0 // loop_footer_branch
    %8 = sbr.rel target = $region3
  $region8: #{cnn_forward.5} parent=0 // loop_exit
    _

// kernel: cnn_forward.6
$region0: #{cnn_forward.6}
  #allocation0 [shape = 'u32[]', space=smem, size = 0x4, offset = 0x4, fixed_abs, tag = 'smem constant byte address 0x4 - core index']
  #allocation1 [shape = 'u32[144,128]{1,0:T(1,128)}', space=vmem, size = 0x12000, scoped, tag = 'internal scratch']
  %s0 = inlined_call_operand.vmem [shape: bf16[2,49,640], index: 0, kind: input, shape index: {}]
  %s1 = inlined_call_operand.vmem [shape: bf16[640,128], index: 1, kind: input, shape index: {}]
  %s2 = inlined_call_operand.vmem [shape: f32[1,128], index: 2, kind: input, shape index: {}]
  %s3 = inlined_call_operand.vmem [shape: bf16[2,9,128], index: 3, kind: output, shape index: {}]
  %s4 = sld [smem:[#allocation0]]
  $region45: #{cnn_forward.6} parent=0
    _
  %s6 = ssub.s32 1, %s4
  %s7 = scalar_select 0, %s6, %s4
  loop: start=0, step=1, limit=4
  $region2: #{cnn_forward.6} parent=0 // loop_pre_header
    _
  $region3: #{cnn_forward.6} parent=0 // loop_header
    %s9 = sphi 0, %s13
    %p10 = scmp.ge.s32.totalorder %s9, 4
    %s19 = sphi 0, %s21
    %s22 = sphi 0, %s19
    %s23 = sphi 0, %s22
    %s39 = sphi 0, %s23
    %s43 = sphi 0, %s43
    %s45 = sphi 0, %s43
    %s46 = sphi 0, %s45
    %s60 = sphi 0, %s46
    %s64 = sphi 0, %s64
    %s66 = sphi 0, %s64
    %s67 = sphi 0, %s66
    %s81 = sphi 0, %s67
    %s87 = sphi 0, %s89
    %s90 = sphi 0, %s87
    %s91 = sphi 0, %s90
    %s107 = sphi 0, %s91
  $region4: #{cnn_forward.6} parent=0 // loop_header_branch
    %12 = sbr.rel (%p10) target = $region8
  $region5: #{cnn_forward.6} parent=0 // loop_body
    %s14 = ssub.s32 %s9, 1
    %s15 = ssub.s32 %s9, 2
    %s16 = sadd.s32 %s9, 1
    %s17 = ssub.s32 %s9, %s16
    %p18 = scmp.eq.s32.totalorder %s17, 0
    %s20 = sadd.s32 %s19, 1
    %s21 = scalar_select %p18, %s19, %s20
    %p24 = pneg %p18
    %p25 = scmp.eq.s32.totalorder %s9, 1
    %p26 = por %p24, %p25
    %p27 = scmp.ne.s32.totalorder %s19, %s22
    %p28 = scmp.eq.s32.totalorder %s9, 0
    %p29 = por %p27, %p28
    %p30 = scmp.ne.s32.totalorder %s19, %s22
    %p31 = scmp.eq.s32.totalorder %s14, 1
    %p32 = por %p30, %p31
    %p33 = scmp.ne.s32.totalorder %s22, %s23
    %p34 = scmp.eq.s32.totalorder %s14, 0
    %p35 = por %p33, %p34
    %p36 = scmp.ne.s32.totalorder %s22, %s23
    %p37 = scmp.eq.s32.totalorder %s15, 1
    %p38 = por %p36, %p37
    %p40 = scmp.ne.s32.totalorder %s23, %s39
    %p41 = scmp.eq.s32.totalorder %s15, 0
    %p42 = por %p40, %p41
    %s44 = sadd.s32 %s43, 1
    %p47 = scmp.eq.s32.totalorder %s9, 1
    %p48 = scmp.ne.s32.totalorder %s43, %s45
    %p49 = scmp.eq.s32.totalorder %s9, 0
    %p50 = por %p48, %p49
    %p51 = scmp.ne.s32.totalorder %s43, %s45
    %p52 = scmp.eq.s32.totalorder %s14, 1
    %p53 = por %p51, %p52
    %p54 = scmp.ne.s32.totalorder %s45, %s46
    %p55 = scmp.eq.s32.totalorder %s14, 0
    %p56 = por %p54, %p55
    %p57 = scmp.ne.s32.totalorder %s45, %s46
    %p58 = scmp.eq.s32.totalorder %s15, 1
    %p59 = por %p57, %p58
    %p61 = scmp.ne.s32.totalorder %s46, %s60
    %p62 = scmp.eq.s32.totalorder %s15, 0
    %p63 = por %p61, %p62
    %s65 = sadd.s32 %s64, 1
    %p68 = scmp.eq.s32.totalorder %s9, 1
    %p69 = scmp.ne.s32.totalorder %s64, %s66
    %p70 = scmp.eq.s32.totalorder %s9, 0
    %p71 = por %p69, %p70
    %p72 = scmp.ne.s32.totalorder %s64, %s66
    %p73 = scmp.eq.s32.totalorder %s14, 1
    %p74 = por %p72, %p73
    %p75 = scmp.ne.s32.totalorder %s66, %s67
    %p76 = scmp.eq.s32.totalorder %s14, 0
    %p77 = por %p75, %p76
    %p78 = scmp.ne.s32.totalorder %s66, %s67
    %p79 = scmp.eq.s32.totalorder %s15, 1
    %p80 = por %p78, %p79
    %p82 = scmp.ne.s32.totalorder %s67, %s81
    %p83 = scmp.eq.s32.totalorder %s15, 0
    %p84 = por %p82, %p83
    %s85 = ssub.s32 %s9, %s16
    %p86 = scmp.eq.s32.totalorder %s85, 0
    %s88 = sadd.s32 %s87, 1
    %s89 = scalar_select %p86, %s87, %s88
    %p92 = pneg %p86
    %p93 = scmp.eq.s32.totalorder %s9, 1
    %p94 = por %p92, %p93
    %p95 = scmp.ne.s32.totalorder %s87, %s90
    %p96 = scmp.eq.s32.totalorder %s9, 0
    %p97 = por %p95, %p96
    %p98 = scmp.ne.s32.totalorder %s87, %s90
    %p99 = scmp.eq.s32.totalorder %s14, 1
    %p100 = por %p98, %p99
    %p101 = scmp.ne.s32.totalorder %s90, %s91
    %p102 = scmp.eq.s32.totalorder %s14, 0
    %p103 = por %p101, %p102
    %p104 = scmp.ne.s32.totalorder %s90, %s91
    %p105 = scmp.eq.s32.totalorder %s15, 1
    %p106 = por %p104, %p105
    %p108 = scmp.ne.s32.totalorder %s91, %s107
    %p109 = scmp.eq.s32.totalorder %s15, 0
    %p110 = por %p108, %p109
    %p111 = scmp.le.s32.totalorder 1, %s9
    %p112 = scmp.lt.s32.totalorder %s9, 3
    %p113 = pnand %p111, %p112
    %p114 = pneg %p113
    // Predicated region
    $region9: #{cnn_forward.6} parent=5 // pred_check
      _
    $region10: #{cnn_forward.6} parent=5 // pred_check_branch
      %116 = sbr.rel (%p113) target = $region12
    $region11: #{cnn_forward.6} parent=5 // pred_region
      %s117 = ssub.s32 %s9, 1
      // Predicated region
      $region13: #{cnn_forward.6} parent=11 // pred_check
        %p118 = pneg %p56
      $region14: #{cnn_forward.6} parent=11 // pred_check_branch
        %120 = sbr.rel (%p118) target = $region16
      $region15: #{cnn_forward.6} parent=11 // pred_region
        _
      $region16: #{cnn_forward.6} parent=11 // pred_fallthru
        _
      // Predicated region
      $region17: #{cnn_forward.6} parent=11 // pred_check
        %p121 = pneg %p77
      $region18: #{cnn_forward.6} parent=11 // pred_check_branch
        %123 = sbr.rel (%p121) target = $region20
      $region19: #{cnn_forward.6} parent=11 // pred_region
        _
      $region20: #{cnn_forward.6} parent=11 // pred_fallthru
        _
    $region12: #{cnn_forward.6} parent=5 // pred_fallthru
      _
    %p124 = scmp.lt.s32.totalorder %s9, 2
    // Predicated region
    $region21: #{cnn_forward.6} parent=5 // pred_check
      %p125 = pneg %p124
    $region22: #{cnn_forward.6} parent=5 // pred_check_branch
      %127 = sbr.rel (%p125) target = $region24
    $region23: #{cnn_forward.6} parent=5 // pred_region
      // Predicated region
      $region25: #{cnn_forward.6} parent=23 // pred_check
        %p128 = pneg %p29
      $region26: #{cnn_forward.6} parent=23 // pred_check_branch
        %130 = sbr.rel (%p128) target = $region28
      $region27: #{cnn_forward.6} parent=23 // pred_region
        %p131 = scmp.lt.s32.totalorder %s9, 1
        %s132 = scalar_select %p131, %s9, 1
        %s133 = smul.addr %s132, 35
        %s134 = smul.addr %s133, 4
        %s135 = scalar_lea.vmem %s0, %s134
      $region28: #{cnn_forward.6} parent=23 // pred_fallthru
        _
    $region24: #{cnn_forward.6} parent=5 // pred_fallthru
      _
    %p136 = scmp.le.s32.totalorder 1, %s9
    %p137 = scmp.lt.s32.totalorder %s9, 3
    %p138 = pnand %p136, %p137
    %p139 = pneg %p138
    // Predicated region
    $region29: #{cnn_forward.6} parent=5 // pred_check
      _
    $region30: #{cnn_forward.6} parent=5 // pred_check_branch
      %141 = sbr.rel (%p138) target = $region32
    $region31: #{cnn_forward.6} parent=5 // pred_region
      %s142 = ssub.s32 %s9, 1
      %p143 = scmp.lt.s32.totalorder %s14, 1
      %s144 = scalar_select %p143, %s14, 1
      %s145 = smul.addr %s144, 35
      %s146 = smul.addr %s145, 4
      %s147 = scalar_lea.vmem %s0, %s146
      %p148 = pneg %p35
      %p149 = pneg %p32
      %p150 = pneg %p56
      %p151 = pneg %p53
      %p152 = pneg %p77
      %p153 = pneg %p74
      %p154 = pneg %p103
      %p155 = pneg %p100
      %p156 = scmp.lt.s32.totalorder %s14, 1
      %s157 = scalar_select %p156, %s14, 1
      %s158 = smul.addr %s157, 2
      %s159 = smul.addr %s158, 4
      %s160 = scalar_lea.vmem %s3, %s159
      %p161 = scmp.lt.s32.totalorder %s14, 1
      %s162 = scalar_select %p161, %s14, 1
      %s163 = smul.addr %s162, 35
      %s164 = smul.addr %s163, 4
      %s165 = scalar_lea.vmem %s0, %s164
      %p166 = scmp.lt.s32.totalorder %s14, 1
      %s167 = scalar_select %p166, %s14, 1
      %s168 = smul.addr %s167, 2
      %s169 = smul.addr %s168, 4
      %s170 = scalar_lea.vmem %s3, %s169
      %v172 = vld [vmem:[%s165] sm:$0xff]
      %v173 = vld [vmem:[%s165 + $0x8] sm:$0xff]
      %v174 = vld [vmem:[%s165 + $0x10] sm:$0xf]
      %v175 = vld [vmem:[%s165 + $0x14] sm:$0xff]
      %v176 = vld [vmem:[%s165 + $0x1c] sm:$0xff]
      %v177 = vld [vmem:[%s165 + $0x24] sm:$0xf]
      %v178 = vld [vmem:[%s165 + $0x28] sm:$0xff]
      %v179 = vld [vmem:[%s165 + $0x30] sm:$0xff]
      %v180 = vld [vmem:[%s165 + $0x38] sm:$0xf]
      %v181 = vld [vmem:[%s165 + $0x3c] sm:$0xff]
      %v182 = vld [vmem:[%s165 + $0x44] sm:$0xff]
      %v183 = vld [vmem:[%s165 + $0x4c] sm:$0xf]
      %v184 = vld [vmem:[%s165 + $0x50] sm:$0xff]
      %v185 = vld [vmem:[%s165 + $0x58] sm:$0xff]
      %v186 = vld [vmem:[%s165 + $0x60] sm:$0xf]
      %v187 = vld [vmem:[%s165 + $0x64] sm:$0xff]
      %v188 = vld [vmem:[%s165 + $0x6c] sm:$0xff]
      %v189 = vld [vmem:[%s165 + $0x74] sm:$0xf]
      %v190 = vld [vmem:[%s165 + $0x78] sm:$0x11]
      %v191 = vld [vmem:[%s165 + $0x80] sm:$0x11]
      %v192 = vld [vmem:[%s165 + $0x88] sm:$0x1]
      %v193 = vld [vmem:[%s1] sm:$0xf]
      %v194 = vld [vmem:[%s1 + $0x4] sm:$0xf]
      %v195 = vld [vmem:[%s1 + $0x8] sm:$0xf]
      %v196 = vld [vmem:[%s1 + $0xc] sm:$0xf]
      %v197 = vld [vmem:[%s1 + $0x10] sm:$0xf]
      %v198 = vld [vmem:[%s1 + $0x14] sm:$0xf]
      %v199 = vld [vmem:[%s1 + $0x18] sm:$0xf]
      %v200 = vld [vmem:[%s1 + $0x1c] sm:$0xf]
      %v201 = vld [vmem:[%s1 + $0x20] sm:$0xf]
      %v202 = vld [vmem:[%s1 + $0x24] sm:$0xf]
      %v203 = vld [vmem:[%s1 + $0x28] sm:$0xf]
      %v204 = vld [vmem:[%s1 + $0x2c] sm:$0xf]
      %v205 = vld [vmem:[%s1 + $0x30] sm:$0xf]
      %v206 = vld [vmem:[%s1 + $0x34] sm:$0xf]
      %v207 = vld [vmem:[%s1 + $0x38] sm:$0xf]
      %v208 = vld [vmem:[%s1 + $0x3c] sm:$0xf]
      %v209 = vld [vmem:[%s1 + $0x40] sm:$0xf]
      %v210 = vld [vmem:[%s1 + $0x44] sm:$0xf]
      %v211 = vld [vmem:[%s1 + $0x48] sm:$0xf]
      %v212 = vld [vmem:[%s1 + $0x4c] sm:$0xf]
      %v213 = vld [vmem:[%s1 + $0x50] sm:$0xf]
      %v214 = vld [vmem:[%s1 + $0x54] sm:$0xf]
      %v215 = vld [vmem:[%s1 + $0x58] sm:$0xf]
      %v216 = vld [vmem:[%s1 + $0x5c] sm:$0xf]
      %v217 = vld [vmem:[%s1 + $0x60] sm:$0xf]
      %v218 = vld [vmem:[%s1 + $0x64] sm:$0xf]
      %v219 = vld [vmem:[%s1 + $0x68] sm:$0xf]
      %v220 = vld [vmem:[%s1 + $0x6c] sm:$0xf]
      %v221 = vld [vmem:[%s1 + $0x70] sm:$0xf]
      %v222 = vld [vmem:[%s1 + $0x74] sm:$0xf]
      %v223 = vld [vmem:[%s1 + $0x78] sm:$0xf]
      %v224 = vld [vmem:[%s1 + $0x7c] sm:$0xf]
      %v225 = vld [vmem:[%s1 + $0x80] sm:$0xf]
      %v226 = vld [vmem:[%s1 + $0x84] sm:$0xf]
      %v227 = vld [vmem:[%s1 + $0x88] sm:$0xf]
      %v228 = vld [vmem:[%s1 + $0x8c] sm:$0xf]
      %v229 = vld [vmem:[%s1 + $0x90] sm:$0xf]
      %v230 = vld [vmem:[%s1 + $0x94] sm:$0xf]
      %v231 = vld [vmem:[%s1 + $0x98] sm:$0xf]
      %v232 = vld [vmem:[%s1 + $0x9c] sm:$0xf]
      %v233 = vld [vmem:[%s1 + $0xa0] sm:$0xf]
      %v234 = vld [vmem:[%s1 + $0xa4] sm:$0xf]
      %v235 = vld [vmem:[%s1 + $0xa8] sm:$0xf]
      %v236 = vld [vmem:[%s1 + $0xac] sm:$0xf]
      %v237 = vld [vmem:[%s1 + $0xb0] sm:$0xf]
      %v238 = vld [vmem:[%s1 + $0xb4] sm:$0xf]
      %v239 = vld [vmem:[%s1 + $0xb8] sm:$0xf]
      %v240 = vld [vmem:[%s1 + $0xbc] sm:$0xf]
      %v241 = vld [vmem:[%s1 + $0xc0] sm:$0xf]
      %v242 = vld [vmem:[%s1 + $0xc4] sm:$0xf]
      %v243 = vld [vmem:[%s1 + $0xc8] sm:$0xf]
      %v244 = vld [vmem:[%s1 + $0xcc] sm:$0xf]
      %v245 = vld [vmem:[%s1 + $0xd0] sm:$0xf]
      %v246 = vld [vmem:[%s1 + $0xd4] sm:$0xf]
      %v247 = vld [vmem:[%s1 + $0xd8] sm:$0xf]
      %v248 = vld [vmem:[%s1 + $0xdc] sm:$0xf]
      %v249 = vld [vmem:[%s1 + $0xe0] sm:$0xf]
      %v250 = vld [vmem:[%s1 + $0xe4] sm:$0xf]
      %v251 = vld [vmem:[%s1 + $0xe8] sm:$0xf]
      %v252 = vld [vmem:[%s1 + $0xec] sm:$0xf]
      %v253 = vld [vmem:[%s1 + $0xf0] sm:$0xf]
      %v254 = vld [vmem:[%s1 + $0xf4] sm:$0xf]
      %v255 = vld [vmem:[%s1 + $0xf8] sm:$0xf]
      %v256 = vld [vmem:[%s1 + $0xfc] sm:$0xf]
      %v257 = vld [vmem:[%s1 + $0x100] sm:$0xf]
      %v258 = vld [vmem:[%s1 + $0x104] sm:$0xf]
      %v259 = vld [vmem:[%s1 + $0x108] sm:$0xf]
      %v260 = vld [vmem:[%s1 + $0x10c] sm:$0xf]
      %v261 = vld [vmem:[%s1 + $0x110] sm:$0xf]
      %v262 = vld [vmem:[%s1 + $0x114] sm:$0xf]
      %v263 = vld [vmem:[%s1 + $0x118] sm:$0xf]
      %v264 = vld [vmem:[%s1 + $0x11c] sm:$0xf]
      %v265 = vld [vmem:[%s1 + $0x120] sm:$0xf]
      %v266 = vld [vmem:[%s1 + $0x124] sm:$0xf]
      %v267 = vld [vmem:[%s1 + $0x128] sm:$0xf]
      %v268 = vld [vmem:[%s1 + $0x12c] sm:$0xf]
      %v269 = vld [vmem:[%s1 + $0x130] sm:$0xf]
      %v270 = vld [vmem:[%s1 + $0x134] sm:$0xf]
      %v271 = vld [vmem:[%s1 + $0x138] sm:$0xf]
      %v272 = vld [vmem:[%s1 + $0x13c] sm:$0xf]
      %v273 = vld [vmem:[%s2] sm:$0x1]
      %v275 = vlaneseq
      %v276 = vshrl.u32 %v275, 7
      %v277 = vsub.s32 0, %v276
      %v278 = vrot.slane %v273, %v277
      %v301 = vunpack.c.l.b16 %v172
      %v302 = vunpack.c.h.b16 %v172
      %v303 = vunpack.c.l.b16 %v173
      %v304 = vunpack.c.h.b16 %v173
      %v305 = vunpack.c.l.b16 %v174
      %v306 = vunpack.c.l.b16 %v175
      %v307 = vunpack.c.h.b16 %v175
      %v308 = vunpack.c.l.b16 %v176
      %v309 = vunpack.c.h.b16 %v176
      %v310 = vunpack.c.l.b16 %v177
      %v311 = vunpack.c.l.b16 %v178
      %v312 = vunpack.c.h.b16 %v178
      %v313 = vunpack.c.l.b16 %v179
      %v314 = vunpack.c.h.b16 %v179
      %v315 = vunpack.c.l.b16 %v180
      %v316 = vunpack.c.l.b16 %v181
      %v317 = vunpack.c.h.b16 %v181
      %v318 = vunpack.c.l.b16 %v182
      %v319 = vunpack.c.h.b16 %v182
      %v320 = vunpack.c.l.b16 %v183
      %v321 = vunpack.c.l.b16 %v184
      %v322 = vunpack.c.h.b16 %v184
      %v323 = vunpack.c.l.b16 %v185
      %v324 = vunpack.c.h.b16 %v185
      %v325 = vunpack.c.l.b16 %v186
      %v326 = vunpack.c.l.b16 %v187
      %v327 = vunpack.c.h.b16 %v187
      %v328 = vunpack.c.l.b16 %v188
      %v329 = vunpack.c.h.b16 %v188
      %v330 = vunpack.c.l.b16 %v189
      %v331 = vunpack.c.l.b16 %v190
      %v332 = vunpack.c.h.b16 %v190
      %v333 = vunpack.c.l.b16 %v191
      %v334 = vunpack.c.h.b16 %v191
      %v335 = vunpack.c.l.b16 %v192
      %v336 = vpack.c.b16 %v306, %v301
      %v337 = vpack.c.b16 %v307, %v302
      %v338 = vpack.c.b16 %v308, %v303
      %v339 = vpack.c.b16 %v309, %v304
      %v340 = vpack.c.b16 %v310, %v305
      %v341 = vpack.c.b16 %v316, %v311
      %v342 = vpack.c.b16 %v317, %v312
      %v343 = vpack.c.b16 %v318, %v313
      %v344 = vpack.c.b16 %v319, %v314
      %v345 = vpack.c.b16 %v320, %v315
      %v346 = vpack.c.b16 %v326, %v321
      %v347 = vpack.c.b16 %v327, %v322
      %v348 = vpack.c.b16 %v328, %v323
      %v349 = vpack.c.b16 %v329, %v324
      %v350 = vpack.c.b16 %v330, %v325
      %v351 = vpack.c.b16 %v331, %v331
      %v352 = vpack.c.b16 %v332, %v332
      %v353 = vpack.c.b16 %v333, %v333
      %v354 = vpack.c.b16 %v334, %v334
      %v355 = vpack.c.b16 %v335, %v335
      %v456 = vunpack.c.l.b16 %v193
      %v457 = vunpack.c.l.b16 %v194
      %v458 = vunpack.c.l.b16 %v195
      %v459 = vunpack.c.l.b16 %v196
      %v460 = vunpack.c.l.b16 %v197
      %v461 = vunpack.c.l.b16 %v198
      %v462 = vunpack.c.l.b16 %v199
      %v463 = vunpack.c.l.b16 %v200
      %v464 = vunpack.c.l.b16 %v201
      %v465 = vunpack.c.l.b16 %v202
      %v466 = vunpack.c.l.b16 %v203
      %v467 = vunpack.c.l.b16 %v204
      %v468 = vunpack.c.l.b16 %v205
      %v469 = vunpack.c.l.b16 %v206
      %v470 = vunpack.c.l.b16 %v207
      %v471 = vunpack.c.l.b16 %v208
      %v472 = vunpack.c.l.b16 %v209
      %v473 = vunpack.c.l.b16 %v210
      %v474 = vunpack.c.l.b16 %v211
      %v475 = vunpack.c.l.b16 %v212
      %v476 = vunpack.c.l.b16 %v213
      %v477 = vunpack.c.l.b16 %v214
      %v478 = vunpack.c.l.b16 %v215
      %v479 = vunpack.c.l.b16 %v216
      %v480 = vunpack.c.l.b16 %v217
      %v481 = vunpack.c.l.b16 %v218
      %v482 = vunpack.c.l.b16 %v219
      %v483 = vunpack.c.l.b16 %v220
      %v484 = vunpack.c.l.b16 %v221
      %v485 = vunpack.c.l.b16 %v222
      %v486 = vunpack.c.l.b16 %v223
      %v487 = vunpack.c.l.b16 %v224
      %v488 = vunpack.c.l.b16 %v225
      %v489 = vunpack.c.l.b16 %v226
      %v490 = vunpack.c.l.b16 %v227
      %v491 = vunpack.c.l.b16 %v228
      %v492 = vunpack.c.l.b16 %v229
      %v493 = vunpack.c.l.b16 %v230
      %v494 = vunpack.c.l.b16 %v231
      %v495 = vunpack.c.l.b16 %v232
      %v496 = vunpack.c.l.b16 %v233
      %v497 = vunpack.c.l.b16 %v234
      %v498 = vunpack.c.l.b16 %v235
      %v499 = vunpack.c.l.b16 %v236
      %v500 = vunpack.c.l.b16 %v237
      %v501 = vunpack.c.l.b16 %v238
      %v502 = vunpack.c.l.b16 %v239
      %v503 = vunpack.c.l.b16 %v240
      %v504 = vunpack.c.l.b16 %v241
      %v505 = vunpack.c.l.b16 %v242
      %v506 = vunpack.c.l.b16 %v243
      %v507 = vunpack.c.l.b16 %v244
      %v508 = vunpack.c.l.b16 %v245
      %v509 = vunpack.c.l.b16 %v246
      %v510 = vunpack.c.l.b16 %v247
      %v511 = vunpack.c.l.b16 %v248
      %v512 = vunpack.c.l.b16 %v249
      %v513 = vunpack.c.l.b16 %v250
      %v514 = vunpack.c.l.b16 %v251
      %v515 = vunpack.c.l.b16 %v252
      %v516 = vunpack.c.l.b16 %v253
      %v517 = vunpack.c.l.b16 %v254
      %v518 = vunpack.c.l.b16 %v255
      %v519 = vunpack.c.l.b16 %v256
      %v520 = vunpack.c.l.b16 %v257
      %v521 = vunpack.c.l.b16 %v258
      %v522 = vunpack.c.l.b16 %v259
      %v523 = vunpack.c.l.b16 %v260
      %v524 = vunpack.c.l.b16 %v261
      %v525 = vunpack.c.l.b16 %v262
      %v526 = vunpack.c.l.b16 %v263
      %v527 = vunpack.c.l.b16 %v264
      %v528 = vunpack.c.l.b16 %v265
      %v529 = vunpack.c.l.b16 %v266
      %v530 = vunpack.c.l.b16 %v267
      %v531 = vunpack.c.l.b16 %v268
      %v532 = vunpack.c.l.b16 %v269
      %v533 = vunpack.c.l.b16 %v270
      %v534 = vunpack.c.l.b16 %v271
      %v535 = vunpack.c.l.b16 %v272
      %v536 = vpack.c.b16 %v457, %v456
      %v537 = vpack.c.b16 %v459, %v458
      %v538 = vpack.c.b16 %v461, %v460
      %v539 = vpack.c.b16 %v463, %v462
      %v540 = vpack.c.b16 %v465, %v464
      %v541 = vpack.c.b16 %v467, %v466
      %v542 = vpack.c.b16 %v469, %v468
      %v543 = vpack.c.b16 %v471, %v470
      %v544 = vpack.c.b16 %v473, %v472
      %v545 = vpack.c.b16 %v475, %v474
      %v546 = vpack.c.b16 %v477, %v476
      %v547 = vpack.c.b16 %v479, %v478
      %v548 = vpack.c.b16 %v481, %v480
      %v549 = vpack.c.b16 %v483, %v482
      %v550 = vpack.c.b16 %v485, %v484
      %v551 = vpack.c.b16 %v487, %v486
      %v552 = vpack.c.b16 %v489, %v488
      %v553 = vpack.c.b16 %v491, %v490
      %v554 = vpack.c.b16 %v493, %v492
      %v555 = vpack.c.b16 %v495, %v494
      %v556 = vpack.c.b16 %v497, %v496
      %v557 = vpack.c.b16 %v499, %v498
      %v558 = vpack.c.b16 %v501, %v500
      %v559 = vpack.c.b16 %v503, %v502
      %v560 = vpack.c.b16 %v505, %v504
      %v561 = vpack.c.b16 %v507, %v506
      %v562 = vpack.c.b16 %v509, %v508
      %v563 = vpack.c.b16 %v511, %v510
      %v564 = vpack.c.b16 %v513, %v512
      %v565 = vpack.c.b16 %v515, %v514
      %v566 = vpack.c.b16 %v517, %v516
      %v567 = vpack.c.b16 %v519, %v518
      %v568 = vpack.c.b16 %v521, %v520
      %v569 = vpack.c.b16 %v523, %v522
      %v570 = vpack.c.b16 %v525, %v524
      %v571 = vpack.c.b16 %v527, %v526
      %v572 = vpack.c.b16 %v529, %v528
      %v573 = vpack.c.b16 %v531, %v530
      %v574 = vpack.c.b16 %v533, %v532
      %v575 = vpack.c.b16 %v535, %v534
      %616 = vmatprep.subr.bf16.mxu0 0
      %617 = vmatpush1.bf16.msra.mxu0 %v536
      %618 = vmatprep.subr.bf16.mxu0 0
      %619 = vmatpush1.bf16.msra.mxu0 %v537
      %620 = vmatprep.subr.bf16.mxu0 0
      %621 = vmatpush1.bf16.msra.mxu0 %v538
      %622 = vmatprep.subr.bf16.mxu0 0
      %623 = vmatpush1.bf16.msra.mxu0 %v539
      %624 = vmatprep.subr.bf16.mxu0 0
      %625 = vmatpush1.bf16.msra.mxu0 %v540
      %626 = vmatprep.subr.bf16.mxu0 0
      %627 = vmatpush1.bf16.msra.mxu0 %v541
      %628 = vmatprep.subr.bf16.mxu0 0
      %629 = vmatpush1.bf16.msra.mxu0 %v542
      %630 = vmatprep.subr.bf16.mxu0 0
      %631 = vmatpush1.bf16.msra.mxu0 %v543
      %632 = vmatprep.subr.bf16.mxu0 0
      %633 = vmatpush1.bf16.msra.mxu0 %v544
      %634 = vmatprep.subr.bf16.mxu0 0
      %635 = vmatpush1.bf16.msra.mxu0 %v545
      %636 = vmatprep.subr.bf16.mxu0 0
      %637 = vmatpush1.bf16.msra.mxu0 %v546
      %638 = vmatprep.subr.bf16.mxu0 0
      %639 = vmatpush1.bf16.msra.mxu0 %v547
      %640 = vmatprep.subr.bf16.mxu0 0
      %641 = vmatpush1.bf16.msra.mxu0 %v548
      %642 = vmatprep.subr.bf16.mxu0 0
      %643 = vmatpush1.bf16.msra.mxu0 %v549
      %644 = vmatprep.subr.bf16.mxu0 0
      %645 = vmatpush1.bf16.msra.mxu0 %v550
      %646 = vmatprep.subr.bf16.mxu0 0
      %647 = vmatpush1.bf16.msra.mxu0 %v551
      %648 = vmatprep.mubr.bf16.mxu0 %v337
      %649 = vmatmul.mubr.bf16.gmra.mrb[0].mxu0 %v336
      %v650 = vpop.f32.mrb[0].mxu0
      %v651 = vadd.f32 %v278, %v650
      %v652 = vpop.f32.mrb[0].mxu0
      %v653 = vpop.f32.mrb[0].mxu0
      %v654 = vadd.f32 %v278, %v653
      %v655 = vpop.f32.mrb[0].mxu0
      %656 = vmatprep.mubr.bf16.mxu0 %v342
      %657 = vmatmul.mubr.bf16.gmra.mrb[0].mxu0 %v341
      %v658 = vpop.f32.mrb[0].mxu0
      %v659 = vadd.f32 %v278, %v658
      %v660 = vpop.f32.mrb[0].mxu0
      %v661 = vpop.f32.mrb[0].mxu0
      %v662 = vadd.f32 %v278, %v661
      %v663 = vpop.f32.mrb[0].mxu0
      %664 = vmatprep.mubr.bf16.mxu0 %v347
      %665 = vmatmul.mubr.bf16.gmra.mrb[0].mxu0 %v346
      %v666 = vpop.f32.mrb[0].mxu0
      %v667 = vadd.f32 %v278, %v666
      %v668 = vpop.f32.mrb[0].mxu0
      %v669 = vpop.f32.mrb[0].mxu0
      %v670 = vadd.f32 %v278, %v669
      %v671 = vpop.f32.mrb[0].mxu0
      %672 = vmatprep.mubr.bf16.mxu0 %v352
      %673 = vmatmul.mubr.bf16.gmra.mrb[0].mxu0 %v351
      %v674 = vpop.f32.mrb[0].mxu0
      %v675 = vpop.f32.mrb[0].mxu0
      %v676 = vpop.f32.mrb[0].mxu0
      %v677 = vpop.f32.mrb[0].mxu0
      %678 = vdwg.mxu0
      %679 = vmatprep.subr.bf16.mxu0 0
      %680 = vmatpush1.bf16.msra.mxu0 %v552
      %681 = vmatprep.subr.bf16.mxu0 0
      %682 = vmatpush1.bf16.msra.mxu0 %v553
      %683 = vmatprep.subr.bf16.mxu0 0
      %684 = vmatpush1.bf16.msra.mxu0 %v554
      %685 = vmatprep.subr.bf16.mxu0 0
      %686 = vmatpush1.bf16.msra.mxu0 %v555
      %687 = vmatprep.subr.bf16.mxu0 0
      %688 = vmatpush1.bf16.msra.mxu0 %v556
      %689 = vmatprep.subr.bf16.mxu0 0
      %690 = vmatpush1.bf16.msra.mxu0 %v557
      %691 = vmatprep.subr.bf16.mxu0 0
      %692 = vmatpush1.bf16.msra.mxu0 %v558
      %693 = vmatprep.subr.bf16.mxu0 0
      %694 = vmatpush1.bf16.msra.mxu0 %v559
      %695 = vmatprep.subr.bf16.mxu0 0
      %696 = vmatpush1.bf16.msra.mxu0 %v560
      %697 = vmatprep.subr.bf16.mxu0 0
      %698 = vmatpush1.bf16.msra.mxu0 %v561
      %699 = vmatprep.subr.bf16.mxu0 0
      %700 = vmatpush1.bf16.msra.mxu0 %v562
      %701 = vmatprep.subr.bf16.mxu0 0
      %702 = vmatpush1.bf16.msra.mxu0 %v563
      %703 = vmatprep.subr.bf16.mxu0 0
      %704 = vmatpush1.bf16.msra.mxu0 %v564
      %705 = vmatprep.subr.bf16.mxu0 0
      %706 = vmatpush1.bf16.msra.mxu0 %v565
      %707 = vmatprep.subr.bf16.mxu0 0
      %708 = vmatpush1.bf16.msra.mxu0 %v566
      %709 = vmatprep.subr.bf16.mxu0 0
      %710 = vmatpush1.bf16.msra.mxu0 %v567
      %711 = vmatprep.mubr.bf16.mxu0 %v339
      %712 = vmatmul.mubr.bf16.gmra.mrb[0].mxu0 %v338
      %v713 = vpop.f32.mrb[0].mxu0
      %v714 = vadd.f32 %v651, %v713
      %v715 = vpop.f32.mrb[0].mxu0
      %v716 = vpop.f32.mrb[0].mxu0
      %v717 = vadd.f32 %v654, %v716
      %v718 = vpop.f32.mrb[0].mxu0
      %719 = vmatprep.mubr.bf16.mxu0 %v344
      %720 = vmatmul.mubr.bf16.gmra.mrb[0].mxu0 %v343
      %v721 = vpop.f32.mrb[0].mxu0
      %v722 = vadd.f32 %v659, %v721
      %v723 = vpop.f32.mrb[0].mxu0
      %v724 = vpop.f32.mrb[0].mxu0
      %v725 = vadd.f32 %v662, %v724
      %v726 = vpop.f32.mrb[0].mxu0
      %727 = vmatprep.mubr.bf16.mxu0 %v349
      %728 = vmatmul.mubr.bf16.gmra.mrb[0].mxu0 %v348
      %v729 = vpop.f32.mrb[0].mxu0
      %v730 = vadd.f32 %v667, %v729
      %v731 = vpop.f32.mrb[0].mxu0
      %v732 = vpop.f32.mrb[0].mxu0
      %v733 = vadd.f32 %v670, %v732
      %v734 = vpop.f32.mrb[0].mxu0
      %735 = vmatprep.mubr.bf16.mxu0 %v354
      %736 = vmatmul.mubr.bf16.gmra.mrb[0].mxu0 %v353
      %v737 = vpop.f32.mrb[0].mxu0
      %v738 = vpop.f32.mrb[0].mxu0
      %v739 = vpop.f32.mrb[0].mxu0
      %v740 = vpop.f32.mrb[0].mxu0
      %741 = vdwg.mxu0
      %742 = vmatprep.subr.bf16.mxu0 0
      %743 = vmatpush1.bf16.msra.mxu0 %v568
      %744 = vmatprep.subr.bf16.mxu0 0
      %745 = vmatpush1.bf16.msra.mxu0 %v569
      %746 = vmatprep.subr.bf16.mxu0 0
      %747 = vmatpush1.bf16.msra.mxu0 %v570
      %748 = vmatprep.subr.bf16.mxu0 0
      %749 = vmatpush1.bf16.msra.mxu0 %v571
      %750 = vmatprep.subr.bf16.mxu0 0
      %751 = vmatpush1.bf16.msra.mxu0 %v572
      %752 = vmatprep.subr.bf16.mxu0 0
      %753 = vmatpush1.bf16.msra.mxu0 %v573
      %754 = vmatprep.subr.bf16.mxu0 0
      %755 = vmatpush1.bf16.msra.mxu0 %v574
      %756 = vmatprep.subr.bf16.mxu0 0
      %757 = vmatpush1.bf16.msra.mxu0 %v575
      %758 = vmatprep.subr.bf16.mxu0 0
      %759 = vmatpush1.bf16.msra.mxu0 0
      %760 = vmatprep.subr.bf16.mxu0 0
      %761 = vmatpush1.bf16.msra.mxu0 0
      %762 = vmatprep.subr.bf16.mxu0 0
      %763 = vmatpush1.bf16.msra.mxu0 0
      %764 = vmatprep.subr.bf16.mxu0 0
      %765 = vmatpush1.bf16.msra.mxu0 0
      %766 = vmatprep.subr.bf16.mxu0 0
      %767 = vmatpush1.bf16.msra.mxu0 0
      %768 = vmatprep.subr.bf16.mxu0 0
      %769 = vmatpush1.bf16.msra.mxu0 0
      %770 = vmatprep.subr.bf16.mxu0 0
      %771 = vmatpush1.bf16.msra.mxu0 0
      %772 = vmatprep.subr.bf16.mxu0 0
      %773 = vmatpush1.bf16.msra.mxu0 0
      %774 = vmatprep.mubr.bf16.mxu0 0
      %775 = vmatmul.mubr.bf16.gmra.mrb[0].mxu0 %v340
      %v776 = vpop.f32.mrb[0].mxu0
      %v777 = vadd.f32 %v714, %v776
      %v778 = vpop.f32.mrb[0].mxu0
      %v779 = vpop.f32.mrb[0].mxu0
      %v780 = vadd.f32 %v717, %v779
      %v781 = vpop.f32.mrb[0].mxu0
      %782 = vmatprep.mubr.bf16.mxu0 0
      %783 = vmatmul.mubr.bf16.gmra.mrb[0].mxu0 %v345
      %v784 = vpop.f32.mrb[0].mxu0
      %v785 = vadd.f32 %v722, %v784
      %v786 = vpop.f32.mrb[0].mxu0
      %v787 = vpop.f32.mrb[0].mxu0
      %v788 = vadd.f32 %v725, %v787
      %v789 = vpop.f32.mrb[0].mxu0
      %790 = vmatprep.mubr.bf16.mxu0 0
      %791 = vmatmul.mubr.bf16.gmra.mrb[0].mxu0 %v350
      %v792 = vpop.f32.mrb[0].mxu0
      %v793 = vadd.f32 %v730, %v792
      %v794 = vpop.f32.mrb[0].mxu0
      %v795 = vpop.f32.mrb[0].mxu0
      %v796 = vadd.f32 %v733, %v795
      %v797 = vpop.f32.mrb[0].mxu0
      %798 = vmatprep.mubr.bf16.mxu0 0
      %799 = vmatmul.mubr.bf16.gmra.mrb[0].mxu0 %v355
      %v800 = vpop.f32.mrb[0].mxu0
      %v801 = vpop.f32.mrb[0].mxu0
      %v802 = vpop.f32.mrb[0].mxu0
      %v803 = vpop.f32.mrb[0].mxu0
      %804 = vdwg.mxu0
      %v805 = vmax.f32 %v777, 0.0
      %v806 = vmax.f32 %v780, 0.0
      %v807 = vmax.f32 %v785, 0.0
      %v808 = vmax.f32 %v788, 0.0
      %v809 = vmax.f32 %v793, 0.0
      %v810 = vmax.f32 %v796, 0.0
      %v817 = vcombine.high %v805, %v805
      %v819 = vunpack.c.l.s4 1983009808
      %v820 = vunpack.c.0.s8 %v819
      %v821 = vlaneseq
      %v822 = vshrl.u32 %v821, 7
      %v823 = vsub.s32 %v820, %v822
      %v824 = vrot.slane %v805, %v823
      %v826 = vunpack.c.l.s4 1983009808
      %v827 = vunpack.c.0.s8 %v826
      %v828 = vlaneseq
      %v829 = vshrl.u32 %v828, 7
      %v830 = vsub.s32 %v827, %v829
      %v831 = vrot.slane %v817, %v830
      %v832 = vcombine.high %v824, %v824
      %v833 = vcombine.high %v831, %v831
      %v834 = vcombine.high %v806, %v806
      %v836 = vunpack.c.l.s4 1983009808
      %v837 = vunpack.c.0.s8 %v836
      %v838 = vlaneseq
      %v839 = vshrl.u32 %v838, 7
      %v840 = vsub.s32 %v837, %v839
      %v841 = vrot.slane %v806, %v840
      %v843 = vunpack.c.l.s4 1983009808
      %v844 = vunpack.c.0.s8 %v843
      %v845 = vlaneseq
      %v846 = vshrl.u32 %v845, 7
      %v847 = vsub.s32 %v844, %v846
      %v848 = vrot.slane %v834, %v847
      %v849 = vcombine.high %v841, %v841
      %v850 = vcombine.high %v848, %v848
      %v851 = vcombine.high %v807, %v807
      %v853 = vunpack.c.l.s4 1983009808
      %v854 = vunpack.c.0.s8 %v853
      %v855 = vlaneseq
      %v856 = vshrl.u32 %v855, 7
      %v857 = vsub.s32 %v854, %v856
      %v858 = vrot.slane %v807, %v857
      %v860 = vunpack.c.l.s4 1983009808
      %v861 = vunpack.c.0.s8 %v860
      %v862 = vlaneseq
      %v863 = vshrl.u32 %v862, 7
      %v864 = vsub.s32 %v861, %v863
      %v865 = vrot.slane %v851, %v864
      %v866 = vcombine.high %v858, %v858
      %v867 = vcombine.high %v865, %v865
      %v868 = vcombine.high %v808, %v808
      %v870 = vunpack.c.l.s4 1983009808
      %v871 = vunpack.c.0.s8 %v870
      %v872 = vlaneseq
      %v873 = vshrl.u32 %v872, 7
      %v874 = vsub.s32 %v871, %v873
      %v875 = vrot.slane %v808, %v874
      %v877 = vunpack.c.l.s4 1983009808
      %v878 = vunpack.c.0.s8 %v877
      %v879 = vlaneseq
      %v880 = vshrl.u32 %v879, 7
      %v881 = vsub.s32 %v878, %v880
      %v882 = vrot.slane %v868, %v881
      %v883 = vcombine.high %v875, %v875
      %v884 = vcombine.high %v882, %v882
      %v885 = vcombine.high %v809, %v809
      %v887 = vunpack.c.l.s4 1983009808
      %v888 = vunpack.c.0.s8 %v887
      %v889 = vlaneseq
      %v890 = vshrl.u32 %v889, 7
      %v891 = vsub.s32 %v888, %v890
      %v892 = vrot.slane %v809, %v891
      %v894 = vunpack.c.l.s4 1983009808
      %v895 = vunpack.c.0.s8 %v894
      %v896 = vlaneseq
      %v897 = vshrl.u32 %v896, 7
      %v898 = vsub.s32 %v895, %v897
      %v899 = vrot.slane %v885, %v898
      %v900 = vcombine.high %v892, %v892
      %v901 = vcombine.high %v899, %v899
      %v903 = vunpack.c.l.s4 1983009808
      %v904 = vunpack.c.0.s8 %v903
      %v905 = vlaneseq
      %v906 = vshrl.u32 %v905, 7
      %v907 = vsub.s32 %v904, %v906
      %v908 = vrot.slane %v810, %v907
      %vm918 = vcmask 1040384
      %vm919 = vcmask 1042434
      %vm920 = vmor %vm918, %vm919
      %vm921 = vcmask 1044484
      %vm922 = vmor %vm920, %vm921
      %vm923 = vcmask 1046534
      %vm924 = vmor %vm922, %vm923
      %v925 = vrot.slane %v833, 7
      %v926 = vrot.slane %v925, 2
      %v927 = vrot.slane %v841, 7
      %v928 = vsel %vm924, %v926, %v927
      %v929 = vrot.slane %v927, 2
      %v930 = vrot.slane %v849, 7
      %v931 = vsel %vm924, %v929, %v930
      %v932 = vrot.slane %v930, 2
      %v933 = vrot.slane %v848, 7
      %v934 = vsel %vm924, %v932, %v933
      %v935 = vrot.slane %v865, 7
      %v936 = vrot.slane %v935, 2
      %v937 = vrot.slane %v867, 7
      %v938 = vsel %vm924, %v936, %v937
      %v939 = vrot.slane %v937, 2
      %v940 = vrot.slane %v875, 7
      %v941 = vsel %vm924, %v939, %v940
      %v942 = vrot.slane %v940, 2
      %v943 = vrot.slane %v883, 7
      %v944 = vsel %vm924, %v942, %v943
      %v945 = vrot.slane %v900, 7
      %v946 = vrot.slane %v945, 2
      %v947 = vrot.slane %v899, 7
      %v948 = vsel %vm924, %v946, %v947
      %v949 = vrot.slane %v947, 2
      %v950 = vrot.slane %v901, 7
      %v951 = vsel %vm924, %v949, %v950
      %v952 = vrot.slane %v950, 2
      %v953 = vrot.slane %v908, 7
      %v954 = vsel %vm924, %v952, %v953
      %v964 = vmax.f32 %v824, %v928
      %v965 = vmax.f32 %v832, %v931
      %v966 = vmax.f32 %v831, %v934
      %v967 = vmax.f32 %v850, %v938
      %v968 = vmax.f32 %v858, %v941
      %v969 = vmax.f32 %v866, %v944
      %v970 = vmax.f32 %v882, %v948
      %v971 = vmax.f32 %v884, %v951
      %v972 = vmax.f32 %v892, %v954
      %v982 = vrot.slane %v964, 7
      %v983 = vrot.slane %v982, 2
      %v984 = vrot.slane %v965, 7
      %v985 = vrot.slane %v984, 2
      %v986 = vrot.slane %v966, 7
      %v987 = vrot.slane %v986, 2
      %v988 = vrot.slane %v967, 7
      %v989 = vrot.slane %v988, 2
      %v990 = vrot.slane %v968, 7
      %v991 = vrot.slane %v990, 2
      %v992 = vrot.slane %v969, 7
      %v993 = vrot.slane %v992, 2
      %v994 = vrot.slane %v970, 7
      %v995 = vrot.slane %v994, 2
      %v996 = vrot.slane %v971, 7
      %v997 = vrot.slane %v996, 2
      %v998 = vrot.slane %v972, 7
      %v999 = vrot.slane %v998, 2
      %v1009 = vmax.f32 %v964, %v983
      %v1010 = vmax.f32 %v965, %v985
      %v1011 = vmax.f32 %v966, %v987
      %v1012 = vmax.f32 %v967, %v989
      %v1013 = vmax.f32 %v968, %v991
      %v1014 = vmax.f32 %v969, %v993
      %v1015 = vmax.f32 %v970, %v995
      %v1016 = vmax.f32 %v971, %v997
      %v1017 = vmax.f32 %v972, %v999
      %v1018 = vpack.c.bf16 %v1009, %v1009
      %v1019 = vpack.c.bf16 %v1010, %v1010
      %v1020 = vpack.c.bf16 %v1011, %v1011
      %v1021 = vpack.c.bf16 %v1012, %v1012
      %v1022 = vpack.c.bf16 %v1013, %v1013
      %v1023 = vpack.c.bf16 %v1014, %v1014
      %v1024 = vpack.c.bf16 %v1015, %v1015
      %v1025 = vpack.c.bf16 %v1016, %v1016
      %v1026 = vpack.c.bf16 %v1017, %v1017
      %v1036 = vunpack.c.l.b16 %v1018
      %v1037 = vunpack.c.l.b16 %v1019
      %v1038 = vunpack.c.l.b16 %v1020
      %v1039 = vunpack.c.l.b16 %v1021
      %v1040 = vunpack.c.l.b16 %v1022
      %v1041 = vunpack.c.l.b16 %v1023
      %v1042 = vunpack.c.l.b16 %v1024
      %v1043 = vunpack.c.l.b16 %v1025
      %v1044 = vunpack.c.l.b16 %v1026
      %v1045 = vpack.c.b16 %v1036, %v1036
      %v1046 = vpack.c.b16 %v1037, %v1037
      %v1047 = vpack.c.b16 %v1038, %v1038
      %v1048 = vpack.c.b16 %v1039, %v1039
      %v1049 = vpack.c.b16 %v1040, %v1040
      %v1050 = vpack.c.b16 %v1041, %v1041
      %v1051 = vpack.c.b16 %v1042, %v1042
      %v1052 = vpack.c.b16 %v1043, %v1043
      %v1053 = vpack.c.b16 %v1044, %v1044
      %v1054 = vunpack.c.l.b16 %v1045
      %v1055 = vunpack.c.l.b16 %v1046
      %v1056 = vunpack.c.l.b16 %v1047
      %v1057 = vunpack.c.l.b16 %v1048
      %v1058 = vunpack.c.l.b16 %v1049
      %v1059 = vunpack.c.l.b16 %v1050
      %v1060 = vunpack.c.l.b16 %v1051
      %v1061 = vunpack.c.l.b16 %v1052
      %v1062 = vunpack.c.l.b16 %v1053
      %v1063 = vrot.slane %v1055, 7
      %vm1064 = vcmask 1041409
      %v1065 = vsel %vm1064, %v1063, %v1054
      %v1066 = vrot.slane %v1056, 6
      %v1067 = vsel %vm919, %v1066, %v1065
      %v1068 = vrot.slane %v1057, 5
      %vm1069 = vcmask 1043459
      %v1070 = vsel %vm1069, %v1068, %v1067
      %v1071 = vrot.slane %v1058, 4
      %v1072 = vsel %vm921, %v1071, %v1070
      %v1073 = vrot.slane %v1059, 3
      %vm1074 = vcmask 1045509
      %v1075 = vsel %vm1074, %v1073, %v1072
      %v1076 = vrot.slane %v1060, 2
      %v1077 = vsel %vm923, %v1076, %v1075
      %v1078 = vrot.slane %v1061, 1
      %vm1079 = vcmask 1047559
      %v1080 = vsel %vm1079, %v1078, %v1077
      %v1081 = vpack.c.b16 %v1080, %v1080
      %v1082 = vpack.c.b16 %v1062, %v1062
      %1085 = vst [vmem:[%s170] sm:$0xf] %v1081
      %vm1086 = vcmask 1040384
      %vm1087 = vsmask.f32 256
      %vm1088 = vmand %vm1086, %vm1087
      %v1089 = vld [vmem:[%s170 + $0x4] sm:$0x1]
      %v1090 = vsel %vm1088, %v1082, %v1089
      %1091 = vst [vmem:[%s170 + $0x4] sm:$0x1] %v1090
      %p1092 = scmp.lt.s32.totalorder %s14, 1
      %s1093 = scalar_select %p1092, %s14, 1
      %s1094 = smul.addr %s1093, 2
      %s1095 = smul.addr %s1094, 4
      %s1096 = scalar_lea.vmem %s3, %s1095
      // Predicated region
      $region33: #{cnn_forward.6} parent=31 // pred_check
        %p1097 = pneg %p100
      $region34: #{cnn_forward.6} parent=31 // pred_check_branch
        %1099 = sbr.rel (%p1097) target = $region36
      $region35: #{cnn_forward.6} parent=31 // pred_region
        _
      $region36: #{cnn_forward.6} parent=31 // pred_fallthru
        _
    $region32: #{cnn_forward.6} parent=5 // pred_fallthru
      _
    %p1100 = scmp.le.s32.totalorder 2, %s9
    // Predicated region
    $region37: #{cnn_forward.6} parent=5 // pred_check
      %p1101 = pneg %p1100
    $region38: #{cnn_forward.6} parent=5 // pred_check_branch
      %1103 = sbr.rel (%p1101) target = $region40
    $region39: #{cnn_forward.6} parent=5 // pred_region
      %s1104 = ssub.s32 %s9, 2
      // Predicated region
      $region41: #{cnn_forward.6} parent=39 // pred_check
        %p1105 = pneg %p106
      $region42: #{cnn_forward.6} parent=39 // pred_check_branch
        %1107 = sbr.rel (%p1105) target = $region44
      $region43: #{cnn_forward.6} parent=39 // pred_region
        %p1108 = scmp.lt.s32.totalorder %s15, 1
        %s1109 = scalar_select %p1108, %s15, 1
        %s1110 = smul.addr %s1109, 2
        %s1111 = smul.addr %s1110, 4
        %s1112 = scalar_lea.vmem %s3, %s1111
      $region44: #{cnn_forward.6} parent=39 // pred_fallthru
        _
    $region40: #{cnn_forward.6} parent=5 // pred_fallthru
      _
  $region6: #{cnn_forward.6} parent=0 // loop_footer
    %s13 = sadd.s32 1, %s9
  $region7: #{cnn_forward.6} parent=0 // loop_footer_branch
    %8 = sbr.rel target = $region3
  $region8: #{cnn_forward.6} parent=0 // loop_exit
    _

// kernel: cnn_forward.7
$region0: #{cnn_forward.7}
  #allocation0 [shape = 'u32[]', space=smem, size = 0x4, offset = 0x4, fixed_abs, tag = 'smem constant byte address 0x4 - core index']
  #allocation1 [shape = 'u32[144,128]{1,0:T(1,128)}', space=vmem, size = 0x12000, scoped, tag = 'internal scratch']
  %s0 = inlined_call_operand.vmem [shape: bf16[8,1152], index: 0, kind: input, shape index: {}]
  %s1 = inlined_call_operand.vmem [shape: bf16[1152,128], index: 1, kind: input, shape index: {}]
  %s2 = inlined_call_operand.vmem [shape: f32[1,128], index: 2, kind: input, shape index: {}]
  %s3 = inlined_call_operand.vmem [shape: bf16[128,128], index: 3, kind: input, shape index: {}]
  %s4 = inlined_call_operand.vmem [shape: f32[1,128], index: 4, kind: input, shape index: {}]
  %s5 = inlined_call_operand.vmem [shape: bf16[128,128], index: 5, kind: input, shape index: {}]
  %s6 = inlined_call_operand.vmem [shape: f32[1,128], index: 6, kind: input, shape index: {}]
  %s7 = inlined_call_operand.vmem [shape: f32[8,128], index: 7, kind: output, shape index: {}]
  %s8 = sld [smem:[#allocation0]]
  $region38: #{cnn_forward.7} parent=0
    _
  %s10 = ssub.s32 1, %s8
  %s11 = scalar_select 0, %s10, %s8
  // Predicated region
  $region2: #{cnn_forward.7} parent=0 // pred_check
    _
  $region3: #{cnn_forward.7} parent=0 // pred_check_branch
    %13 = sbr.rel (0) target = $region5
  $region4: #{cnn_forward.7} parent=0 // pred_region
    _
  $region5: #{cnn_forward.7} parent=0 // pred_fallthru
    _
  // Predicated region
  $region6: #{cnn_forward.7} parent=0 // pred_check
    _
  $region7: #{cnn_forward.7} parent=0 // pred_check_branch
    %15 = sbr.rel (0) target = $region9
  $region8: #{cnn_forward.7} parent=0 // pred_region
    _
  $region9: #{cnn_forward.7} parent=0 // pred_fallthru
    _
  // Predicated region
  $region10: #{cnn_forward.7} parent=0 // pred_check
    _
  $region11: #{cnn_forward.7} parent=0 // pred_check_branch
    %17 = sbr.rel (0) target = $region13
  $region12: #{cnn_forward.7} parent=0 // pred_region
    _
  $region13: #{cnn_forward.7} parent=0 // pred_fallthru
    _
  // Predicated region
  $region14: #{cnn_forward.7} parent=0 // pred_check
    _
  $region15: #{cnn_forward.7} parent=0 // pred_check_branch
    %19 = sbr.rel (0) target = $region17
  $region16: #{cnn_forward.7} parent=0 // pred_region
    _
  $region17: #{cnn_forward.7} parent=0 // pred_fallthru
    _
  // Predicated region
  $region18: #{cnn_forward.7} parent=0 // pred_check
    _
  $region19: #{cnn_forward.7} parent=0 // pred_check_branch
    %21 = sbr.rel (0) target = $region21
  $region20: #{cnn_forward.7} parent=0 // pred_region
    _
  $region21: #{cnn_forward.7} parent=0 // pred_fallthru
    _
  // Predicated region
  $region22: #{cnn_forward.7} parent=0 // pred_check
    _
  $region23: #{cnn_forward.7} parent=0 // pred_check_branch
    %23 = sbr.rel (0) target = $region25
  $region24: #{cnn_forward.7} parent=0 // pred_region
    _
  $region25: #{cnn_forward.7} parent=0 // pred_fallthru
    _
  // Predicated region
  $region26: #{cnn_forward.7} parent=0 // pred_check
    _
  $region27: #{cnn_forward.7} parent=0 // pred_check_branch
    %25 = sbr.rel (0) target = $region29
  $region28: #{cnn_forward.7} parent=0 // pred_region
    _
  $region29: #{cnn_forward.7} parent=0 // pred_fallthru
    _
  %v27 = vld [vmem:[%s0] sm:$0xff]
  %v28 = vld [vmem:[%s0 + $0x8] sm:$0xff]
  %v29 = vld [vmem:[%s0 + $0x10] sm:$0xff]
  %v30 = vld [vmem:[%s0 + $0x18] sm:$0xff]
  %v31 = vld [vmem:[%s0 + $0x20] sm:$0xf]
  %v32 = vld [vmem:[%s1] sm:$0xf]
  %v33 = vld [vmem:[%s1 + $0x4] sm:$0xf]
  %v34 = vld [vmem:[%s1 + $0x8] sm:$0xf]
  %v35 = vld [vmem:[%s1 + $0xc] sm:$0xf]
  %v36 = vld [vmem:[%s1 + $0x10] sm:$0xf]
  %v37 = vld [vmem:[%s1 + $0x14] sm:$0xf]
  %v38 = vld [vmem:[%s1 + $0x18] sm:$0xf]
  %v39 = vld [vmem:[%s1 + $0x1c] sm:$0xf]
  %v40 = vld [vmem:[%s1 + $0x20] sm:$0xf]
  %v41 = vld [vmem:[%s1 + $0x24] sm:$0xf]
  %v42 = vld [vmem:[%s1 + $0x28] sm:$0xf]
  %v43 = vld [vmem:[%s1 + $0x2c] sm:$0xf]
  %v44 = vld [vmem:[%s1 + $0x30] sm:$0xf]
  %v45 = vld [vmem:[%s1 + $0x34] sm:$0xf]
  %v46 = vld [vmem:[%s1 + $0x38] sm:$0xf]
  %v47 = vld [vmem:[%s1 + $0x3c] sm:$0xf]
  %v48 = vld [vmem:[%s1 + $0x40] sm:$0xf]
  %v49 = vld [vmem:[%s1 + $0x44] sm:$0xf]
  %v50 = vld [vmem:[%s1 + $0x48] sm:$0xf]
  %v51 = vld [vmem:[%s1 + $0x4c] sm:$0xf]
  %v52 = vld [vmem:[%s1 + $0x50] sm:$0xf]
  %v53 = vld [vmem:[%s1 + $0x54] sm:$0xf]
  %v54 = vld [vmem:[%s1 + $0x58] sm:$0xf]
  %v55 = vld [vmem:[%s1 + $0x5c] sm:$0xf]
  %v56 = vld [vmem:[%s1 + $0x60] sm:$0xf]
  %v57 = vld [vmem:[%s1 + $0x64] sm:$0xf]
  %v58 = vld [vmem:[%s1 + $0x68] sm:$0xf]
  %v59 = vld [vmem:[%s1 + $0x6c] sm:$0xf]
  %v60 = vld [vmem:[%s1 + $0x70] sm:$0xf]
  %v61 = vld [vmem:[%s1 + $0x74] sm:$0xf]
  %v62 = vld [vmem:[%s1 + $0x78] sm:$0xf]
  %v63 = vld [vmem:[%s1 + $0x7c] sm:$0xf]
  %v64 = vld [vmem:[%s1 + $0x80] sm:$0xf]
  %v65 = vld [vmem:[%s1 + $0x84] sm:$0xf]
  %v66 = vld [vmem:[%s1 + $0x88] sm:$0xf]
  %v67 = vld [vmem:[%s1 + $0x8c] sm:$0xf]
  %v68 = vld [vmem:[%s1 + $0x90] sm:$0xf]
  %v69 = vld [vmem:[%s1 + $0x94] sm:$0xf]
  %v70 = vld [vmem:[%s1 + $0x98] sm:$0xf]
  %v71 = vld [vmem:[%s1 + $0x9c] sm:$0xf]
  %v72 = vld [vmem:[%s1 + $0xa0] sm:$0xf]
  %v73 = vld [vmem:[%s1 + $0xa4] sm:$0xf]
  %v74 = vld [vmem:[%s1 + $0xa8] sm:$0xf]
  %v75 = vld [vmem:[%s1 + $0xac] sm:$0xf]
  %v76 = vld [vmem:[%s1 + $0xb0] sm:$0xf]
  %v77 = vld [vmem:[%s1 + $0xb4] sm:$0xf]
  %v78 = vld [vmem:[%s1 + $0xb8] sm:$0xf]
  %v79 = vld [vmem:[%s1 + $0xbc] sm:$0xf]
  %v80 = vld [vmem:[%s1 + $0xc0] sm:$0xf]
  %v81 = vld [vmem:[%s1 + $0xc4] sm:$0xf]
  %v82 = vld [vmem:[%s1 + $0xc8] sm:$0xf]
  %v83 = vld [vmem:[%s1 + $0xcc] sm:$0xf]
  %v84 = vld [vmem:[%s1 + $0xd0] sm:$0xf]
  %v85 = vld [vmem:[%s1 + $0xd4] sm:$0xf]
  %v86 = vld [vmem:[%s1 + $0xd8] sm:$0xf]
  %v87 = vld [vmem:[%s1 + $0xdc] sm:$0xf]
  %v88 = vld [vmem:[%s1 + $0xe0] sm:$0xf]
  %v89 = vld [vmem:[%s1 + $0xe4] sm:$0xf]
  %v90 = vld [vmem:[%s1 + $0xe8] sm:$0xf]
  %v91 = vld [vmem:[%s1 + $0xec] sm:$0xf]
  %v92 = vld [vmem:[%s1 + $0xf0] sm:$0xf]
  %v93 = vld [vmem:[%s1 + $0xf4] sm:$0xf]
  %v94 = vld [vmem:[%s1 + $0xf8] sm:$0xf]
  %v95 = vld [vmem:[%s1 + $0xfc] sm:$0xf]
  %v96 = vld [vmem:[%s1 + $0x100] sm:$0xf]
  %v97 = vld [vmem:[%s1 + $0x104] sm:$0xf]
  %v98 = vld [vmem:[%s1 + $0x108] sm:$0xf]
  %v99 = vld [vmem:[%s1 + $0x10c] sm:$0xf]
  %v100 = vld [vmem:[%s1 + $0x110] sm:$0xf]
  %v101 = vld [vmem:[%s1 + $0x114] sm:$0xf]
  %v102 = vld [vmem:[%s1 + $0x118] sm:$0xf]
  %v103 = vld [vmem:[%s1 + $0x11c] sm:$0xf]
  %v104 = vld [vmem:[%s1 + $0x120] sm:$0xf]
  %v105 = vld [vmem:[%s1 + $0x124] sm:$0xf]
  %v106 = vld [vmem:[%s1 + $0x128] sm:$0xf]
  %v107 = vld [vmem:[%s1 + $0x12c] sm:$0xf]
  %v108 = vld [vmem:[%s1 + $0x130] sm:$0xf]
  %v109 = vld [vmem:[%s1 + $0x134] sm:$0xf]
  %v110 = vld [vmem:[%s1 + $0x138] sm:$0xf]
  %v111 = vld [vmem:[%s1 + $0x13c] sm:$0xf]
  %v112 = vld [vmem:[%s1 + $0x140] sm:$0xf]
  %v113 = vld [vmem:[%s1 + $0x144] sm:$0xf]
  %v114 = vld [vmem:[%s1 + $0x148] sm:$0xf]
  %v115 = vld [vmem:[%s1 + $0x14c] sm:$0xf]
  %v116 = vld [vmem:[%s1 + $0x150] sm:$0xf]
  %v117 = vld [vmem:[%s1 + $0x154] sm:$0xf]
  %v118 = vld [vmem:[%s1 + $0x158] sm:$0xf]
  %v119 = vld [vmem:[%s1 + $0x15c] sm:$0xf]
  %v120 = vld [vmem:[%s1 + $0x160] sm:$0xf]
  %v121 = vld [vmem:[%s1 + $0x164] sm:$0xf]
  %v122 = vld [vmem:[%s1 + $0x168] sm:$0xf]
  %v123 = vld [vmem:[%s1 + $0x16c] sm:$0xf]
  %v124 = vld [vmem:[%s1 + $0x170] sm:$0xf]
  %v125 = vld [vmem:[%s1 + $0x174] sm:$0xf]
  %v126 = vld [vmem:[%s1 + $0x178] sm:$0xf]
  %v127 = vld [vmem:[%s1 + $0x17c] sm:$0xf]
  %v128 = vld [vmem:[%s1 + $0x180] sm:$0xf]
  %v129 = vld [vmem:[%s1 + $0x184] sm:$0xf]
  %v130 = vld [vmem:[%s1 + $0x188] sm:$0xf]
  %v131 = vld [vmem:[%s1 + $0x18c] sm:$0xf]
  %v132 = vld [vmem:[%s1 + $0x190] sm:$0xf]
  %v133 = vld [vmem:[%s1 + $0x194] sm:$0xf]
  %v134 = vld [vmem:[%s1 + $0x198] sm:$0xf]
  %v135 = vld [vmem:[%s1 + $0x19c] sm:$0xf]
  %v136 = vld [vmem:[%s1 + $0x1a0] sm:$0xf]
  %v137 = vld [vmem:[%s1 + $0x1a4] sm:$0xf]
  %v138 = vld [vmem:[%s1 + $0x1a8] sm:$0xf]
  %v139 = vld [vmem:[%s1 + $0x1ac] sm:$0xf]
  %v140 = vld [vmem:[%s1 + $0x1b0] sm:$0xf]
  %v141 = vld [vmem:[%s1 + $0x1b4] sm:$0xf]
  %v142 = vld [vmem:[%s1 + $0x1b8] sm:$0xf]
  %v143 = vld [vmem:[%s1 + $0x1bc] sm:$0xf]
  %v144 = vld [vmem:[%s1 + $0x1c0] sm:$0xf]
  %v145 = vld [vmem:[%s1 + $0x1c4] sm:$0xf]
  %v146 = vld [vmem:[%s1 + $0x1c8] sm:$0xf]
  %v147 = vld [vmem:[%s1 + $0x1cc] sm:$0xf]
  %v148 = vld [vmem:[%s1 + $0x1d0] sm:$0xf]
  %v149 = vld [vmem:[%s1 + $0x1d4] sm:$0xf]
  %v150 = vld [vmem:[%s1 + $0x1d8] sm:$0xf]
  %v151 = vld [vmem:[%s1 + $0x1dc] sm:$0xf]
  %v152 = vld [vmem:[%s1 + $0x1e0] sm:$0xf]
  %v153 = vld [vmem:[%s1 + $0x1e4] sm:$0xf]
  %v154 = vld [vmem:[%s1 + $0x1e8] sm:$0xf]
  %v155 = vld [vmem:[%s1 + $0x1ec] sm:$0xf]
  %v156 = vld [vmem:[%s1 + $0x1f0] sm:$0xf]
  %v157 = vld [vmem:[%s1 + $0x1f4] sm:$0xf]
  %v158 = vld [vmem:[%s1 + $0x1f8] sm:$0xf]
  %v159 = vld [vmem:[%s1 + $0x1fc] sm:$0xf]
  %v160 = vld [vmem:[%s1 + $0x200] sm:$0xf]
  %v161 = vld [vmem:[%s1 + $0x204] sm:$0xf]
  %v162 = vld [vmem:[%s1 + $0x208] sm:$0xf]
  %v163 = vld [vmem:[%s1 + $0x20c] sm:$0xf]
  %v164 = vld [vmem:[%s1 + $0x210] sm:$0xf]
  %v165 = vld [vmem:[%s1 + $0x214] sm:$0xf]
  %v166 = vld [vmem:[%s1 + $0x218] sm:$0xf]
  %v167 = vld [vmem:[%s1 + $0x21c] sm:$0xf]
  %v168 = vld [vmem:[%s1 + $0x220] sm:$0xf]
  %v169 = vld [vmem:[%s1 + $0x224] sm:$0xf]
  %v170 = vld [vmem:[%s1 + $0x228] sm:$0xf]
  %v171 = vld [vmem:[%s1 + $0x22c] sm:$0xf]
  %v172 = vld [vmem:[%s1 + $0x230] sm:$0xf]
  %v173 = vld [vmem:[%s1 + $0x234] sm:$0xf]
  %v174 = vld [vmem:[%s1 + $0x238] sm:$0xf]
  %v175 = vld [vmem:[%s1 + $0x23c] sm:$0xf]
  %v176 = vld [vmem:[%s2] sm:$0x1]
  %v178 = vlaneseq
  %v179 = vshrl.u32 %v178, 7
  %v180 = vsub.s32 0, %v179
  %v181 = vrot.slane %v176, %v180
  %v188 = vunpack.c.l.b16 %v27
  %v189 = vunpack.c.h.b16 %v27
  %v190 = vunpack.c.l.b16 %v28
  %v191 = vunpack.c.h.b16 %v28
  %v192 = vunpack.c.l.b16 %v29
  %v193 = vunpack.c.h.b16 %v29
  %v194 = vunpack.c.l.b16 %v30
  %v195 = vunpack.c.h.b16 %v30
  %v196 = vunpack.c.l.b16 %v31
  %v197 = vpack.c.b16 %v188, %v188
  %v198 = vpack.c.b16 %v189, %v189
  %v199 = vpack.c.b16 %v190, %v190
  %v200 = vpack.c.b16 %v191, %v191
  %v201 = vpack.c.b16 %v192, %v192
  %v202 = vpack.c.b16 %v193, %v193
  %v203 = vpack.c.b16 %v194, %v194
  %v204 = vpack.c.b16 %v195, %v195
  %v205 = vpack.c.b16 %v196, %v196
  %v359 = vunpack.c.l.b16 %v32
  %v360 = vunpack.c.l.b16 %v33
  %v361 = vunpack.c.l.b16 %v34
  %v362 = vunpack.c.l.b16 %v35
  %v363 = vunpack.c.l.b16 %v36
  %v364 = vunpack.c.l.b16 %v37
  %v365 = vunpack.c.l.b16 %v38
  %v366 = vunpack.c.l.b16 %v39
  %v367 = vunpack.c.l.b16 %v40
  %v368 = vunpack.c.l.b16 %v41
  %v369 = vunpack.c.l.b16 %v42
  %v370 = vunpack.c.l.b16 %v43
  %v371 = vunpack.c.l.b16 %v44
  %v372 = vunpack.c.l.b16 %v45
  %v373 = vunpack.c.l.b16 %v46
  %v374 = vunpack.c.l.b16 %v47
  %v375 = vunpack.c.l.b16 %v48
  %v376 = vunpack.c.l.b16 %v49
  %v377 = vunpack.c.l.b16 %v50
  %v378 = vunpack.c.l.b16 %v51
  %v379 = vunpack.c.l.b16 %v52
  %v380 = vunpack.c.l.b16 %v53
  %v381 = vunpack.c.l.b16 %v54
  %v382 = vunpack.c.l.b16 %v55
  %v383 = vunpack.c.l.b16 %v56
  %v384 = vunpack.c.l.b16 %v57
  %v385 = vunpack.c.l.b16 %v58
  %v386 = vunpack.c.l.b16 %v59
  %v387 = vunpack.c.l.b16 %v60
  %v388 = vunpack.c.l.b16 %v61
  %v389 = vunpack.c.l.b16 %v62
  %v390 = vunpack.c.l.b16 %v63
  %v391 = vunpack.c.l.b16 %v64
  %v392 = vunpack.c.l.b16 %v65
  %v393 = vunpack.c.l.b16 %v66
  %v394 = vunpack.c.l.b16 %v67
  %v395 = vunpack.c.l.b16 %v68
  %v396 = vunpack.c.l.b16 %v69
  %v397 = vunpack.c.l.b16 %v70
  %v398 = vunpack.c.l.b16 %v71
  %v399 = vunpack.c.l.b16 %v72
  %v400 = vunpack.c.l.b16 %v73
  %v401 = vunpack.c.l.b16 %v74
  %v402 = vunpack.c.l.b16 %v75
  %v403 = vunpack.c.l.b16 %v76
  %v404 = vunpack.c.l.b16 %v77
  %v405 = vunpack.c.l.b16 %v78
  %v406 = vunpack.c.l.b16 %v79
  %v407 = vunpack.c.l.b16 %v80
  %v408 = vunpack.c.l.b16 %v81
  %v409 = vunpack.c.l.b16 %v82
  %v410 = vunpack.c.l.b16 %v83
  %v411 = vunpack.c.l.b16 %v84
  %v412 = vunpack.c.l.b16 %v85
  %v413 = vunpack.c.l.b16 %v86
  %v414 = vunpack.c.l.b16 %v87
  %v415 = vunpack.c.l.b16 %v88
  %v416 = vunpack.c.l.b16 %v89
  %v417 = vunpack.c.l.b16 %v90
  %v418 = vunpack.c.l.b16 %v91
  %v419 = vunpack.c.l.b16 %v92
  %v420 = vunpack.c.l.b16 %v93
  %v421 = vunpack.c.l.b16 %v94
  %v422 = vunpack.c.l.b16 %v95
  %v423 = vunpack.c.l.b16 %v96
  %v424 = vunpack.c.l.b16 %v97
  %v425 = vunpack.c.l.b16 %v98
  %v426 = vunpack.c.l.b16 %v99
  %v427 = vunpack.c.l.b16 %v100
  %v428 = vunpack.c.l.b16 %v101
  %v429 = vunpack.c.l.b16 %v102
  %v430 = vunpack.c.l.b16 %v103
  %v431 = vunpack.c.l.b16 %v104
  %v432 = vunpack.c.l.b16 %v105
  %v433 = vunpack.c.l.b16 %v106
  %v434 = vunpack.c.l.b16 %v107
  %v435 = vunpack.c.l.b16 %v108
  %v436 = vunpack.c.l.b16 %v109
  %v437 = vunpack.c.l.b16 %v110
  %v438 = vunpack.c.l.b16 %v111
  %v439 = vunpack.c.l.b16 %v112
  %v440 = vunpack.c.l.b16 %v113
  %v441 = vunpack.c.l.b16 %v114
  %v442 = vunpack.c.l.b16 %v115
  %v443 = vunpack.c.l.b16 %v116
  %v444 = vunpack.c.l.b16 %v117
  %v445 = vunpack.c.l.b16 %v118
  %v446 = vunpack.c.l.b16 %v119
  %v447 = vunpack.c.l.b16 %v120
  %v448 = vunpack.c.l.b16 %v121
  %v449 = vunpack.c.l.b16 %v122
  %v450 = vunpack.c.l.b16 %v123
  %v451 = vunpack.c.l.b16 %v124
  %v452 = vunpack.c.l.b16 %v125
  %v453 = vunpack.c.l.b16 %v126
  %v454 = vunpack.c.l.b16 %v127
  %v455 = vunpack.c.l.b16 %v128
  %v456 = vunpack.c.l.b16 %v129
  %v457 = vunpack.c.l.b16 %v130
  %v458 = vunpack.c.l.b16 %v131
  %v459 = vunpack.c.l.b16 %v132
  %v460 = vunpack.c.l.b16 %v133
  %v461 = vunpack.c.l.b16 %v134
  %v462 = vunpack.c.l.b16 %v135
  %v463 = vunpack.c.l.b16 %v136
  %v464 = vunpack.c.l.b16 %v137
  %v465 = vunpack.c.l.b16 %v138
  %v466 = vunpack.c.l.b16 %v139
  %v467 = vunpack.c.l.b16 %v140
  %v468 = vunpack.c.l.b16 %v141
  %v469 = vunpack.c.l.b16 %v142
  %v470 = vunpack.c.l.b16 %v143
  %v471 = vunpack.c.l.b16 %v144
  %v472 = vunpack.c.l.b16 %v145
  %v473 = vunpack.c.l.b16 %v146
  %v474 = vunpack.c.l.b16 %v147
  %v475 = vunpack.c.l.b16 %v148
  %v476 = vunpack.c.l.b16 %v149
  %v477 = vunpack.c.l.b16 %v150
  %v478 = vunpack.c.l.b16 %v151
  %v479 = vunpack.c.l.b16 %v152
  %v480 = vunpack.c.l.b16 %v153
  %v481 = vunpack.c.l.b16 %v154
  %v482 = vunpack.c.l.b16 %v155
  %v483 = vunpack.c.l.b16 %v156
  %v484 = vunpack.c.l.b16 %v157
  %v485 = vunpack.c.l.b16 %v158
  %v486 = vunpack.c.l.b16 %v159
  %v487 = vunpack.c.l.b16 %v160
  %v488 = vunpack.c.l.b16 %v161
  %v489 = vunpack.c.l.b16 %v162
  %v490 = vunpack.c.l.b16 %v163
  %v491 = vunpack.c.l.b16 %v164
  %v492 = vunpack.c.l.b16 %v165
  %v493 = vunpack.c.l.b16 %v166
  %v494 = vunpack.c.l.b16 %v167
  %v495 = vunpack.c.l.b16 %v168
  %v496 = vunpack.c.l.b16 %v169
  %v497 = vunpack.c.l.b16 %v170
  %v498 = vunpack.c.l.b16 %v171
  %v499 = vunpack.c.l.b16 %v172
  %v500 = vunpack.c.l.b16 %v173
  %v501 = vunpack.c.l.b16 %v174
  %v502 = vunpack.c.l.b16 %v175
  %v503 = vpack.c.b16 %v360, %v359
  %v504 = vpack.c.b16 %v362, %v361
  %v505 = vpack.c.b16 %v364, %v363
  %v506 = vpack.c.b16 %v366, %v365
  %v507 = vpack.c.b16 %v368, %v367
  %v508 = vpack.c.b16 %v370, %v369
  %v509 = vpack.c.b16 %v372, %v371
  %v510 = vpack.c.b16 %v374, %v373
  %v511 = vpack.c.b16 %v376, %v375
  %v512 = vpack.c.b16 %v378, %v377
  %v513 = vpack.c.b16 %v380, %v379
  %v514 = vpack.c.b16 %v382, %v381
  %v515 = vpack.c.b16 %v384, %v383
  %v516 = vpack.c.b16 %v386, %v385
  %v517 = vpack.c.b16 %v388, %v387
  %v518 = vpack.c.b16 %v390, %v389
  %v519 = vpack.c.b16 %v392, %v391
  %v520 = vpack.c.b16 %v394, %v393
  %v521 = vpack.c.b16 %v396, %v395
  %v522 = vpack.c.b16 %v398, %v397
  %v523 = vpack.c.b16 %v400, %v399
  %v524 = vpack.c.b16 %v402, %v401
  %v525 = vpack.c.b16 %v404, %v403
  %v526 = vpack.c.b16 %v406, %v405
  %v527 = vpack.c.b16 %v408, %v407
  %v528 = vpack.c.b16 %v410, %v409
  %v529 = vpack.c.b16 %v412, %v411
  %v530 = vpack.c.b16 %v414, %v413
  %v531 = vpack.c.b16 %v416, %v415
  %v532 = vpack.c.b16 %v418, %v417
  %v533 = vpack.c.b16 %v420, %v419
  %v534 = vpack.c.b16 %v422, %v421
  %v535 = vpack.c.b16 %v424, %v423
  %v536 = vpack.c.b16 %v426, %v425
  %v537 = vpack.c.b16 %v428, %v427
  %v538 = vpack.c.b16 %v430, %v429
  %v539 = vpack.c.b16 %v432, %v431
  %v540 = vpack.c.b16 %v434, %v433
  %v541 = vpack.c.b16 %v436, %v435
  %v542 = vpack.c.b16 %v438, %v437
  %v543 = vpack.c.b16 %v440, %v439
  %v544 = vpack.c.b16 %v442, %v441
  %v545 = vpack.c.b16 %v444, %v443
  %v546 = vpack.c.b16 %v446, %v445
  %v547 = vpack.c.b16 %v448, %v447
  %v548 = vpack.c.b16 %v450, %v449
  %v549 = vpack.c.b16 %v452, %v451
  %v550 = vpack.c.b16 %v454, %v453
  %v551 = vpack.c.b16 %v456, %v455
  %v552 = vpack.c.b16 %v458, %v457
  %v553 = vpack.c.b16 %v460, %v459
  %v554 = vpack.c.b16 %v462, %v461
  %v555 = vpack.c.b16 %v464, %v463
  %v556 = vpack.c.b16 %v466, %v465
  %v557 = vpack.c.b16 %v468, %v467
  %v558 = vpack.c.b16 %v470, %v469
  %v559 = vpack.c.b16 %v472, %v471
  %v560 = vpack.c.b16 %v474, %v473
  %v561 = vpack.c.b16 %v476, %v475
  %v562 = vpack.c.b16 %v478, %v477
  %v563 = vpack.c.b16 %v480, %v479
  %v564 = vpack.c.b16 %v482, %v481
  %v565 = vpack.c.b16 %v484, %v483
  %v566 = vpack.c.b16 %v486, %v485
  %v567 = vpack.c.b16 %v488, %v487
  %v568 = vpack.c.b16 %v490, %v489
  %v569 = vpack.c.b16 %v492, %v491
  %v570 = vpack.c.b16 %v494, %v493
  %v571 = vpack.c.b16 %v496, %v495
  %v572 = vpack.c.b16 %v498, %v497
  %v573 = vpack.c.b16 %v500, %v499
  %v574 = vpack.c.b16 %v502, %v501
  %647 = vmatprep.subr.bf16.mxu0 0
  %648 = vmatpush1.bf16.msra.mxu0 %v503
  %649 = vmatprep.subr.bf16.mxu0 0
  %650 = vmatpush1.bf16.msra.mxu0 %v504
  %651 = vmatprep.subr.bf16.mxu0 0
  %652 = vmatpush1.bf16.msra.mxu0 %v505
  %653 = vmatprep.subr.bf16.mxu0 0
  %654 = vmatpush1.bf16.msra.mxu0 %v506
  %655 = vmatprep.subr.bf16.mxu0 0
  %656 = vmatpush1.bf16.msra.mxu0 %v507
  %657 = vmatprep.subr.bf16.mxu0 0
  %658 = vmatpush1.bf16.msra.mxu0 %v508
  %659 = vmatprep.subr.bf16.mxu0 0
  %660 = vmatpush1.bf16.msra.mxu0 %v509
  %661 = vmatprep.subr.bf16.mxu0 0
  %662 = vmatpush1.bf16.msra.mxu0 %v510
  %663 = vmatprep.subr.bf16.mxu0 0
  %664 = vmatpush1.bf16.msra.mxu0 %v511
  %665 = vmatprep.subr.bf16.mxu0 0
  %666 = vmatpush1.bf16.msra.mxu0 %v512
  %667 = vmatprep.subr.bf16.mxu0 0
  %668 = vmatpush1.bf16.msra.mxu0 %v513
  %669 = vmatprep.subr.bf16.mxu0 0
  %670 = vmatpush1.bf16.msra.mxu0 %v514
  %671 = vmatprep.subr.bf16.mxu0 0
  %672 = vmatpush1.bf16.msra.mxu0 %v515
  %673 = vmatprep.subr.bf16.mxu0 0
  %674 = vmatpush1.bf16.msra.mxu0 %v516
  %675 = vmatprep.subr.bf16.mxu0 0
  %676 = vmatpush1.bf16.msra.mxu0 %v517
  %677 = vmatprep.subr.bf16.mxu0 0
  %678 = vmatpush1.bf16.msra.mxu0 %v518
  %679 = vmatprep.mubr.bf16.mxu0 %v198
  %680 = vmatmul.mubr.bf16.gmra.mrb[0].mxu0 %v197
  %v681 = vpop.f32.mrb[0].mxu0
  %v682 = vadd.f32 %v181, %v681
  %v683 = vpop.f32.mrb[0].mxu0
  %v684 = vpop.f32.mrb[0].mxu0
  %v685 = vpop.f32.mrb[0].mxu0
  %686 = vdwg.mxu0
  %687 = vmatprep.subr.bf16.mxu0 0
  %688 = vmatpush1.bf16.msra.mxu0 %v519
  %689 = vmatprep.subr.bf16.mxu0 0
  %690 = vmatpush1.bf16.msra.mxu0 %v520
  %691 = vmatprep.subr.bf16.mxu0 0
  %692 = vmatpush1.bf16.msra.mxu0 %v521
  %693 = vmatprep.subr.bf16.mxu0 0
  %694 = vmatpush1.bf16.msra.mxu0 %v522
  %695 = vmatprep.subr.bf16.mxu0 0
  %696 = vmatpush1.bf16.msra.mxu0 %v523
  %697 = vmatprep.subr.bf16.mxu0 0
  %698 = vmatpush1.bf16.msra.mxu0 %v524
  %699 = vmatprep.subr.bf16.mxu0 0
  %700 = vmatpush1.bf16.msra.mxu0 %v525
  %701 = vmatprep.subr.bf16.mxu0 0
  %702 = vmatpush1.bf16.msra.mxu0 %v526
  %703 = vmatprep.subr.bf16.mxu0 0
  %704 = vmatpush1.bf16.msra.mxu0 %v527
  %705 = vmatprep.subr.bf16.mxu0 0
  %706 = vmatpush1.bf16.msra.mxu0 %v528
  %707 = vmatprep.subr.bf16.mxu0 0
  %708 = vmatpush1.bf16.msra.mxu0 %v529
  %709 = vmatprep.subr.bf16.mxu0 0
  %710 = vmatpush1.bf16.msra.mxu0 %v530
  %711 = vmatprep.subr.bf16.mxu0 0
  %712 = vmatpush1.bf16.msra.mxu0 %v531
  %713 = vmatprep.subr.bf16.mxu0 0
  %714 = vmatpush1.bf16.msra.mxu0 %v532
  %715 = vmatprep.subr.bf16.mxu0 0
  %716 = vmatpush1.bf16.msra.mxu0 %v533
  %717 = vmatprep.subr.bf16.mxu0 0
  %718 = vmatpush1.bf16.msra.mxu0 %v534
  %719 = vmatprep.mubr.bf16.mxu0 %v200
  %720 = vmatmul.mubr.bf16.gmra.mrb[0].mxu0 %v199
  %v721 = vpop.f32.mrb[0].mxu0
  %v722 = vadd.f32 %v682, %v721
  %v723 = vpop.f32.mrb[0].mxu0
  %v724 = vpop.f32.mrb[0].mxu0
  %v725 = vpop.f32.mrb[0].mxu0
  %726 = vdwg.mxu0
  %727 = vmatprep.subr.bf16.mxu0 0
  %728 = vmatpush1.bf16.msra.mxu0 %v535
  %729 = vmatprep.subr.bf16.mxu0 0
  %730 = vmatpush1.bf16.msra.mxu0 %v536
  %731 = vmatprep.subr.bf16.mxu0 0
  %732 = vmatpush1.bf16.msra.mxu0 %v537
  %733 = vmatprep.subr.bf16.mxu0 0
  %734 = vmatpush1.bf16.msra.mxu0 %v538
  %735 = vmatprep.subr.bf16.mxu0 0
  %736 = vmatpush1.bf16.msra.mxu0 %v539
  %737 = vmatprep.subr.bf16.mxu0 0
  %738 = vmatpush1.bf16.msra.mxu0 %v540
  %739 = vmatprep.subr.bf16.mxu0 0
  %740 = vmatpush1.bf16.msra.mxu0 %v541
  %741 = vmatprep.subr.bf16.mxu0 0
  %742 = vmatpush1.bf16.msra.mxu0 %v542
  %743 = vmatprep.subr.bf16.mxu0 0
  %744 = vmatpush1.bf16.msra.mxu0 %v543
  %745 = vmatprep.subr.bf16.mxu0 0
  %746 = vmatpush1.bf16.msra.mxu0 %v544
  %747 = vmatprep.subr.bf16.mxu0 0
  %748 = vmatpush1.bf16.msra.mxu0 %v545
  %749 = vmatprep.subr.bf16.mxu0 0
  %750 = vmatpush1.bf16.msra.mxu0 %v546
  %751 = vmatprep.subr.bf16.mxu0 0
  %752 = vmatpush1.bf16.msra.mxu0 %v547
  %753 = vmatprep.subr.bf16.mxu0 0
  %754 = vmatpush1.bf16.msra.mxu0 %v548
  %755 = vmatprep.subr.bf16.mxu0 0
  %756 = vmatpush1.bf16.msra.mxu0 %v549
  %757 = vmatprep.subr.bf16.mxu0 0
  %758 = vmatpush1.bf16.msra.mxu0 %v550
  %759 = vmatprep.mubr.bf16.mxu0 %v202
  %760 = vmatmul.mubr.bf16.gmra.mrb[0].mxu0 %v201
  %v761 = vpop.f32.mrb[0].mxu0
  %v762 = vadd.f32 %v722, %v761
  %v763 = vpop.f32.mrb[0].mxu0
  %v764 = vpop.f32.mrb[0].mxu0
  %v765 = vpop.f32.mrb[0].mxu0
  %766 = vdwg.mxu0
  %767 = vmatprep.subr.bf16.mxu0 0
  %768 = vmatpush1.bf16.msra.mxu0 %v551
  %769 = vmatprep.subr.bf16.mxu0 0
  %770 = vmatpush1.bf16.msra.mxu0 %v552
  %771 = vmatprep.subr.bf16.mxu0 0
  %772 = vmatpush1.bf16.msra.mxu0 %v553
  %773 = vmatprep.subr.bf16.mxu0 0
  %774 = vmatpush1.bf16.msra.mxu0 %v554
  %775 = vmatprep.subr.bf16.mxu0 0
  %776 = vmatpush1.bf16.msra.mxu0 %v555
  %777 = vmatprep.subr.bf16.mxu0 0
  %778 = vmatpush1.bf16.msra.mxu0 %v556
  %779 = vmatprep.subr.bf16.mxu0 0
  %780 = vmatpush1.bf16.msra.mxu0 %v557
  %781 = vmatprep.subr.bf16.mxu0 0
  %782 = vmatpush1.bf16.msra.mxu0 %v558
  %783 = vmatprep.subr.bf16.mxu0 0
  %784 = vmatpush1.bf16.msra.mxu0 %v559
  %785 = vmatprep.subr.bf16.mxu0 0
  %786 = vmatpush1.bf16.msra.mxu0 %v560
  %787 = vmatprep.subr.bf16.mxu0 0
  %788 = vmatpush1.bf16.msra.mxu0 %v561
  %789 = vmatprep.subr.bf16.mxu0 0
  %790 = vmatpush1.bf16.msra.mxu0 %v562
  %791 = vmatprep.subr.bf16.mxu0 0
  %792 = vmatpush1.bf16.msra.mxu0 %v563
  %793 = vmatprep.subr.bf16.mxu0 0
  %794 = vmatpush1.bf16.msra.mxu0 %v564
  %795 = vmatprep.subr.bf16.mxu0 0
  %796 = vmatpush1.bf16.msra.mxu0 %v565
  %797 = vmatprep.subr.bf16.mxu0 0
  %798 = vmatpush1.bf16.msra.mxu0 %v566
  %799 = vmatprep.mubr.bf16.mxu0 %v204
  %800 = vmatmul.mubr.bf16.gmra.mrb[0].mxu0 %v203
  %v801 = vpop.f32.mrb[0].mxu0
  %v802 = vadd.f32 %v762, %v801
  %v803 = vpop.f32.mrb[0].mxu0
  %v804 = vpop.f32.mrb[0].mxu0
  %v805 = vpop.f32.mrb[0].mxu0
  %806 = vdwg.mxu0
  %807 = vmatprep.subr.bf16.mxu0 0
  %808 = vmatpush1.bf16.msra.mxu0 %v567
  %809 = vmatprep.subr.bf16.mxu0 0
  %810 = vmatpush1.bf16.msra.mxu0 %v568
  %811 = vmatprep.subr.bf16.mxu0 0
  %812 = vmatpush1.bf16.msra.mxu0 %v569
  %813 = vmatprep.subr.bf16.mxu0 0
  %814 = vmatpush1.bf16.msra.mxu0 %v570
  %815 = vmatprep.subr.bf16.mxu0 0
  %816 = vmatpush1.bf16.msra.mxu0 %v571
  %817 = vmatprep.subr.bf16.mxu0 0
  %818 = vmatpush1.bf16.msra.mxu0 %v572
  %819 = vmatprep.subr.bf16.mxu0 0
  %820 = vmatpush1.bf16.msra.mxu0 %v573
  %821 = vmatprep.subr.bf16.mxu0 0
  %822 = vmatpush1.bf16.msra.mxu0 %v574
  %823 = vmatprep.subr.bf16.mxu0 0
  %824 = vmatpush1.bf16.msra.mxu0 0
  %825 = vmatprep.subr.bf16.mxu0 0
  %826 = vmatpush1.bf16.msra.mxu0 0
  %827 = vmatprep.subr.bf16.mxu0 0
  %828 = vmatpush1.bf16.msra.mxu0 0
  %829 = vmatprep.subr.bf16.mxu0 0
  %830 = vmatpush1.bf16.msra.mxu0 0
  %831 = vmatprep.subr.bf16.mxu0 0
  %832 = vmatpush1.bf16.msra.mxu0 0
  %833 = vmatprep.subr.bf16.mxu0 0
  %834 = vmatpush1.bf16.msra.mxu0 0
  %835 = vmatprep.subr.bf16.mxu0 0
  %836 = vmatpush1.bf16.msra.mxu0 0
  %837 = vmatprep.subr.bf16.mxu0 0
  %838 = vmatpush1.bf16.msra.mxu0 0
  %839 = vmatprep.mubr.bf16.mxu0 0
  %840 = vmatmul.mubr.bf16.gmra.mrb[0].mxu0 %v205
  %v841 = vpop.f32.mrb[0].mxu0
  %v842 = vadd.f32 %v802, %v841
  %v843 = vpop.f32.mrb[0].mxu0
  %v844 = vpop.f32.mrb[0].mxu0
  %v845 = vpop.f32.mrb[0].mxu0
  %846 = vdwg.mxu0
  %v847 = vmax.f32 %v842, 0.0
  %v848 = vpack.c.bf16 %v847, %v847
  %v849 = vld [vmem:[%s3] sm:$0xf]
  %v850 = vld [vmem:[%s3 + $0x4] sm:$0xf]
  %v851 = vld [vmem:[%s3 + $0x8] sm:$0xf]
  %v852 = vld [vmem:[%s3 + $0xc] sm:$0xf]
  %v853 = vld [vmem:[%s3 + $0x10] sm:$0xf]
  %v854 = vld [vmem:[%s3 + $0x14] sm:$0xf]
  %v855 = vld [vmem:[%s3 + $0x18] sm:$0xf]
  %v856 = vld [vmem:[%s3 + $0x1c] sm:$0xf]
  %v857 = vld [vmem:[%s3 + $0x20] sm:$0xf]
  %v858 = vld [vmem:[%s3 + $0x24] sm:$0xf]
  %v859 = vld [vmem:[%s3 + $0x28] sm:$0xf]
  %v860 = vld [vmem:[%s3 + $0x2c] sm:$0xf]
  %v861 = vld [vmem:[%s3 + $0x30] sm:$0xf]
  %v862 = vld [vmem:[%s3 + $0x34] sm:$0xf]
  %v863 = vld [vmem:[%s3 + $0x38] sm:$0xf]
  %v864 = vld [vmem:[%s3 + $0x3c] sm:$0xf]
  %v865 = vld [vmem:[%s4] sm:$0x1]
  %v867 = vlaneseq
  %v868 = vshrl.u32 %v867, 7
  %v869 = vsub.s32 0, %v868
  %v870 = vrot.slane %v865, %v869
  %v888 = vunpack.c.l.b16 %v849
  %v889 = vunpack.c.l.b16 %v850
  %v890 = vunpack.c.l.b16 %v851
  %v891 = vunpack.c.l.b16 %v852
  %v892 = vunpack.c.l.b16 %v853
  %v893 = vunpack.c.l.b16 %v854
  %v894 = vunpack.c.l.b16 %v855
  %v895 = vunpack.c.l.b16 %v856
  %v896 = vunpack.c.l.b16 %v857
  %v897 = vunpack.c.l.b16 %v858
  %v898 = vunpack.c.l.b16 %v859
  %v899 = vunpack.c.l.b16 %v860
  %v900 = vunpack.c.l.b16 %v861
  %v901 = vunpack.c.l.b16 %v862
  %v902 = vunpack.c.l.b16 %v863
  %v903 = vunpack.c.l.b16 %v864
  %v904 = vpack.c.b16 %v889, %v888
  %v905 = vpack.c.b16 %v891, %v890
  %v906 = vpack.c.b16 %v893, %v892
  %v907 = vpack.c.b16 %v895, %v894
  %v908 = vpack.c.b16 %v897, %v896
  %v909 = vpack.c.b16 %v899, %v898
  %v910 = vpack.c.b16 %v901, %v900
  %v911 = vpack.c.b16 %v903, %v902
  %920 = vmatprep.subr.bf16.mxu0 0
  %921 = vmatpush1.bf16.msra.mxu0 %v904
  %922 = vmatprep.subr.bf16.mxu0 0
  %923 = vmatpush1.bf16.msra.mxu0 %v905
  %924 = vmatprep.subr.bf16.mxu0 0
  %925 = vmatpush1.bf16.msra.mxu0 %v906
  %926 = vmatprep.subr.bf16.mxu0 0
  %927 = vmatpush1.bf16.msra.mxu0 %v907
  %928 = vmatprep.subr.bf16.mxu0 0
  %929 = vmatpush1.bf16.msra.mxu0 %v908
  %930 = vmatprep.subr.bf16.mxu0 0
  %931 = vmatpush1.bf16.msra.mxu0 %v909
  %932 = vmatprep.subr.bf16.mxu0 0
  %933 = vmatpush1.bf16.msra.mxu0 %v910
  %934 = vmatprep.subr.bf16.mxu0 0
  %935 = vmatpush1.bf16.msra.mxu0 %v911
  %936 = vmatprep.subr.bf16.mxu0 0
  %937 = vmatpush1.bf16.msra.mxu0 0
  %938 = vmatprep.subr.bf16.mxu0 0
  %939 = vmatpush1.bf16.msra.mxu0 0
  %940 = vmatprep.subr.bf16.mxu0 0
  %941 = vmatpush1.bf16.msra.mxu0 0
  %942 = vmatprep.subr.bf16.mxu0 0
  %943 = vmatpush1.bf16.msra.mxu0 0
  %944 = vmatprep.subr.bf16.mxu0 0
  %945 = vmatpush1.bf16.msra.mxu0 0
  %946 = vmatprep.subr.bf16.mxu0 0
  %947 = vmatpush1.bf16.msra.mxu0 0
  %948 = vmatprep.subr.bf16.mxu0 0
  %949 = vmatpush1.bf16.msra.mxu0 0
  %950 = vmatprep.subr.bf16.mxu0 0
  %951 = vmatpush1.bf16.msra.mxu0 0
  %952 = vmatprep.mubr.bf16.mxu0 0
  %953 = vmatmul.mubr.bf16.gmra.mrb[0].mxu0 %v848
  %v954 = vpop.f32.mrb[0].mxu0
  %v955 = vadd.f32 %v870, %v954
  %v956 = vpop.f32.mrb[0].mxu0
  %v957 = vpop.f32.mrb[0].mxu0
  %v958 = vpop.f32.mrb[0].mxu0
  %959 = vdwg.mxu0
  %v960 = vmax.f32 %v955, 0.0
  %v961 = vpack.c.bf16 %v960, %v960
  %v962 = vld [vmem:[%s5] sm:$0xf]
  %v963 = vld [vmem:[%s5 + $0x4] sm:$0xf]
  %v964 = vld [vmem:[%s5 + $0x8] sm:$0xf]
  %v965 = vld [vmem:[%s5 + $0xc] sm:$0xf]
  %v966 = vld [vmem:[%s5 + $0x10] sm:$0xf]
  %v967 = vld [vmem:[%s5 + $0x14] sm:$0xf]
  %v968 = vld [vmem:[%s5 + $0x18] sm:$0xf]
  %v969 = vld [vmem:[%s5 + $0x1c] sm:$0xf]
  %v970 = vld [vmem:[%s5 + $0x20] sm:$0xf]
  %v971 = vld [vmem:[%s5 + $0x24] sm:$0xf]
  %v972 = vld [vmem:[%s5 + $0x28] sm:$0xf]
  %v973 = vld [vmem:[%s5 + $0x2c] sm:$0xf]
  %v974 = vld [vmem:[%s5 + $0x30] sm:$0xf]
  %v975 = vld [vmem:[%s5 + $0x34] sm:$0xf]
  %v976 = vld [vmem:[%s5 + $0x38] sm:$0xf]
  %v977 = vld [vmem:[%s5 + $0x3c] sm:$0xf]
  %v978 = vld [vmem:[%s6] sm:$0x1]
  %v980 = vlaneseq
  %v981 = vshrl.u32 %v980, 7
  %v982 = vsub.s32 0, %v981
  %v983 = vrot.slane %v978, %v982
  %v1001 = vunpack.c.l.b16 %v962
  %v1002 = vunpack.c.l.b16 %v963
  %v1003 = vunpack.c.l.b16 %v964
  %v1004 = vunpack.c.l.b16 %v965
  %v1005 = vunpack.c.l.b16 %v966
  %v1006 = vunpack.c.l.b16 %v967
  %v1007 = vunpack.c.l.b16 %v968
  %v1008 = vunpack.c.l.b16 %v969
  %v1009 = vunpack.c.l.b16 %v970
  %v1010 = vunpack.c.l.b16 %v971
  %v1011 = vunpack.c.l.b16 %v972
  %v1012 = vunpack.c.l.b16 %v973
  %v1013 = vunpack.c.l.b16 %v974
  %v1014 = vunpack.c.l.b16 %v975
  %v1015 = vunpack.c.l.b16 %v976
  %v1016 = vunpack.c.l.b16 %v977
  %v1017 = vpack.c.b16 %v1002, %v1001
  %v1018 = vpack.c.b16 %v1004, %v1003
  %v1019 = vpack.c.b16 %v1006, %v1005
  %v1020 = vpack.c.b16 %v1008, %v1007
  %v1021 = vpack.c.b16 %v1010, %v1009
  %v1022 = vpack.c.b16 %v1012, %v1011
  %v1023 = vpack.c.b16 %v1014, %v1013
  %v1024 = vpack.c.b16 %v1016, %v1015
  %1033 = vmatprep.subr.bf16.mxu0 0
  %1034 = vmatpush1.bf16.msra.mxu0 %v1017
  %1035 = vmatprep.subr.bf16.mxu0 0
  %1036 = vmatpush1.bf16.msra.mxu0 %v1018
  %1037 = vmatprep.subr.bf16.mxu0 0
  %1038 = vmatpush1.bf16.msra.mxu0 %v1019
  %1039 = vmatprep.subr.bf16.mxu0 0
  %1040 = vmatpush1.bf16.msra.mxu0 %v1020
  %1041 = vmatprep.subr.bf16.mxu0 0
  %1042 = vmatpush1.bf16.msra.mxu0 %v1021
  %1043 = vmatprep.subr.bf16.mxu0 0
  %1044 = vmatpush1.bf16.msra.mxu0 %v1022
  %1045 = vmatprep.subr.bf16.mxu0 0
  %1046 = vmatpush1.bf16.msra.mxu0 %v1023
  %1047 = vmatprep.subr.bf16.mxu0 0
  %1048 = vmatpush1.bf16.msra.mxu0 %v1024
  %1049 = vmatprep.subr.bf16.mxu0 0
  %1050 = vmatpush1.bf16.msra.mxu0 0
  %1051 = vmatprep.subr.bf16.mxu0 0
  %1052 = vmatpush1.bf16.msra.mxu0 0
  %1053 = vmatprep.subr.bf16.mxu0 0
  %1054 = vmatpush1.bf16.msra.mxu0 0
  %1055 = vmatprep.subr.bf16.mxu0 0
  %1056 = vmatpush1.bf16.msra.mxu0 0
  %1057 = vmatprep.subr.bf16.mxu0 0
  %1058 = vmatpush1.bf16.msra.mxu0 0
  %1059 = vmatprep.subr.bf16.mxu0 0
  %1060 = vmatpush1.bf16.msra.mxu0 0
  %1061 = vmatprep.subr.bf16.mxu0 0
  %1062 = vmatpush1.bf16.msra.mxu0 0
  %1063 = vmatprep.subr.bf16.mxu0 0
  %1064 = vmatpush1.bf16.msra.mxu0 0
  %1065 = vmatprep.mubr.bf16.mxu0 0
  %1066 = vmatmul.mubr.bf16.gmra.mrb[0].mxu0 %v961
  %v1067 = vpop.f32.mrb[0].mxu0
  %v1068 = vadd.f32 %v983, %v1067
  %v1069 = vpop.f32.mrb[0].mxu0
  %v1070 = vpop.f32.mrb[0].mxu0
  %v1071 = vpop.f32.mrb[0].mxu0
  %1072 = vdwg.mxu0
  %1073 = vst [vmem:[%s7] sm:$0xff] %v1068
  // Predicated region
  $region30: #{cnn_forward.7} parent=0 // pred_check
    _
  $region31: #{cnn_forward.7} parent=0 // pred_check_branch
    %1075 = sbr.rel (0) target = $region33
  $region32: #{cnn_forward.7} parent=0 // pred_region
    _
  $region33: #{cnn_forward.7} parent=0 // pred_fallthru
    _
  // Predicated region
  $region34: #{cnn_forward.7} parent=0 // pred_check
    _
  $region35: #{cnn_forward.7} parent=0 // pred_check_branch
    %1077 = sbr.rel (0) target = $region37
  $region36: #{cnn_forward.7} parent=0 // pred_region
    _
  $region37: #{cnn_forward.7} parent=0 // pred_fallthru
    _

</llo_original>
